<compile_context>
chip_gen: v7x
topology: tpu7x:2x2x1
jax: 0.10.0
libtpu: 0.0.40
codegen_flags: <defaults>
</compile_context>

<pallas_src>
import jax
import jax.numpy as jnp
from jax.experimental import pallas as pl
from jax.experimental.pallas import tpu as pltpu

# ---------------- config (small synthetic BERT) ----------------
VOCAB = 64
HIDDEN = 256          # matches linear1 in_features
N_HEADS = 4
HEAD_DIM = HIDDEN // N_HEADS
FFN = 512
N_LAYERS = 2
MAX_SEQ = 32
LN_EPS = 1e-12
NUM_CLASSES = 4
LIN1_OUT = 32
CHUNK = 2             # examples per grid step (keeps >=2 "parallel" steps for v7x's 2 TCs)


# ---------------- fused Pallas kernel (one grid step = CHUNK batch examples) ----------------
def _fused_bert_kernel(onehot_ref, mask_ref,
                       wte_ref, pos_ref, emb_g_ref, emb_b_ref,
                       wqkv_ref, bqkv_ref, wo_ref, bo_ref,
                       ln1_g_ref, ln1_b_ref, w1_ref, b1_ref,
                       w2_ref, b2_ref, ln2_g_ref, ln2_b_ref,
                       wh_ref, bh_ref, out_ref):
    chunk, S = mask_ref.shape[1], mask_ref.shape[2]
    bf16 = jnp.bfloat16

    def layernorm(v, g, b):
        mu = jnp.mean(v, axis=-1, keepdims=True)
        var = jnp.mean(jnp.square(v - mu), axis=-1, keepdims=True)
        return (v - mu) * jax.lax.rsqrt(var + LN_EPS) * g + b

    def mxu(a, w, bias=None):
        # bf16 MXU matmul, f32 accumulation; bias add in f32.
        y = jnp.dot(a, w, preferred_element_type=jnp.float32)
        return y if bias is None else y + bias

    # ---- embedding lookup fused in-kernel: one-hot MXU matmul + position add + emb LN ----
    x = mxu(onehot_ref[...], wte_ref[...]) + pos_ref[...]              # [chunk*S, H] f32
    x = layernorm(x, emb_g_ref[...], emb_b_ref[...])

    mask2 = mask_ref[0]                                                 # [chunk, S] additive
    scale = 1.0 / float(HEAD_DIM) ** 0.5

    for l in range(N_LAYERS):
        # fused QKV projection over ALL chunk*S rows; single bf16 cast of the result.
        qkv = mxu(x.astype(bf16), wqkv_ref[l], bqkv_ref[l]).astype(bf16)   # [chunk*S, 3H]

        ctx_rows = []
        for c in range(chunk):                     # small unrolled loop over examples
            base = c * S

            def heads(off):
                # head-major relayout [nH, S, dh] (one relayout per example per layer)
                return jnp.stack(
                    [qkv[base:base + S, off + h * HEAD_DIM: off + (h + 1) * HEAD_DIM]
                     for h in range(N_HEADS)], axis=0)

            q, k, v = heads(0), heads(HIDDEN), heads(2 * HIDDEN)           # [nH, S, dh] bf16
            # head-batched QK^T and P@V: one contraction each (no per-head matmul loop)
            s = jnp.einsum('hqd,hkd->hqk', q, k,
                           preferred_element_type=jnp.float32)             # [nH, S, S]
            s = s * scale + mask2[c:c + 1, :][None, :, :]
            s = s - jnp.max(s, axis=-1, keepdims=True)
            p = jnp.exp(s)
            p = p * pl.reciprocal(jnp.sum(p, axis=-1, keepdims=True), approx=True)
            ctx = jnp.einsum('hqk,hkd->hqd', p.astype(bf16), v,
                             preferred_element_type=jnp.float32)            # [nH, S, dh]
            # merge heads back to [S, H] so W_o is a single [H, H] matmul
            ctx_rows.append(jnp.concatenate([ctx[h] for h in range(N_HEADS)], axis=-1))

        attn_in = jnp.concatenate(ctx_rows, axis=0)                         # [chunk*S, H] f32
        attn = mxu(attn_in.astype(bf16), wo_ref[l], bo_ref[l])              # one W_o matmul

        x = layernorm(x + attn, ln1_g_ref[l], ln1_b_ref[l])

        # ---- feed-forward (all chunk*S rows at once) ----
        ff = mxu(x.astype(bf16), w1_ref[l], b1_ref[l])                      # [chunk*S, FFN]
        # TODO(synk): HF BERT uses exact erf-GELU; tanh-approx GELU used here.
        ff = jax.nn.gelu(ff, approximate=True)
        ff = mxu(ff.astype(bf16), w2_ref[l], b2_ref[l])                     # [chunk*S, H]
        x = layernorm(x + ff, ln2_g_ref[l], ln2_b_ref[l])

    # ---- folded (linear1 @ linear2) classification head on the CLS rows ----
    cls = jnp.concatenate([x[c * S:c * S + 1, :] for c in range(chunk)], axis=0)  # [chunk, H]
    logits = mxu(cls.astype(bf16), wh_ref[...], bh_ref[...])                # [chunk, 4] f32
    out_ref[0] = logits.astype(out_ref.dtype)


# ---------------- forward wrapper (single pallas_call, whole forward jitted) ----------------
@jax.jit
def custom_bert_forward(fused, ids, mask):
    """ids:[B,S] int32, mask:[B,S] (1=token, 0=pad) -> logits [B, NUM_CLASSES]"""
    B, S = ids.shape
    assert B % CHUNK == 0, "batch must be a multiple of CHUNK"
    G = B // CHUNK

    # Tiny XLA-side glue: bf16 one-hot ids (much smaller than an f32 embedding slab),
    # the tiled position embedding, and the additive attention mask. The actual gather,
    # position add and embedding LayerNorm run inside the kernel.
    onehot = (ids.reshape(B * S, 1) ==
              jnp.arange(VOCAB, dtype=ids.dtype)[None, :]).astype(jnp.bfloat16)  # [B*S, VOCAB]
    pos = jnp.tile(fused["wpe"][:S], (CHUNK, 1))                                  # [CHUNK*S, H]
    mask_add = ((1.0 - mask.astype(jnp.float32)) * -1e9).reshape(G, CHUNK, S)

    def const_spec(shape):
        # constant-index weight block: single-buffered (re-DMA / double-buffer buys nothing)
        nd = len(shape)
        return pl.BlockSpec(shape, lambda i: (0,) * nd, pipeline_mode=pl.Buffered(1))

    in_specs = [
        pl.BlockSpec((CHUNK * S, VOCAB), lambda i: (i, 0)),               # one-hot ids (bf16)
        pl.BlockSpec((1, CHUNK, S), lambda i: (i, 0, 0)),                 # additive mask
        const_spec((VOCAB, HIDDEN)),                                      # wte (bf16)
        const_spec((CHUNK * S, HIDDEN)),                                  # tiled positions
        const_spec((1, HIDDEN)), const_spec((1, HIDDEN)),                 # emb LN gamma/beta
        const_spec((N_LAYERS, HIDDEN, 3 * HIDDEN)),                       # wqkv  [L,H,3H] bf16
        const_spec((N_LAYERS, 1, 3 * HIDDEN)),                            # bqkv
        const_spec((N_LAYERS, HIDDEN, HIDDEN)),                           # wo    [L,H,H] bf16
        const_spec((N_LAYERS, 1, HIDDEN)),                                # bo
        const_spec((N_LAYERS, 1, HIDDEN)), const_spec((N_LAYERS, 1, HIDDEN)),   # ln1 g/b
        const_spec((N_LAYERS, HIDDEN, FFN)), const_spec((N_LAYERS, 1, FFN)),    # w1, b1
        const_spec((N_LAYERS, FFN, HIDDEN)), const_spec((N_LAYERS, 1, HIDDEN)), # w2, b2
        const_spec((N_LAYERS, 1, HIDDEN)), const_spec((N_LAYERS, 1, HIDDEN)),   # ln2 g/b
        const_spec((HIDDEN, NUM_CLASSES)), const_spec((1, NUM_CLASSES)),        # folded head
    ]

    out = pl.pallas_call(
        _fused_bert_kernel,
        out_shape=jax.ShapeDtypeStruct((G, CHUNK, NUM_CLASSES), jnp.float32),
        grid=(G,),
        in_specs=in_specs,
        out_specs=pl.BlockSpec((1, CHUNK, NUM_CLASSES), lambda i: (i, 0, 0)),
        compiler_params=pltpu.CompilerParams(dimension_semantics=("parallel",)),
    )(onehot, mask_add,
      fused["wte"], pos, fused["emb_ln_g"], fused["emb_ln_b"],
      fused["wqkv"], fused["bqkv"], fused["wo"], fused["bo"],
      fused["ln1_g"], fused["ln1_b"], fused["w1"], fused["b1"],
      fused["w2"], fused["b2"], fused["ln2_g"], fused["ln2_b"],
      fused["w_head"], fused["b_head"])
    return out.reshape(B, NUM_CLASSES)


# ---------------- parameter init & fusion (done once, outside the kernel) ----------------
def init_params(key):
    keys = jax.random.split(key, 128)
    it = iter(keys)

    def nrm(shape, scale=0.02):
        return (scale * jax.random.normal(next(it), shape)).astype(jnp.float32)

    zeros = lambda s: jnp.zeros(s, jnp.float32)
    ones = lambda s: jnp.ones(s, jnp.float32)

    layers = []
    for _ in range(N_LAYERS):
        layers.append(dict(
            wq=nrm((HIDDEN, HIDDEN)), bq=zeros((HIDDEN,)),
            wk=nrm((HIDDEN, HIDDEN)), bk=zeros((HIDDEN,)),
            wv=nrm((HIDDEN, HIDDEN)), bv=zeros((HIDDEN,)),
            wo=nrm((HIDDEN, HIDDEN)), bo=zeros((HIDDEN,)),
            ln1_g=ones((HIDDEN,)), ln1_b=zeros((HIDDEN,)),
            w1=nrm((HIDDEN, FFN)), b1=zeros((FFN,)),
            w2=nrm((FFN, HIDDEN)), b2=zeros((HIDDEN,)),
            ln2_g=ones((HIDDEN,)), ln2_b=zeros((HIDDEN,)),
        ))
    return dict(
        wte=nrm((VOCAB, HIDDEN)), wpe=nrm((MAX_SEQ, HIDDEN)),
        emb_ln_g=ones((HIDDEN,)), emb_ln_b=zeros((HIDDEN,)),
        layers=layers,
        # head (matches torch.nn.Linear(256, 32) and Linear(32, 4))
        lin1_w=nrm((HIDDEN, LIN1_OUT)), lin1_b=zeros((LIN1_OUT,)),
        lin2_w=nrm((LIN1_OUT, NUM_CLASSES)), lin2_b=zeros((NUM_CLASSES,)),
    )


def fuse_params(p):
    """Stack per-layer weights, fuse QKV, fold lin1@lin2, cast matmul weights to bf16."""
    bf16 = jnp.bfloat16

    def stack(name):
        return jnp.stack([l[name] for l in p["layers"]], axis=0)

    wqkv = jnp.stack(
        [jnp.concatenate([l["wq"], l["wk"], l["wv"]], axis=1) for l in p["layers"]],
        axis=0).astype(bf16)                                            # [L, H, 3H]
    bqkv = jnp.stack(
        [jnp.concatenate([l["bq"], l["bk"], l["bv"]], axis=0) for l in p["layers"]],
        axis=0)[:, None, :]                                             # [L, 1, 3H]
    # Fold head: no nonlinearity between linear1 and linear2.
    w_head = (p["lin1_w"] @ p["lin2_w"]).astype(bf16)                   # [H, NUM_CLASSES]
    b_head = (p["lin1_b"] @ p["lin2_w"] + p["lin2_b"])[None, :]         # [1, NUM_CLASSES]
    return dict(
        wte=p["wte"].astype(bf16), wpe=p["wpe"],
        emb_ln_g=p["emb_ln_g"][None, :], emb_ln_b=p["emb_ln_b"][None, :],
        wqkv=wqkv, bqkv=bqkv,
        wo=stack("wo").astype(bf16), bo=stack("bo")[:, None, :],
        ln1_g=stack("ln1_g")[:, None, :], ln1_b=stack("ln1_b")[:, None, :],
        w1=stack("w1").astype(bf16), b1=stack("b1")[:, None, :],
        w2=stack("w2").astype(bf16), b2=stack("b2")[:, None, :],
        ln2_g=stack("ln2_g")[:, None, :], ln2_b=stack("ln2_b")[:, None, :],
        w_head=w_head, b_head=b_head,
    )


if __name__ == "__main__":
    key = jax.random.PRNGKey(0)
    k_param, k_ids = jax.random.split(key)
    params = init_params(k_param)
    fused = fuse_params(params)

    B, S = 4, 8                                            # 2 grid steps x CHUNK=2 examples
    ids = jax.random.randint(k_ids, (B, S), 0, VOCAB, dtype=jnp.int32)
    mask = jnp.ones((B, S), jnp.int32).at[1, 6:].set(0).at[3, 4:].set(0)   # some padding

    logits = custom_bert_forward(fused, ids, mask)
    jax.block_until_ready(logits)
    assert logits.shape == (B, NUM_CLASSES) and logits.dtype == jnp.float32
    print("KERNEL_OK")
</pallas_src>

<mosaic_0001>
module attributes {stable_mosaic.version = 11 : i64} {
  func.func @_fused_bert_kernel(%arg0: i32, %arg1: memref<16x64xbf16, #tpu.memory_space<vmem>>, %arg2: memref<1x2x8xf32, #tpu.memory_space<vmem>>, %arg3: memref<64x256xbf16, #tpu.memory_space<vmem>>, %arg4: memref<16x256xf32, #tpu.memory_space<vmem>>, %arg5: memref<1x256xf32, #tpu.memory_space<vmem>>, %arg6: memref<1x256xf32, #tpu.memory_space<vmem>>, %arg7: memref<2x256x768xbf16, #tpu.memory_space<vmem>>, %arg8: memref<2x1x768xf32, #tpu.memory_space<vmem>>, %arg9: memref<2x256x256xbf16, #tpu.memory_space<vmem>>, %arg10: memref<2x1x256xf32, #tpu.memory_space<vmem>>, %arg11: memref<2x1x256xf32, #tpu.memory_space<vmem>>, %arg12: memref<2x1x256xf32, #tpu.memory_space<vmem>>, %arg13: memref<2x256x512xbf16, #tpu.memory_space<vmem>>, %arg14: memref<2x1x512xf32, #tpu.memory_space<vmem>>, %arg15: memref<2x512x256xbf16, #tpu.memory_space<vmem>>, %arg16: memref<2x1x256xf32, #tpu.memory_space<vmem>>, %arg17: memref<2x1x256xf32, #tpu.memory_space<vmem>>, %arg18: memref<2x1x256xf32, #tpu.memory_space<vmem>>, %arg19: memref<256x4xbf16, #tpu.memory_space<vmem>>, %arg20: memref<1x4xf32, #tpu.memory_space<vmem>>, %arg21: memref<1x2x4xf32, #tpu.memory_space<vmem>>) attributes {dimension_semantics = [#tpu.dimension_semantics<parallel>], iteration_bounds = array<i64: 2>, scalar_prefetch = 0 : i64, scratch_operands = 0 : i64, tpu.core_type = #tpu.core_type<tc>, window_params = [{transform_indices = @transform_0, window_bounds = array<i64: 16, 64>}, {transform_indices = @transform_1, window_bounds = array<i64: 1, 2, 8>}, {pipeline_mode = #tpu.pipeline_mode<synchronous>, transform_indices = @transform_2, window_bounds = array<i64: 64, 256>}, {pipeline_mode = #tpu.pipeline_mode<synchronous>, transform_indices = @transform_3, window_bounds = array<i64: 16, 256>}, {pipeline_mode = #tpu.pipeline_mode<synchronous>, transform_indices = @transform_4, window_bounds = array<i64: 1, 256>}, {pipeline_mode = #tpu.pipeline_mode<synchronous>, transform_indices = @transform_5, window_bounds = array<i64: 1, 256>}, {pipeline_mode = #tpu.pipeline_mode<synchronous>, transform_indices = @transform_6, window_bounds = array<i64: 2, 256, 768>}, {pipeline_mode = #tpu.pipeline_mode<synchronous>, transform_indices = @transform_7, window_bounds = array<i64: 2, 1, 768>}, {pipeline_mode = #tpu.pipeline_mode<synchronous>, transform_indices = @transform_8, window_bounds = array<i64: 2, 256, 256>}, {pipeline_mode = #tpu.pipeline_mode<synchronous>, transform_indices = @transform_9, window_bounds = array<i64: 2, 1, 256>}, {pipeline_mode = #tpu.pipeline_mode<synchronous>, transform_indices = @transform_10, window_bounds = array<i64: 2, 1, 256>}, {pipeline_mode = #tpu.pipeline_mode<synchronous>, transform_indices = @transform_11, window_bounds = array<i64: 2, 1, 256>}, {pipeline_mode = #tpu.pipeline_mode<synchronous>, transform_indices = @transform_12, window_bounds = array<i64: 2, 256, 512>}, {pipeline_mode = #tpu.pipeline_mode<synchronous>, transform_indices = @transform_13, window_bounds = array<i64: 2, 1, 512>}, {pipeline_mode = #tpu.pipeline_mode<synchronous>, transform_indices = @transform_14, window_bounds = array<i64: 2, 512, 256>}, {pipeline_mode = #tpu.pipeline_mode<synchronous>, transform_indices = @transform_15, window_bounds = array<i64: 2, 1, 256>}, {pipeline_mode = #tpu.pipeline_mode<synchronous>, transform_indices = @transform_16, window_bounds = array<i64: 2, 1, 256>}, {pipeline_mode = #tpu.pipeline_mode<synchronous>, transform_indices = @transform_17, window_bounds = array<i64: 2, 1, 256>}, {pipeline_mode = #tpu.pipeline_mode<synchronous>, transform_indices = @transform_18, window_bounds = array<i64: 256, 4>}, {pipeline_mode = #tpu.pipeline_mode<synchronous>, transform_indices = @transform_19, window_bounds = array<i64: 1, 4>}, {transform_indices = @transform_20, window_bounds = array<i64: 1, 2, 4>}]} {
    %c0 = arith.constant 0 : index
    %c0_0 = arith.constant 0 : index
    %0 = vector.load %arg1[%c0, %c0_0] : memref<16x64xbf16, #tpu.memory_space<vmem>>, vector<16x64xbf16>
    %c0_1 = arith.constant 0 : index
    %c0_2 = arith.constant 0 : index
    %1 = vector.load %arg3[%c0_1, %c0_2] : memref<64x256xbf16, #tpu.memory_space<vmem>>, vector<64x256xbf16>
    %cst = arith.constant dense<0.000000e+00> : vector<16x256xf32>
    %2 = tpu.matmul %0, %1, %cst {dimension_numbers = #tpu.dot_dimension_numbers<[1], [0], [0], [1], [0, 0, 1, 1], [], []>} : vector<16x64xbf16>, vector<64x256xbf16>, vector<16x256xf32> -> vector<16x256xf32>
    %c0_3 = arith.constant 0 : index
    %c0_4 = arith.constant 0 : index
    %3 = vector.load %arg4[%c0_3, %c0_4] : memref<16x256xf32, #tpu.memory_space<vmem>>, vector<16x256xf32>
    %4 = arith.addf %2, %3 : vector<16x256xf32>
    %c0_5 = arith.constant 0 : index
    %c0_6 = arith.constant 0 : index
    %5 = vector.load %arg5[%c0_5, %c0_6] : memref<1x256xf32, #tpu.memory_space<vmem>>, vector<1x256xf32>
    %c0_7 = arith.constant 0 : index
    %c0_8 = arith.constant 0 : index
    %6 = vector.load %arg6[%c0_7, %c0_8] : memref<1x256xf32, #tpu.memory_space<vmem>>, vector<1x256xf32>
    %cst_9 = arith.constant dense<0.000000e+00> : vector<16xf32>
    %7 = vector.multi_reduction <add>, %4, %cst_9 [1] : vector<16x256xf32> to vector<16xf32>
    %8 = vector.shape_cast %7 : vector<16xf32> to vector<16x1xf32>
    %cst_10 = arith.constant 2.560000e+02 : f32
    %9 = vector.broadcast %cst_10 : f32 to vector<16x1xf32>
    %10 = arith.divf %8, %9 : vector<16x1xf32>
    %11 = vector.broadcast %10 : vector<16x1xf32> to vector<16x256xf32>
    %12 = arith.subf %4, %11 : vector<16x256xf32>
    %13 = arith.mulf %12, %12 : vector<16x256xf32>
    %cst_11 = arith.constant dense<0.000000e+00> : vector<16xf32>
    %14 = vector.multi_reduction <add>, %13, %cst_11 [1] : vector<16x256xf32> to vector<16xf32>
    %15 = vector.shape_cast %14 : vector<16xf32> to vector<16x1xf32>
    %cst_12 = arith.constant 2.560000e+02 : f32
    %16 = vector.broadcast %cst_12 : f32 to vector<16x1xf32>
    %17 = arith.divf %15, %16 : vector<16x1xf32>
    %18 = vector.broadcast %10 : vector<16x1xf32> to vector<16x256xf32>
    %19 = arith.subf %4, %18 : vector<16x256xf32>
    %cst_13 = arith.constant 9.99999996E-13 : f32
    %20 = vector.broadcast %cst_13 : f32 to vector<16x1xf32>
    %21 = arith.addf %17, %20 : vector<16x1xf32>
    %22 = math.rsqrt %21 : vector<16x1xf32>
    %23 = vector.broadcast %22 : vector<16x1xf32> to vector<16x256xf32>
    %24 = arith.mulf %19, %23 : vector<16x256xf32>
    %25 = vector.broadcast %5 : vector<1x256xf32> to vector<16x256xf32>
    %26 = arith.mulf %24, %25 : vector<16x256xf32>
    %27 = vector.broadcast %6 : vector<1x256xf32> to vector<16x256xf32>
    %28 = arith.addf %26, %27 : vector<16x256xf32>
    %c0_14 = arith.constant 0 : index
    %c0_15 = arith.constant 0 : index
    %c0_16 = arith.constant 0 : index
    %29 = vector.load %arg2[%c0_14, %c0_15, %c0_16] : memref<1x2x8xf32, #tpu.memory_space<vmem>>, vector<1x2x8xf32>
    %30 = vector.shape_cast %29 : vector<1x2x8xf32> to vector<2x8xf32>
    %31 = arith.truncf %28 : vector<16x256xf32> to vector<16x256xbf16>
    %c0_17 = arith.constant 0 : index
    %c0_18 = arith.constant 0 : index
    %c0_19 = arith.constant 0 : index
    %32 = vector.load %arg7[%c0_17, %c0_18, %c0_19] : memref<2x256x768xbf16, #tpu.memory_space<vmem>>, vector<1x256x768xbf16>
    %33 = vector.shape_cast %32 : vector<1x256x768xbf16> to vector<256x768xbf16>
    %c0_20 = arith.constant 0 : index
    %c0_21 = arith.constant 0 : index
    %c0_22 = arith.constant 0 : index
    %34 = vector.load %arg8[%c0_20, %c0_21, %c0_22] : memref<2x1x768xf32, #tpu.memory_space<vmem>>, vector<1x1x768xf32>
    %35 = vector.shape_cast %34 : vector<1x1x768xf32> to vector<1x768xf32>
    %cst_23 = arith.constant dense<0.000000e+00> : vector<16x768xf32>
    %36 = tpu.matmul %31, %33, %cst_23 {dimension_numbers = #tpu.dot_dimension_numbers<[1], [0], [0], [1], [0, 0, 1, 1], [], []>} : vector<16x256xbf16>, vector<256x768xbf16>, vector<16x768xf32> -> vector<16x768xf32>
    %37 = vector.broadcast %35 : vector<1x768xf32> to vector<16x768xf32>
    %38 = arith.addf %36, %37 : vector<16x768xf32>
    %39 = arith.truncf %38 : vector<16x768xf32> to vector<16x768xbf16>
    %40 = vector.extract_strided_slice %39 {offsets = [0, 0], sizes = [8, 64], strides = [1, 1]} : vector<16x768xbf16> to vector<8x64xbf16>
    %41 = vector.extract_strided_slice %39 {offsets = [0, 64], sizes = [8, 64], strides = [1, 1]} : vector<16x768xbf16> to vector<8x64xbf16>
    %42 = vector.extract_strided_slice %39 {offsets = [0, 128], sizes = [8, 64], strides = [1, 1]} : vector<16x768xbf16> to vector<8x64xbf16>
    %43 = vector.extract_strided_slice %39 {offsets = [0, 192], sizes = [8, 64], strides = [1, 1]} : vector<16x768xbf16> to vector<8x64xbf16>
    %44 = vector.shape_cast %40 : vector<8x64xbf16> to vector<1x8x64xbf16>
    %45 = vector.shape_cast %41 : vector<8x64xbf16> to vector<1x8x64xbf16>
    %46 = vector.shape_cast %42 : vector<8x64xbf16> to vector<1x8x64xbf16>
    %47 = vector.shape_cast %43 : vector<8x64xbf16> to vector<1x8x64xbf16>
    %48 = tpu.concatenate %44, %45, %46, %47 in 0 : vector<1x8x64xbf16>, vector<1x8x64xbf16>, vector<1x8x64xbf16>, vector<1x8x64xbf16> -> vector<4x8x64xbf16>
    %49 = vector.extract_strided_slice %39 {offsets = [0, 256], sizes = [8, 64], strides = [1, 1]} : vector<16x768xbf16> to vector<8x64xbf16>
    %50 = vector.extract_strided_slice %39 {offsets = [0, 320], sizes = [8, 64], strides = [1, 1]} : vector<16x768xbf16> to vector<8x64xbf16>
    %51 = vector.extract_strided_slice %39 {offsets = [0, 384], sizes = [8, 64], strides = [1, 1]} : vector<16x768xbf16> to vector<8x64xbf16>
    %52 = vector.extract_strided_slice %39 {offsets = [0, 448], sizes = [8, 64], strides = [1, 1]} : vector<16x768xbf16> to vector<8x64xbf16>
    %53 = vector.shape_cast %49 : vector<8x64xbf16> to vector<1x8x64xbf16>
    %54 = vector.shape_cast %50 : vector<8x64xbf16> to vector<1x8x64xbf16>
    %55 = vector.shape_cast %51 : vector<8x64xbf16> to vector<1x8x64xbf16>
    %56 = vector.shape_cast %52 : vector<8x64xbf16> to vector<1x8x64xbf16>
    %57 = tpu.concatenate %53, %54, %55, %56 in 0 : vector<1x8x64xbf16>, vector<1x8x64xbf16>, vector<1x8x64xbf16>, vector<1x8x64xbf16> -> vector<4x8x64xbf16>
    %58 = vector.extract_strided_slice %39 {offsets = [0, 512], sizes = [8, 64], strides = [1, 1]} : vector<16x768xbf16> to vector<8x64xbf16>
    %59 = vector.extract_strided_slice %39 {offsets = [0, 576], sizes = [8, 64], strides = [1, 1]} : vector<16x768xbf16> to vector<8x64xbf16>
    %60 = vector.extract_strided_slice %39 {offsets = [0, 640], sizes = [8, 64], strides = [1, 1]} : vector<16x768xbf16> to vector<8x64xbf16>
    %61 = vector.extract_strided_slice %39 {offsets = [0, 704], sizes = [8, 64], strides = [1, 1]} : vector<16x768xbf16> to vector<8x64xbf16>
    %62 = vector.shape_cast %58 : vector<8x64xbf16> to vector<1x8x64xbf16>
    %63 = vector.shape_cast %59 : vector<8x64xbf16> to vector<1x8x64xbf16>
    %64 = vector.shape_cast %60 : vector<8x64xbf16> to vector<1x8x64xbf16>
    %65 = vector.shape_cast %61 : vector<8x64xbf16> to vector<1x8x64xbf16>
    %66 = tpu.concatenate %62, %63, %64, %65 in 0 : vector<1x8x64xbf16>, vector<1x8x64xbf16>, vector<1x8x64xbf16>, vector<1x8x64xbf16> -> vector<4x8x64xbf16>
    "tpu.trace_start"() <{level = 10 : i32, message = "hqd,hkd->hqk"}> : () -> ()
    %cst_24 = arith.constant dense<0.000000e+00> : vector<4x8x8xf32>
    %67 = tpu.matmul %48, %57, %cst_24 {dimension_numbers = #tpu.dot_dimension_numbers<[2], [2], [1], [1], [0, 0, 0, 1, 1, 1], [0], [0]>} : vector<4x8x64xbf16>, vector<4x8x64xbf16>, vector<4x8x8xf32> -> vector<4x8x8xf32>
    "tpu.trace_stop"() : () -> ()
    %cst_25 = arith.constant 1.250000e-01 : f32
    %68 = vector.broadcast %cst_25 : f32 to vector<4x8x8xf32>
    %69 = arith.mulf %67, %68 : vector<4x8x8xf32>
    %70 = vector.extract_strided_slice %30 {offsets = [0, 0], sizes = [1, 8], strides = [1, 1]} : vector<2x8xf32> to vector<1x8xf32>
    %71 = vector.shape_cast %70 : vector<1x8xf32> to vector<1x1x8xf32>
    %72 = vector.broadcast %71 : vector<1x1x8xf32> to vector<4x8x8xf32>
    %73 = arith.addf %69, %72 : vector<4x8x8xf32>
    %cst_26 = arith.constant dense<0xFF800000> : vector<4x8xf32>
    %74 = vector.multi_reduction <maximumf>, %73, %cst_26 [2] : vector<4x8x8xf32> to vector<4x8xf32>
    %75 = vector.shape_cast %74 : vector<4x8xf32> to vector<4x8x1xf32>
    %76 = vector.broadcast %75 : vector<4x8x1xf32> to vector<4x8x8xf32>
    %77 = arith.subf %73, %76 : vector<4x8x8xf32>
    %78 = math.exp %77 : vector<4x8x8xf32>
    %cst_27 = arith.constant dense<0.000000e+00> : vector<4x8xf32>
    %79 = vector.multi_reduction <add>, %78, %cst_27 [2] : vector<4x8x8xf32> to vector<4x8xf32>
    %80 = vector.shape_cast %79 : vector<4x8xf32> to vector<4x8x1xf32>
    %81 = tpu.reciprocal %80 {approx = true} : vector<4x8x1xf32> -> vector<4x8x1xf32>
    %82 = vector.broadcast %81 : vector<4x8x1xf32> to vector<4x8x8xf32>
    %83 = arith.mulf %78, %82 : vector<4x8x8xf32>
    %84 = arith.truncf %83 : vector<4x8x8xf32> to vector<4x8x8xbf16>
    "tpu.trace_start"() <{level = 10 : i32, message = "hqk,hkd->hqd"}> : () -> ()
    %cst_28 = arith.constant dense<0.000000e+00> : vector<4x8x64xf32>
    %85 = tpu.matmul %84, %66, %cst_28 {dimension_numbers = #tpu.dot_dimension_numbers<[2], [1], [1], [2], [0, 0, 0, 1, 1, 2], [0], [0]>} : vector<4x8x8xbf16>, vector<4x8x64xbf16>, vector<4x8x64xf32> -> vector<4x8x64xf32>
    "tpu.trace_stop"() : () -> ()
    %86 = vector.extract_strided_slice %85 {offsets = [0, 0, 0], sizes = [1, 8, 64], strides = [1, 1, 1]} : vector<4x8x64xf32> to vector<1x8x64xf32>
    %87 = vector.shape_cast %86 : vector<1x8x64xf32> to vector<8x64xf32>
    %88 = vector.extract_strided_slice %85 {offsets = [1, 0, 0], sizes = [1, 8, 64], strides = [1, 1, 1]} : vector<4x8x64xf32> to vector<1x8x64xf32>
    %89 = vector.shape_cast %88 : vector<1x8x64xf32> to vector<8x64xf32>
    %90 = vector.extract_strided_slice %85 {offsets = [2, 0, 0], sizes = [1, 8, 64], strides = [1, 1, 1]} : vector<4x8x64xf32> to vector<1x8x64xf32>
    %91 = vector.shape_cast %90 : vector<1x8x64xf32> to vector<8x64xf32>
    %92 = vector.extract_strided_slice %85 {offsets = [3, 0, 0], sizes = [1, 8, 64], strides = [1, 1, 1]} : vector<4x8x64xf32> to vector<1x8x64xf32>
    %93 = vector.shape_cast %92 : vector<1x8x64xf32> to vector<8x64xf32>
    %94 = tpu.concatenate %87, %89, %91, %93 in 1 : vector<8x64xf32>, vector<8x64xf32>, vector<8x64xf32>, vector<8x64xf32> -> vector<8x256xf32>
    %95 = vector.extract_strided_slice %39 {offsets = [8, 0], sizes = [8, 64], strides = [1, 1]} : vector<16x768xbf16> to vector<8x64xbf16>
    %96 = vector.extract_strided_slice %39 {offsets = [8, 64], sizes = [8, 64], strides = [1, 1]} : vector<16x768xbf16> to vector<8x64xbf16>
    %97 = vector.extract_strided_slice %39 {offsets = [8, 128], sizes = [8, 64], strides = [1, 1]} : vector<16x768xbf16> to vector<8x64xbf16>
    %98 = vector.extract_strided_slice %39 {offsets = [8, 192], sizes = [8, 64], strides = [1, 1]} : vector<16x768xbf16> to vector<8x64xbf16>
    %99 = vector.shape_cast %95 : vector<8x64xbf16> to vector<1x8x64xbf16>
    %100 = vector.shape_cast %96 : vector<8x64xbf16> to vector<1x8x64xbf16>
    %101 = vector.shape_cast %97 : vector<8x64xbf16> to vector<1x8x64xbf16>
    %102 = vector.shape_cast %98 : vector<8x64xbf16> to vector<1x8x64xbf16>
    %103 = tpu.concatenate %99, %100, %101, %102 in 0 : vector<1x8x64xbf16>, vector<1x8x64xbf16>, vector<1x8x64xbf16>, vector<1x8x64xbf16> -> vector<4x8x64xbf16>
    %104 = vector.extract_strided_slice %39 {offsets = [8, 256], sizes = [8, 64], strides = [1, 1]} : vector<16x768xbf16> to vector<8x64xbf16>
    %105 = vector.extract_strided_slice %39 {offsets = [8, 320], sizes = [8, 64], strides = [1, 1]} : vector<16x768xbf16> to vector<8x64xbf16>
    %106 = vector.extract_strided_slice %39 {offsets = [8, 384], sizes = [8, 64], strides = [1, 1]} : vector<16x768xbf16> to vector<8x64xbf16>
    %107 = vector.extract_strided_slice %39 {offsets = [8, 448], sizes = [8, 64], strides = [1, 1]} : vector<16x768xbf16> to vector<8x64xbf16>
    %108 = vector.shape_cast %104 : vector<8x64xbf16> to vector<1x8x64xbf16>
    %109 = vector.shape_cast %105 : vector<8x64xbf16> to vector<1x8x64xbf16>
    %110 = vector.shape_cast %106 : vector<8x64xbf16> to vector<1x8x64xbf16>
    %111 = vector.shape_cast %107 : vector<8x64xbf16> to vector<1x8x64xbf16>
    %112 = tpu.concatenate %108, %109, %110, %111 in 0 : vector<1x8x64xbf16>, vector<1x8x64xbf16>, vector<1x8x64xbf16>, vector<1x8x64xbf16> -> vector<4x8x64xbf16>
    %113 = vector.extract_strided_slice %39 {offsets = [8, 512], sizes = [8, 64], strides = [1, 1]} : vector<16x768xbf16> to vector<8x64xbf16>
    %114 = vector.extract_strided_slice %39 {offsets = [8, 576], sizes = [8, 64], strides = [1, 1]} : vector<16x768xbf16> to vector<8x64xbf16>
    %115 = vector.extract_strided_slice %39 {offsets = [8, 640], sizes = [8, 64], strides = [1, 1]} : vector<16x768xbf16> to vector<8x64xbf16>
    %116 = vector.extract_strided_slice %39 {offsets = [8, 704], sizes = [8, 64], strides = [1, 1]} : vector<16x768xbf16> to vector<8x64xbf16>
    %117 = vector.shape_cast %113 : vector<8x64xbf16> to vector<1x8x64xbf16>
    %118 = vector.shape_cast %114 : vector<8x64xbf16> to vector<1x8x64xbf16>
    %119 = vector.shape_cast %115 : vector<8x64xbf16> to vector<1x8x64xbf16>
    %120 = vector.shape_cast %116 : vector<8x64xbf16> to vector<1x8x64xbf16>
    %121 = tpu.concatenate %117, %118, %119, %120 in 0 : vector<1x8x64xbf16>, vector<1x8x64xbf16>, vector<1x8x64xbf16>, vector<1x8x64xbf16> -> vector<4x8x64xbf16>
    "tpu.trace_start"() <{level = 10 : i32, message = "hqd,hkd->hqk"}> : () -> ()
    %cst_29 = arith.constant dense<0.000000e+00> : vector<4x8x8xf32>
    %122 = tpu.matmul %103, %112, %cst_29 {dimension_numbers = #tpu.dot_dimension_numbers<[2], [2], [1], [1], [0, 0, 0, 1, 1, 1], [0], [0]>} : vector<4x8x64xbf16>, vector<4x8x64xbf16>, vector<4x8x8xf32> -> vector<4x8x8xf32>
    "tpu.trace_stop"() : () -> ()
    %cst_30 = arith.constant 1.250000e-01 : f32
    %123 = vector.broadcast %cst_30 : f32 to vector<4x8x8xf32>
    %124 = arith.mulf %122, %123 : vector<4x8x8xf32>
    %125 = vector.extract_strided_slice %30 {offsets = [1, 0], sizes = [1, 8], strides = [1, 1]} : vector<2x8xf32> to vector<1x8xf32>
    %126 = vector.shape_cast %125 : vector<1x8xf32> to vector<1x1x8xf32>
    %127 = vector.broadcast %126 : vector<1x1x8xf32> to vector<4x8x8xf32>
    %128 = arith.addf %124, %127 : vector<4x8x8xf32>
    %cst_31 = arith.constant dense<0xFF800000> : vector<4x8xf32>
    %129 = vector.multi_reduction <maximumf>, %128, %cst_31 [2] : vector<4x8x8xf32> to vector<4x8xf32>
    %130 = vector.shape_cast %129 : vector<4x8xf32> to vector<4x8x1xf32>
    %131 = vector.broadcast %130 : vector<4x8x1xf32> to vector<4x8x8xf32>
    %132 = arith.subf %128, %131 : vector<4x8x8xf32>
    %133 = math.exp %132 : vector<4x8x8xf32>
    %cst_32 = arith.constant dense<0.000000e+00> : vector<4x8xf32>
    %134 = vector.multi_reduction <add>, %133, %cst_32 [2] : vector<4x8x8xf32> to vector<4x8xf32>
    %135 = vector.shape_cast %134 : vector<4x8xf32> to vector<4x8x1xf32>
    %136 = tpu.reciprocal %135 {approx = true} : vector<4x8x1xf32> -> vector<4x8x1xf32>
    %137 = vector.broadcast %136 : vector<4x8x1xf32> to vector<4x8x8xf32>
    %138 = arith.mulf %133, %137 : vector<4x8x8xf32>
    %139 = arith.truncf %138 : vector<4x8x8xf32> to vector<4x8x8xbf16>
    "tpu.trace_start"() <{level = 10 : i32, message = "hqk,hkd->hqd"}> : () -> ()
    %cst_33 = arith.constant dense<0.000000e+00> : vector<4x8x64xf32>
    %140 = tpu.matmul %139, %121, %cst_33 {dimension_numbers = #tpu.dot_dimension_numbers<[2], [1], [1], [2], [0, 0, 0, 1, 1, 2], [0], [0]>} : vector<4x8x8xbf16>, vector<4x8x64xbf16>, vector<4x8x64xf32> -> vector<4x8x64xf32>
    "tpu.trace_stop"() : () -> ()
    %141 = vector.extract_strided_slice %140 {offsets = [0, 0, 0], sizes = [1, 8, 64], strides = [1, 1, 1]} : vector<4x8x64xf32> to vector<1x8x64xf32>
    %142 = vector.shape_cast %141 : vector<1x8x64xf32> to vector<8x64xf32>
    %143 = vector.extract_strided_slice %140 {offsets = [1, 0, 0], sizes = [1, 8, 64], strides = [1, 1, 1]} : vector<4x8x64xf32> to vector<1x8x64xf32>
    %144 = vector.shape_cast %143 : vector<1x8x64xf32> to vector<8x64xf32>
    %145 = vector.extract_strided_slice %140 {offsets = [2, 0, 0], sizes = [1, 8, 64], strides = [1, 1, 1]} : vector<4x8x64xf32> to vector<1x8x64xf32>
    %146 = vector.shape_cast %145 : vector<1x8x64xf32> to vector<8x64xf32>
    %147 = vector.extract_strided_slice %140 {offsets = [3, 0, 0], sizes = [1, 8, 64], strides = [1, 1, 1]} : vector<4x8x64xf32> to vector<1x8x64xf32>
    %148 = vector.shape_cast %147 : vector<1x8x64xf32> to vector<8x64xf32>
    %149 = tpu.concatenate %142, %144, %146, %148 in 1 : vector<8x64xf32>, vector<8x64xf32>, vector<8x64xf32>, vector<8x64xf32> -> vector<8x256xf32>
    %150 = tpu.concatenate %94, %149 in 0 : vector<8x256xf32>, vector<8x256xf32> -> vector<16x256xf32>
    %151 = arith.truncf %150 : vector<16x256xf32> to vector<16x256xbf16>
    %c0_34 = arith.constant 0 : index
    %c0_35 = arith.constant 0 : index
    %c0_36 = arith.constant 0 : index
    %152 = vector.load %arg9[%c0_34, %c0_35, %c0_36] : memref<2x256x256xbf16, #tpu.memory_space<vmem>>, vector<1x256x256xbf16>
    %153 = vector.shape_cast %152 : vector<1x256x256xbf16> to vector<256x256xbf16>
    %c0_37 = arith.constant 0 : index
    %c0_38 = arith.constant 0 : index
    %c0_39 = arith.constant 0 : index
    %154 = vector.load %arg10[%c0_37, %c0_38, %c0_39] : memref<2x1x256xf32, #tpu.memory_space<vmem>>, vector<1x1x256xf32>
    %155 = vector.shape_cast %154 : vector<1x1x256xf32> to vector<1x256xf32>
    %cst_40 = arith.constant dense<0.000000e+00> : vector<16x256xf32>
    %156 = tpu.matmul %151, %153, %cst_40 {dimension_numbers = #tpu.dot_dimension_numbers<[1], [0], [0], [1], [0, 0, 1, 1], [], []>} : vector<16x256xbf16>, vector<256x256xbf16>, vector<16x256xf32> -> vector<16x256xf32>
    %157 = vector.broadcast %155 : vector<1x256xf32> to vector<16x256xf32>
    %158 = arith.addf %156, %157 : vector<16x256xf32>
    %159 = arith.addf %28, %158 : vector<16x256xf32>
    %c0_41 = arith.constant 0 : index
    %c0_42 = arith.constant 0 : index
    %c0_43 = arith.constant 0 : index
    %160 = vector.load %arg11[%c0_41, %c0_42, %c0_43] : memref<2x1x256xf32, #tpu.memory_space<vmem>>, vector<1x1x256xf32>
    %161 = vector.shape_cast %160 : vector<1x1x256xf32> to vector<1x256xf32>
    %c0_44 = arith.constant 0 : index
    %c0_45 = arith.constant 0 : index
    %c0_46 = arith.constant 0 : index
    %162 = vector.load %arg12[%c0_44, %c0_45, %c0_46] : memref<2x1x256xf32, #tpu.memory_space<vmem>>, vector<1x1x256xf32>
    %163 = vector.shape_cast %162 : vector<1x1x256xf32> to vector<1x256xf32>
    %cst_47 = arith.constant dense<0.000000e+00> : vector<16xf32>
    %164 = vector.multi_reduction <add>, %159, %cst_47 [1] : vector<16x256xf32> to vector<16xf32>
    %165 = vector.shape_cast %164 : vector<16xf32> to vector<16x1xf32>
    %cst_48 = arith.constant 2.560000e+02 : f32
    %166 = vector.broadcast %cst_48 : f32 to vector<16x1xf32>
    %167 = arith.divf %165, %166 : vector<16x1xf32>
    %168 = vector.broadcast %167 : vector<16x1xf32> to vector<16x256xf32>
    %169 = arith.subf %159, %168 : vector<16x256xf32>
    %170 = arith.mulf %169, %169 : vector<16x256xf32>
    %cst_49 = arith.constant dense<0.000000e+00> : vector<16xf32>
    %171 = vector.multi_reduction <add>, %170, %cst_49 [1] : vector<16x256xf32> to vector<16xf32>
    %172 = vector.shape_cast %171 : vector<16xf32> to vector<16x1xf32>
    %cst_50 = arith.constant 2.560000e+02 : f32
    %173 = vector.broadcast %cst_50 : f32 to vector<16x1xf32>
    %174 = arith.divf %172, %173 : vector<16x1xf32>
    %175 = vector.broadcast %167 : vector<16x1xf32> to vector<16x256xf32>
    %176 = arith.subf %159, %175 : vector<16x256xf32>
    %cst_51 = arith.constant 9.99999996E-13 : f32
    %177 = vector.broadcast %cst_51 : f32 to vector<16x1xf32>
    %178 = arith.addf %174, %177 : vector<16x1xf32>
    %179 = math.rsqrt %178 : vector<16x1xf32>
    %180 = vector.broadcast %179 : vector<16x1xf32> to vector<16x256xf32>
    %181 = arith.mulf %176, %180 : vector<16x256xf32>
    %182 = vector.broadcast %161 : vector<1x256xf32> to vector<16x256xf32>
    %183 = arith.mulf %181, %182 : vector<16x256xf32>
    %184 = vector.broadcast %163 : vector<1x256xf32> to vector<16x256xf32>
    %185 = arith.addf %183, %184 : vector<16x256xf32>
    %186 = arith.truncf %185 : vector<16x256xf32> to vector<16x256xbf16>
    %c0_52 = arith.constant 0 : index
    %c0_53 = arith.constant 0 : index
    %c0_54 = arith.constant 0 : index
    %187 = vector.load %arg13[%c0_52, %c0_53, %c0_54] : memref<2x256x512xbf16, #tpu.memory_space<vmem>>, vector<1x256x512xbf16>
    %188 = vector.shape_cast %187 : vector<1x256x512xbf16> to vector<256x512xbf16>
    %c0_55 = arith.constant 0 : index
    %c0_56 = arith.constant 0 : index
    %c0_57 = arith.constant 0 : index
    %189 = vector.load %arg14[%c0_55, %c0_56, %c0_57] : memref<2x1x512xf32, #tpu.memory_space<vmem>>, vector<1x1x512xf32>
    %190 = vector.shape_cast %189 : vector<1x1x512xf32> to vector<1x512xf32>
    %cst_58 = arith.constant dense<0.000000e+00> : vector<16x512xf32>
    %191 = tpu.matmul %186, %188, %cst_58 {dimension_numbers = #tpu.dot_dimension_numbers<[1], [0], [0], [1], [0, 0, 1, 1], [], []>} : vector<16x256xbf16>, vector<256x512xbf16>, vector<16x512xf32> -> vector<16x512xf32>
    %192 = vector.broadcast %190 : vector<1x512xf32> to vector<16x512xf32>
    %193 = arith.addf %191, %192 : vector<16x512xf32>
    %194 = arith.mulf %193, %193 : vector<16x512xf32>
    %195 = arith.mulf %193, %194 : vector<16x512xf32>
    %cst_59 = arith.constant 4.471500e-02 : f32
    %196 = vector.broadcast %cst_59 : f32 to vector<16x512xf32>
    %197 = arith.mulf %196, %195 : vector<16x512xf32>
    %198 = arith.addf %193, %197 : vector<16x512xf32>
    %cst_60 = arith.constant 0.797884583 : f32
    %199 = vector.broadcast %cst_60 : f32 to vector<16x512xf32>
    %200 = arith.mulf %199, %198 : vector<16x512xf32>
    %201 = math.tanh %200 : vector<16x512xf32>
    %cst_61 = arith.constant 1.000000e+00 : f32
    %202 = vector.broadcast %cst_61 : f32 to vector<16x512xf32>
    %203 = arith.addf %202, %201 : vector<16x512xf32>
    %cst_62 = arith.constant 5.000000e-01 : f32
    %204 = vector.broadcast %cst_62 : f32 to vector<16x512xf32>
    %205 = arith.mulf %204, %203 : vector<16x512xf32>
    %206 = arith.mulf %193, %205 : vector<16x512xf32>
    %207 = arith.truncf %206 : vector<16x512xf32> to vector<16x512xbf16>
    %c0_63 = arith.constant 0 : index
    %c0_64 = arith.constant 0 : index
    %c0_65 = arith.constant 0 : index
    %208 = vector.load %arg15[%c0_63, %c0_64, %c0_65] : memref<2x512x256xbf16, #tpu.memory_space<vmem>>, vector<1x512x256xbf16>
    %209 = vector.shape_cast %208 : vector<1x512x256xbf16> to vector<512x256xbf16>
    %c0_66 = arith.constant 0 : index
    %c0_67 = arith.constant 0 : index
    %c0_68 = arith.constant 0 : index
    %210 = vector.load %arg16[%c0_66, %c0_67, %c0_68] : memref<2x1x256xf32, #tpu.memory_space<vmem>>, vector<1x1x256xf32>
    %211 = vector.shape_cast %210 : vector<1x1x256xf32> to vector<1x256xf32>
    %cst_69 = arith.constant dense<0.000000e+00> : vector<16x256xf32>
    %212 = tpu.matmul %207, %209, %cst_69 {dimension_numbers = #tpu.dot_dimension_numbers<[1], [0], [0], [1], [0, 0, 1, 1], [], []>} : vector<16x512xbf16>, vector<512x256xbf16>, vector<16x256xf32> -> vector<16x256xf32>
    %213 = vector.broadcast %211 : vector<1x256xf32> to vector<16x256xf32>
    %214 = arith.addf %212, %213 : vector<16x256xf32>
    %215 = arith.addf %185, %214 : vector<16x256xf32>
    %c0_70 = arith.constant 0 : index
    %c0_71 = arith.constant 0 : index
    %c0_72 = arith.constant 0 : index
    %216 = vector.load %arg17[%c0_70, %c0_71, %c0_72] : memref<2x1x256xf32, #tpu.memory_space<vmem>>, vector<1x1x256xf32>
    %217 = vector.shape_cast %216 : vector<1x1x256xf32> to vector<1x256xf32>
    %c0_73 = arith.constant 0 : index
    %c0_74 = arith.constant 0 : index
    %c0_75 = arith.constant 0 : index
    %218 = vector.load %arg18[%c0_73, %c0_74, %c0_75] : memref<2x1x256xf32, #tpu.memory_space<vmem>>, vector<1x1x256xf32>
    %219 = vector.shape_cast %218 : vector<1x1x256xf32> to vector<1x256xf32>
    %cst_76 = arith.constant dense<0.000000e+00> : vector<16xf32>
    %220 = vector.multi_reduction <add>, %215, %cst_76 [1] : vector<16x256xf32> to vector<16xf32>
    %221 = vector.shape_cast %220 : vector<16xf32> to vector<16x1xf32>
    %cst_77 = arith.constant 2.560000e+02 : f32
    %222 = vector.broadcast %cst_77 : f32 to vector<16x1xf32>
    %223 = arith.divf %221, %222 : vector<16x1xf32>
    %224 = vector.broadcast %223 : vector<16x1xf32> to vector<16x256xf32>
    %225 = arith.subf %215, %224 : vector<16x256xf32>
    %226 = arith.mulf %225, %225 : vector<16x256xf32>
    %cst_78 = arith.constant dense<0.000000e+00> : vector<16xf32>
    %227 = vector.multi_reduction <add>, %226, %cst_78 [1] : vector<16x256xf32> to vector<16xf32>
    %228 = vector.shape_cast %227 : vector<16xf32> to vector<16x1xf32>
    %cst_79 = arith.constant 2.560000e+02 : f32
    %229 = vector.broadcast %cst_79 : f32 to vector<16x1xf32>
    %230 = arith.divf %228, %229 : vector<16x1xf32>
    %231 = vector.broadcast %223 : vector<16x1xf32> to vector<16x256xf32>
    %232 = arith.subf %215, %231 : vector<16x256xf32>
    %cst_80 = arith.constant 9.99999996E-13 : f32
    %233 = vector.broadcast %cst_80 : f32 to vector<16x1xf32>
    %234 = arith.addf %230, %233 : vector<16x1xf32>
    %235 = math.rsqrt %234 : vector<16x1xf32>
    %236 = vector.broadcast %235 : vector<16x1xf32> to vector<16x256xf32>
    %237 = arith.mulf %232, %236 : vector<16x256xf32>
    %238 = vector.broadcast %217 : vector<1x256xf32> to vector<16x256xf32>
    %239 = arith.mulf %237, %238 : vector<16x256xf32>
    %240 = vector.broadcast %219 : vector<1x256xf32> to vector<16x256xf32>
    %241 = arith.addf %239, %240 : vector<16x256xf32>
    %242 = arith.truncf %241 : vector<16x256xf32> to vector<16x256xbf16>
    %c1 = arith.constant 1 : index
    %c0_81 = arith.constant 0 : index
    %c0_82 = arith.constant 0 : index
    %243 = vector.load %arg7[%c1, %c0_81, %c0_82] : memref<2x256x768xbf16, #tpu.memory_space<vmem>>, vector<1x256x768xbf16>
    %244 = vector.shape_cast %243 : vector<1x256x768xbf16> to vector<256x768xbf16>
    %c1_83 = arith.constant 1 : index
    %c0_84 = arith.constant 0 : index
    %c0_85 = arith.constant 0 : index
    %245 = vector.load %arg8[%c1_83, %c0_84, %c0_85] : memref<2x1x768xf32, #tpu.memory_space<vmem>>, vector<1x1x768xf32>
    %246 = vector.shape_cast %245 : vector<1x1x768xf32> to vector<1x768xf32>
    %cst_86 = arith.constant dense<0.000000e+00> : vector<16x768xf32>
    %247 = tpu.matmul %242, %244, %cst_86 {dimension_numbers = #tpu.dot_dimension_numbers<[1], [0], [0], [1], [0, 0, 1, 1], [], []>} : vector<16x256xbf16>, vector<256x768xbf16>, vector<16x768xf32> -> vector<16x768xf32>
    %248 = vector.broadcast %246 : vector<1x768xf32> to vector<16x768xf32>
    %249 = arith.addf %247, %248 : vector<16x768xf32>
    %250 = arith.truncf %249 : vector<16x768xf32> to vector<16x768xbf16>
    %251 = vector.extract_strided_slice %250 {offsets = [0, 0], sizes = [8, 64], strides = [1, 1]} : vector<16x768xbf16> to vector<8x64xbf16>
    %252 = vector.extract_strided_slice %250 {offsets = [0, 64], sizes = [8, 64], strides = [1, 1]} : vector<16x768xbf16> to vector<8x64xbf16>
    %253 = vector.extract_strided_slice %250 {offsets = [0, 128], sizes = [8, 64], strides = [1, 1]} : vector<16x768xbf16> to vector<8x64xbf16>
    %254 = vector.extract_strided_slice %250 {offsets = [0, 192], sizes = [8, 64], strides = [1, 1]} : vector<16x768xbf16> to vector<8x64xbf16>
    %255 = vector.shape_cast %251 : vector<8x64xbf16> to vector<1x8x64xbf16>
    %256 = vector.shape_cast %252 : vector<8x64xbf16> to vector<1x8x64xbf16>
    %257 = vector.shape_cast %253 : vector<8x64xbf16> to vector<1x8x64xbf16>
    %258 = vector.shape_cast %254 : vector<8x64xbf16> to vector<1x8x64xbf16>
    %259 = tpu.concatenate %255, %256, %257, %258 in 0 : vector<1x8x64xbf16>, vector<1x8x64xbf16>, vector<1x8x64xbf16>, vector<1x8x64xbf16> -> vector<4x8x64xbf16>
    %260 = vector.extract_strided_slice %250 {offsets = [0, 256], sizes = [8, 64], strides = [1, 1]} : vector<16x768xbf16> to vector<8x64xbf16>
    %261 = vector.extract_strided_slice %250 {offsets = [0, 320], sizes = [8, 64], strides = [1, 1]} : vector<16x768xbf16> to vector<8x64xbf16>
    %262 = vector.extract_strided_slice %250 {offsets = [0, 384], sizes = [8, 64], strides = [1, 1]} : vector<16x768xbf16> to vector<8x64xbf16>
    %263 = vector.extract_strided_slice %250 {offsets = [0, 448], sizes = [8, 64], strides = [1, 1]} : vector<16x768xbf16> to vector<8x64xbf16>
    %264 = vector.shape_cast %260 : vector<8x64xbf16> to vector<1x8x64xbf16>
    %265 = vector.shape_cast %261 : vector<8x64xbf16> to vector<1x8x64xbf16>
    %266 = vector.shape_cast %262 : vector<8x64xbf16> to vector<1x8x64xbf16>
    %267 = vector.shape_cast %263 : vector<8x64xbf16> to vector<1x8x64xbf16>
    %268 = tpu.concatenate %264, %265, %266, %267 in 0 : vector<1x8x64xbf16>, vector<1x8x64xbf16>, vector<1x8x64xbf16>, vector<1x8x64xbf16> -> vector<4x8x64xbf16>
    %269 = vector.extract_strided_slice %250 {offsets = [0, 512], sizes = [8, 64], strides = [1, 1]} : vector<16x768xbf16> to vector<8x64xbf16>
    %270 = vector.extract_strided_slice %250 {offsets = [0, 576], sizes = [8, 64], strides = [1, 1]} : vector<16x768xbf16> to vector<8x64xbf16>
    %271 = vector.extract_strided_slice %250 {offsets = [0, 640], sizes = [8, 64], strides = [1, 1]} : vector<16x768xbf16> to vector<8x64xbf16>
    %272 = vector.extract_strided_slice %250 {offsets = [0, 704], sizes = [8, 64], strides = [1, 1]} : vector<16x768xbf16> to vector<8x64xbf16>
    %273 = vector.shape_cast %269 : vector<8x64xbf16> to vector<1x8x64xbf16>
    %274 = vector.shape_cast %270 : vector<8x64xbf16> to vector<1x8x64xbf16>
    %275 = vector.shape_cast %271 : vector<8x64xbf16> to vector<1x8x64xbf16>
    %276 = vector.shape_cast %272 : vector<8x64xbf16> to vector<1x8x64xbf16>
    %277 = tpu.concatenate %273, %274, %275, %276 in 0 : vector<1x8x64xbf16>, vector<1x8x64xbf16>, vector<1x8x64xbf16>, vector<1x8x64xbf16> -> vector<4x8x64xbf16>
    "tpu.trace_start"() <{level = 10 : i32, message = "hqd,hkd->hqk"}> : () -> ()
    %cst_87 = arith.constant dense<0.000000e+00> : vector<4x8x8xf32>
    %278 = tpu.matmul %259, %268, %cst_87 {dimension_numbers = #tpu.dot_dimension_numbers<[2], [2], [1], [1], [0, 0, 0, 1, 1, 1], [0], [0]>} : vector<4x8x64xbf16>, vector<4x8x64xbf16>, vector<4x8x8xf32> -> vector<4x8x8xf32>
    "tpu.trace_stop"() : () -> ()
    %cst_88 = arith.constant 1.250000e-01 : f32
    %279 = vector.broadcast %cst_88 : f32 to vector<4x8x8xf32>
    %280 = arith.mulf %278, %279 : vector<4x8x8xf32>
    %281 = vector.extract_strided_slice %30 {offsets = [0, 0], sizes = [1, 8], strides = [1, 1]} : vector<2x8xf32> to vector<1x8xf32>
    %282 = vector.shape_cast %281 : vector<1x8xf32> to vector<1x1x8xf32>
    %283 = vector.broadcast %282 : vector<1x1x8xf32> to vector<4x8x8xf32>
    %284 = arith.addf %280, %283 : vector<4x8x8xf32>
    %cst_89 = arith.constant dense<0xFF800000> : vector<4x8xf32>
    %285 = vector.multi_reduction <maximumf>, %284, %cst_89 [2] : vector<4x8x8xf32> to vector<4x8xf32>
    %286 = vector.shape_cast %285 : vector<4x8xf32> to vector<4x8x1xf32>
    %287 = vector.broadcast %286 : vector<4x8x1xf32> to vector<4x8x8xf32>
    %288 = arith.subf %284, %287 : vector<4x8x8xf32>
    %289 = math.exp %288 : vector<4x8x8xf32>
    %cst_90 = arith.constant dense<0.000000e+00> : vector<4x8xf32>
    %290 = vector.multi_reduction <add>, %289, %cst_90 [2] : vector<4x8x8xf32> to vector<4x8xf32>
    %291 = vector.shape_cast %290 : vector<4x8xf32> to vector<4x8x1xf32>
    %292 = tpu.reciprocal %291 {approx = true} : vector<4x8x1xf32> -> vector<4x8x1xf32>
    %293 = vector.broadcast %292 : vector<4x8x1xf32> to vector<4x8x8xf32>
    %294 = arith.mulf %289, %293 : vector<4x8x8xf32>
    %295 = arith.truncf %294 : vector<4x8x8xf32> to vector<4x8x8xbf16>
    "tpu.trace_start"() <{level = 10 : i32, message = "hqk,hkd->hqd"}> : () -> ()
    %cst_91 = arith.constant dense<0.000000e+00> : vector<4x8x64xf32>
    %296 = tpu.matmul %295, %277, %cst_91 {dimension_numbers = #tpu.dot_dimension_numbers<[2], [1], [1], [2], [0, 0, 0, 1, 1, 2], [0], [0]>} : vector<4x8x8xbf16>, vector<4x8x64xbf16>, vector<4x8x64xf32> -> vector<4x8x64xf32>
    "tpu.trace_stop"() : () -> ()
    %297 = vector.extract_strided_slice %296 {offsets = [0, 0, 0], sizes = [1, 8, 64], strides = [1, 1, 1]} : vector<4x8x64xf32> to vector<1x8x64xf32>
    %298 = vector.shape_cast %297 : vector<1x8x64xf32> to vector<8x64xf32>
    %299 = vector.extract_strided_slice %296 {offsets = [1, 0, 0], sizes = [1, 8, 64], strides = [1, 1, 1]} : vector<4x8x64xf32> to vector<1x8x64xf32>
    %300 = vector.shape_cast %299 : vector<1x8x64xf32> to vector<8x64xf32>
    %301 = vector.extract_strided_slice %296 {offsets = [2, 0, 0], sizes = [1, 8, 64], strides = [1, 1, 1]} : vector<4x8x64xf32> to vector<1x8x64xf32>
    %302 = vector.shape_cast %301 : vector<1x8x64xf32> to vector<8x64xf32>
    %303 = vector.extract_strided_slice %296 {offsets = [3, 0, 0], sizes = [1, 8, 64], strides = [1, 1, 1]} : vector<4x8x64xf32> to vector<1x8x64xf32>
    %304 = vector.shape_cast %303 : vector<1x8x64xf32> to vector<8x64xf32>
    %305 = tpu.concatenate %298, %300, %302, %304 in 1 : vector<8x64xf32>, vector<8x64xf32>, vector<8x64xf32>, vector<8x64xf32> -> vector<8x256xf32>
    %306 = vector.extract_strided_slice %250 {offsets = [8, 0], sizes = [8, 64], strides = [1, 1]} : vector<16x768xbf16> to vector<8x64xbf16>
    %307 = vector.extract_strided_slice %250 {offsets = [8, 64], sizes = [8, 64], strides = [1, 1]} : vector<16x768xbf16> to vector<8x64xbf16>
    %308 = vector.extract_strided_slice %250 {offsets = [8, 128], sizes = [8, 64], strides = [1, 1]} : vector<16x768xbf16> to vector<8x64xbf16>
    %309 = vector.extract_strided_slice %250 {offsets = [8, 192], sizes = [8, 64], strides = [1, 1]} : vector<16x768xbf16> to vector<8x64xbf16>
    %310 = vector.shape_cast %306 : vector<8x64xbf16> to vector<1x8x64xbf16>
    %311 = vector.shape_cast %307 : vector<8x64xbf16> to vector<1x8x64xbf16>
    %312 = vector.shape_cast %308 : vector<8x64xbf16> to vector<1x8x64xbf16>
    %313 = vector.shape_cast %309 : vector<8x64xbf16> to vector<1x8x64xbf16>
    %314 = tpu.concatenate %310, %311, %312, %313 in 0 : vector<1x8x64xbf16>, vector<1x8x64xbf16>, vector<1x8x64xbf16>, vector<1x8x64xbf16> -> vector<4x8x64xbf16>
    %315 = vector.extract_strided_slice %250 {offsets = [8, 256], sizes = [8, 64], strides = [1, 1]} : vector<16x768xbf16> to vector<8x64xbf16>
    %316 = vector.extract_strided_slice %250 {offsets = [8, 320], sizes = [8, 64], strides = [1, 1]} : vector<16x768xbf16> to vector<8x64xbf16>
    %317 = vector.extract_strided_slice %250 {offsets = [8, 384], sizes = [8, 64], strides = [1, 1]} : vector<16x768xbf16> to vector<8x64xbf16>
    %318 = vector.extract_strided_slice %250 {offsets = [8, 448], sizes = [8, 64], strides = [1, 1]} : vector<16x768xbf16> to vector<8x64xbf16>
    %319 = vector.shape_cast %315 : vector<8x64xbf16> to vector<1x8x64xbf16>
    %320 = vector.shape_cast %316 : vector<8x64xbf16> to vector<1x8x64xbf16>
    %321 = vector.shape_cast %317 : vector<8x64xbf16> to vector<1x8x64xbf16>
    %322 = vector.shape_cast %318 : vector<8x64xbf16> to vector<1x8x64xbf16>
    %323 = tpu.concatenate %319, %320, %321, %322 in 0 : vector<1x8x64xbf16>, vector<1x8x64xbf16>, vector<1x8x64xbf16>, vector<1x8x64xbf16> -> vector<4x8x64xbf16>
    %324 = vector.extract_strided_slice %250 {offsets = [8, 512], sizes = [8, 64], strides = [1, 1]} : vector<16x768xbf16> to vector<8x64xbf16>
    %325 = vector.extract_strided_slice %250 {offsets = [8, 576], sizes = [8, 64], strides = [1, 1]} : vector<16x768xbf16> to vector<8x64xbf16>
    %326 = vector.extract_strided_slice %250 {offsets = [8, 640], sizes = [8, 64], strides = [1, 1]} : vector<16x768xbf16> to vector<8x64xbf16>
    %327 = vector.extract_strided_slice %250 {offsets = [8, 704], sizes = [8, 64], strides = [1, 1]} : vector<16x768xbf16> to vector<8x64xbf16>
    %328 = vector.shape_cast %324 : vector<8x64xbf16> to vector<1x8x64xbf16>
    %329 = vector.shape_cast %325 : vector<8x64xbf16> to vector<1x8x64xbf16>
    %330 = vector.shape_cast %326 : vector<8x64xbf16> to vector<1x8x64xbf16>
    %331 = vector.shape_cast %327 : vector<8x64xbf16> to vector<1x8x64xbf16>
    %332 = tpu.concatenate %328, %329, %330, %331 in 0 : vector<1x8x64xbf16>, vector<1x8x64xbf16>, vector<1x8x64xbf16>, vector<1x8x64xbf16> -> vector<4x8x64xbf16>
    "tpu.trace_start"() <{level = 10 : i32, message = "hqd,hkd->hqk"}> : () -> ()
    %cst_92 = arith.constant dense<0.000000e+00> : vector<4x8x8xf32>
    %333 = tpu.matmul %314, %323, %cst_92 {dimension_numbers = #tpu.dot_dimension_numbers<[2], [2], [1], [1], [0, 0, 0, 1, 1, 1], [0], [0]>} : vector<4x8x64xbf16>, vector<4x8x64xbf16>, vector<4x8x8xf32> -> vector<4x8x8xf32>
    "tpu.trace_stop"() : () -> ()
    %cst_93 = arith.constant 1.250000e-01 : f32
    %334 = vector.broadcast %cst_93 : f32 to vector<4x8x8xf32>
    %335 = arith.mulf %333, %334 : vector<4x8x8xf32>
    %336 = vector.extract_strided_slice %30 {offsets = [1, 0], sizes = [1, 8], strides = [1, 1]} : vector<2x8xf32> to vector<1x8xf32>
    %337 = vector.shape_cast %336 : vector<1x8xf32> to vector<1x1x8xf32>
    %338 = vector.broadcast %337 : vector<1x1x8xf32> to vector<4x8x8xf32>
    %339 = arith.addf %335, %338 : vector<4x8x8xf32>
    %cst_94 = arith.constant dense<0xFF800000> : vector<4x8xf32>
    %340 = vector.multi_reduction <maximumf>, %339, %cst_94 [2] : vector<4x8x8xf32> to vector<4x8xf32>
    %341 = vector.shape_cast %340 : vector<4x8xf32> to vector<4x8x1xf32>
    %342 = vector.broadcast %341 : vector<4x8x1xf32> to vector<4x8x8xf32>
    %343 = arith.subf %339, %342 : vector<4x8x8xf32>
    %344 = math.exp %343 : vector<4x8x8xf32>
    %cst_95 = arith.constant dense<0.000000e+00> : vector<4x8xf32>
    %345 = vector.multi_reduction <add>, %344, %cst_95 [2] : vector<4x8x8xf32> to vector<4x8xf32>
    %346 = vector.shape_cast %345 : vector<4x8xf32> to vector<4x8x1xf32>
    %347 = tpu.reciprocal %346 {approx = true} : vector<4x8x1xf32> -> vector<4x8x1xf32>
    %348 = vector.broadcast %347 : vector<4x8x1xf32> to vector<4x8x8xf32>
    %349 = arith.mulf %344, %348 : vector<4x8x8xf32>
    %350 = arith.truncf %349 : vector<4x8x8xf32> to vector<4x8x8xbf16>
    "tpu.trace_start"() <{level = 10 : i32, message = "hqk,hkd->hqd"}> : () -> ()
    %cst_96 = arith.constant dense<0.000000e+00> : vector<4x8x64xf32>
    %351 = tpu.matmul %350, %332, %cst_96 {dimension_numbers = #tpu.dot_dimension_numbers<[2], [1], [1], [2], [0, 0, 0, 1, 1, 2], [0], [0]>} : vector<4x8x8xbf16>, vector<4x8x64xbf16>, vector<4x8x64xf32> -> vector<4x8x64xf32>
    "tpu.trace_stop"() : () -> ()
    %352 = vector.extract_strided_slice %351 {offsets = [0, 0, 0], sizes = [1, 8, 64], strides = [1, 1, 1]} : vector<4x8x64xf32> to vector<1x8x64xf32>
    %353 = vector.shape_cast %352 : vector<1x8x64xf32> to vector<8x64xf32>
    %354 = vector.extract_strided_slice %351 {offsets = [1, 0, 0], sizes = [1, 8, 64], strides = [1, 1, 1]} : vector<4x8x64xf32> to vector<1x8x64xf32>
    %355 = vector.shape_cast %354 : vector<1x8x64xf32> to vector<8x64xf32>
    %356 = vector.extract_strided_slice %351 {offsets = [2, 0, 0], sizes = [1, 8, 64], strides = [1, 1, 1]} : vector<4x8x64xf32> to vector<1x8x64xf32>
    %357 = vector.shape_cast %356 : vector<1x8x64xf32> to vector<8x64xf32>
    %358 = vector.extract_strided_slice %351 {offsets = [3, 0, 0], sizes = [1, 8, 64], strides = [1, 1, 1]} : vector<4x8x64xf32> to vector<1x8x64xf32>
    %359 = vector.shape_cast %358 : vector<1x8x64xf32> to vector<8x64xf32>
    %360 = tpu.concatenate %353, %355, %357, %359 in 1 : vector<8x64xf32>, vector<8x64xf32>, vector<8x64xf32>, vector<8x64xf32> -> vector<8x256xf32>
    %361 = tpu.concatenate %305, %360 in 0 : vector<8x256xf32>, vector<8x256xf32> -> vector<16x256xf32>
    %362 = arith.truncf %361 : vector<16x256xf32> to vector<16x256xbf16>
    %c1_97 = arith.constant 1 : index
    %c0_98 = arith.constant 0 : index
    %c0_99 = arith.constant 0 : index
    %363 = vector.load %arg9[%c1_97, %c0_98, %c0_99] : memref<2x256x256xbf16, #tpu.memory_space<vmem>>, vector<1x256x256xbf16>
    %364 = vector.shape_cast %363 : vector<1x256x256xbf16> to vector<256x256xbf16>
    %c1_100 = arith.constant 1 : index
    %c0_101 = arith.constant 0 : index
    %c0_102 = arith.constant 0 : index
    %365 = vector.load %arg10[%c1_100, %c0_101, %c0_102] : memref<2x1x256xf32, #tpu.memory_space<vmem>>, vector<1x1x256xf32>
    %366 = vector.shape_cast %365 : vector<1x1x256xf32> to vector<1x256xf32>
    %cst_103 = arith.constant dense<0.000000e+00> : vector<16x256xf32>
    %367 = tpu.matmul %362, %364, %cst_103 {dimension_numbers = #tpu.dot_dimension_numbers<[1], [0], [0], [1], [0, 0, 1, 1], [], []>} : vector<16x256xbf16>, vector<256x256xbf16>, vector<16x256xf32> -> vector<16x256xf32>
    %368 = vector.broadcast %366 : vector<1x256xf32> to vector<16x256xf32>
    %369 = arith.addf %367, %368 : vector<16x256xf32>
    %370 = arith.addf %241, %369 : vector<16x256xf32>
    %c1_104 = arith.constant 1 : index
    %c0_105 = arith.constant 0 : index
    %c0_106 = arith.constant 0 : index
    %371 = vector.load %arg11[%c1_104, %c0_105, %c0_106] : memref<2x1x256xf32, #tpu.memory_space<vmem>>, vector<1x1x256xf32>
    %372 = vector.shape_cast %371 : vector<1x1x256xf32> to vector<1x256xf32>
    %c1_107 = arith.constant 1 : index
    %c0_108 = arith.constant 0 : index
    %c0_109 = arith.constant 0 : index
    %373 = vector.load %arg12[%c1_107, %c0_108, %c0_109] : memref<2x1x256xf32, #tpu.memory_space<vmem>>, vector<1x1x256xf32>
    %374 = vector.shape_cast %373 : vector<1x1x256xf32> to vector<1x256xf32>
    %cst_110 = arith.constant dense<0.000000e+00> : vector<16xf32>
    %375 = vector.multi_reduction <add>, %370, %cst_110 [1] : vector<16x256xf32> to vector<16xf32>
    %376 = vector.shape_cast %375 : vector<16xf32> to vector<16x1xf32>
    %cst_111 = arith.constant 2.560000e+02 : f32
    %377 = vector.broadcast %cst_111 : f32 to vector<16x1xf32>
    %378 = arith.divf %376, %377 : vector<16x1xf32>
    %379 = vector.broadcast %378 : vector<16x1xf32> to vector<16x256xf32>
    %380 = arith.subf %370, %379 : vector<16x256xf32>
    %381 = arith.mulf %380, %380 : vector<16x256xf32>
    %cst_112 = arith.constant dense<0.000000e+00> : vector<16xf32>
    %382 = vector.multi_reduction <add>, %381, %cst_112 [1] : vector<16x256xf32> to vector<16xf32>
    %383 = vector.shape_cast %382 : vector<16xf32> to vector<16x1xf32>
    %cst_113 = arith.constant 2.560000e+02 : f32
    %384 = vector.broadcast %cst_113 : f32 to vector<16x1xf32>
    %385 = arith.divf %383, %384 : vector<16x1xf32>
    %386 = vector.broadcast %378 : vector<16x1xf32> to vector<16x256xf32>
    %387 = arith.subf %370, %386 : vector<16x256xf32>
    %cst_114 = arith.constant 9.99999996E-13 : f32
    %388 = vector.broadcast %cst_114 : f32 to vector<16x1xf32>
    %389 = arith.addf %385, %388 : vector<16x1xf32>
    %390 = math.rsqrt %389 : vector<16x1xf32>
    %391 = vector.broadcast %390 : vector<16x1xf32> to vector<16x256xf32>
    %392 = arith.mulf %387, %391 : vector<16x256xf32>
    %393 = vector.broadcast %372 : vector<1x256xf32> to vector<16x256xf32>
    %394 = arith.mulf %392, %393 : vector<16x256xf32>
    %395 = vector.broadcast %374 : vector<1x256xf32> to vector<16x256xf32>
    %396 = arith.addf %394, %395 : vector<16x256xf32>
    %397 = arith.truncf %396 : vector<16x256xf32> to vector<16x256xbf16>
    %c1_115 = arith.constant 1 : index
    %c0_116 = arith.constant 0 : index
    %c0_117 = arith.constant 0 : index
    %398 = vector.load %arg13[%c1_115, %c0_116, %c0_117] : memref<2x256x512xbf16, #tpu.memory_space<vmem>>, vector<1x256x512xbf16>
    %399 = vector.shape_cast %398 : vector<1x256x512xbf16> to vector<256x512xbf16>
    %c1_118 = arith.constant 1 : index
    %c0_119 = arith.constant 0 : index
    %c0_120 = arith.constant 0 : index
    %400 = vector.load %arg14[%c1_118, %c0_119, %c0_120] : memref<2x1x512xf32, #tpu.memory_space<vmem>>, vector<1x1x512xf32>
    %401 = vector.shape_cast %400 : vector<1x1x512xf32> to vector<1x512xf32>
    %cst_121 = arith.constant dense<0.000000e+00> : vector<16x512xf32>
    %402 = tpu.matmul %397, %399, %cst_121 {dimension_numbers = #tpu.dot_dimension_numbers<[1], [0], [0], [1], [0, 0, 1, 1], [], []>} : vector<16x256xbf16>, vector<256x512xbf16>, vector<16x512xf32> -> vector<16x512xf32>
    %403 = vector.broadcast %401 : vector<1x512xf32> to vector<16x512xf32>
    %404 = arith.addf %402, %403 : vector<16x512xf32>
    %405 = arith.mulf %404, %404 : vector<16x512xf32>
    %406 = arith.mulf %404, %405 : vector<16x512xf32>
    %cst_122 = arith.constant 4.471500e-02 : f32
    %407 = vector.broadcast %cst_122 : f32 to vector<16x512xf32>
    %408 = arith.mulf %407, %406 : vector<16x512xf32>
    %409 = arith.addf %404, %408 : vector<16x512xf32>
    %cst_123 = arith.constant 0.797884583 : f32
    %410 = vector.broadcast %cst_123 : f32 to vector<16x512xf32>
    %411 = arith.mulf %410, %409 : vector<16x512xf32>
    %412 = math.tanh %411 : vector<16x512xf32>
    %cst_124 = arith.constant 1.000000e+00 : f32
    %413 = vector.broadcast %cst_124 : f32 to vector<16x512xf32>
    %414 = arith.addf %413, %412 : vector<16x512xf32>
    %cst_125 = arith.constant 5.000000e-01 : f32
    %415 = vector.broadcast %cst_125 : f32 to vector<16x512xf32>
    %416 = arith.mulf %415, %414 : vector<16x512xf32>
    %417 = arith.mulf %404, %416 : vector<16x512xf32>
    %418 = arith.truncf %417 : vector<16x512xf32> to vector<16x512xbf16>
    %c1_126 = arith.constant 1 : index
    %c0_127 = arith.constant 0 : index
    %c0_128 = arith.constant 0 : index
    %419 = vector.load %arg15[%c1_126, %c0_127, %c0_128] : memref<2x512x256xbf16, #tpu.memory_space<vmem>>, vector<1x512x256xbf16>
    %420 = vector.shape_cast %419 : vector<1x512x256xbf16> to vector<512x256xbf16>
    %c1_129 = arith.constant 1 : index
    %c0_130 = arith.constant 0 : index
    %c0_131 = arith.constant 0 : index
    %421 = vector.load %arg16[%c1_129, %c0_130, %c0_131] : memref<2x1x256xf32, #tpu.memory_space<vmem>>, vector<1x1x256xf32>
    %422 = vector.shape_cast %421 : vector<1x1x256xf32> to vector<1x256xf32>
    %cst_132 = arith.constant dense<0.000000e+00> : vector<16x256xf32>
    %423 = tpu.matmul %418, %420, %cst_132 {dimension_numbers = #tpu.dot_dimension_numbers<[1], [0], [0], [1], [0, 0, 1, 1], [], []>} : vector<16x512xbf16>, vector<512x256xbf16>, vector<16x256xf32> -> vector<16x256xf32>
    %424 = vector.broadcast %422 : vector<1x256xf32> to vector<16x256xf32>
    %425 = arith.addf %423, %424 : vector<16x256xf32>
    %426 = arith.addf %396, %425 : vector<16x256xf32>
    %c1_133 = arith.constant 1 : index
    %c0_134 = arith.constant 0 : index
    %c0_135 = arith.constant 0 : index
    %427 = vector.load %arg17[%c1_133, %c0_134, %c0_135] : memref<2x1x256xf32, #tpu.memory_space<vmem>>, vector<1x1x256xf32>
    %428 = vector.shape_cast %427 : vector<1x1x256xf32> to vector<1x256xf32>
    %c1_136 = arith.constant 1 : index
    %c0_137 = arith.constant 0 : index
    %c0_138 = arith.constant 0 : index
    %429 = vector.load %arg18[%c1_136, %c0_137, %c0_138] : memref<2x1x256xf32, #tpu.memory_space<vmem>>, vector<1x1x256xf32>
    %430 = vector.shape_cast %429 : vector<1x1x256xf32> to vector<1x256xf32>
    %cst_139 = arith.constant dense<0.000000e+00> : vector<16xf32>
    %431 = vector.multi_reduction <add>, %426, %cst_139 [1] : vector<16x256xf32> to vector<16xf32>
    %432 = vector.shape_cast %431 : vector<16xf32> to vector<16x1xf32>
    %cst_140 = arith.constant 2.560000e+02 : f32
    %433 = vector.broadcast %cst_140 : f32 to vector<16x1xf32>
    %434 = arith.divf %432, %433 : vector<16x1xf32>
    %435 = vector.broadcast %434 : vector<16x1xf32> to vector<16x256xf32>
    %436 = arith.subf %426, %435 : vector<16x256xf32>
    %437 = arith.mulf %436, %436 : vector<16x256xf32>
    %cst_141 = arith.constant dense<0.000000e+00> : vector<16xf32>
    %438 = vector.multi_reduction <add>, %437, %cst_141 [1] : vector<16x256xf32> to vector<16xf32>
    %439 = vector.shape_cast %438 : vector<16xf32> to vector<16x1xf32>
    %cst_142 = arith.constant 2.560000e+02 : f32
    %440 = vector.broadcast %cst_142 : f32 to vector<16x1xf32>
    %441 = arith.divf %439, %440 : vector<16x1xf32>
    %442 = vector.broadcast %434 : vector<16x1xf32> to vector<16x256xf32>
    %443 = arith.subf %426, %442 : vector<16x256xf32>
    %cst_143 = arith.constant 9.99999996E-13 : f32
    %444 = vector.broadcast %cst_143 : f32 to vector<16x1xf32>
    %445 = arith.addf %441, %444 : vector<16x1xf32>
    %446 = math.rsqrt %445 : vector<16x1xf32>
    %447 = vector.broadcast %446 : vector<16x1xf32> to vector<16x256xf32>
    %448 = arith.mulf %443, %447 : vector<16x256xf32>
    %449 = vector.broadcast %428 : vector<1x256xf32> to vector<16x256xf32>
    %450 = arith.mulf %448, %449 : vector<16x256xf32>
    %451 = vector.broadcast %430 : vector<1x256xf32> to vector<16x256xf32>
    %452 = arith.addf %450, %451 : vector<16x256xf32>
    %453 = vector.extract_strided_slice %452 {offsets = [0, 0], sizes = [1, 256], strides = [1, 1]} : vector<16x256xf32> to vector<1x256xf32>
    %454 = vector.extract_strided_slice %452 {offsets = [8, 0], sizes = [1, 256], strides = [1, 1]} : vector<16x256xf32> to vector<1x256xf32>
    %455 = tpu.concatenate %453, %454 in 0 : vector<1x256xf32>, vector<1x256xf32> -> vector<2x256xf32>
    %456 = arith.truncf %455 : vector<2x256xf32> to vector<2x256xbf16>
    %c0_144 = arith.constant 0 : index
    %c0_145 = arith.constant 0 : index
    %457 = vector.load %arg19[%c0_144, %c0_145] : memref<256x4xbf16, #tpu.memory_space<vmem>>, vector<256x4xbf16>
    %c0_146 = arith.constant 0 : index
    %c0_147 = arith.constant 0 : index
    %458 = vector.load %arg20[%c0_146, %c0_147] : memref<1x4xf32, #tpu.memory_space<vmem>>, vector<1x4xf32>
    %cst_148 = arith.constant dense<0.000000e+00> : vector<2x4xf32>
    %459 = tpu.matmul %456, %457, %cst_148 {dimension_numbers = #tpu.dot_dimension_numbers<[1], [0], [0], [1], [0, 0, 1, 1], [], []>} : vector<2x256xbf16>, vector<256x4xbf16>, vector<2x4xf32> -> vector<2x4xf32>
    %460 = vector.broadcast %458 : vector<1x4xf32> to vector<2x4xf32>
    %461 = arith.addf %459, %460 : vector<2x4xf32>
    %c0_149 = arith.constant 0 : index
    %c0_150 = arith.constant 0 : index
    %c0_151 = arith.constant 0 : index
    %462 = vector.load %arg21[%c0_149, %c0_150, %c0_151] : memref<1x2x4xf32, #tpu.memory_space<vmem>>, vector<1x2x4xf32>
    %463 = vector.shape_cast %462 : vector<1x2x4xf32> to vector<2x4xf32>
    %464 = vector.shape_cast %461 : vector<2x4xf32> to vector<1x2x4xf32>
    tpu.vector_store %arg21[%c0_149, %c0_150, %c0_151], %464 {strides = array<i32>} : memref<1x2x4xf32, #tpu.memory_space<vmem>>, vector<1x2x4xf32>,
    return
  }
  func.func @transform_0(%arg0: i32) -> (i32, i32) {
    %c0_i32 = arith.constant 0 : i32
    %c0_i32_0 = arith.constant 0 : i32
    return %arg0, %c0_i32 : i32, i32
  }
  func.func @transform_1(%arg0: i32) -> (i32, i32, i32) {
    %c0_i32 = arith.constant 0 : i32
    %c0_i32_0 = arith.constant 0 : i32
    %c0_i32_1 = arith.constant 0 : i32
    return %arg0, %c0_i32, %c0_i32_0 : i32, i32, i32
  }
  func.func @transform_2(%arg0: i32) -> (i32, i32) {
    %c0_i32 = arith.constant 0 : i32
    %c0_i32_0 = arith.constant 0 : i32
    %c0_i32_1 = arith.constant 0 : i32
    return %c0_i32, %c0_i32_0 : i32, i32
  }
  func.func @transform_3(%arg0: i32) -> (i32, i32) {
    %c0_i32 = arith.constant 0 : i32
    %c0_i32_0 = arith.constant 0 : i32
    %c0_i32_1 = arith.constant 0 : i32
    return %c0_i32, %c0_i32_0 : i32, i32
  }
  func.func @transform_4(%arg0: i32) -> (i32, i32) {
    %c0_i32 = arith.constant 0 : i32
    %c0_i32_0 = arith.constant 0 : i32
    %c0_i32_1 = arith.constant 0 : i32
    return %c0_i32, %c0_i32_0 : i32, i32
  }
  func.func @transform_5(%arg0: i32) -> (i32, i32) {
    %c0_i32 = arith.constant 0 : i32
    %c0_i32_0 = arith.constant 0 : i32
    %c0_i32_1 = arith.constant 0 : i32
    return %c0_i32, %c0_i32_0 : i32, i32
  }
  func.func @transform_6(%arg0: i32) -> (i32, i32, i32) {
    %c0_i32 = arith.constant 0 : i32
    %c0_i32_0 = arith.constant 0 : i32
    %c0_i32_1 = arith.constant 0 : i32
    %c0_i32_2 = arith.constant 0 : i32
    return %c0_i32, %c0_i32_0, %c0_i32_1 : i32, i32, i32
  }
  func.func @transform_7(%arg0: i32) -> (i32, i32, i32) {
    %c0_i32 = arith.constant 0 : i32
    %c0_i32_0 = arith.constant 0 : i32
    %c0_i32_1 = arith.constant 0 : i32
    %c0_i32_2 = arith.constant 0 : i32
    return %c0_i32, %c0_i32_0, %c0_i32_1 : i32, i32, i32
  }
  func.func @transform_8(%arg0: i32) -> (i32, i32, i32) {
    %c0_i32 = arith.constant 0 : i32
    %c0_i32_0 = arith.constant 0 : i32
    %c0_i32_1 = arith.constant 0 : i32
    %c0_i32_2 = arith.constant 0 : i32
    return %c0_i32, %c0_i32_0, %c0_i32_1 : i32, i32, i32
  }
  func.func @transform_9(%arg0: i32) -> (i32, i32, i32) {
    %c0_i32 = arith.constant 0 : i32
    %c0_i32_0 = arith.constant 0 : i32
    %c0_i32_1 = arith.constant 0 : i32
    %c0_i32_2 = arith.constant 0 : i32
    return %c0_i32, %c0_i32_0, %c0_i32_1 : i32, i32, i32
  }
  func.func @transform_10(%arg0: i32) -> (i32, i32, i32) {
    %c0_i32 = arith.constant 0 : i32
    %c0_i32_0 = arith.constant 0 : i32
    %c0_i32_1 = arith.constant 0 : i32
    %c0_i32_2 = arith.constant 0 : i32
    return %c0_i32, %c0_i32_0, %c0_i32_1 : i32, i32, i32
  }
  func.func @transform_11(%arg0: i32) -> (i32, i32, i32) {
    %c0_i32 = arith.constant 0 : i32
    %c0_i32_0 = arith.constant 0 : i32
    %c0_i32_1 = arith.constant 0 : i32
    %c0_i32_2 = arith.constant 0 : i32
    return %c0_i32, %c0_i32_0, %c0_i32_1 : i32, i32, i32
  }
  func.func @transform_12(%arg0: i32) -> (i32, i32, i32) {
    %c0_i32 = arith.constant 0 : i32
    %c0_i32_0 = arith.constant 0 : i32
    %c0_i32_1 = arith.constant 0 : i32
    %c0_i32_2 = arith.constant 0 : i32
    return %c0_i32, %c0_i32_0, %c0_i32_1 : i32, i32, i32
  }
  func.func @transform_13(%arg0: i32) -> (i32, i32, i32) {
    %c0_i32 = arith.constant 0 : i32
    %c0_i32_0 = arith.constant 0 : i32
    %c0_i32_1 = arith.constant 0 : i32
    %c0_i32_2 = arith.constant 0 : i32
    return %c0_i32, %c0_i32_0, %c0_i32_1 : i32, i32, i32
  }
  func.func @transform_14(%arg0: i32) -> (i32, i32, i32) {
    %c0_i32 = arith.constant 0 : i32
    %c0_i32_0 = arith.constant 0 : i32
    %c0_i32_1 = arith.constant 0 : i32
    %c0_i32_2 = arith.constant 0 : i32
    return %c0_i32, %c0_i32_0, %c0_i32_1 : i32, i32, i32
  }
  func.func @transform_15(%arg0: i32) -> (i32, i32, i32) {
    %c0_i32 = arith.constant 0 : i32
    %c0_i32_0 = arith.constant 0 : i32
    %c0_i32_1 = arith.constant 0 : i32
    %c0_i32_2 = arith.constant 0 : i32
    return %c0_i32, %c0_i32_0, %c0_i32_1 : i32, i32, i32
  }
  func.func @transform_16(%arg0: i32) -> (i32, i32, i32) {
    %c0_i32 = arith.constant 0 : i32
    %c0_i32_0 = arith.constant 0 : i32
    %c0_i32_1 = arith.constant 0 : i32
    %c0_i32_2 = arith.constant 0 : i32
    return %c0_i32, %c0_i32_0, %c0_i32_1 : i32, i32, i32
  }
  func.func @transform_17(%arg0: i32) -> (i32, i32, i32) {
    %c0_i32 = arith.constant 0 : i32
    %c0_i32_0 = arith.constant 0 : i32
    %c0_i32_1 = arith.constant 0 : i32
    %c0_i32_2 = arith.constant 0 : i32
    return %c0_i32, %c0_i32_0, %c0_i32_1 : i32, i32, i32
  }
  func.func @transform_18(%arg0: i32) -> (i32, i32) {
    %c0_i32 = arith.constant 0 : i32
    %c0_i32_0 = arith.constant 0 : i32
    %c0_i32_1 = arith.constant 0 : i32
    return %c0_i32, %c0_i32_0 : i32, i32
  }
  func.func @transform_19(%arg0: i32) -> (i32, i32) {
    %c0_i32 = arith.constant 0 : i32
    %c0_i32_0 = arith.constant 0 : i32
    %c0_i32_1 = arith.constant 0 : i32
    return %c0_i32, %c0_i32_0 : i32, i32
  }
  func.func @transform_20(%arg0: i32) -> (i32, i32, i32) {
    %c0_i32 = arith.constant 0 : i32
    %c0_i32_0 = arith.constant 0 : i32
    %c0_i32_1 = arith.constant 0 : i32
    return %arg0, %c0_i32, %c0_i32_0 : i32, i32, i32
  }
}

</mosaic_0001>

<llo_original>
// kernel: eq.8
$region0: #{eq.8}
  %s0 = inlined_call_operand.vmem [shape: s32[4,8], index: 0, kind: input, shape index: {}]
  %s1 = inlined_call_operand.vmem [shape: s32[32], index: 1, kind: output, shape index: {}]
  $region1: #{eq.8} parent=0
    #allocation0 [shape = 'u8[4096]{0}', space=vmem, size = 0x1000, scoped, tag = 'scoped mem for output reshape']
    #allocation1 [shape = 'u8[4096]{0}', space=vmem, size = 0x1000, scoped, tag = 'scoped mem for input reshape']
    %s3 = sshllo.u32 0, 4
    %v4 = vld [vmem:[%s0] sm:%s3]
    %5 = vst [vmem:[#allocation1] sm:%s3] %v4
    %v6 = vld [vmem:[#allocation1] sm:$0x1]
    %vm7 = vcmask 64512
    %8 = vst.msk [vmem:[#allocation0] sm:$0x1] %vm7, %v6
    %s9 = scalar_lea.vmem [#allocation1], 3
    %v10 = vld [vmem:[%s9] sm:$0x1]
    %11 = vrot.lane.b32.xlu0 %v10, 24
    %v12 = vpop.permute.xlu0 %11
    %vm13 = vcmask 261312
    %14 = vst.msk [vmem:[#allocation0] sm:$0x1] %vm13, %v12
    %s15 = scalar_lea.vmem [#allocation1], 2
    %v16 = vld [vmem:[%s15] sm:$0x1]
    %17 = vrot.lane.b32.xlu0 %v16, 16
    %v18 = vpop.permute.xlu0 %17
    %vm19 = vcmask 195712
    %20 = vst.msk [vmem:[#allocation0] sm:$0x1] %vm19, %v18
    %s21 = scalar_lea.vmem [#allocation1], 1
    %v22 = vld [vmem:[%s21] sm:$0x1]
    %23 = vrot.lane.b32.xlu0 %v22, 8
    %v24 = vpop.permute.xlu0 %23
    %vm25 = vcmask 130112
    %26 = vst.msk [vmem:[#allocation0] sm:$0x1] %vm25, %v24
    %s28 = sshllo.u32 0, 1
    %v30 = vld [vmem:[#allocation0] sm:%s28]
    %s31 = sshllo.u32 0, 1
    %32 = vst [vmem:[%s1] sm:%s31] %v30

// kernel: custom_bert_forward.1
$region0: #{custom_bert_forward.1}
  #allocation0 [shape = 'u32[]', space=smem, size = 0x4, offset = 0x4, fixed_abs, tag = 'smem constant byte address 0x4 - core index']
  #allocation1 [shape = 'u32[144,128]{1,0:T(1,128)}', space=vmem, size = 0x12000, scoped, tag = 'internal scratch']
  %s0 = inlined_call_operand.vmem [shape: bf16[32,64], index: 0, kind: input, shape index: {}]
  %s1 = inlined_call_operand.vmem [shape: f32[2,2,8], index: 1, kind: input, shape index: {}]
  %s2 = inlined_call_operand.vmem [shape: bf16[64,256], index: 2, kind: input, shape index: {}]
  %s3 = inlined_call_operand.vmem [shape: f32[16,256], index: 3, kind: input, shape index: {}]
  %s4 = inlined_call_operand.vmem [shape: f32[1,256], index: 4, kind: input, shape index: {}]
  %s5 = inlined_call_operand.vmem [shape: f32[1,256], index: 5, kind: input, shape index: {}]
  %s6 = inlined_call_operand.hbm [shape: bf16[2,256,768], index: 6, kind: input, shape index: {}]
  %s7 = inlined_call_operand.vmem [shape: f32[2,1,768], index: 7, kind: input, shape index: {}]
  %s8 = inlined_call_operand.hbm [shape: bf16[2,256,256], index: 8, kind: input, shape index: {}]
  %s9 = inlined_call_operand.vmem [shape: f32[2,1,256], index: 9, kind: input, shape index: {}]
  %s10 = inlined_call_operand.vmem [shape: f32[2,1,256], index: 10, kind: input, shape index: {}]
  %s11 = inlined_call_operand.vmem [shape: f32[2,1,256], index: 11, kind: input, shape index: {}]
  %s12 = inlined_call_operand.hbm [shape: bf16[2,256,512], index: 12, kind: input, shape index: {}]
  %s13 = inlined_call_operand.vmem [shape: f32[2,1,512], index: 13, kind: input, shape index: {}]
  %s14 = inlined_call_operand.hbm [shape: bf16[2,512,256], index: 14, kind: input, shape index: {}]
  %s15 = inlined_call_operand.vmem [shape: f32[2,1,256], index: 15, kind: input, shape index: {}]
  %s16 = inlined_call_operand.vmem [shape: f32[2,1,256], index: 16, kind: input, shape index: {}]
  %s17 = inlined_call_operand.vmem [shape: f32[2,1,256], index: 17, kind: input, shape index: {}]
  %s18 = inlined_call_operand.vmem [shape: bf16[256,4], index: 18, kind: input, shape index: {}]
  %s19 = inlined_call_operand.vmem [shape: f32[1,4], index: 19, kind: input, shape index: {}]
  %s20 = inlined_call_operand.hbm [shape: f32[2,2,4], index: 20, kind: output, shape index: {}]
  %s21 = sld [smem:[#allocation0]]
  $region129: #{custom_bert_forward.1} parent=0
    _
  %s23 = ssub.s32 1, %s21
  %s24 = scalar_select 0, %s23, %s21
  $region1: #{custom_bert_forward.1} parent=0
    #allocation2 [shape = 'u8[786432]{0}', space=vmem, size = 0xc0000, scoped, tag = 'input window, operand 6, single buffered']
    #allocation3 [shape = 's32[2]{0}', space=sflag, size = 0x8, scoped, tag = 'scoped memory for custom_bert_forward.1']
    #allocation4 [shape = 's32[2]{0}', space=sflag, size = 0x8, scoped, tag = 'scoped memory for custom_bert_forward.1']
    #allocation5 [shape = 'u8[262144]{0}', space=vmem, size = 0x40000, scoped, tag = 'input window, operand 8, single buffered']
    #allocation6 [shape = 's32[1]{0}', space=sflag, size = 0x4, scoped, tag = 'scoped memory for custom_bert_forward.1']
    #allocation7 [shape = 'u8[524288]{0}', space=vmem, size = 0x80000, scoped, tag = 'input window, operand 12, single buffered']
    #allocation8 [shape = 'u8[524288]{0}', space=vmem, size = 0x80000, scoped, tag = 'input window, operand 14, single buffered']
    #allocation9 [shape = 's32[1]{0}', space=sflag, size = 0x4, scoped, tag = 'scoped memory for custom_bert_forward.1']
    #allocation10 [shape = 'u8[2048]{0}', space=vmem, size = 0x800, scoped, tag = 'output window, operand 0']
    %25 = vsyncpa [#allocation3], 0
    %26 = vsyncpa [#allocation6], 0
    %27 = vsyncpa [#allocation9], 0
    %28 = vsyncpa [#allocation4], 0
    %s29 = scalar_lea.sflag [#allocation4], 1
    %30 = vsyncpa %s29, 0
    loop: start=0, step=1, limit=4
    $region2: #{custom_bert_forward.1} parent=1 // loop_pre_header
      _
    $region3: #{custom_bert_forward.1} parent=1 // loop_header
      %s32 = sphi 0, %s36
      %p33 = scmp.ge.s32.totalorder %s32, 4
      %s42 = sphi 0, %s44
      %s45 = sphi 0, %s42
      %s46 = sphi 0, %s45
      %s62 = sphi 0, %s46
      %s68 = sphi 0, %s70
      %s71 = sphi 0, %s68
      %s72 = sphi 0, %s71
      %s88 = sphi 0, %s72
      %s92 = sphi 0, %s92
      %s94 = sphi 0, %s92
      %s95 = sphi 0, %s94
      %s109 = sphi 0, %s95
      %s113 = sphi 0, %s113
      %s115 = sphi 0, %s113
      %s116 = sphi 0, %s115
      %s130 = sphi 0, %s116
      %s134 = sphi 0, %s134
      %s136 = sphi 0, %s134
      %s137 = sphi 0, %s136
      %s151 = sphi 0, %s137
      %s155 = sphi 0, %s155
      %s157 = sphi 0, %s155
      %s158 = sphi 0, %s157
      %s172 = sphi 0, %s158
      %s176 = sphi 0, %s176
      %s178 = sphi 0, %s176
      %s179 = sphi 0, %s178
      %s193 = sphi 0, %s179
      %s197 = sphi 0, %s197
      %s199 = sphi 0, %s197
      %s200 = sphi 0, %s199
      %s214 = sphi 0, %s200
      %s218 = sphi 0, %s218
      %s220 = sphi 0, %s218
      %s221 = sphi 0, %s220
      %s235 = sphi 0, %s221
      %s239 = sphi 0, %s239
      %s241 = sphi 0, %s239
      %s242 = sphi 0, %s241
      %s256 = sphi 0, %s242
      %s260 = sphi 0, %s260
      %s262 = sphi 0, %s260
      %s263 = sphi 0, %s262
      %s277 = sphi 0, %s263
      %s281 = sphi 0, %s281
      %s283 = sphi 0, %s281
      %s284 = sphi 0, %s283
      %s298 = sphi 0, %s284
      %s302 = sphi 0, %s302
      %s304 = sphi 0, %s302
      %s305 = sphi 0, %s304
      %s319 = sphi 0, %s305
      %s323 = sphi 0, %s323
      %s325 = sphi 0, %s323
      %s326 = sphi 0, %s325
      %s340 = sphi 0, %s326
      %s344 = sphi 0, %s344
      %s346 = sphi 0, %s344
      %s347 = sphi 0, %s346
      %s361 = sphi 0, %s347
      %s365 = sphi 0, %s365
      %s367 = sphi 0, %s365
      %s368 = sphi 0, %s367
      %s382 = sphi 0, %s368
      %s386 = sphi 0, %s386
      %s388 = sphi 0, %s386
      %s389 = sphi 0, %s388
      %s403 = sphi 0, %s389
      %s407 = sphi 0, %s407
      %s409 = sphi 0, %s407
      %s410 = sphi 0, %s409
      %s424 = sphi 0, %s410
      %s428 = sphi 0, %s428
      %s430 = sphi 0, %s428
      %s431 = sphi 0, %s430
      %s445 = sphi 0, %s431
      %s449 = sphi 0, %s449
      %s451 = sphi 0, %s449
      %s452 = sphi 0, %s451
      %s466 = sphi 0, %s452
      %s472 = sphi 0, %s474
      %s475 = sphi 0, %s472
      %s476 = sphi 0, %s475
      %s492 = sphi 0, %s476
    $region4: #{custom_bert_forward.1} parent=1 // loop_header_branch
      %35 = sbr.rel (%p33) target = $region8
    $region5: #{custom_bert_forward.1} parent=1 // loop_body
      %s37 = ssub.s32 %s32, 1
      %s38 = ssub.s32 %s32, 2
      %s39 = sadd.s32 %s32, 1
      %s40 = ssub.s32 %s32, %s39
      %p41 = scmp.eq.s32.totalorder %s40, 0
      %s43 = sadd.s32 %s42, 1
      %s44 = scalar_select %p41, %s42, %s43
      %p47 = pneg %p41
      %p48 = scmp.eq.s32.totalorder %s32, 1
      %p49 = por %p47, %p48
      %p50 = scmp.ne.s32.totalorder %s42, %s45
      %p51 = scmp.eq.s32.totalorder %s32, 0
      %p52 = por %p50, %p51
      %p53 = scmp.ne.s32.totalorder %s42, %s45
      %p54 = scmp.eq.s32.totalorder %s37, 1
      %p55 = por %p53, %p54
      %p56 = scmp.ne.s32.totalorder %s45, %s46
      %p57 = scmp.eq.s32.totalorder %s37, 0
      %p58 = por %p56, %p57
      %p59 = scmp.ne.s32.totalorder %s45, %s46
      %p60 = scmp.eq.s32.totalorder %s38, 1
      %p61 = por %p59, %p60
      %p63 = scmp.ne.s32.totalorder %s46, %s62
      %p64 = scmp.eq.s32.totalorder %s38, 0
      %p65 = por %p63, %p64
      %s66 = ssub.s32 %s32, %s39
      %p67 = scmp.eq.s32.totalorder %s66, 0
      %s69 = sadd.s32 %s68, 1
      %s70 = scalar_select %p67, %s68, %s69
      %p73 = pneg %p67
      %p74 = scmp.eq.s32.totalorder %s32, 1
      %p75 = por %p73, %p74
      %p76 = scmp.ne.s32.totalorder %s68, %s71
      %p77 = scmp.eq.s32.totalorder %s32, 0
      %p78 = por %p76, %p77
      %p79 = scmp.ne.s32.totalorder %s68, %s71
      %p80 = scmp.eq.s32.totalorder %s37, 1
      %p81 = por %p79, %p80
      %p82 = scmp.ne.s32.totalorder %s71, %s72
      %p83 = scmp.eq.s32.totalorder %s37, 0
      %p84 = por %p82, %p83
      %p85 = scmp.ne.s32.totalorder %s71, %s72
      %p86 = scmp.eq.s32.totalorder %s38, 1
      %p87 = por %p85, %p86
      %p89 = scmp.ne.s32.totalorder %s72, %s88
      %p90 = scmp.eq.s32.totalorder %s38, 0
      %p91 = por %p89, %p90
      %s93 = sadd.s32 %s92, 1
      %p96 = scmp.eq.s32.totalorder %s32, 1
      %p97 = scmp.ne.s32.totalorder %s92, %s94
      %p98 = scmp.eq.s32.totalorder %s32, 0
      %p99 = por %p97, %p98
      %p100 = scmp.ne.s32.totalorder %s92, %s94
      %p101 = scmp.eq.s32.totalorder %s37, 1
      %p102 = por %p100, %p101
      %p103 = scmp.ne.s32.totalorder %s94, %s95
      %p104 = scmp.eq.s32.totalorder %s37, 0
      %p105 = por %p103, %p104
      %p106 = scmp.ne.s32.totalorder %s94, %s95
      %p107 = scmp.eq.s32.totalorder %s38, 1
      %p108 = por %p106, %p107
      %p110 = scmp.ne.s32.totalorder %s95, %s109
      %p111 = scmp.eq.s32.totalorder %s38, 0
      %p112 = por %p110, %p111
      %s114 = sadd.s32 %s113, 1
      %p117 = scmp.eq.s32.totalorder %s32, 1
      %p118 = scmp.ne.s32.totalorder %s113, %s115
      %p119 = scmp.eq.s32.totalorder %s32, 0
      %p120 = por %p118, %p119
      %p121 = scmp.ne.s32.totalorder %s113, %s115
      %p122 = scmp.eq.s32.totalorder %s37, 1
      %p123 = por %p121, %p122
      %p124 = scmp.ne.s32.totalorder %s115, %s116
      %p125 = scmp.eq.s32.totalorder %s37, 0
      %p126 = por %p124, %p125
      %p127 = scmp.ne.s32.totalorder %s115, %s116
      %p128 = scmp.eq.s32.totalorder %s38, 1
      %p129 = por %p127, %p128
      %p131 = scmp.ne.s32.totalorder %s116, %s130
      %p132 = scmp.eq.s32.totalorder %s38, 0
      %p133 = por %p131, %p132
      %s135 = sadd.s32 %s134, 1
      %p138 = scmp.eq.s32.totalorder %s32, 1
      %p139 = scmp.ne.s32.totalorder %s134, %s136
      %p140 = scmp.eq.s32.totalorder %s32, 0
      %p141 = por %p139, %p140
      %p142 = scmp.ne.s32.totalorder %s134, %s136
      %p143 = scmp.eq.s32.totalorder %s37, 1
      %p144 = por %p142, %p143
      %p145 = scmp.ne.s32.totalorder %s136, %s137
      %p146 = scmp.eq.s32.totalorder %s37, 0
      %p147 = por %p145, %p146
      %p148 = scmp.ne.s32.totalorder %s136, %s137
      %p149 = scmp.eq.s32.totalorder %s38, 1
      %p150 = por %p148, %p149
      %p152 = scmp.ne.s32.totalorder %s137, %s151
      %p153 = scmp.eq.s32.totalorder %s38, 0
      %p154 = por %p152, %p153
      %s156 = sadd.s32 %s155, 1
      %p159 = scmp.eq.s32.totalorder %s32, 1
      %p160 = scmp.ne.s32.totalorder %s155, %s157
      %p161 = scmp.eq.s32.totalorder %s32, 0
      %p162 = por %p160, %p161
      %p163 = scmp.ne.s32.totalorder %s155, %s157
      %p164 = scmp.eq.s32.totalorder %s37, 1
      %p165 = por %p163, %p164
      %p166 = scmp.ne.s32.totalorder %s157, %s158
      %p167 = scmp.eq.s32.totalorder %s37, 0
      %p168 = por %p166, %p167
      %p169 = scmp.ne.s32.totalorder %s157, %s158
      %p170 = scmp.eq.s32.totalorder %s38, 1
      %p171 = por %p169, %p170
      %p173 = scmp.ne.s32.totalorder %s158, %s172
      %p174 = scmp.eq.s32.totalorder %s38, 0
      %p175 = por %p173, %p174
      %s177 = sadd.s32 %s176, 1
      %p180 = scmp.eq.s32.totalorder %s32, 1
      %p181 = scmp.ne.s32.totalorder %s176, %s178
      %p182 = scmp.eq.s32.totalorder %s32, 0
      %p183 = por %p181, %p182
      %p184 = scmp.ne.s32.totalorder %s176, %s178
      %p185 = scmp.eq.s32.totalorder %s37, 1
      %p186 = por %p184, %p185
      %p187 = scmp.ne.s32.totalorder %s178, %s179
      %p188 = scmp.eq.s32.totalorder %s37, 0
      %p189 = por %p187, %p188
      %p190 = scmp.ne.s32.totalorder %s178, %s179
      %p191 = scmp.eq.s32.totalorder %s38, 1
      %p192 = por %p190, %p191
      %p194 = scmp.ne.s32.totalorder %s179, %s193
      %p195 = scmp.eq.s32.totalorder %s38, 0
      %p196 = por %p194, %p195
      %s198 = sadd.s32 %s197, 1
      %p201 = scmp.eq.s32.totalorder %s32, 1
      %p202 = scmp.ne.s32.totalorder %s197, %s199
      %p203 = scmp.eq.s32.totalorder %s32, 0
      %p204 = por %p202, %p203
      %p205 = scmp.ne.s32.totalorder %s197, %s199
      %p206 = scmp.eq.s32.totalorder %s37, 1
      %p207 = por %p205, %p206
      %p208 = scmp.ne.s32.totalorder %s199, %s200
      %p209 = scmp.eq.s32.totalorder %s37, 0
      %p210 = por %p208, %p209
      %p211 = scmp.ne.s32.totalorder %s199, %s200
      %p212 = scmp.eq.s32.totalorder %s38, 1
      %p213 = por %p211, %p212
      %p215 = scmp.ne.s32.totalorder %s200, %s214
      %p216 = scmp.eq.s32.totalorder %s38, 0
      %p217 = por %p215, %p216
      %s219 = sadd.s32 %s218, 1
      %p222 = scmp.eq.s32.totalorder %s32, 1
      %p223 = scmp.ne.s32.totalorder %s218, %s220
      %p224 = scmp.eq.s32.totalorder %s32, 0
      %p225 = por %p223, %p224
      %p226 = scmp.ne.s32.totalorder %s218, %s220
      %p227 = scmp.eq.s32.totalorder %s37, 1
      %p228 = por %p226, %p227
      %p229 = scmp.ne.s32.totalorder %s220, %s221
      %p230 = scmp.eq.s32.totalorder %s37, 0
      %p231 = por %p229, %p230
      %p232 = scmp.ne.s32.totalorder %s220, %s221
      %p233 = scmp.eq.s32.totalorder %s38, 1
      %p234 = por %p232, %p233
      %p236 = scmp.ne.s32.totalorder %s221, %s235
      %p237 = scmp.eq.s32.totalorder %s38, 0
      %p238 = por %p236, %p237
      %s240 = sadd.s32 %s239, 1
      %p243 = scmp.eq.s32.totalorder %s32, 1
      %p244 = scmp.ne.s32.totalorder %s239, %s241
      %p245 = scmp.eq.s32.totalorder %s32, 0
      %p246 = por %p244, %p245
      %p247 = scmp.ne.s32.totalorder %s239, %s241
      %p248 = scmp.eq.s32.totalorder %s37, 1
      %p249 = por %p247, %p248
      %p250 = scmp.ne.s32.totalorder %s241, %s242
      %p251 = scmp.eq.s32.totalorder %s37, 0
      %p252 = por %p250, %p251
      %p253 = scmp.ne.s32.totalorder %s241, %s242
      %p254 = scmp.eq.s32.totalorder %s38, 1
      %p255 = por %p253, %p254
      %p257 = scmp.ne.s32.totalorder %s242, %s256
      %p258 = scmp.eq.s32.totalorder %s38, 0
      %p259 = por %p257, %p258
      %s261 = sadd.s32 %s260, 1
      %p264 = scmp.eq.s32.totalorder %s32, 1
      %p265 = scmp.ne.s32.totalorder %s260, %s262
      %p266 = scmp.eq.s32.totalorder %s32, 0
      %p267 = por %p265, %p266
      %p268 = scmp.ne.s32.totalorder %s260, %s262
      %p269 = scmp.eq.s32.totalorder %s37, 1
      %p270 = por %p268, %p269
      %p271 = scmp.ne.s32.totalorder %s262, %s263
      %p272 = scmp.eq.s32.totalorder %s37, 0
      %p273 = por %p271, %p272
      %p274 = scmp.ne.s32.totalorder %s262, %s263
      %p275 = scmp.eq.s32.totalorder %s38, 1
      %p276 = por %p274, %p275
      %p278 = scmp.ne.s32.totalorder %s263, %s277
      %p279 = scmp.eq.s32.totalorder %s38, 0
      %p280 = por %p278, %p279
      %s282 = sadd.s32 %s281, 1
      %p285 = scmp.eq.s32.totalorder %s32, 1
      %p286 = scmp.ne.s32.totalorder %s281, %s283
      %p287 = scmp.eq.s32.totalorder %s32, 0
      %p288 = por %p286, %p287
      %p289 = scmp.ne.s32.totalorder %s281, %s283
      %p290 = scmp.eq.s32.totalorder %s37, 1
      %p291 = por %p289, %p290
      %p292 = scmp.ne.s32.totalorder %s283, %s284
      %p293 = scmp.eq.s32.totalorder %s37, 0
      %p294 = por %p292, %p293
      %p295 = scmp.ne.s32.totalorder %s283, %s284
      %p296 = scmp.eq.s32.totalorder %s38, 1
      %p297 = por %p295, %p296
      %p299 = scmp.ne.s32.totalorder %s284, %s298
      %p300 = scmp.eq.s32.totalorder %s38, 0
      %p301 = por %p299, %p300
      %s303 = sadd.s32 %s302, 1
      %p306 = scmp.eq.s32.totalorder %s32, 1
      %p307 = scmp.ne.s32.totalorder %s302, %s304
      %p308 = scmp.eq.s32.totalorder %s32, 0
      %p309 = por %p307, %p308
      %p310 = scmp.ne.s32.totalorder %s302, %s304
      %p311 = scmp.eq.s32.totalorder %s37, 1
      %p312 = por %p310, %p311
      %p313 = scmp.ne.s32.totalorder %s304, %s305
      %p314 = scmp.eq.s32.totalorder %s37, 0
      %p315 = por %p313, %p314
      %p316 = scmp.ne.s32.totalorder %s304, %s305
      %p317 = scmp.eq.s32.totalorder %s38, 1
      %p318 = por %p316, %p317
      %p320 = scmp.ne.s32.totalorder %s305, %s319
      %p321 = scmp.eq.s32.totalorder %s38, 0
      %p322 = por %p320, %p321
      %s324 = sadd.s32 %s323, 1
      %p327 = scmp.eq.s32.totalorder %s32, 1
      %p328 = scmp.ne.s32.totalorder %s323, %s325
      %p329 = scmp.eq.s32.totalorder %s32, 0
      %p330 = por %p328, %p329
      %p331 = scmp.ne.s32.totalorder %s323, %s325
      %p332 = scmp.eq.s32.totalorder %s37, 1
      %p333 = por %p331, %p332
      %p334 = scmp.ne.s32.totalorder %s325, %s326
      %p335 = scmp.eq.s32.totalorder %s37, 0
      %p336 = por %p334, %p335
      %p337 = scmp.ne.s32.totalorder %s325, %s326
      %p338 = scmp.eq.s32.totalorder %s38, 1
      %p339 = por %p337, %p338
      %p341 = scmp.ne.s32.totalorder %s326, %s340
      %p342 = scmp.eq.s32.totalorder %s38, 0
      %p343 = por %p341, %p342
      %s345 = sadd.s32 %s344, 1
      %p348 = scmp.eq.s32.totalorder %s32, 1
      %p349 = scmp.ne.s32.totalorder %s344, %s346
      %p350 = scmp.eq.s32.totalorder %s32, 0
      %p351 = por %p349, %p350
      %p352 = scmp.ne.s32.totalorder %s344, %s346
      %p353 = scmp.eq.s32.totalorder %s37, 1
      %p354 = por %p352, %p353
      %p355 = scmp.ne.s32.totalorder %s346, %s347
      %p356 = scmp.eq.s32.totalorder %s37, 0
      %p357 = por %p355, %p356
      %p358 = scmp.ne.s32.totalorder %s346, %s347
      %p359 = scmp.eq.s32.totalorder %s38, 1
      %p360 = por %p358, %p359
      %p362 = scmp.ne.s32.totalorder %s347, %s361
      %p363 = scmp.eq.s32.totalorder %s38, 0
      %p364 = por %p362, %p363
      %s366 = sadd.s32 %s365, 1
      %p369 = scmp.eq.s32.totalorder %s32, 1
      %p370 = scmp.ne.s32.totalorder %s365, %s367
      %p371 = scmp.eq.s32.totalorder %s32, 0
      %p372 = por %p370, %p371
      %p373 = scmp.ne.s32.totalorder %s365, %s367
      %p374 = scmp.eq.s32.totalorder %s37, 1
      %p375 = por %p373, %p374
      %p376 = scmp.ne.s32.totalorder %s367, %s368
      %p377 = scmp.eq.s32.totalorder %s37, 0
      %p378 = por %p376, %p377
      %p379 = scmp.ne.s32.totalorder %s367, %s368
      %p380 = scmp.eq.s32.totalorder %s38, 1
      %p381 = por %p379, %p380
      %p383 = scmp.ne.s32.totalorder %s368, %s382
      %p384 = scmp.eq.s32.totalorder %s38, 0
      %p385 = por %p383, %p384
      %s387 = sadd.s32 %s386, 1
      %p390 = scmp.eq.s32.totalorder %s32, 1
      %p391 = scmp.ne.s32.totalorder %s386, %s388
      %p392 = scmp.eq.s32.totalorder %s32, 0
      %p393 = por %p391, %p392
      %p394 = scmp.ne.s32.totalorder %s386, %s388
      %p395 = scmp.eq.s32.totalorder %s37, 1
      %p396 = por %p394, %p395
      %p397 = scmp.ne.s32.totalorder %s388, %s389
      %p398 = scmp.eq.s32.totalorder %s37, 0
      %p399 = por %p397, %p398
      %p400 = scmp.ne.s32.totalorder %s388, %s389
      %p401 = scmp.eq.s32.totalorder %s38, 1
      %p402 = por %p400, %p401
      %p404 = scmp.ne.s32.totalorder %s389, %s403
      %p405 = scmp.eq.s32.totalorder %s38, 0
      %p406 = por %p404, %p405
      %s408 = sadd.s32 %s407, 1
      %p411 = scmp.eq.s32.totalorder %s32, 1
      %p412 = scmp.ne.s32.totalorder %s407, %s409
      %p413 = scmp.eq.s32.totalorder %s32, 0
      %p414 = por %p412, %p413
      %p415 = scmp.ne.s32.totalorder %s407, %s409
      %p416 = scmp.eq.s32.totalorder %s37, 1
      %p417 = por %p415, %p416
      %p418 = scmp.ne.s32.totalorder %s409, %s410
      %p419 = scmp.eq.s32.totalorder %s37, 0
      %p420 = por %p418, %p419
      %p421 = scmp.ne.s32.totalorder %s409, %s410
      %p422 = scmp.eq.s32.totalorder %s38, 1
      %p423 = por %p421, %p422
      %p425 = scmp.ne.s32.totalorder %s410, %s424
      %p426 = scmp.eq.s32.totalorder %s38, 0
      %p427 = por %p425, %p426
      %s429 = sadd.s32 %s428, 1
      %p432 = scmp.eq.s32.totalorder %s32, 1
      %p433 = scmp.ne.s32.totalorder %s428, %s430
      %p434 = scmp.eq.s32.totalorder %s32, 0
      %p435 = por %p433, %p434
      %p436 = scmp.ne.s32.totalorder %s428, %s430
      %p437 = scmp.eq.s32.totalorder %s37, 1
      %p438 = por %p436, %p437
      %p439 = scmp.ne.s32.totalorder %s430, %s431
      %p440 = scmp.eq.s32.totalorder %s37, 0
      %p441 = por %p439, %p440
      %p442 = scmp.ne.s32.totalorder %s430, %s431
      %p443 = scmp.eq.s32.totalorder %s38, 1
      %p444 = por %p442, %p443
      %p446 = scmp.ne.s32.totalorder %s431, %s445
      %p447 = scmp.eq.s32.totalorder %s38, 0
      %p448 = por %p446, %p447
      %s450 = sadd.s32 %s449, 1
      %p453 = scmp.eq.s32.totalorder %s32, 1
      %p454 = scmp.ne.s32.totalorder %s449, %s451
      %p455 = scmp.eq.s32.totalorder %s32, 0
      %p456 = por %p454, %p455
      %p457 = scmp.ne.s32.totalorder %s449, %s451
      %p458 = scmp.eq.s32.totalorder %s37, 1
      %p459 = por %p457, %p458
      %p460 = scmp.ne.s32.totalorder %s451, %s452
      %p461 = scmp.eq.s32.totalorder %s37, 0
      %p462 = por %p460, %p461
      %p463 = scmp.ne.s32.totalorder %s451, %s452
      %p464 = scmp.eq.s32.totalorder %s38, 1
      %p465 = por %p463, %p464
      %p467 = scmp.ne.s32.totalorder %s452, %s466
      %p468 = scmp.eq.s32.totalorder %s38, 0
      %p469 = por %p467, %p468
      %s470 = ssub.s32 %s32, %s39
      %p471 = scmp.eq.s32.totalorder %s470, 0
      %s473 = sadd.s32 %s472, 1
      %s474 = scalar_select %p471, %s472, %s473
      %p477 = pneg %p471
      %p478 = scmp.eq.s32.totalorder %s32, 1
      %p479 = por %p477, %p478
      %p480 = scmp.ne.s32.totalorder %s472, %s475
      %p481 = scmp.eq.s32.totalorder %s32, 0
      %p482 = por %p480, %p481
      %p483 = scmp.ne.s32.totalorder %s472, %s475
      %p484 = scmp.eq.s32.totalorder %s37, 1
      %p485 = por %p483, %p484
      %p486 = scmp.ne.s32.totalorder %s475, %s476
      %p487 = scmp.eq.s32.totalorder %s37, 0
      %p488 = por %p486, %p487
      %p489 = scmp.ne.s32.totalorder %s475, %s476
      %p490 = scmp.eq.s32.totalorder %s38, 1
      %p491 = por %p489, %p490
      %p493 = scmp.ne.s32.totalorder %s476, %s492
      %p494 = scmp.eq.s32.totalorder %s38, 0
      %p495 = por %p493, %p494
      %p496 = scmp.le.s32.totalorder 1, %s32
      %p497 = scmp.lt.s32.totalorder %s32, 3
      %p498 = pnand %p496, %p497
      %p499 = pneg %p498
      // Predicated region
      $region9: #{custom_bert_forward.1} parent=5 // pred_check
        _
      $region10: #{custom_bert_forward.1} parent=5 // pred_check_branch
        %501 = sbr.rel (%p498) target = $region12
      $region11: #{custom_bert_forward.1} parent=5 // pred_region
        %s502 = ssub.s32 %s32, 1
        // Predicated region
        $region13: #{custom_bert_forward.1} parent=11 // pred_check
          %p503 = pneg %p105
        $region14: #{custom_bert_forward.1} parent=11 // pred_check_branch
          %505 = sbr.rel (%p503) target = $region16
        $region15: #{custom_bert_forward.1} parent=11 // pred_region
          _
        $region16: #{custom_bert_forward.1} parent=11 // pred_fallthru
          _
        // Predicated region
        $region17: #{custom_bert_forward.1} parent=11 // pred_check
          %p506 = pneg %p126
        $region18: #{custom_bert_forward.1} parent=11 // pred_check_branch
          %508 = sbr.rel (%p506) target = $region20
        $region19: #{custom_bert_forward.1} parent=11 // pred_region
          _
        $region20: #{custom_bert_forward.1} parent=11 // pred_fallthru
          _
        // Predicated region
        $region21: #{custom_bert_forward.1} parent=11 // pred_check
          %p509 = pneg %p147
        $region22: #{custom_bert_forward.1} parent=11 // pred_check_branch
          %511 = sbr.rel (%p509) target = $region24
        $region23: #{custom_bert_forward.1} parent=11 // pred_region
          _
        $region24: #{custom_bert_forward.1} parent=11 // pred_fallthru
          _
        // Predicated region
        $region25: #{custom_bert_forward.1} parent=11 // pred_check
          %p512 = pneg %p168
        $region26: #{custom_bert_forward.1} parent=11 // pred_check_branch
          %514 = sbr.rel (%p512) target = $region28
        $region27: #{custom_bert_forward.1} parent=11 // pred_region
          _
        $region28: #{custom_bert_forward.1} parent=11 // pred_fallthru
          _
        // Predicated region
        $region29: #{custom_bert_forward.1} parent=11 // pred_check
          %p515 = pneg %p189
        $region30: #{custom_bert_forward.1} parent=11 // pred_check_branch
          %517 = sbr.rel (%p515) target = $region32
        $region31: #{custom_bert_forward.1} parent=11 // pred_region
          %s519 = ssub.s32 24576, 24576
          %520 = vsyncadd [#allocation3], %s519
          %s521 = sshll.u32 [#allocation2], 4
          %s522 = int_to_ptr.vmem [resolvable:$true] %s521
          %527 = dma.hbm_to_vmem [thread:$0]  %s6, 24576, %s522, [#allocation3], 384, 384, 24
        $region32: #{custom_bert_forward.1} parent=11 // pred_fallthru
          _
        // Predicated region
        $region33: #{custom_bert_forward.1} parent=11 // pred_check
          %p528 = pneg %p210
        $region34: #{custom_bert_forward.1} parent=11 // pred_check_branch
          %530 = sbr.rel (%p528) target = $region36
        $region35: #{custom_bert_forward.1} parent=11 // pred_region
          _
        $region36: #{custom_bert_forward.1} parent=11 // pred_fallthru
          _
        // Predicated region
        $region37: #{custom_bert_forward.1} parent=11 // pred_check
          %p531 = pneg %p231
        $region38: #{custom_bert_forward.1} parent=11 // pred_check_branch
          %533 = sbr.rel (%p531) target = $region40
        $region39: #{custom_bert_forward.1} parent=11 // pred_region
          %s535 = ssub.s32 8192, 8192
          %536 = vsyncadd [#allocation6], %s535
          %s537 = sshll.u32 [#allocation5], 4
          %s538 = int_to_ptr.vmem [resolvable:$true] %s537
          %543 = dma.hbm_to_vmem [thread:$0]  %s8, 8192, %s538, [#allocation6], 128, 128, 8
        $region40: #{custom_bert_forward.1} parent=11 // pred_fallthru
          _
        // Predicated region
        $region41: #{custom_bert_forward.1} parent=11 // pred_check
          %p544 = pneg %p252
        $region42: #{custom_bert_forward.1} parent=11 // pred_check_branch
          %546 = sbr.rel (%p544) target = $region44
        $region43: #{custom_bert_forward.1} parent=11 // pred_region
          _
        $region44: #{custom_bert_forward.1} parent=11 // pred_fallthru
          _
        // Predicated region
        $region45: #{custom_bert_forward.1} parent=11 // pred_check
          %p547 = pneg %p273
        $region46: #{custom_bert_forward.1} parent=11 // pred_check_branch
          %549 = sbr.rel (%p547) target = $region48
        $region47: #{custom_bert_forward.1} parent=11 // pred_region
          _
        $region48: #{custom_bert_forward.1} parent=11 // pred_fallthru
          _
        // Predicated region
        $region49: #{custom_bert_forward.1} parent=11 // pred_check
          %p550 = pneg %p294
        $region50: #{custom_bert_forward.1} parent=11 // pred_check_branch
          %552 = sbr.rel (%p550) target = $region52
        $region51: #{custom_bert_forward.1} parent=11 // pred_region
          _
        $region52: #{custom_bert_forward.1} parent=11 // pred_fallthru
          _
        // Predicated region
        $region53: #{custom_bert_forward.1} parent=11 // pred_check
          %p553 = pneg %p315
        $region54: #{custom_bert_forward.1} parent=11 // pred_check_branch
          %555 = sbr.rel (%p553) target = $region56
        $region55: #{custom_bert_forward.1} parent=11 // pred_region
          %s557 = ssub.s32 16384, 16384
          %558 = vsyncadd [#allocation6], %s557
          %s559 = sshll.u32 [#allocation7], 4
          %s560 = int_to_ptr.vmem [resolvable:$true] %s559
          %565 = dma.hbm_to_vmem [thread:$0]  %s12, 16384, %s560, [#allocation6], 256, 256, 16
        $region56: #{custom_bert_forward.1} parent=11 // pred_fallthru
          _
        // Predicated region
        $region57: #{custom_bert_forward.1} parent=11 // pred_check
          %p566 = pneg %p336
        $region58: #{custom_bert_forward.1} parent=11 // pred_check_branch
          %568 = sbr.rel (%p566) target = $region60
        $region59: #{custom_bert_forward.1} parent=11 // pred_region
          _
        $region60: #{custom_bert_forward.1} parent=11 // pred_fallthru
          _
        // Predicated region
        $region61: #{custom_bert_forward.1} parent=11 // pred_check
          %p569 = pneg %p357
        $region62: #{custom_bert_forward.1} parent=11 // pred_check_branch
          %571 = sbr.rel (%p569) target = $region64
        $region63: #{custom_bert_forward.1} parent=11 // pred_region
          %s573 = ssub.s32 16384, 16384
          %574 = vsyncadd [#allocation9], %s573
          %s575 = sshll.u32 [#allocation8], 4
          %s576 = int_to_ptr.vmem [resolvable:$true] %s575
          %581 = dma.hbm_to_vmem [thread:$0]  %s14, 16384, %s576, [#allocation9], 128, 128, 8
        $region64: #{custom_bert_forward.1} parent=11 // pred_fallthru
          _
        // Predicated region
        $region65: #{custom_bert_forward.1} parent=11 // pred_check
          %p582 = pneg %p378
        $region66: #{custom_bert_forward.1} parent=11 // pred_check_branch
          %584 = sbr.rel (%p582) target = $region68
        $region67: #{custom_bert_forward.1} parent=11 // pred_region
          _
        $region68: #{custom_bert_forward.1} parent=11 // pred_fallthru
          _
        // Predicated region
        $region69: #{custom_bert_forward.1} parent=11 // pred_check
          %p585 = pneg %p399
        $region70: #{custom_bert_forward.1} parent=11 // pred_check_branch
          %587 = sbr.rel (%p585) target = $region72
        $region71: #{custom_bert_forward.1} parent=11 // pred_region
          _
        $region72: #{custom_bert_forward.1} parent=11 // pred_fallthru
          _
        // Predicated region
        $region73: #{custom_bert_forward.1} parent=11 // pred_check
          %p588 = pneg %p420
        $region74: #{custom_bert_forward.1} parent=11 // pred_check_branch
          %590 = sbr.rel (%p588) target = $region76
        $region75: #{custom_bert_forward.1} parent=11 // pred_region
          _
        $region76: #{custom_bert_forward.1} parent=11 // pred_fallthru
          _
        // Predicated region
        $region77: #{custom_bert_forward.1} parent=11 // pred_check
          %p591 = pneg %p441
        $region78: #{custom_bert_forward.1} parent=11 // pred_check_branch
          %593 = sbr.rel (%p591) target = $region80
        $region79: #{custom_bert_forward.1} parent=11 // pred_region
          _
        $region80: #{custom_bert_forward.1} parent=11 // pred_fallthru
          _
        // Predicated region
        $region81: #{custom_bert_forward.1} parent=11 // pred_check
          %p594 = pneg %p462
        $region82: #{custom_bert_forward.1} parent=11 // pred_check_branch
          %596 = sbr.rel (%p594) target = $region84
        $region83: #{custom_bert_forward.1} parent=11 // pred_region
          _
        $region84: #{custom_bert_forward.1} parent=11 // pred_fallthru
          _
      $region12: #{custom_bert_forward.1} parent=5 // pred_fallthru
        _
      %p597 = scmp.lt.s32.totalorder %s32, 2
      // Predicated region
      $region85: #{custom_bert_forward.1} parent=5 // pred_check
        %p598 = pneg %p597
      $region86: #{custom_bert_forward.1} parent=5 // pred_check_branch
        %600 = sbr.rel (%p598) target = $region88
      $region87: #{custom_bert_forward.1} parent=5 // pred_region
        // Predicated region
        $region89: #{custom_bert_forward.1} parent=87 // pred_check
          %p601 = pneg %p52
        $region90: #{custom_bert_forward.1} parent=87 // pred_check_branch
          %603 = sbr.rel (%p601) target = $region92
        $region91: #{custom_bert_forward.1} parent=87 // pred_region
          %s604 = smul.u32 2, %s32
          %p605 = scmp.lt.s32.totalorder %s604, 3
          %s606 = scalar_select %p605, %s604, 3
          %s607 = smul.addr %s606, 4
          %s608 = scalar_lea.vmem %s0, %s607
          %s609 = smul.u32 2, %s32
        $region92: #{custom_bert_forward.1} parent=87 // pred_fallthru
          _
        // Predicated region
        $region93: #{custom_bert_forward.1} parent=87 // pred_check
          %p610 = pneg %p78
        $region94: #{custom_bert_forward.1} parent=87 // pred_check_branch
          %612 = sbr.rel (%p610) target = $region96
        $region95: #{custom_bert_forward.1} parent=87 // pred_region
          %p613 = scmp.lt.s32.totalorder %s32, 1
          %s614 = scalar_select %p613, %s32, 1
          %s615 = smul.addr %s614, 2
          %s616 = scalar_lea.vmem %s1, %s615
        $region96: #{custom_bert_forward.1} parent=87 // pred_fallthru
          _
      $region88: #{custom_bert_forward.1} parent=5 // pred_fallthru
        _
      %p617 = scmp.le.s32.totalorder 1, %s32
      %p618 = scmp.lt.s32.totalorder %s32, 3
      %p619 = pnand %p617, %p618
      %p620 = pneg %p619
      // Predicated region
      $region97: #{custom_bert_forward.1} parent=5 // pred_check
        _
      $region98: #{custom_bert_forward.1} parent=5 // pred_check_branch
        %622 = sbr.rel (%p619) target = $region100
      $region99: #{custom_bert_forward.1} parent=5 // pred_region
        %s623 = ssub.s32 %s32, 1
        // Predicated region
        $region101: #{custom_bert_forward.1} parent=99 // pred_check
          %p624 = pneg %p189
        $region102: #{custom_bert_forward.1} parent=99 // pred_check_branch
          %626 = sbr.rel (%p624) target = $region104
        $region103: #{custom_bert_forward.1} parent=99 // pred_region
          %627 = dma.done [#allocation3], 24576
        $region104: #{custom_bert_forward.1} parent=99 // pred_fallthru
          _
        // Predicated region
        $region105: #{custom_bert_forward.1} parent=99 // pred_check
          %p628 = pneg %p231
        $region106: #{custom_bert_forward.1} parent=99 // pred_check_branch
          %630 = sbr.rel (%p628) target = $region108
        $region107: #{custom_bert_forward.1} parent=99 // pred_region
          %631 = dma.done [#allocation6], 8192
        $region108: #{custom_bert_forward.1} parent=99 // pred_fallthru
          _
        // Predicated region
        $region109: #{custom_bert_forward.1} parent=99 // pred_check
          %p632 = pneg %p315
        $region110: #{custom_bert_forward.1} parent=99 // pred_check_branch
          %634 = sbr.rel (%p632) target = $region112
        $region111: #{custom_bert_forward.1} parent=99 // pred_region
          %635 = dma.done [#allocation6], 16384
        $region112: #{custom_bert_forward.1} parent=99 // pred_fallthru
          _
        // Predicated region
        $region113: #{custom_bert_forward.1} parent=99 // pred_check
          %p636 = pneg %p357
        $region114: #{custom_bert_forward.1} parent=99 // pred_check_branch
          %638 = sbr.rel (%p636) target = $region116
        $region115: #{custom_bert_forward.1} parent=99 // pred_region
          %639 = dma.done [#allocation9], 16384
        $region116: #{custom_bert_forward.1} parent=99 // pred_fallthru
          _
        %s640 = smul.u32 2, %s37
        %p641 = scmp.lt.s32.totalorder %s640, 3
        %s642 = scalar_select %p641, %s640, 3
        %s643 = smul.addr %s642, 4
        %s644 = scalar_lea.vmem %s0, %s643
        %p645 = pneg %p58
        %p646 = pneg %p55
        %p647 = scmp.lt.s32.totalorder %s37, 1
        %s648 = scalar_select %p647, %s37, 1
        %s649 = smul.addr %s648, 2
        %s650 = scalar_lea.vmem %s1, %s649
        %p651 = pneg %p84
        %p652 = pneg %p81
        %p653 = pneg %p105
        %p654 = pneg %p102
        %p655 = pneg %p126
        %p656 = pneg %p123
        %p657 = pneg %p147
        %p658 = pneg %p144
        %p659 = pneg %p168
        %p660 = pneg %p165
        %p661 = pneg %p189
        %p662 = pneg %p186
        %p663 = pneg %p210
        %p664 = pneg %p207
        %p665 = pneg %p231
        %p666 = pneg %p228
        %p667 = pneg %p252
        %p668 = pneg %p249
        %p669 = pneg %p273
        %p670 = pneg %p270
        %p671 = pneg %p294
        %p672 = pneg %p291
        %p673 = pneg %p315
        %p674 = pneg %p312
        %p675 = pneg %p336
        %p676 = pneg %p333
        %p677 = pneg %p357
        %p678 = pneg %p354
        %p679 = pneg %p378
        %p680 = pneg %p375
        %p681 = pneg %p399
        %p682 = pneg %p396
        %p683 = pneg %p420
        %p684 = pneg %p417
        %p685 = pneg %p441
        %p686 = pneg %p438
        %p687 = pneg %p462
        %p688 = pneg %p459
        %p689 = pneg %p488
        %p690 = pneg %p485
        %s691 = sand.u32 %s475, 1
        %s692 = scalar_lea.sflag [#allocation4], %s691
        %s693 = sand.u32 %s475, 1
        %s694 = smul.addr %s693, 2
        %s695 = scalar_lea.vmem [#allocation10], %s694
        %s696 = smul.u32 2, %s37
        %p697 = scmp.lt.s32.totalorder %s696, 3
        %s698 = scalar_select %p697, %s696, 3
        %s699 = smul.addr %s698, 4
        %s700 = scalar_lea.vmem %s0, %s699
        %s701 = smul.u32 2, %s37
        %p702 = scmp.lt.s32.totalorder %s37, 1
        %s703 = scalar_select %p702, %s37, 1
        %s704 = smul.addr %s703, 2
        %s705 = scalar_lea.vmem %s1, %s704
        %v707 = vld [vmem:[%s700] sm:$0xf]
        %v708 = vld [vmem:[%s700 + $0x4] sm:$0xf]
        %v709 = vld [vmem:[%s2] sm:$0xff]
        %v710 = vld [vmem:[%s2 + $0x8] sm:$0xff]
        %v711 = vld [vmem:[%s2 + $0x10] sm:$0xff]
        %v712 = vld [vmem:[%s2 + $0x18] sm:$0xff]
        %v713 = vld [vmem:[%s2 + $0x20] sm:$0xff]
        %v714 = vld [vmem:[%s2 + $0x28] sm:$0xff]
        %v715 = vld [vmem:[%s2 + $0x30] sm:$0xff]
        %v716 = vld [vmem:[%s2 + $0x38] sm:$0xff]
        %v717 = vld [vmem:[%s3] sm:$0xff]
        %v718 = vld [vmem:[%s3 + $0x8] sm:$0xff]
        %v719 = vld [vmem:[%s3 + $0x10] sm:$0xff]
        %v720 = vld [vmem:[%s3 + $0x18] sm:$0xff]
        %v723 = vunpack.c.l.b16 %v707
        %v724 = vunpack.c.l.b16 %v708
        %v725 = vpack.c.b16 %v724, %v723
        %v734 = vunpack.c.l.b16 %v709
        %v735 = vunpack.c.h.b16 %v709
        %v736 = vunpack.c.l.b16 %v710
        %v737 = vunpack.c.h.b16 %v710
        %v738 = vunpack.c.l.b16 %v711
        %v739 = vunpack.c.h.b16 %v711
        %v740 = vunpack.c.l.b16 %v712
        %v741 = vunpack.c.h.b16 %v712
        %v742 = vunpack.c.l.b16 %v713
        %v743 = vunpack.c.h.b16 %v713
        %v744 = vunpack.c.l.b16 %v714
        %v745 = vunpack.c.h.b16 %v714
        %v746 = vunpack.c.l.b16 %v715
        %v747 = vunpack.c.h.b16 %v715
        %v748 = vunpack.c.l.b16 %v716
        %v749 = vunpack.c.h.b16 %v716
        %v750 = vpack.c.b16 %v736, %v734
        %v751 = vpack.c.b16 %v737, %v735
        %v752 = vpack.c.b16 %v740, %v738
        %v753 = vpack.c.b16 %v741, %v739
        %v754 = vpack.c.b16 %v744, %v742
        %v755 = vpack.c.b16 %v745, %v743
        %v756 = vpack.c.b16 %v748, %v746
        %v757 = vpack.c.b16 %v749, %v747
        %vm766 = vcmask 523264
        %v768 = vsel %vm766, %v725, 0
        %770 = vmatprep.subr.bf16.mxu0 %v751
        %771 = vmatpush1.bf16.msra.mxu0 %v750
        %772 = vmatprep.subr.bf16.mxu0 %v753
        %773 = vmatpush1.bf16.msra.mxu0 %v752
        %774 = vmatprep.subr.bf16.mxu0 %v755
        %775 = vmatpush1.bf16.msra.mxu0 %v754
        %776 = vmatprep.subr.bf16.mxu0 %v757
        %777 = vmatpush1.bf16.msra.mxu0 %v756
        %778 = vmatprep.subr.bf16.mxu0 0
        %779 = vmatpush1.bf16.msra.mxu0 0
        %780 = vmatprep.subr.bf16.mxu0 0
        %781 = vmatpush1.bf16.msra.mxu0 0
        %782 = vmatprep.subr.bf16.mxu0 0
        %783 = vmatpush1.bf16.msra.mxu0 0
        %784 = vmatprep.subr.bf16.mxu0 0
        %785 = vmatpush1.bf16.msra.mxu0 0
        %786 = vmatprep.subr.bf16.mxu0 0
        %787 = vmatpush1.bf16.msra.mxu0 0
        %788 = vmatprep.subr.bf16.mxu0 0
        %789 = vmatpush1.bf16.msra.mxu0 0
        %790 = vmatprep.subr.bf16.mxu0 0
        %791 = vmatpush1.bf16.msra.mxu0 0
        %792 = vmatprep.subr.bf16.mxu0 0
        %793 = vmatpush1.bf16.msra.mxu0 0
        %794 = vmatprep.subr.bf16.mxu0 0
        %795 = vmatpush1.bf16.msra.mxu0 0
        %796 = vmatprep.subr.bf16.mxu0 0
        %797 = vmatpush1.bf16.msra.mxu0 0
        %798 = vmatprep.subr.bf16.mxu0 0
        %799 = vmatpush1.bf16.msra.mxu0 0
        %800 = vmatprep.subr.bf16.mxu0 0
        %801 = vmatpush1.bf16.msra.mxu0 0
        %802 = vmatprep.mubr.bf16.mxu0 0
        %803 = vmatmul.mubr.bf16.gmra.mrb[0].mxu0 %v768
        %v804 = vpop.f32.mrb[0].mxu0
        %v805 = vadd.f32 %v717, %v804
        %v806 = vpop.f32.mrb[0].mxu0
        %v807 = vadd.f32 %v718, %v806
        %v808 = vpop.f32.mrb[0].mxu0
        %v809 = vadd.f32 %v719, %v808
        %v810 = vpop.f32.mrb[0].mxu0
        %v811 = vadd.f32 %v720, %v810
        %812 = vdwg.mxu0
        %v813 = vld [vmem:[%s4] sm:$0x3]
        %v814 = vld [vmem:[%s5] sm:$0x3]
        %v815 = vadd.f32 %v805, %v807
        %816 = vadd.xlane.f32.xlu0 %v815
        %v817 = vpop.xlane.xlu0 %816
        %v818 = vadd.f32 %v809, %v811
        %819 = vadd.xlane.f32.xlu0 %v818
        %v820 = vpop.xlane.xlu0 %819
        %v821 = vrcp.pop 256.0
        %v822 = vmul.f32 %v817, %v821
        %v823 = vmul.f32 %v820, %v821
        %v824 = vsub.f32 %v805, %v822
        %v825 = vsub.f32 %v807, %v822
        %v826 = vsub.f32 %v809, %v823
        %v827 = vsub.f32 %v811, %v823
        %v828 = vmul.f32 %v824, %v824
        %v829 = vmul.f32 %v825, %v825
        %v830 = vmul.f32 %v826, %v826
        %v831 = vmul.f32 %v827, %v827
        %v832 = vadd.f32 %v828, %v829
        %833 = vadd.xlane.f32.xlu0 %v832
        %v834 = vpop.xlane.xlu0 %833
        %v835 = vadd.f32 %v830, %v831
        %836 = vadd.xlane.f32.xlu0 %v835
        %v837 = vpop.xlane.xlu0 %836
        %v838 = vmul.f32 %v834, %v821
        %v839 = vmul.f32 %v837, %v821
        %v840 = vadd.f32 %v838, 1e-12
        %v841 = vadd.f32 %v839, 1e-12
        %v842 = vrsqrt.pop %v840
        %v843 = vrsqrt.pop %v841
        %v844 = vmul.f32 %v824, %v842
        %v845 = vmul.f32 %v825, %v842
        %v846 = vmul.f32 %v826, %v843
        %v847 = vmul.f32 %v827, %v843
        %v849 = vlaneseq
        %v850 = vshrl.u32 %v849, 7
        %v851 = vsub.s32 0, %v850
        %v852 = vrot.slane %v813, %v851
        %v853 = vlaneseq
        %v854 = vshrl.u32 %v853, 7
        %v855 = vsub.s32 1, %v854
        %v856 = vrot.slane %v813, %v855
        %v859 = vmul.f32 %v844, %v852
        %v860 = vmul.f32 %v845, %v856
        %v861 = vmul.f32 %v846, %v852
        %v862 = vmul.f32 %v847, %v856
        %v864 = vlaneseq
        %v865 = vshrl.u32 %v864, 7
        %v866 = vsub.s32 0, %v865
        %v867 = vrot.slane %v814, %v866
        %v868 = vlaneseq
        %v869 = vshrl.u32 %v868, 7
        %v870 = vsub.s32 1, %v869
        %v871 = vrot.slane %v814, %v870
        %v874 = vadd.f32 %v859, %v867
        %v875 = vadd.f32 %v860, %v871
        %v876 = vadd.f32 %v861, %v867
        %v877 = vadd.f32 %v862, %v871
        %v878 = vld [vmem:[%s705] sm:$0x3]
        %v879 = vpack.c.bf16 %v876, %v874
        %v880 = vpack.c.bf16 %v877, %v875
        %v881 = vld [vmem:[#allocation2] sm:$0xff]
        %v882 = vld [vmem:[#allocation2 + $0x8] sm:$0xff]
        %v883 = vld [vmem:[#allocation2 + $0x10] sm:$0xff]
        %v884 = vld [vmem:[#allocation2 + $0x18] sm:$0xff]
        %v885 = vld [vmem:[#allocation2 + $0x20] sm:$0xff]
        %v886 = vld [vmem:[#allocation2 + $0x28] sm:$0xff]
        %v887 = vld [vmem:[#allocation2 + $0x30] sm:$0xff]
        %v888 = vld [vmem:[#allocation2 + $0x38] sm:$0xff]
        %v889 = vld [vmem:[#allocation2 + $0x40] sm:$0xff]
        %v890 = vld [vmem:[#allocation2 + $0x48] sm:$0xff]
        %v891 = vld [vmem:[#allocation2 + $0x50] sm:$0xff]
        %v892 = vld [vmem:[#allocation2 + $0x58] sm:$0xff]
        %v893 = vld [vmem:[#allocation2 + $0x60] sm:$0xff]
        %v894 = vld [vmem:[#allocation2 + $0x68] sm:$0xff]
        %v895 = vld [vmem:[#allocation2 + $0x70] sm:$0xff]
        %v896 = vld [vmem:[#allocation2 + $0x78] sm:$0xff]
        %v897 = vld [vmem:[#allocation2 + $0x80] sm:$0xff]
        %v898 = vld [vmem:[#allocation2 + $0x88] sm:$0xff]
        %v899 = vld [vmem:[#allocation2 + $0x90] sm:$0xff]
        %v900 = vld [vmem:[#allocation2 + $0x98] sm:$0xff]
        %v901 = vld [vmem:[#allocation2 + $0xa0] sm:$0xff]
        %v902 = vld [vmem:[#allocation2 + $0xa8] sm:$0xff]
        %v903 = vld [vmem:[#allocation2 + $0xb0] sm:$0xff]
        %v904 = vld [vmem:[#allocation2 + $0xb8] sm:$0xff]
        %v905 = vld [vmem:[#allocation2 + $0xc0] sm:$0xff]
        %v906 = vld [vmem:[#allocation2 + $0xc8] sm:$0xff]
        %v907 = vld [vmem:[#allocation2 + $0xd0] sm:$0xff]
        %v908 = vld [vmem:[#allocation2 + $0xd8] sm:$0xff]
        %v909 = vld [vmem:[#allocation2 + $0xe0] sm:$0xff]
        %v910 = vld [vmem:[#allocation2 + $0xe8] sm:$0xff]
        %v911 = vld [vmem:[#allocation2 + $0xf0] sm:$0xff]
        %v912 = vld [vmem:[#allocation2 + $0xf8] sm:$0xff]
        %v913 = vld [vmem:[#allocation2 + $0x100] sm:$0xff]
        %v914 = vld [vmem:[#allocation2 + $0x108] sm:$0xff]
        %v915 = vld [vmem:[#allocation2 + $0x110] sm:$0xff]
        %v916 = vld [vmem:[#allocation2 + $0x118] sm:$0xff]
        %v917 = vld [vmem:[#allocation2 + $0x120] sm:$0xff]
        %v918 = vld [vmem:[#allocation2 + $0x128] sm:$0xff]
        %v919 = vld [vmem:[#allocation2 + $0x130] sm:$0xff]
        %v920 = vld [vmem:[#allocation2 + $0x138] sm:$0xff]
        %v921 = vld [vmem:[#allocation2 + $0x140] sm:$0xff]
        %v922 = vld [vmem:[#allocation2 + $0x148] sm:$0xff]
        %v923 = vld [vmem:[#allocation2 + $0x150] sm:$0xff]
        %v924 = vld [vmem:[#allocation2 + $0x158] sm:$0xff]
        %v925 = vld [vmem:[#allocation2 + $0x160] sm:$0xff]
        %v926 = vld [vmem:[#allocation2 + $0x168] sm:$0xff]
        %v927 = vld [vmem:[#allocation2 + $0x170] sm:$0xff]
        %v928 = vld [vmem:[#allocation2 + $0x178] sm:$0xff]
        %v929 = vld [vmem:[#allocation2 + $0x180] sm:$0xff]
        %v930 = vld [vmem:[#allocation2 + $0x188] sm:$0xff]
        %v931 = vld [vmem:[#allocation2 + $0x190] sm:$0xff]
        %v932 = vld [vmem:[#allocation2 + $0x198] sm:$0xff]
        %v933 = vld [vmem:[#allocation2 + $0x1a0] sm:$0xff]
        %v934 = vld [vmem:[#allocation2 + $0x1a8] sm:$0xff]
        %v935 = vld [vmem:[#allocation2 + $0x1b0] sm:$0xff]
        %v936 = vld [vmem:[#allocation2 + $0x1b8] sm:$0xff]
        %v937 = vld [vmem:[#allocation2 + $0x1c0] sm:$0xff]
        %v938 = vld [vmem:[#allocation2 + $0x1c8] sm:$0xff]
        %v939 = vld [vmem:[#allocation2 + $0x1d0] sm:$0xff]
        %v940 = vld [vmem:[#allocation2 + $0x1d8] sm:$0xff]
        %v941 = vld [vmem:[#allocation2 + $0x1e0] sm:$0xff]
        %v942 = vld [vmem:[#allocation2 + $0x1e8] sm:$0xff]
        %v943 = vld [vmem:[#allocation2 + $0x1f0] sm:$0xff]
        %v944 = vld [vmem:[#allocation2 + $0x1f8] sm:$0xff]
        %v945 = vld [vmem:[#allocation2 + $0x200] sm:$0xff]
        %v946 = vld [vmem:[#allocation2 + $0x208] sm:$0xff]
        %v947 = vld [vmem:[#allocation2 + $0x210] sm:$0xff]
        %v948 = vld [vmem:[#allocation2 + $0x218] sm:$0xff]
        %v949 = vld [vmem:[#allocation2 + $0x220] sm:$0xff]
        %v950 = vld [vmem:[#allocation2 + $0x228] sm:$0xff]
        %v951 = vld [vmem:[#allocation2 + $0x230] sm:$0xff]
        %v952 = vld [vmem:[#allocation2 + $0x238] sm:$0xff]
        %v953 = vld [vmem:[#allocation2 + $0x240] sm:$0xff]
        %v954 = vld [vmem:[#allocation2 + $0x248] sm:$0xff]
        %v955 = vld [vmem:[#allocation2 + $0x250] sm:$0xff]
        %v956 = vld [vmem:[#allocation2 + $0x258] sm:$0xff]
        %v957 = vld [vmem:[#allocation2 + $0x260] sm:$0xff]
        %v958 = vld [vmem:[#allocation2 + $0x268] sm:$0xff]
        %v959 = vld [vmem:[#allocation2 + $0x270] sm:$0xff]
        %v960 = vld [vmem:[#allocation2 + $0x278] sm:$0xff]
        %v961 = vld [vmem:[#allocation2 + $0x280] sm:$0xff]
        %v962 = vld [vmem:[#allocation2 + $0x288] sm:$0xff]
        %v963 = vld [vmem:[#allocation2 + $0x290] sm:$0xff]
        %v964 = vld [vmem:[#allocation2 + $0x298] sm:$0xff]
        %v965 = vld [vmem:[#allocation2 + $0x2a0] sm:$0xff]
        %v966 = vld [vmem:[#allocation2 + $0x2a8] sm:$0xff]
        %v967 = vld [vmem:[#allocation2 + $0x2b0] sm:$0xff]
        %v968 = vld [vmem:[#allocation2 + $0x2b8] sm:$0xff]
        %v969 = vld [vmem:[#allocation2 + $0x2c0] sm:$0xff]
        %v970 = vld [vmem:[#allocation2 + $0x2c8] sm:$0xff]
        %v971 = vld [vmem:[#allocation2 + $0x2d0] sm:$0xff]
        %v972 = vld [vmem:[#allocation2 + $0x2d8] sm:$0xff]
        %v973 = vld [vmem:[#allocation2 + $0x2e0] sm:$0xff]
        %v974 = vld [vmem:[#allocation2 + $0x2e8] sm:$0xff]
        %v975 = vld [vmem:[#allocation2 + $0x2f0] sm:$0xff]
        %v976 = vld [vmem:[#allocation2 + $0x2f8] sm:$0xff]
        %v977 = vld [vmem:[%s7] sm:$0x3f]
        %v979 = vlaneseq
        %v980 = vshrl.u32 %v979, 7
        %v981 = vsub.s32 0, %v980
        %v982 = vrot.slane %v977, %v981
        %v983 = vlaneseq
        %v984 = vshrl.u32 %v983, 7
        %v985 = vsub.s32 1, %v984
        %v986 = vrot.slane %v977, %v985
        %v987 = vlaneseq
        %v988 = vshrl.u32 %v987, 7
        %v989 = vsub.s32 2, %v988
        %v990 = vrot.slane %v977, %v989
        %v991 = vlaneseq
        %v992 = vshrl.u32 %v991, 7
        %v993 = vsub.s32 3, %v992
        %v994 = vrot.slane %v977, %v993
        %v995 = vlaneseq
        %v996 = vshrl.u32 %v995, 7
        %v997 = vsub.s32 4, %v996
        %v998 = vrot.slane %v977, %v997
        %v999 = vlaneseq
        %v1000 = vshrl.u32 %v999, 7
        %v1001 = vsub.s32 5, %v1000
        %v1002 = vrot.slane %v977, %v1001
        %v1105 = vunpack.c.l.b16 %v881
        %v1106 = vunpack.c.h.b16 %v881
        %v1107 = vunpack.c.l.b16 %v882
        %v1108 = vunpack.c.h.b16 %v882
        %v1109 = vunpack.c.l.b16 %v883
        %v1110 = vunpack.c.h.b16 %v883
        %v1111 = vunpack.c.l.b16 %v884
        %v1112 = vunpack.c.h.b16 %v884
        %v1113 = vunpack.c.l.b16 %v885
        %v1114 = vunpack.c.h.b16 %v885
        %v1115 = vunpack.c.l.b16 %v886
        %v1116 = vunpack.c.h.b16 %v886
        %v1117 = vunpack.c.l.b16 %v887
        %v1118 = vunpack.c.h.b16 %v887
        %v1119 = vunpack.c.l.b16 %v888
        %v1120 = vunpack.c.h.b16 %v888
        %v1121 = vunpack.c.l.b16 %v889
        %v1122 = vunpack.c.h.b16 %v889
        %v1123 = vunpack.c.l.b16 %v890
        %v1124 = vunpack.c.h.b16 %v890
        %v1125 = vunpack.c.l.b16 %v891
        %v1126 = vunpack.c.h.b16 %v891
        %v1127 = vunpack.c.l.b16 %v892
        %v1128 = vunpack.c.h.b16 %v892
        %v1129 = vunpack.c.l.b16 %v893
        %v1130 = vunpack.c.h.b16 %v893
        %v1131 = vunpack.c.l.b16 %v894
        %v1132 = vunpack.c.h.b16 %v894
        %v1133 = vunpack.c.l.b16 %v895
        %v1134 = vunpack.c.h.b16 %v895
        %v1135 = vunpack.c.l.b16 %v896
        %v1136 = vunpack.c.h.b16 %v896
        %v1137 = vunpack.c.l.b16 %v897
        %v1138 = vunpack.c.h.b16 %v897
        %v1139 = vunpack.c.l.b16 %v898
        %v1140 = vunpack.c.h.b16 %v898
        %v1141 = vunpack.c.l.b16 %v899
        %v1142 = vunpack.c.h.b16 %v899
        %v1143 = vunpack.c.l.b16 %v900
        %v1144 = vunpack.c.h.b16 %v900
        %v1145 = vunpack.c.l.b16 %v901
        %v1146 = vunpack.c.h.b16 %v901
        %v1147 = vunpack.c.l.b16 %v902
        %v1148 = vunpack.c.h.b16 %v902
        %v1149 = vunpack.c.l.b16 %v903
        %v1150 = vunpack.c.h.b16 %v903
        %v1151 = vunpack.c.l.b16 %v904
        %v1152 = vunpack.c.h.b16 %v904
        %v1153 = vunpack.c.l.b16 %v905
        %v1154 = vunpack.c.h.b16 %v905
        %v1155 = vunpack.c.l.b16 %v906
        %v1156 = vunpack.c.h.b16 %v906
        %v1157 = vunpack.c.l.b16 %v907
        %v1158 = vunpack.c.h.b16 %v907
        %v1159 = vunpack.c.l.b16 %v908
        %v1160 = vunpack.c.h.b16 %v908
        %v1161 = vunpack.c.l.b16 %v909
        %v1162 = vunpack.c.h.b16 %v909
        %v1163 = vunpack.c.l.b16 %v910
        %v1164 = vunpack.c.h.b16 %v910
        %v1165 = vunpack.c.l.b16 %v911
        %v1166 = vunpack.c.h.b16 %v911
        %v1167 = vunpack.c.l.b16 %v912
        %v1168 = vunpack.c.h.b16 %v912
        %v1169 = vunpack.c.l.b16 %v913
        %v1170 = vunpack.c.h.b16 %v913
        %v1171 = vunpack.c.l.b16 %v914
        %v1172 = vunpack.c.h.b16 %v914
        %v1173 = vunpack.c.l.b16 %v915
        %v1174 = vunpack.c.h.b16 %v915
        %v1175 = vunpack.c.l.b16 %v916
        %v1176 = vunpack.c.h.b16 %v916
        %v1177 = vunpack.c.l.b16 %v917
        %v1178 = vunpack.c.h.b16 %v917
        %v1179 = vunpack.c.l.b16 %v918
        %v1180 = vunpack.c.h.b16 %v918
        %v1181 = vunpack.c.l.b16 %v919
        %v1182 = vunpack.c.h.b16 %v919
        %v1183 = vunpack.c.l.b16 %v920
        %v1184 = vunpack.c.h.b16 %v920
        %v1185 = vunpack.c.l.b16 %v921
        %v1186 = vunpack.c.h.b16 %v921
        %v1187 = vunpack.c.l.b16 %v922
        %v1188 = vunpack.c.h.b16 %v922
        %v1189 = vunpack.c.l.b16 %v923
        %v1190 = vunpack.c.h.b16 %v923
        %v1191 = vunpack.c.l.b16 %v924
        %v1192 = vunpack.c.h.b16 %v924
        %v1193 = vunpack.c.l.b16 %v925
        %v1194 = vunpack.c.h.b16 %v925
        %v1195 = vunpack.c.l.b16 %v926
        %v1196 = vunpack.c.h.b16 %v926
        %v1197 = vunpack.c.l.b16 %v927
        %v1198 = vunpack.c.h.b16 %v927
        %v1199 = vunpack.c.l.b16 %v928
        %v1200 = vunpack.c.h.b16 %v928
        %v1201 = vunpack.c.l.b16 %v929
        %v1202 = vunpack.c.h.b16 %v929
        %v1203 = vunpack.c.l.b16 %v930
        %v1204 = vunpack.c.h.b16 %v930
        %v1205 = vunpack.c.l.b16 %v931
        %v1206 = vunpack.c.h.b16 %v931
        %v1207 = vunpack.c.l.b16 %v932
        %v1208 = vunpack.c.h.b16 %v932
        %v1209 = vunpack.c.l.b16 %v933
        %v1210 = vunpack.c.h.b16 %v933
        %v1211 = vunpack.c.l.b16 %v934
        %v1212 = vunpack.c.h.b16 %v934
        %v1213 = vunpack.c.l.b16 %v935
        %v1214 = vunpack.c.h.b16 %v935
        %v1215 = vunpack.c.l.b16 %v936
        %v1216 = vunpack.c.h.b16 %v936
        %v1217 = vunpack.c.l.b16 %v937
        %v1218 = vunpack.c.h.b16 %v937
        %v1219 = vunpack.c.l.b16 %v938
        %v1220 = vunpack.c.h.b16 %v938
        %v1221 = vunpack.c.l.b16 %v939
        %v1222 = vunpack.c.h.b16 %v939
        %v1223 = vunpack.c.l.b16 %v940
        %v1224 = vunpack.c.h.b16 %v940
        %v1225 = vunpack.c.l.b16 %v941
        %v1226 = vunpack.c.h.b16 %v941
        %v1227 = vunpack.c.l.b16 %v942
        %v1228 = vunpack.c.h.b16 %v942
        %v1229 = vunpack.c.l.b16 %v943
        %v1230 = vunpack.c.h.b16 %v943
        %v1231 = vunpack.c.l.b16 %v944
        %v1232 = vunpack.c.h.b16 %v944
        %v1233 = vunpack.c.l.b16 %v945
        %v1234 = vunpack.c.h.b16 %v945
        %v1235 = vunpack.c.l.b16 %v946
        %v1236 = vunpack.c.h.b16 %v946
        %v1237 = vunpack.c.l.b16 %v947
        %v1238 = vunpack.c.h.b16 %v947
        %v1239 = vunpack.c.l.b16 %v948
        %v1240 = vunpack.c.h.b16 %v948
        %v1241 = vunpack.c.l.b16 %v949
        %v1242 = vunpack.c.h.b16 %v949
        %v1243 = vunpack.c.l.b16 %v950
        %v1244 = vunpack.c.h.b16 %v950
        %v1245 = vunpack.c.l.b16 %v951
        %v1246 = vunpack.c.h.b16 %v951
        %v1247 = vunpack.c.l.b16 %v952
        %v1248 = vunpack.c.h.b16 %v952
        %v1249 = vunpack.c.l.b16 %v953
        %v1250 = vunpack.c.h.b16 %v953
        %v1251 = vunpack.c.l.b16 %v954
        %v1252 = vunpack.c.h.b16 %v954
        %v1253 = vunpack.c.l.b16 %v955
        %v1254 = vunpack.c.h.b16 %v955
        %v1255 = vunpack.c.l.b16 %v956
        %v1256 = vunpack.c.h.b16 %v956
        %v1257 = vunpack.c.l.b16 %v957
        %v1258 = vunpack.c.h.b16 %v957
        %v1259 = vunpack.c.l.b16 %v958
        %v1260 = vunpack.c.h.b16 %v958
        %v1261 = vunpack.c.l.b16 %v959
        %v1262 = vunpack.c.h.b16 %v959
        %v1263 = vunpack.c.l.b16 %v960
        %v1264 = vunpack.c.h.b16 %v960
        %v1265 = vunpack.c.l.b16 %v961
        %v1266 = vunpack.c.h.b16 %v961
        %v1267 = vunpack.c.l.b16 %v962
        %v1268 = vunpack.c.h.b16 %v962
        %v1269 = vunpack.c.l.b16 %v963
        %v1270 = vunpack.c.h.b16 %v963
        %v1271 = vunpack.c.l.b16 %v964
        %v1272 = vunpack.c.h.b16 %v964
        %v1273 = vunpack.c.l.b16 %v965
        %v1274 = vunpack.c.h.b16 %v965
        %v1275 = vunpack.c.l.b16 %v966
        %v1276 = vunpack.c.h.b16 %v966
        %v1277 = vunpack.c.l.b16 %v967
        %v1278 = vunpack.c.h.b16 %v967
        %v1279 = vunpack.c.l.b16 %v968
        %v1280 = vunpack.c.h.b16 %v968
        %v1281 = vunpack.c.l.b16 %v969
        %v1282 = vunpack.c.h.b16 %v969
        %v1283 = vunpack.c.l.b16 %v970
        %v1284 = vunpack.c.h.b16 %v970
        %v1285 = vunpack.c.l.b16 %v971
        %v1286 = vunpack.c.h.b16 %v971
        %v1287 = vunpack.c.l.b16 %v972
        %v1288 = vunpack.c.h.b16 %v972
        %v1289 = vunpack.c.l.b16 %v973
        %v1290 = vunpack.c.h.b16 %v973
        %v1291 = vunpack.c.l.b16 %v974
        %v1292 = vunpack.c.h.b16 %v974
        %v1293 = vunpack.c.l.b16 %v975
        %v1294 = vunpack.c.h.b16 %v975
        %v1295 = vunpack.c.l.b16 %v976
        %v1296 = vunpack.c.h.b16 %v976
        %v1297 = vpack.c.b16 %v1111, %v1105
        %v1298 = vpack.c.b16 %v1112, %v1106
        %v1299 = vpack.c.b16 %v1113, %v1107
        %v1300 = vpack.c.b16 %v1114, %v1108
        %v1301 = vpack.c.b16 %v1115, %v1109
        %v1302 = vpack.c.b16 %v1116, %v1110
        %v1303 = vpack.c.b16 %v1123, %v1117
        %v1304 = vpack.c.b16 %v1124, %v1118
        %v1305 = vpack.c.b16 %v1125, %v1119
        %v1306 = vpack.c.b16 %v1126, %v1120
        %v1307 = vpack.c.b16 %v1127, %v1121
        %v1308 = vpack.c.b16 %v1128, %v1122
        %v1309 = vpack.c.b16 %v1135, %v1129
        %v1310 = vpack.c.b16 %v1136, %v1130
        %v1311 = vpack.c.b16 %v1137, %v1131
        %v1312 = vpack.c.b16 %v1138, %v1132
        %v1313 = vpack.c.b16 %v1139, %v1133
        %v1314 = vpack.c.b16 %v1140, %v1134
        %v1315 = vpack.c.b16 %v1147, %v1141
        %v1316 = vpack.c.b16 %v1148, %v1142
        %v1317 = vpack.c.b16 %v1149, %v1143
        %v1318 = vpack.c.b16 %v1150, %v1144
        %v1319 = vpack.c.b16 %v1151, %v1145
        %v1320 = vpack.c.b16 %v1152, %v1146
        %v1321 = vpack.c.b16 %v1159, %v1153
        %v1322 = vpack.c.b16 %v1160, %v1154
        %v1323 = vpack.c.b16 %v1161, %v1155
        %v1324 = vpack.c.b16 %v1162, %v1156
        %v1325 = vpack.c.b16 %v1163, %v1157
        %v1326 = vpack.c.b16 %v1164, %v1158
        %v1327 = vpack.c.b16 %v1171, %v1165
        %v1328 = vpack.c.b16 %v1172, %v1166
        %v1329 = vpack.c.b16 %v1173, %v1167
        %v1330 = vpack.c.b16 %v1174, %v1168
        %v1331 = vpack.c.b16 %v1175, %v1169
        %v1332 = vpack.c.b16 %v1176, %v1170
        %v1333 = vpack.c.b16 %v1183, %v1177
        %v1334 = vpack.c.b16 %v1184, %v1178
        %v1335 = vpack.c.b16 %v1185, %v1179
        %v1336 = vpack.c.b16 %v1186, %v1180
        %v1337 = vpack.c.b16 %v1187, %v1181
        %v1338 = vpack.c.b16 %v1188, %v1182
        %v1339 = vpack.c.b16 %v1195, %v1189
        %v1340 = vpack.c.b16 %v1196, %v1190
        %v1341 = vpack.c.b16 %v1197, %v1191
        %v1342 = vpack.c.b16 %v1198, %v1192
        %v1343 = vpack.c.b16 %v1199, %v1193
        %v1344 = vpack.c.b16 %v1200, %v1194
        %v1345 = vpack.c.b16 %v1207, %v1201
        %v1346 = vpack.c.b16 %v1208, %v1202
        %v1347 = vpack.c.b16 %v1209, %v1203
        %v1348 = vpack.c.b16 %v1210, %v1204
        %v1349 = vpack.c.b16 %v1211, %v1205
        %v1350 = vpack.c.b16 %v1212, %v1206
        %v1351 = vpack.c.b16 %v1219, %v1213
        %v1352 = vpack.c.b16 %v1220, %v1214
        %v1353 = vpack.c.b16 %v1221, %v1215
        %v1354 = vpack.c.b16 %v1222, %v1216
        %v1355 = vpack.c.b16 %v1223, %v1217
        %v1356 = vpack.c.b16 %v1224, %v1218
        %v1357 = vpack.c.b16 %v1231, %v1225
        %v1358 = vpack.c.b16 %v1232, %v1226
        %v1359 = vpack.c.b16 %v1233, %v1227
        %v1360 = vpack.c.b16 %v1234, %v1228
        %v1361 = vpack.c.b16 %v1235, %v1229
        %v1362 = vpack.c.b16 %v1236, %v1230
        %v1363 = vpack.c.b16 %v1243, %v1237
        %v1364 = vpack.c.b16 %v1244, %v1238
        %v1365 = vpack.c.b16 %v1245, %v1239
        %v1366 = vpack.c.b16 %v1246, %v1240
        %v1367 = vpack.c.b16 %v1247, %v1241
        %v1368 = vpack.c.b16 %v1248, %v1242
        %v1369 = vpack.c.b16 %v1255, %v1249
        %v1370 = vpack.c.b16 %v1256, %v1250
        %v1371 = vpack.c.b16 %v1257, %v1251
        %v1372 = vpack.c.b16 %v1258, %v1252
        %v1373 = vpack.c.b16 %v1259, %v1253
        %v1374 = vpack.c.b16 %v1260, %v1254
        %v1375 = vpack.c.b16 %v1267, %v1261
        %v1376 = vpack.c.b16 %v1268, %v1262
        %v1377 = vpack.c.b16 %v1269, %v1263
        %v1378 = vpack.c.b16 %v1270, %v1264
        %v1379 = vpack.c.b16 %v1271, %v1265
        %v1380 = vpack.c.b16 %v1272, %v1266
        %v1381 = vpack.c.b16 %v1279, %v1273
        %v1382 = vpack.c.b16 %v1280, %v1274
        %v1383 = vpack.c.b16 %v1281, %v1275
        %v1384 = vpack.c.b16 %v1282, %v1276
        %v1385 = vpack.c.b16 %v1283, %v1277
        %v1386 = vpack.c.b16 %v1284, %v1278
        %v1387 = vpack.c.b16 %v1291, %v1285
        %v1388 = vpack.c.b16 %v1292, %v1286
        %v1389 = vpack.c.b16 %v1293, %v1287
        %v1390 = vpack.c.b16 %v1294, %v1288
        %v1391 = vpack.c.b16 %v1295, %v1289
        %v1392 = vpack.c.b16 %v1296, %v1290
        %1489 = vmatprep.subr.bf16.mxu0 %v1298
        %1490 = vmatpush1.bf16.msra.mxu0 %v1297
        %1491 = vmatprep.subr.bf16.mxu0 %v1304
        %1492 = vmatpush1.bf16.msra.mxu0 %v1303
        %1493 = vmatprep.subr.bf16.mxu0 %v1310
        %1494 = vmatpush1.bf16.msra.mxu0 %v1309
        %1495 = vmatprep.subr.bf16.mxu0 %v1316
        %1496 = vmatpush1.bf16.msra.mxu0 %v1315
        %1497 = vmatprep.subr.bf16.mxu0 %v1322
        %1498 = vmatpush1.bf16.msra.mxu0 %v1321
        %1499 = vmatprep.subr.bf16.mxu0 %v1328
        %1500 = vmatpush1.bf16.msra.mxu0 %v1327
        %1501 = vmatprep.subr.bf16.mxu0 %v1334
        %1502 = vmatpush1.bf16.msra.mxu0 %v1333
        %1503 = vmatprep.subr.bf16.mxu0 %v1340
        %1504 = vmatpush1.bf16.msra.mxu0 %v1339
        %1505 = vmatprep.subr.bf16.mxu0 %v1346
        %1506 = vmatpush1.bf16.msra.mxu0 %v1345
        %1507 = vmatprep.subr.bf16.mxu0 %v1352
        %1508 = vmatpush1.bf16.msra.mxu0 %v1351
        %1509 = vmatprep.subr.bf16.mxu0 %v1358
        %1510 = vmatpush1.bf16.msra.mxu0 %v1357
        %1511 = vmatprep.subr.bf16.mxu0 %v1364
        %1512 = vmatpush1.bf16.msra.mxu0 %v1363
        %1513 = vmatprep.subr.bf16.mxu0 %v1370
        %1514 = vmatpush1.bf16.msra.mxu0 %v1369
        %1515 = vmatprep.subr.bf16.mxu0 %v1376
        %1516 = vmatpush1.bf16.msra.mxu0 %v1375
        %1517 = vmatprep.subr.bf16.mxu0 %v1382
        %1518 = vmatpush1.bf16.msra.mxu0 %v1381
        %1519 = vmatprep.subr.bf16.mxu0 %v1388
        %1520 = vmatpush1.bf16.msra.mxu0 %v1387
        %1521 = vmatprep.mubr.bf16.mxu0 %v880
        %1522 = vmatmul.mubr.bf16.gmra.mrb[0].mxu0 %v879
        %v1523 = vpop.f32.mrb[0].mxu0
        %v1524 = vadd.f32 %v982, %v1523
        %v1525 = vpop.f32.mrb[0].mxu0
        %v1526 = vadd.f32 %v986, %v1525
        %v1527 = vpop.f32.mrb[0].mxu0
        %v1528 = vadd.f32 %v982, %v1527
        %v1529 = vpop.f32.mrb[0].mxu0
        %v1530 = vadd.f32 %v986, %v1529
        %1531 = vdwg.mxu0
        %1532 = vmatprep.subr.bf16.mxu0 %v1300
        %1533 = vmatpush1.bf16.msra.mxu0 %v1299
        %1534 = vmatprep.subr.bf16.mxu0 %v1306
        %1535 = vmatpush1.bf16.msra.mxu0 %v1305
        %1536 = vmatprep.subr.bf16.mxu0 %v1312
        %1537 = vmatpush1.bf16.msra.mxu0 %v1311
        %1538 = vmatprep.subr.bf16.mxu0 %v1318
        %1539 = vmatpush1.bf16.msra.mxu0 %v1317
        %1540 = vmatprep.subr.bf16.mxu0 %v1324
        %1541 = vmatpush1.bf16.msra.mxu0 %v1323
        %1542 = vmatprep.subr.bf16.mxu0 %v1330
        %1543 = vmatpush1.bf16.msra.mxu0 %v1329
        %1544 = vmatprep.subr.bf16.mxu0 %v1336
        %1545 = vmatpush1.bf16.msra.mxu0 %v1335
        %1546 = vmatprep.subr.bf16.mxu0 %v1342
        %1547 = vmatpush1.bf16.msra.mxu0 %v1341
        %1548 = vmatprep.subr.bf16.mxu0 %v1348
        %1549 = vmatpush1.bf16.msra.mxu0 %v1347
        %1550 = vmatprep.subr.bf16.mxu0 %v1354
        %1551 = vmatpush1.bf16.msra.mxu0 %v1353
        %1552 = vmatprep.subr.bf16.mxu0 %v1360
        %1553 = vmatpush1.bf16.msra.mxu0 %v1359
        %1554 = vmatprep.subr.bf16.mxu0 %v1366
        %1555 = vmatpush1.bf16.msra.mxu0 %v1365
        %1556 = vmatprep.subr.bf16.mxu0 %v1372
        %1557 = vmatpush1.bf16.msra.mxu0 %v1371
        %1558 = vmatprep.subr.bf16.mxu0 %v1378
        %1559 = vmatpush1.bf16.msra.mxu0 %v1377
        %1560 = vmatprep.subr.bf16.mxu0 %v1384
        %1561 = vmatpush1.bf16.msra.mxu0 %v1383
        %1562 = vmatprep.subr.bf16.mxu0 %v1390
        %1563 = vmatpush1.bf16.msra.mxu0 %v1389
        %1564 = vmatprep.mubr.bf16.mxu0 %v880
        %1565 = vmatmul.mubr.bf16.gmra.mrb[0].mxu0 %v879
        %v1566 = vpop.f32.mrb[0].mxu0
        %v1567 = vadd.f32 %v990, %v1566
        %v1568 = vpop.f32.mrb[0].mxu0
        %v1569 = vadd.f32 %v994, %v1568
        %v1570 = vpop.f32.mrb[0].mxu0
        %v1571 = vadd.f32 %v990, %v1570
        %v1572 = vpop.f32.mrb[0].mxu0
        %v1573 = vadd.f32 %v994, %v1572
        %1574 = vdwg.mxu0
        %1575 = vmatprep.subr.bf16.mxu0 %v1302
        %1576 = vmatpush1.bf16.msra.mxu0 %v1301
        %1577 = vmatprep.subr.bf16.mxu0 %v1308
        %1578 = vmatpush1.bf16.msra.mxu0 %v1307
        %1579 = vmatprep.subr.bf16.mxu0 %v1314
        %1580 = vmatpush1.bf16.msra.mxu0 %v1313
        %1581 = vmatprep.subr.bf16.mxu0 %v1320
        %1582 = vmatpush1.bf16.msra.mxu0 %v1319
        %1583 = vmatprep.subr.bf16.mxu0 %v1326
        %1584 = vmatpush1.bf16.msra.mxu0 %v1325
        %1585 = vmatprep.subr.bf16.mxu0 %v1332
        %1586 = vmatpush1.bf16.msra.mxu0 %v1331
        %1587 = vmatprep.subr.bf16.mxu0 %v1338
        %1588 = vmatpush1.bf16.msra.mxu0 %v1337
        %1589 = vmatprep.subr.bf16.mxu0 %v1344
        %1590 = vmatpush1.bf16.msra.mxu0 %v1343
        %1591 = vmatprep.subr.bf16.mxu0 %v1350
        %1592 = vmatpush1.bf16.msra.mxu0 %v1349
        %1593 = vmatprep.subr.bf16.mxu0 %v1356
        %1594 = vmatpush1.bf16.msra.mxu0 %v1355
        %1595 = vmatprep.subr.bf16.mxu0 %v1362
        %1596 = vmatpush1.bf16.msra.mxu0 %v1361
        %1597 = vmatprep.subr.bf16.mxu0 %v1368
        %1598 = vmatpush1.bf16.msra.mxu0 %v1367
        %1599 = vmatprep.subr.bf16.mxu0 %v1374
        %1600 = vmatpush1.bf16.msra.mxu0 %v1373
        %1601 = vmatprep.subr.bf16.mxu0 %v1380
        %1602 = vmatpush1.bf16.msra.mxu0 %v1379
        %1603 = vmatprep.subr.bf16.mxu0 %v1386
        %1604 = vmatpush1.bf16.msra.mxu0 %v1385
        %1605 = vmatprep.subr.bf16.mxu0 %v1392
        %1606 = vmatpush1.bf16.msra.mxu0 %v1391
        %1607 = vmatprep.mubr.bf16.mxu0 %v880
        %1608 = vmatmul.mubr.bf16.gmra.mrb[0].mxu0 %v879
        %v1609 = vpop.f32.mrb[0].mxu0
        %v1610 = vadd.f32 %v998, %v1609
        %v1611 = vpop.f32.mrb[0].mxu0
        %v1612 = vadd.f32 %v1002, %v1611
        %v1613 = vpop.f32.mrb[0].mxu0
        %v1614 = vadd.f32 %v998, %v1613
        %v1615 = vpop.f32.mrb[0].mxu0
        %v1616 = vadd.f32 %v1002, %v1615
        %1617 = vdwg.mxu0
        %v1618 = vpack.c.bf16 %v1528, %v1524
        %v1619 = vpack.c.bf16 %v1530, %v1526
        %v1620 = vpack.c.bf16 %v1571, %v1567
        %v1621 = vpack.c.bf16 %v1573, %v1569
        %v1622 = vpack.c.bf16 %v1614, %v1610
        %v1623 = vpack.c.bf16 %v1616, %v1612
        %1625 = vrot.lane.b32.xlu0 %v1618, 64
        %v1626 = vpop.permute.xlu0 %1625
        %1628 = vrot.lane.b32.xlu0 %v1619, 64
        %v1629 = vpop.permute.xlu0 %1628
        %1631 = vrot.lane.b32.xlu0 %v1620, 64
        %v1632 = vpop.permute.xlu0 %1631
        %1634 = vrot.lane.b32.xlu0 %v1621, 64
        %v1635 = vpop.permute.xlu0 %1634
        %1637 = vrot.lane.b32.xlu0 %v1622, 64
        %v1638 = vpop.permute.xlu0 %1637
        %1640 = vrot.lane.b32.xlu0 %v1623, 64
        %v1641 = vpop.permute.xlu0 %1640
        %v1643 = vsel %vm766, %v1618, 0
        %v1646 = vsel %vm766, %v1620, 0
        %1648 = vmatprep.subr.bf16.mxu0 0
        %1649 = vmatpush1.bf16.xpose.msra.mxu0 %v1646
        %1650 = vmatprep.subr.bf16.mxu0 0
        %1651 = vmatpush1.bf16.xpose.msra.mxu0 0
        %1652 = vmatprep.subr.bf16.mxu0 0
        %1653 = vmatpush1.bf16.xpose.msra.mxu0 0
        %1654 = vmatprep.subr.bf16.mxu0 0
        %1655 = vmatpush1.bf16.xpose.msra.mxu0 0
        %1656 = vmatprep.subr.bf16.mxu0 0
        %1657 = vmatpush1.bf16.xpose.msra.mxu0 0
        %1658 = vmatprep.subr.bf16.mxu0 0
        %1659 = vmatpush1.bf16.xpose.msra.mxu0 0
        %1660 = vmatprep.subr.bf16.mxu0 0
        %1661 = vmatpush1.bf16.xpose.msra.mxu0 0
        %1662 = vmatprep.subr.bf16.mxu0 0
        %1663 = vmatpush1.bf16.xpose.msra.mxu0 0
        %1664 = vmatprep.subr.bf16.mxu0 0
        %1665 = vmatpush1.bf16.xpose.msra.mxu0 0
        %1666 = vmatprep.subr.bf16.mxu0 0
        %1667 = vmatpush1.bf16.xpose.msra.mxu0 0
        %1668 = vmatprep.subr.bf16.mxu0 0
        %1669 = vmatpush1.bf16.xpose.msra.mxu0 0
        %1670 = vmatprep.subr.bf16.mxu0 0
        %1671 = vmatpush1.bf16.xpose.msra.mxu0 0
        %1672 = vmatprep.subr.bf16.mxu0 0
        %1673 = vmatpush1.bf16.xpose.msra.mxu0 0
        %1674 = vmatprep.subr.bf16.mxu0 0
        %1675 = vmatpush1.bf16.xpose.msra.mxu0 0
        %1676 = vmatprep.subr.bf16.mxu0 0
        %1677 = vmatpush1.bf16.xpose.msra.mxu0 0
        %1678 = vmatprep.subr.bf16.mxu0 0
        %1679 = vmatpush1.bf16.xpose.msra.mxu0 0
        %1680 = vmatprep.mubr.bf16.mxu0 0
        %1681 = vmatmul.mubr.bf16.gmra.mrb[0].mxu0 %v1643
        %v1682 = vpop.f32.mrb[0].mxu0
        %v1683 = vadd.f32 0.0, %v1682
        %v1684 = vpop.f32.mrb[0].mxu0
        %v1685 = vpop.f32.mrb[0].mxu0
        %v1686 = vpop.f32.mrb[0].mxu0
        %1687 = vdwg.mxu0
        %v1689 = vsel %vm766, %v1626, 0
        %v1692 = vsel %vm766, %v1632, 0
        %1694 = vmatprep.subr.bf16.mxu0 0
        %1695 = vmatpush1.bf16.xpose.msra.mxu0 %v1692
        %1696 = vmatprep.subr.bf16.mxu0 0
        %1697 = vmatpush1.bf16.xpose.msra.mxu0 0
        %1698 = vmatprep.subr.bf16.mxu0 0
        %1699 = vmatpush1.bf16.xpose.msra.mxu0 0
        %1700 = vmatprep.subr.bf16.mxu0 0
        %1701 = vmatpush1.bf16.xpose.msra.mxu0 0
        %1702 = vmatprep.subr.bf16.mxu0 0
        %1703 = vmatpush1.bf16.xpose.msra.mxu0 0
        %1704 = vmatprep.subr.bf16.mxu0 0
        %1705 = vmatpush1.bf16.xpose.msra.mxu0 0
        %1706 = vmatprep.subr.bf16.mxu0 0
        %1707 = vmatpush1.bf16.xpose.msra.mxu0 0
        %1708 = vmatprep.subr.bf16.mxu0 0
        %1709 = vmatpush1.bf16.xpose.msra.mxu0 0
        %1710 = vmatprep.subr.bf16.mxu0 0
        %1711 = vmatpush1.bf16.xpose.msra.mxu0 0
        %1712 = vmatprep.subr.bf16.mxu0 0
        %1713 = vmatpush1.bf16.xpose.msra.mxu0 0
        %1714 = vmatprep.subr.bf16.mxu0 0
        %1715 = vmatpush1.bf16.xpose.msra.mxu0 0
        %1716 = vmatprep.subr.bf16.mxu0 0
        %1717 = vmatpush1.bf16.xpose.msra.mxu0 0
        %1718 = vmatprep.subr.bf16.mxu0 0
        %1719 = vmatpush1.bf16.xpose.msra.mxu0 0
        %1720 = vmatprep.subr.bf16.mxu0 0
        %1721 = vmatpush1.bf16.xpose.msra.mxu0 0
        %1722 = vmatprep.subr.bf16.mxu0 0
        %1723 = vmatpush1.bf16.xpose.msra.mxu0 0
        %1724 = vmatprep.subr.bf16.mxu0 0
        %1725 = vmatpush1.bf16.xpose.msra.mxu0 0
        %1726 = vmatprep.mubr.bf16.mxu0 0
        %1727 = vmatmul.mubr.bf16.gmra.mrb[0].mxu0 %v1689
        %v1728 = vpop.f32.mrb[0].mxu0
        %v1729 = vadd.f32 0.0, %v1728
        %v1730 = vpop.f32.mrb[0].mxu0
        %v1731 = vpop.f32.mrb[0].mxu0
        %v1732 = vpop.f32.mrb[0].mxu0
        %1733 = vdwg.mxu0
        %v1735 = vsel %vm766, %v1619, 0
        %v1738 = vsel %vm766, %v1621, 0
        %1740 = vmatprep.subr.bf16.mxu0 0
        %1741 = vmatpush1.bf16.xpose.msra.mxu0 %v1738
        %1742 = vmatprep.subr.bf16.mxu0 0
        %1743 = vmatpush1.bf16.xpose.msra.mxu0 0
        %1744 = vmatprep.subr.bf16.mxu0 0
        %1745 = vmatpush1.bf16.xpose.msra.mxu0 0
        %1746 = vmatprep.subr.bf16.mxu0 0
        %1747 = vmatpush1.bf16.xpose.msra.mxu0 0
        %1748 = vmatprep.subr.bf16.mxu0 0
        %1749 = vmatpush1.bf16.xpose.msra.mxu0 0
        %1750 = vmatprep.subr.bf16.mxu0 0
        %1751 = vmatpush1.bf16.xpose.msra.mxu0 0
        %1752 = vmatprep.subr.bf16.mxu0 0
        %1753 = vmatpush1.bf16.xpose.msra.mxu0 0
        %1754 = vmatprep.subr.bf16.mxu0 0
        %1755 = vmatpush1.bf16.xpose.msra.mxu0 0
        %1756 = vmatprep.subr.bf16.mxu0 0
        %1757 = vmatpush1.bf16.xpose.msra.mxu0 0
        %1758 = vmatprep.subr.bf16.mxu0 0
        %1759 = vmatpush1.bf16.xpose.msra.mxu0 0
        %1760 = vmatprep.subr.bf16.mxu0 0
        %1761 = vmatpush1.bf16.xpose.msra.mxu0 0
        %1762 = vmatprep.subr.bf16.mxu0 0
        %1763 = vmatpush1.bf16.xpose.msra.mxu0 0
        %1764 = vmatprep.subr.bf16.mxu0 0
        %1765 = vmatpush1.bf16.xpose.msra.mxu0 0
        %1766 = vmatprep.subr.bf16.mxu0 0
        %1767 = vmatpush1.bf16.xpose.msra.mxu0 0
        %1768 = vmatprep.subr.bf16.mxu0 0
        %1769 = vmatpush1.bf16.xpose.msra.mxu0 0
        %1770 = vmatprep.subr.bf16.mxu0 0
        %1771 = vmatpush1.bf16.xpose.msra.mxu0 0
        %1772 = vmatprep.mubr.bf16.mxu0 0
        %1773 = vmatmul.mubr.bf16.gmra.mrb[0].mxu0 %v1735
        %v1774 = vpop.f32.mrb[0].mxu0
        %v1775 = vadd.f32 0.0, %v1774
        %v1776 = vpop.f32.mrb[0].mxu0
        %v1777 = vpop.f32.mrb[0].mxu0
        %v1778 = vpop.f32.mrb[0].mxu0
        %1779 = vdwg.mxu0
        %v1781 = vsel %vm766, %v1629, 0
        %v1784 = vsel %vm766, %v1635, 0
        %1786 = vmatprep.subr.bf16.mxu0 0
        %1787 = vmatpush1.bf16.xpose.msra.mxu0 %v1784
        %1788 = vmatprep.subr.bf16.mxu0 0
        %1789 = vmatpush1.bf16.xpose.msra.mxu0 0
        %1790 = vmatprep.subr.bf16.mxu0 0
        %1791 = vmatpush1.bf16.xpose.msra.mxu0 0
        %1792 = vmatprep.subr.bf16.mxu0 0
        %1793 = vmatpush1.bf16.xpose.msra.mxu0 0
        %1794 = vmatprep.subr.bf16.mxu0 0
        %1795 = vmatpush1.bf16.xpose.msra.mxu0 0
        %1796 = vmatprep.subr.bf16.mxu0 0
        %1797 = vmatpush1.bf16.xpose.msra.mxu0 0
        %1798 = vmatprep.subr.bf16.mxu0 0
        %1799 = vmatpush1.bf16.xpose.msra.mxu0 0
        %1800 = vmatprep.subr.bf16.mxu0 0
        %1801 = vmatpush1.bf16.xpose.msra.mxu0 0
        %1802 = vmatprep.subr.bf16.mxu0 0
        %1803 = vmatpush1.bf16.xpose.msra.mxu0 0
        %1804 = vmatprep.subr.bf16.mxu0 0
        %1805 = vmatpush1.bf16.xpose.msra.mxu0 0
        %1806 = vmatprep.subr.bf16.mxu0 0
        %1807 = vmatpush1.bf16.xpose.msra.mxu0 0
        %1808 = vmatprep.subr.bf16.mxu0 0
        %1809 = vmatpush1.bf16.xpose.msra.mxu0 0
        %1810 = vmatprep.subr.bf16.mxu0 0
        %1811 = vmatpush1.bf16.xpose.msra.mxu0 0
        %1812 = vmatprep.subr.bf16.mxu0 0
        %1813 = vmatpush1.bf16.xpose.msra.mxu0 0
        %1814 = vmatprep.subr.bf16.mxu0 0
        %1815 = vmatpush1.bf16.xpose.msra.mxu0 0
        %1816 = vmatprep.subr.bf16.mxu0 0
        %1817 = vmatpush1.bf16.xpose.msra.mxu0 0
        %1818 = vmatprep.mubr.bf16.mxu0 0
        %1819 = vmatmul.mubr.bf16.gmra.mrb[0].mxu0 %v1781
        %v1820 = vpop.f32.mrb[0].mxu0
        %v1821 = vadd.f32 0.0, %v1820
        %v1822 = vpop.f32.mrb[0].mxu0
        %v1823 = vpop.f32.mrb[0].mxu0
        %v1824 = vpop.f32.mrb[0].mxu0
        %1825 = vdwg.mxu0
        %v1826 = vmul.f32 %v1683, 0.125
        %v1827 = vmul.f32 %v1729, 0.125
        %v1828 = vmul.f32 %v1775, 0.125
        %v1829 = vmul.f32 %v1821, 0.125
        %v1830 = vlaneseq
        %v1831 = vshrl.u32 %v1830, 7
        %v1832 = vsub.s32 0, %v1831
        %v1833 = vrot.slane %v878, %v1832
        %v1834 = vadd.f32 %v1826, %v1833
        %v1835 = vadd.f32 %v1827, %v1833
        %v1836 = vadd.f32 %v1828, %v1833
        %v1837 = vadd.f32 %v1829, %v1833
        %vm1838 = vcmask 64512
        %v1839 = vsel %vm1838, %v1834, -inf
        %1840 = vmax.xlane.f32.xlu0 %v1839
        %v1841 = vpop.xlane.xlu0 %1840
        %v1842 = vsel %vm1838, %v1835, -inf
        %1843 = vmax.xlane.f32.xlu0 %v1842
        %v1844 = vpop.xlane.xlu0 %1843
        %v1845 = vsel %vm1838, %v1836, -inf
        %1846 = vmax.xlane.f32.xlu0 %v1845
        %v1847 = vpop.xlane.xlu0 %1846
        %v1848 = vsel %vm1838, %v1837, -inf
        %1849 = vmax.xlane.f32.xlu0 %v1848
        %v1850 = vpop.xlane.xlu0 %1849
        %v1851 = vsub.f32 %v1834, %v1841
        %v1852 = vsub.f32 %v1835, %v1844
        %v1853 = vsub.f32 %v1836, %v1847
        %v1854 = vsub.f32 %v1837, %v1850
        %v1855 = vmul.f32 %v1851, 1.442695
        %v1856 = vpow.pop %v1855
        %v1857 = vmul.f32 %v1852, 1.442695
        %v1858 = vpow.pop %v1857
        %v1859 = vmul.f32 %v1853, 1.442695
        %v1860 = vpow.pop %v1859
        %v1861 = vmul.f32 %v1854, 1.442695
        %v1862 = vpow.pop %v1861
        %v1863 = vsel %vm1838, %v1856, 0.0
        %1864 = vadd.xlane.f32.xlu0 %v1863
        %v1865 = vpop.xlane.xlu0 %1864
        %v1866 = vsel %vm1838, %v1858, 0.0
        %1867 = vadd.xlane.f32.xlu0 %v1866
        %v1868 = vpop.xlane.xlu0 %1867
        %v1869 = vsel %vm1838, %v1860, 0.0
        %1870 = vadd.xlane.f32.xlu0 %v1869
        %v1871 = vpop.xlane.xlu0 %1870
        %v1872 = vsel %vm1838, %v1862, 0.0
        %1873 = vadd.xlane.f32.xlu0 %v1872
        %v1874 = vpop.xlane.xlu0 %1873
        %v1875 = vrcp.pop %v1865
        %v1876 = vrcp.pop %v1868
        %v1877 = vrcp.pop %v1871
        %v1878 = vrcp.pop %v1874
        %v1879 = vmul.f32 %v1856, %v1875
        %v1880 = vmul.f32 %v1858, %v1876
        %v1881 = vmul.f32 %v1860, %v1877
        %v1882 = vmul.f32 %v1862, %v1878
        %v1883 = vpack.c.bf16 %v1879, %v1879
        %v1884 = vpack.c.bf16 %v1880, %v1880
        %v1885 = vpack.c.bf16 %v1881, %v1881
        %v1886 = vpack.c.bf16 %v1882, %v1882
        %v1888 = vsel %vm1838, %v1883, 0
        %vm1890 = vcmask 1043456
        %v1892 = vsel %vm1890, %v1622, 0
        %1894 = vmatprep.subr.bf16.mxu0 0
        %1895 = vmatpush1.bf16.msra.mxu0 %v1892
        %1896 = vmatprep.subr.bf16.mxu0 0
        %1897 = vmatpush1.bf16.msra.mxu0 0
        %1898 = vmatprep.subr.bf16.mxu0 0
        %1899 = vmatpush1.bf16.msra.mxu0 0
        %1900 = vmatprep.subr.bf16.mxu0 0
        %1901 = vmatpush1.bf16.msra.mxu0 0
        %1902 = vmatprep.subr.bf16.mxu0 0
        %1903 = vmatpush1.bf16.msra.mxu0 0
        %1904 = vmatprep.subr.bf16.mxu0 0
        %1905 = vmatpush1.bf16.msra.mxu0 0
        %1906 = vmatprep.subr.bf16.mxu0 0
        %1907 = vmatpush1.bf16.msra.mxu0 0
        %1908 = vmatprep.subr.bf16.mxu0 0
        %1909 = vmatpush1.bf16.msra.mxu0 0
        %1910 = vmatprep.subr.bf16.mxu0 0
        %1911 = vmatpush1.bf16.msra.mxu0 0
        %1912 = vmatprep.subr.bf16.mxu0 0
        %1913 = vmatpush1.bf16.msra.mxu0 0
        %1914 = vmatprep.subr.bf16.mxu0 0
        %1915 = vmatpush1.bf16.msra.mxu0 0
        %1916 = vmatprep.subr.bf16.mxu0 0
        %1917 = vmatpush1.bf16.msra.mxu0 0
        %1918 = vmatprep.subr.bf16.mxu0 0
        %1919 = vmatpush1.bf16.msra.mxu0 0
        %1920 = vmatprep.subr.bf16.mxu0 0
        %1921 = vmatpush1.bf16.msra.mxu0 0
        %1922 = vmatprep.subr.bf16.mxu0 0
        %1923 = vmatpush1.bf16.msra.mxu0 0
        %1924 = vmatprep.subr.bf16.mxu0 0
        %1925 = vmatpush1.bf16.msra.mxu0 0
        %1926 = vmatprep.mubr.bf16.mxu0 0
        %1927 = vmatmul.mubr.bf16.gmra.mrb[0].mxu0 %v1888
        %v1928 = vpop.f32.mrb[0].mxu0
        %v1929 = vadd.f32 0.0, %v1928
        %v1930 = vpop.f32.mrb[0].mxu0
        %v1931 = vpop.f32.mrb[0].mxu0
        %v1932 = vpop.f32.mrb[0].mxu0
        %1933 = vdwg.mxu0
        %v1935 = vsel %vm1838, %v1884, 0
        %v1938 = vsel %vm1890, %v1638, 0
        %1940 = vmatprep.subr.bf16.mxu0 0
        %1941 = vmatpush1.bf16.msra.mxu0 %v1938
        %1942 = vmatprep.subr.bf16.mxu0 0
        %1943 = vmatpush1.bf16.msra.mxu0 0
        %1944 = vmatprep.subr.bf16.mxu0 0
        %1945 = vmatpush1.bf16.msra.mxu0 0
        %1946 = vmatprep.subr.bf16.mxu0 0
        %1947 = vmatpush1.bf16.msra.mxu0 0
        %1948 = vmatprep.subr.bf16.mxu0 0
        %1949 = vmatpush1.bf16.msra.mxu0 0
        %1950 = vmatprep.subr.bf16.mxu0 0
        %1951 = vmatpush1.bf16.msra.mxu0 0
        %1952 = vmatprep.subr.bf16.mxu0 0
        %1953 = vmatpush1.bf16.msra.mxu0 0
        %1954 = vmatprep.subr.bf16.mxu0 0
        %1955 = vmatpush1.bf16.msra.mxu0 0
        %1956 = vmatprep.subr.bf16.mxu0 0
        %1957 = vmatpush1.bf16.msra.mxu0 0
        %1958 = vmatprep.subr.bf16.mxu0 0
        %1959 = vmatpush1.bf16.msra.mxu0 0
        %1960 = vmatprep.subr.bf16.mxu0 0
        %1961 = vmatpush1.bf16.msra.mxu0 0
        %1962 = vmatprep.subr.bf16.mxu0 0
        %1963 = vmatpush1.bf16.msra.mxu0 0
        %1964 = vmatprep.subr.bf16.mxu0 0
        %1965 = vmatpush1.bf16.msra.mxu0 0
        %1966 = vmatprep.subr.bf16.mxu0 0
        %1967 = vmatpush1.bf16.msra.mxu0 0
        %1968 = vmatprep.subr.bf16.mxu0 0
        %1969 = vmatpush1.bf16.msra.mxu0 0
        %1970 = vmatprep.subr.bf16.mxu0 0
        %1971 = vmatpush1.bf16.msra.mxu0 0
        %1972 = vmatprep.mubr.bf16.mxu0 0
        %1973 = vmatmul.mubr.bf16.gmra.mrb[0].mxu0 %v1935
        %v1974 = vpop.f32.mrb[0].mxu0
        %v1975 = vadd.f32 0.0, %v1974
        %v1976 = vpop.f32.mrb[0].mxu0
        %v1977 = vpop.f32.mrb[0].mxu0
        %v1978 = vpop.f32.mrb[0].mxu0
        %1979 = vdwg.mxu0
        %v1981 = vsel %vm1838, %v1885, 0
        %v1984 = vsel %vm1890, %v1623, 0
        %1986 = vmatprep.subr.bf16.mxu0 0
        %1987 = vmatpush1.bf16.msra.mxu0 %v1984
        %1988 = vmatprep.subr.bf16.mxu0 0
        %1989 = vmatpush1.bf16.msra.mxu0 0
        %1990 = vmatprep.subr.bf16.mxu0 0
        %1991 = vmatpush1.bf16.msra.mxu0 0
        %1992 = vmatprep.subr.bf16.mxu0 0
        %1993 = vmatpush1.bf16.msra.mxu0 0
        %1994 = vmatprep.subr.bf16.mxu0 0
        %1995 = vmatpush1.bf16.msra.mxu0 0
        %1996 = vmatprep.subr.bf16.mxu0 0
        %1997 = vmatpush1.bf16.msra.mxu0 0
        %1998 = vmatprep.subr.bf16.mxu0 0
        %1999 = vmatpush1.bf16.msra.mxu0 0
        %2000 = vmatprep.subr.bf16.mxu0 0
        %2001 = vmatpush1.bf16.msra.mxu0 0
        %2002 = vmatprep.subr.bf16.mxu0 0
        %2003 = vmatpush1.bf16.msra.mxu0 0
        %2004 = vmatprep.subr.bf16.mxu0 0
        %2005 = vmatpush1.bf16.msra.mxu0 0
        %2006 = vmatprep.subr.bf16.mxu0 0
        %2007 = vmatpush1.bf16.msra.mxu0 0
        %2008 = vmatprep.subr.bf16.mxu0 0
        %2009 = vmatpush1.bf16.msra.mxu0 0
        %2010 = vmatprep.subr.bf16.mxu0 0
        %2011 = vmatpush1.bf16.msra.mxu0 0
        %2012 = vmatprep.subr.bf16.mxu0 0
        %2013 = vmatpush1.bf16.msra.mxu0 0
        %2014 = vmatprep.subr.bf16.mxu0 0
        %2015 = vmatpush1.bf16.msra.mxu0 0
        %2016 = vmatprep.subr.bf16.mxu0 0
        %2017 = vmatpush1.bf16.msra.mxu0 0
        %2018 = vmatprep.mubr.bf16.mxu0 0
        %2019 = vmatmul.mubr.bf16.gmra.mrb[0].mxu0 %v1981
        %v2020 = vpop.f32.mrb[0].mxu0
        %v2021 = vadd.f32 0.0, %v2020
        %v2022 = vpop.f32.mrb[0].mxu0
        %v2023 = vpop.f32.mrb[0].mxu0
        %v2024 = vpop.f32.mrb[0].mxu0
        %2025 = vdwg.mxu0
        %v2027 = vsel %vm1838, %v1886, 0
        %v2030 = vsel %vm1890, %v1641, 0
        %2032 = vmatprep.subr.bf16.mxu0 0
        %2033 = vmatpush1.bf16.msra.mxu0 %v2030
        %2034 = vmatprep.subr.bf16.mxu0 0
        %2035 = vmatpush1.bf16.msra.mxu0 0
        %2036 = vmatprep.subr.bf16.mxu0 0
        %2037 = vmatpush1.bf16.msra.mxu0 0
        %2038 = vmatprep.subr.bf16.mxu0 0
        %2039 = vmatpush1.bf16.msra.mxu0 0
        %2040 = vmatprep.subr.bf16.mxu0 0
        %2041 = vmatpush1.bf16.msra.mxu0 0
        %2042 = vmatprep.subr.bf16.mxu0 0
        %2043 = vmatpush1.bf16.msra.mxu0 0
        %2044 = vmatprep.subr.bf16.mxu0 0
        %2045 = vmatpush1.bf16.msra.mxu0 0
        %2046 = vmatprep.subr.bf16.mxu0 0
        %2047 = vmatpush1.bf16.msra.mxu0 0
        %2048 = vmatprep.subr.bf16.mxu0 0
        %2049 = vmatpush1.bf16.msra.mxu0 0
        %2050 = vmatprep.subr.bf16.mxu0 0
        %2051 = vmatpush1.bf16.msra.mxu0 0
        %2052 = vmatprep.subr.bf16.mxu0 0
        %2053 = vmatpush1.bf16.msra.mxu0 0
        %2054 = vmatprep.subr.bf16.mxu0 0
        %2055 = vmatpush1.bf16.msra.mxu0 0
        %2056 = vmatprep.subr.bf16.mxu0 0
        %2057 = vmatpush1.bf16.msra.mxu0 0
        %2058 = vmatprep.subr.bf16.mxu0 0
        %2059 = vmatpush1.bf16.msra.mxu0 0
        %2060 = vmatprep.subr.bf16.mxu0 0
        %2061 = vmatpush1.bf16.msra.mxu0 0
        %2062 = vmatprep.subr.bf16.mxu0 0
        %2063 = vmatpush1.bf16.msra.mxu0 0
        %2064 = vmatprep.mubr.bf16.mxu0 0
        %2065 = vmatmul.mubr.bf16.gmra.mrb[0].mxu0 %v2027
        %v2066 = vpop.f32.mrb[0].mxu0
        %v2067 = vadd.f32 0.0, %v2066
        %v2068 = vpop.f32.mrb[0].mxu0
        %v2069 = vpop.f32.mrb[0].mxu0
        %v2070 = vpop.f32.mrb[0].mxu0
        %2071 = vdwg.mxu0
        %2073 = vrot.lane.b32.xlu0 %v1975, 64
        %v2074 = vpop.permute.xlu0 %2073
        %2077 = vrot.lane.b32.xlu0 %v2067, 64
        %v2078 = vpop.permute.xlu0 %2077
        %v2080 = vsel %vm766, %v1929, %v2074
        %v2081 = vsel %vm766, %v2021, %v2078
        %v2082 = vrot.slane %v1618, 4
        %v2083 = vrot.slane %v1620, 4
        %v2085 = vsel %vm766, %v2082, 0
        %v2088 = vsel %vm766, %v2083, 0
        %2090 = vmatprep.subr.bf16.mxu0 0
        %2091 = vmatpush1.bf16.xpose.msra.mxu0 %v2088
        %2092 = vmatprep.subr.bf16.mxu0 0
        %2093 = vmatpush1.bf16.xpose.msra.mxu0 0
        %2094 = vmatprep.subr.bf16.mxu0 0
        %2095 = vmatpush1.bf16.xpose.msra.mxu0 0
        %2096 = vmatprep.subr.bf16.mxu0 0
        %2097 = vmatpush1.bf16.xpose.msra.mxu0 0
        %2098 = vmatprep.subr.bf16.mxu0 0
        %2099 = vmatpush1.bf16.xpose.msra.mxu0 0
        %2100 = vmatprep.subr.bf16.mxu0 0
        %2101 = vmatpush1.bf16.xpose.msra.mxu0 0
        %2102 = vmatprep.subr.bf16.mxu0 0
        %2103 = vmatpush1.bf16.xpose.msra.mxu0 0
        %2104 = vmatprep.subr.bf16.mxu0 0
        %2105 = vmatpush1.bf16.xpose.msra.mxu0 0
        %2106 = vmatprep.subr.bf16.mxu0 0
        %2107 = vmatpush1.bf16.xpose.msra.mxu0 0
        %2108 = vmatprep.subr.bf16.mxu0 0
        %2109 = vmatpush1.bf16.xpose.msra.mxu0 0
        %2110 = vmatprep.subr.bf16.mxu0 0
        %2111 = vmatpush1.bf16.xpose.msra.mxu0 0
        %2112 = vmatprep.subr.bf16.mxu0 0
        %2113 = vmatpush1.bf16.xpose.msra.mxu0 0
        %2114 = vmatprep.subr.bf16.mxu0 0
        %2115 = vmatpush1.bf16.xpose.msra.mxu0 0
        %2116 = vmatprep.subr.bf16.mxu0 0
        %2117 = vmatpush1.bf16.xpose.msra.mxu0 0
        %2118 = vmatprep.subr.bf16.mxu0 0
        %2119 = vmatpush1.bf16.xpose.msra.mxu0 0
        %2120 = vmatprep.subr.bf16.mxu0 0
        %2121 = vmatpush1.bf16.xpose.msra.mxu0 0
        %2122 = vmatprep.mubr.bf16.mxu0 0
        %2123 = vmatmul.mubr.bf16.gmra.mrb[0].mxu0 %v2085
        %v2124 = vpop.f32.mrb[0].mxu0
        %v2125 = vadd.f32 0.0, %v2124
        %v2126 = vpop.f32.mrb[0].mxu0
        %v2127 = vpop.f32.mrb[0].mxu0
        %v2128 = vpop.f32.mrb[0].mxu0
        %2129 = vdwg.mxu0
        %v2130 = vrot.slane %v1626, 4
        %v2131 = vrot.slane %v1632, 4
        %v2133 = vsel %vm766, %v2130, 0
        %v2136 = vsel %vm766, %v2131, 0
        %2138 = vmatprep.subr.bf16.mxu0 0
        %2139 = vmatpush1.bf16.xpose.msra.mxu0 %v2136
        %2140 = vmatprep.subr.bf16.mxu0 0
        %2141 = vmatpush1.bf16.xpose.msra.mxu0 0
        %2142 = vmatprep.subr.bf16.mxu0 0
        %2143 = vmatpush1.bf16.xpose.msra.mxu0 0
        %2144 = vmatprep.subr.bf16.mxu0 0
        %2145 = vmatpush1.bf16.xpose.msra.mxu0 0
        %2146 = vmatprep.subr.bf16.mxu0 0
        %2147 = vmatpush1.bf16.xpose.msra.mxu0 0
        %2148 = vmatprep.subr.bf16.mxu0 0
        %2149 = vmatpush1.bf16.xpose.msra.mxu0 0
        %2150 = vmatprep.subr.bf16.mxu0 0
        %2151 = vmatpush1.bf16.xpose.msra.mxu0 0
        %2152 = vmatprep.subr.bf16.mxu0 0
        %2153 = vmatpush1.bf16.xpose.msra.mxu0 0
        %2154 = vmatprep.subr.bf16.mxu0 0
        %2155 = vmatpush1.bf16.xpose.msra.mxu0 0
        %2156 = vmatprep.subr.bf16.mxu0 0
        %2157 = vmatpush1.bf16.xpose.msra.mxu0 0
        %2158 = vmatprep.subr.bf16.mxu0 0
        %2159 = vmatpush1.bf16.xpose.msra.mxu0 0
        %2160 = vmatprep.subr.bf16.mxu0 0
        %2161 = vmatpush1.bf16.xpose.msra.mxu0 0
        %2162 = vmatprep.subr.bf16.mxu0 0
        %2163 = vmatpush1.bf16.xpose.msra.mxu0 0
        %2164 = vmatprep.subr.bf16.mxu0 0
        %2165 = vmatpush1.bf16.xpose.msra.mxu0 0
        %2166 = vmatprep.subr.bf16.mxu0 0
        %2167 = vmatpush1.bf16.xpose.msra.mxu0 0
        %2168 = vmatprep.subr.bf16.mxu0 0
        %2169 = vmatpush1.bf16.xpose.msra.mxu0 0
        %2170 = vmatprep.mubr.bf16.mxu0 0
        %2171 = vmatmul.mubr.bf16.gmra.mrb[0].mxu0 %v2133
        %v2172 = vpop.f32.mrb[0].mxu0
        %v2173 = vadd.f32 0.0, %v2172
        %v2174 = vpop.f32.mrb[0].mxu0
        %v2175 = vpop.f32.mrb[0].mxu0
        %v2176 = vpop.f32.mrb[0].mxu0
        %2177 = vdwg.mxu0
        %v2178 = vrot.slane %v1619, 4
        %v2179 = vrot.slane %v1621, 4
        %v2181 = vsel %vm766, %v2178, 0
        %v2184 = vsel %vm766, %v2179, 0
        %2186 = vmatprep.subr.bf16.mxu0 0
        %2187 = vmatpush1.bf16.xpose.msra.mxu0 %v2184
        %2188 = vmatprep.subr.bf16.mxu0 0
        %2189 = vmatpush1.bf16.xpose.msra.mxu0 0
        %2190 = vmatprep.subr.bf16.mxu0 0
        %2191 = vmatpush1.bf16.xpose.msra.mxu0 0
        %2192 = vmatprep.subr.bf16.mxu0 0
        %2193 = vmatpush1.bf16.xpose.msra.mxu0 0
        %2194 = vmatprep.subr.bf16.mxu0 0
        %2195 = vmatpush1.bf16.xpose.msra.mxu0 0
        %2196 = vmatprep.subr.bf16.mxu0 0
        %2197 = vmatpush1.bf16.xpose.msra.mxu0 0
        %2198 = vmatprep.subr.bf16.mxu0 0
        %2199 = vmatpush1.bf16.xpose.msra.mxu0 0
        %2200 = vmatprep.subr.bf16.mxu0 0
        %2201 = vmatpush1.bf16.xpose.msra.mxu0 0
        %2202 = vmatprep.subr.bf16.mxu0 0
        %2203 = vmatpush1.bf16.xpose.msra.mxu0 0
        %2204 = vmatprep.subr.bf16.mxu0 0
        %2205 = vmatpush1.bf16.xpose.msra.mxu0 0
        %2206 = vmatprep.subr.bf16.mxu0 0
        %2207 = vmatpush1.bf16.xpose.msra.mxu0 0
        %2208 = vmatprep.subr.bf16.mxu0 0
        %2209 = vmatpush1.bf16.xpose.msra.mxu0 0
        %2210 = vmatprep.subr.bf16.mxu0 0
        %2211 = vmatpush1.bf16.xpose.msra.mxu0 0
        %2212 = vmatprep.subr.bf16.mxu0 0
        %2213 = vmatpush1.bf16.xpose.msra.mxu0 0
        %2214 = vmatprep.subr.bf16.mxu0 0
        %2215 = vmatpush1.bf16.xpose.msra.mxu0 0
        %2216 = vmatprep.subr.bf16.mxu0 0
        %2217 = vmatpush1.bf16.xpose.msra.mxu0 0
        %2218 = vmatprep.mubr.bf16.mxu0 0
        %2219 = vmatmul.mubr.bf16.gmra.mrb[0].mxu0 %v2181
        %v2220 = vpop.f32.mrb[0].mxu0
        %v2221 = vadd.f32 0.0, %v2220
        %v2222 = vpop.f32.mrb[0].mxu0
        %v2223 = vpop.f32.mrb[0].mxu0
        %v2224 = vpop.f32.mrb[0].mxu0
        %2225 = vdwg.mxu0
        %v2226 = vrot.slane %v1629, 4
        %v2227 = vrot.slane %v1635, 4
        %v2229 = vsel %vm766, %v2226, 0
        %v2232 = vsel %vm766, %v2227, 0
        %2234 = vmatprep.subr.bf16.mxu0 0
        %2235 = vmatpush1.bf16.xpose.msra.mxu0 %v2232
        %2236 = vmatprep.subr.bf16.mxu0 0
        %2237 = vmatpush1.bf16.xpose.msra.mxu0 0
        %2238 = vmatprep.subr.bf16.mxu0 0
        %2239 = vmatpush1.bf16.xpose.msra.mxu0 0
        %2240 = vmatprep.subr.bf16.mxu0 0
        %2241 = vmatpush1.bf16.xpose.msra.mxu0 0
        %2242 = vmatprep.subr.bf16.mxu0 0
        %2243 = vmatpush1.bf16.xpose.msra.mxu0 0
        %2244 = vmatprep.subr.bf16.mxu0 0
        %2245 = vmatpush1.bf16.xpose.msra.mxu0 0
        %2246 = vmatprep.subr.bf16.mxu0 0
        %2247 = vmatpush1.bf16.xpose.msra.mxu0 0
        %2248 = vmatprep.subr.bf16.mxu0 0
        %2249 = vmatpush1.bf16.xpose.msra.mxu0 0
        %2250 = vmatprep.subr.bf16.mxu0 0
        %2251 = vmatpush1.bf16.xpose.msra.mxu0 0
        %2252 = vmatprep.subr.bf16.mxu0 0
        %2253 = vmatpush1.bf16.xpose.msra.mxu0 0
        %2254 = vmatprep.subr.bf16.mxu0 0
        %2255 = vmatpush1.bf16.xpose.msra.mxu0 0
        %2256 = vmatprep.subr.bf16.mxu0 0
        %2257 = vmatpush1.bf16.xpose.msra.mxu0 0
        %2258 = vmatprep.subr.bf16.mxu0 0
        %2259 = vmatpush1.bf16.xpose.msra.mxu0 0
        %2260 = vmatprep.subr.bf16.mxu0 0
        %2261 = vmatpush1.bf16.xpose.msra.mxu0 0
        %2262 = vmatprep.subr.bf16.mxu0 0
        %2263 = vmatpush1.bf16.xpose.msra.mxu0 0
        %2264 = vmatprep.subr.bf16.mxu0 0
        %2265 = vmatpush1.bf16.xpose.msra.mxu0 0
        %2266 = vmatprep.mubr.bf16.mxu0 0
        %2267 = vmatmul.mubr.bf16.gmra.mrb[0].mxu0 %v2229
        %v2268 = vpop.f32.mrb[0].mxu0
        %v2269 = vadd.f32 0.0, %v2268
        %v2270 = vpop.f32.mrb[0].mxu0
        %v2271 = vpop.f32.mrb[0].mxu0
        %v2272 = vpop.f32.mrb[0].mxu0
        %2273 = vdwg.mxu0
        %v2274 = vmul.f32 %v2125, 0.125
        %v2275 = vmul.f32 %v2173, 0.125
        %v2276 = vmul.f32 %v2221, 0.125
        %v2277 = vmul.f32 %v2269, 0.125
        %v2278 = vlaneseq
        %v2279 = vshrl.u32 %v2278, 7
        %v2280 = vsub.s32 1, %v2279
        %v2281 = vrot.slane %v878, %v2280
        %v2282 = vadd.f32 %v2274, %v2281
        %v2283 = vadd.f32 %v2275, %v2281
        %v2284 = vadd.f32 %v2276, %v2281
        %v2285 = vadd.f32 %v2277, %v2281
        %v2286 = vsel %vm1838, %v2282, -inf
        %2287 = vmax.xlane.f32.xlu0 %v2286
        %v2288 = vpop.xlane.xlu0 %2287
        %v2289 = vsel %vm1838, %v2283, -inf
        %2290 = vmax.xlane.f32.xlu0 %v2289
        %v2291 = vpop.xlane.xlu0 %2290
        %v2292 = vsel %vm1838, %v2284, -inf
        %2293 = vmax.xlane.f32.xlu0 %v2292
        %v2294 = vpop.xlane.xlu0 %2293
        %v2295 = vsel %vm1838, %v2285, -inf
        %2296 = vmax.xlane.f32.xlu0 %v2295
        %v2297 = vpop.xlane.xlu0 %2296
        %v2298 = vsub.f32 %v2282, %v2288
        %v2299 = vsub.f32 %v2283, %v2291
        %v2300 = vsub.f32 %v2284, %v2294
        %v2301 = vsub.f32 %v2285, %v2297
        %v2302 = vmul.f32 %v2298, 1.442695
        %v2303 = vpow.pop %v2302
        %v2304 = vmul.f32 %v2299, 1.442695
        %v2305 = vpow.pop %v2304
        %v2306 = vmul.f32 %v2300, 1.442695
        %v2307 = vpow.pop %v2306
        %v2308 = vmul.f32 %v2301, 1.442695
        %v2309 = vpow.pop %v2308
        %v2310 = vsel %vm1838, %v2303, 0.0
        %2311 = vadd.xlane.f32.xlu0 %v2310
        %v2312 = vpop.xlane.xlu0 %2311
        %v2313 = vsel %vm1838, %v2305, 0.0
        %2314 = vadd.xlane.f32.xlu0 %v2313
        %v2315 = vpop.xlane.xlu0 %2314
        %v2316 = vsel %vm1838, %v2307, 0.0
        %2317 = vadd.xlane.f32.xlu0 %v2316
        %v2318 = vpop.xlane.xlu0 %2317
        %v2319 = vsel %vm1838, %v2309, 0.0
        %2320 = vadd.xlane.f32.xlu0 %v2319
        %v2321 = vpop.xlane.xlu0 %2320
        %v2322 = vrcp.pop %v2312
        %v2323 = vrcp.pop %v2315
        %v2324 = vrcp.pop %v2318
        %v2325 = vrcp.pop %v2321
        %v2326 = vmul.f32 %v2303, %v2322
        %v2327 = vmul.f32 %v2305, %v2323
        %v2328 = vmul.f32 %v2307, %v2324
        %v2329 = vmul.f32 %v2309, %v2325
        %v2330 = vpack.c.bf16 %v2326, %v2326
        %v2331 = vpack.c.bf16 %v2327, %v2327
        %v2332 = vpack.c.bf16 %v2328, %v2328
        %v2333 = vpack.c.bf16 %v2329, %v2329
        %v2334 = vrot.slane %v1622, 4
        %v2336 = vsel %vm1838, %v2330, 0
        %v2339 = vsel %vm1890, %v2334, 0
        %2341 = vmatprep.subr.bf16.mxu0 0
        %2342 = vmatpush1.bf16.msra.mxu0 %v2339
        %2343 = vmatprep.subr.bf16.mxu0 0
        %2344 = vmatpush1.bf16.msra.mxu0 0
        %2345 = vmatprep.subr.bf16.mxu0 0
        %2346 = vmatpush1.bf16.msra.mxu0 0
        %2347 = vmatprep.subr.bf16.mxu0 0
        %2348 = vmatpush1.bf16.msra.mxu0 0
        %2349 = vmatprep.subr.bf16.mxu0 0
        %2350 = vmatpush1.bf16.msra.mxu0 0
        %2351 = vmatprep.subr.bf16.mxu0 0
        %2352 = vmatpush1.bf16.msra.mxu0 0
        %2353 = vmatprep.subr.bf16.mxu0 0
        %2354 = vmatpush1.bf16.msra.mxu0 0
        %2355 = vmatprep.subr.bf16.mxu0 0
        %2356 = vmatpush1.bf16.msra.mxu0 0
        %2357 = vmatprep.subr.bf16.mxu0 0
        %2358 = vmatpush1.bf16.msra.mxu0 0
        %2359 = vmatprep.subr.bf16.mxu0 0
        %2360 = vmatpush1.bf16.msra.mxu0 0
        %2361 = vmatprep.subr.bf16.mxu0 0
        %2362 = vmatpush1.bf16.msra.mxu0 0
        %2363 = vmatprep.subr.bf16.mxu0 0
        %2364 = vmatpush1.bf16.msra.mxu0 0
        %2365 = vmatprep.subr.bf16.mxu0 0
        %2366 = vmatpush1.bf16.msra.mxu0 0
        %2367 = vmatprep.subr.bf16.mxu0 0
        %2368 = vmatpush1.bf16.msra.mxu0 0
        %2369 = vmatprep.subr.bf16.mxu0 0
        %2370 = vmatpush1.bf16.msra.mxu0 0
        %2371 = vmatprep.subr.bf16.mxu0 0
        %2372 = vmatpush1.bf16.msra.mxu0 0
        %2373 = vmatprep.mubr.bf16.mxu0 0
        %2374 = vmatmul.mubr.bf16.gmra.mrb[0].mxu0 %v2336
        %v2375 = vpop.f32.mrb[0].mxu0
        %v2376 = vadd.f32 0.0, %v2375
        %v2377 = vpop.f32.mrb[0].mxu0
        %v2378 = vpop.f32.mrb[0].mxu0
        %v2379 = vpop.f32.mrb[0].mxu0
        %2380 = vdwg.mxu0
        %v2381 = vrot.slane %v1638, 4
        %v2383 = vsel %vm1838, %v2331, 0
        %v2386 = vsel %vm1890, %v2381, 0
        %2388 = vmatprep.subr.bf16.mxu0 0
        %2389 = vmatpush1.bf16.msra.mxu0 %v2386
        %2390 = vmatprep.subr.bf16.mxu0 0
        %2391 = vmatpush1.bf16.msra.mxu0 0
        %2392 = vmatprep.subr.bf16.mxu0 0
        %2393 = vmatpush1.bf16.msra.mxu0 0
        %2394 = vmatprep.subr.bf16.mxu0 0
        %2395 = vmatpush1.bf16.msra.mxu0 0
        %2396 = vmatprep.subr.bf16.mxu0 0
        %2397 = vmatpush1.bf16.msra.mxu0 0
        %2398 = vmatprep.subr.bf16.mxu0 0
        %2399 = vmatpush1.bf16.msra.mxu0 0
        %2400 = vmatprep.subr.bf16.mxu0 0
        %2401 = vmatpush1.bf16.msra.mxu0 0
        %2402 = vmatprep.subr.bf16.mxu0 0
        %2403 = vmatpush1.bf16.msra.mxu0 0
        %2404 = vmatprep.subr.bf16.mxu0 0
        %2405 = vmatpush1.bf16.msra.mxu0 0
        %2406 = vmatprep.subr.bf16.mxu0 0
        %2407 = vmatpush1.bf16.msra.mxu0 0
        %2408 = vmatprep.subr.bf16.mxu0 0
        %2409 = vmatpush1.bf16.msra.mxu0 0
        %2410 = vmatprep.subr.bf16.mxu0 0
        %2411 = vmatpush1.bf16.msra.mxu0 0
        %2412 = vmatprep.subr.bf16.mxu0 0
        %2413 = vmatpush1.bf16.msra.mxu0 0
        %2414 = vmatprep.subr.bf16.mxu0 0
        %2415 = vmatpush1.bf16.msra.mxu0 0
        %2416 = vmatprep.subr.bf16.mxu0 0
        %2417 = vmatpush1.bf16.msra.mxu0 0
        %2418 = vmatprep.subr.bf16.mxu0 0
        %2419 = vmatpush1.bf16.msra.mxu0 0
        %2420 = vmatprep.mubr.bf16.mxu0 0
        %2421 = vmatmul.mubr.bf16.gmra.mrb[0].mxu0 %v2383
        %v2422 = vpop.f32.mrb[0].mxu0
        %v2423 = vadd.f32 0.0, %v2422
        %v2424 = vpop.f32.mrb[0].mxu0
        %v2425 = vpop.f32.mrb[0].mxu0
        %v2426 = vpop.f32.mrb[0].mxu0
        %2427 = vdwg.mxu0
        %v2428 = vrot.slane %v1623, 4
        %v2430 = vsel %vm1838, %v2332, 0
        %v2433 = vsel %vm1890, %v2428, 0
        %2435 = vmatprep.subr.bf16.mxu0 0
        %2436 = vmatpush1.bf16.msra.mxu0 %v2433
        %2437 = vmatprep.subr.bf16.mxu0 0
        %2438 = vmatpush1.bf16.msra.mxu0 0
        %2439 = vmatprep.subr.bf16.mxu0 0
        %2440 = vmatpush1.bf16.msra.mxu0 0
        %2441 = vmatprep.subr.bf16.mxu0 0
        %2442 = vmatpush1.bf16.msra.mxu0 0
        %2443 = vmatprep.subr.bf16.mxu0 0
        %2444 = vmatpush1.bf16.msra.mxu0 0
        %2445 = vmatprep.subr.bf16.mxu0 0
        %2446 = vmatpush1.bf16.msra.mxu0 0
        %2447 = vmatprep.subr.bf16.mxu0 0
        %2448 = vmatpush1.bf16.msra.mxu0 0
        %2449 = vmatprep.subr.bf16.mxu0 0
        %2450 = vmatpush1.bf16.msra.mxu0 0
        %2451 = vmatprep.subr.bf16.mxu0 0
        %2452 = vmatpush1.bf16.msra.mxu0 0
        %2453 = vmatprep.subr.bf16.mxu0 0
        %2454 = vmatpush1.bf16.msra.mxu0 0
        %2455 = vmatprep.subr.bf16.mxu0 0
        %2456 = vmatpush1.bf16.msra.mxu0 0
        %2457 = vmatprep.subr.bf16.mxu0 0
        %2458 = vmatpush1.bf16.msra.mxu0 0
        %2459 = vmatprep.subr.bf16.mxu0 0
        %2460 = vmatpush1.bf16.msra.mxu0 0
        %2461 = vmatprep.subr.bf16.mxu0 0
        %2462 = vmatpush1.bf16.msra.mxu0 0
        %2463 = vmatprep.subr.bf16.mxu0 0
        %2464 = vmatpush1.bf16.msra.mxu0 0
        %2465 = vmatprep.subr.bf16.mxu0 0
        %2466 = vmatpush1.bf16.msra.mxu0 0
        %2467 = vmatprep.mubr.bf16.mxu0 0
        %2468 = vmatmul.mubr.bf16.gmra.mrb[0].mxu0 %v2430
        %v2469 = vpop.f32.mrb[0].mxu0
        %v2470 = vadd.f32 0.0, %v2469
        %v2471 = vpop.f32.mrb[0].mxu0
        %v2472 = vpop.f32.mrb[0].mxu0
        %v2473 = vpop.f32.mrb[0].mxu0
        %2474 = vdwg.mxu0
        %v2475 = vrot.slane %v1641, 4
        %v2477 = vsel %vm1838, %v2333, 0
        %v2480 = vsel %vm1890, %v2475, 0
        %2482 = vmatprep.subr.bf16.mxu0 0
        %2483 = vmatpush1.bf16.msra.mxu0 %v2480
        %2484 = vmatprep.subr.bf16.mxu0 0
        %2485 = vmatpush1.bf16.msra.mxu0 0
        %2486 = vmatprep.subr.bf16.mxu0 0
        %2487 = vmatpush1.bf16.msra.mxu0 0
        %2488 = vmatprep.subr.bf16.mxu0 0
        %2489 = vmatpush1.bf16.msra.mxu0 0
        %2490 = vmatprep.subr.bf16.mxu0 0
        %2491 = vmatpush1.bf16.msra.mxu0 0
        %2492 = vmatprep.subr.bf16.mxu0 0
        %2493 = vmatpush1.bf16.msra.mxu0 0
        %2494 = vmatprep.subr.bf16.mxu0 0
        %2495 = vmatpush1.bf16.msra.mxu0 0
        %2496 = vmatprep.subr.bf16.mxu0 0
        %2497 = vmatpush1.bf16.msra.mxu0 0
        %2498 = vmatprep.subr.bf16.mxu0 0
        %2499 = vmatpush1.bf16.msra.mxu0 0
        %2500 = vmatprep.subr.bf16.mxu0 0
        %2501 = vmatpush1.bf16.msra.mxu0 0
        %2502 = vmatprep.subr.bf16.mxu0 0
        %2503 = vmatpush1.bf16.msra.mxu0 0
        %2504 = vmatprep.subr.bf16.mxu0 0
        %2505 = vmatpush1.bf16.msra.mxu0 0
        %2506 = vmatprep.subr.bf16.mxu0 0
        %2507 = vmatpush1.bf16.msra.mxu0 0
        %2508 = vmatprep.subr.bf16.mxu0 0
        %2509 = vmatpush1.bf16.msra.mxu0 0
        %2510 = vmatprep.subr.bf16.mxu0 0
        %2511 = vmatpush1.bf16.msra.mxu0 0
        %2512 = vmatprep.subr.bf16.mxu0 0
        %2513 = vmatpush1.bf16.msra.mxu0 0
        %2514 = vmatprep.mubr.bf16.mxu0 0
        %2515 = vmatmul.mubr.bf16.gmra.mrb[0].mxu0 %v2477
        %v2516 = vpop.f32.mrb[0].mxu0
        %v2517 = vadd.f32 0.0, %v2516
        %v2518 = vpop.f32.mrb[0].mxu0
        %v2519 = vpop.f32.mrb[0].mxu0
        %v2520 = vpop.f32.mrb[0].mxu0
        %2521 = vdwg.mxu0
        %2523 = vrot.lane.b32.xlu0 %v2423, 64
        %v2524 = vpop.permute.xlu0 %2523
        %2527 = vrot.lane.b32.xlu0 %v2517, 64
        %v2528 = vpop.permute.xlu0 %2527
        %v2530 = vsel %vm766, %v2376, %v2524
        %v2531 = vsel %vm766, %v2470, %v2528
        %v2532 = vpack.c.bf16 %v2530, %v2080
        %v2533 = vpack.c.bf16 %v2531, %v2081
        %v2534 = vld [vmem:[#allocation5] sm:$0xff]
        %v2535 = vld [vmem:[#allocation5 + $0x8] sm:$0xff]
        %v2536 = vld [vmem:[#allocation5 + $0x10] sm:$0xff]
        %v2537 = vld [vmem:[#allocation5 + $0x18] sm:$0xff]
        %v2538 = vld [vmem:[#allocation5 + $0x20] sm:$0xff]
        %v2539 = vld [vmem:[#allocation5 + $0x28] sm:$0xff]
        %v2540 = vld [vmem:[#allocation5 + $0x30] sm:$0xff]
        %v2541 = vld [vmem:[#allocation5 + $0x38] sm:$0xff]
        %v2542 = vld [vmem:[#allocation5 + $0x40] sm:$0xff]
        %v2543 = vld [vmem:[#allocation5 + $0x48] sm:$0xff]
        %v2544 = vld [vmem:[#allocation5 + $0x50] sm:$0xff]
        %v2545 = vld [vmem:[#allocation5 + $0x58] sm:$0xff]
        %v2546 = vld [vmem:[#allocation5 + $0x60] sm:$0xff]
        %v2547 = vld [vmem:[#allocation5 + $0x68] sm:$0xff]
        %v2548 = vld [vmem:[#allocation5 + $0x70] sm:$0xff]
        %v2549 = vld [vmem:[#allocation5 + $0x78] sm:$0xff]
        %v2550 = vld [vmem:[#allocation5 + $0x80] sm:$0xff]
        %v2551 = vld [vmem:[#allocation5 + $0x88] sm:$0xff]
        %v2552 = vld [vmem:[#allocation5 + $0x90] sm:$0xff]
        %v2553 = vld [vmem:[#allocation5 + $0x98] sm:$0xff]
        %v2554 = vld [vmem:[#allocation5 + $0xa0] sm:$0xff]
        %v2555 = vld [vmem:[#allocation5 + $0xa8] sm:$0xff]
        %v2556 = vld [vmem:[#allocation5 + $0xb0] sm:$0xff]
        %v2557 = vld [vmem:[#allocation5 + $0xb8] sm:$0xff]
        %v2558 = vld [vmem:[#allocation5 + $0xc0] sm:$0xff]
        %v2559 = vld [vmem:[#allocation5 + $0xc8] sm:$0xff]
        %v2560 = vld [vmem:[#allocation5 + $0xd0] sm:$0xff]
        %v2561 = vld [vmem:[#allocation5 + $0xd8] sm:$0xff]
        %v2562 = vld [vmem:[#allocation5 + $0xe0] sm:$0xff]
        %v2563 = vld [vmem:[#allocation5 + $0xe8] sm:$0xff]
        %v2564 = vld [vmem:[#allocation5 + $0xf0] sm:$0xff]
        %v2565 = vld [vmem:[#allocation5 + $0xf8] sm:$0xff]
        %v2566 = vld [vmem:[%s9] sm:$0x3]
        %v2568 = vlaneseq
        %v2569 = vshrl.u32 %v2568, 7
        %v2570 = vsub.s32 0, %v2569
        %v2571 = vrot.slane %v2566, %v2570
        %v2572 = vlaneseq
        %v2573 = vshrl.u32 %v2572, 7
        %v2574 = vsub.s32 1, %v2573
        %v2575 = vrot.slane %v2566, %v2574
        %v2610 = vunpack.c.l.b16 %v2534
        %v2611 = vunpack.c.h.b16 %v2534
        %v2612 = vunpack.c.l.b16 %v2535
        %v2613 = vunpack.c.h.b16 %v2535
        %v2614 = vunpack.c.l.b16 %v2536
        %v2615 = vunpack.c.h.b16 %v2536
        %v2616 = vunpack.c.l.b16 %v2537
        %v2617 = vunpack.c.h.b16 %v2537
        %v2618 = vunpack.c.l.b16 %v2538
        %v2619 = vunpack.c.h.b16 %v2538
        %v2620 = vunpack.c.l.b16 %v2539
        %v2621 = vunpack.c.h.b16 %v2539
        %v2622 = vunpack.c.l.b16 %v2540
        %v2623 = vunpack.c.h.b16 %v2540
        %v2624 = vunpack.c.l.b16 %v2541
        %v2625 = vunpack.c.h.b16 %v2541
        %v2626 = vunpack.c.l.b16 %v2542
        %v2627 = vunpack.c.h.b16 %v2542
        %v2628 = vunpack.c.l.b16 %v2543
        %v2629 = vunpack.c.h.b16 %v2543
        %v2630 = vunpack.c.l.b16 %v2544
        %v2631 = vunpack.c.h.b16 %v2544
        %v2632 = vunpack.c.l.b16 %v2545
        %v2633 = vunpack.c.h.b16 %v2545
        %v2634 = vunpack.c.l.b16 %v2546
        %v2635 = vunpack.c.h.b16 %v2546
        %v2636 = vunpack.c.l.b16 %v2547
        %v2637 = vunpack.c.h.b16 %v2547
        %v2638 = vunpack.c.l.b16 %v2548
        %v2639 = vunpack.c.h.b16 %v2548
        %v2640 = vunpack.c.l.b16 %v2549
        %v2641 = vunpack.c.h.b16 %v2549
        %v2642 = vunpack.c.l.b16 %v2550
        %v2643 = vunpack.c.h.b16 %v2550
        %v2644 = vunpack.c.l.b16 %v2551
        %v2645 = vunpack.c.h.b16 %v2551
        %v2646 = vunpack.c.l.b16 %v2552
        %v2647 = vunpack.c.h.b16 %v2552
        %v2648 = vunpack.c.l.b16 %v2553
        %v2649 = vunpack.c.h.b16 %v2553
        %v2650 = vunpack.c.l.b16 %v2554
        %v2651 = vunpack.c.h.b16 %v2554
        %v2652 = vunpack.c.l.b16 %v2555
        %v2653 = vunpack.c.h.b16 %v2555
        %v2654 = vunpack.c.l.b16 %v2556
        %v2655 = vunpack.c.h.b16 %v2556
        %v2656 = vunpack.c.l.b16 %v2557
        %v2657 = vunpack.c.h.b16 %v2557
        %v2658 = vunpack.c.l.b16 %v2558
        %v2659 = vunpack.c.h.b16 %v2558
        %v2660 = vunpack.c.l.b16 %v2559
        %v2661 = vunpack.c.h.b16 %v2559
        %v2662 = vunpack.c.l.b16 %v2560
        %v2663 = vunpack.c.h.b16 %v2560
        %v2664 = vunpack.c.l.b16 %v2561
        %v2665 = vunpack.c.h.b16 %v2561
        %v2666 = vunpack.c.l.b16 %v2562
        %v2667 = vunpack.c.h.b16 %v2562
        %v2668 = vunpack.c.l.b16 %v2563
        %v2669 = vunpack.c.h.b16 %v2563
        %v2670 = vunpack.c.l.b16 %v2564
        %v2671 = vunpack.c.h.b16 %v2564
        %v2672 = vunpack.c.l.b16 %v2565
        %v2673 = vunpack.c.h.b16 %v2565
        %v2674 = vpack.c.b16 %v2612, %v2610
        %v2675 = vpack.c.b16 %v2613, %v2611
        %v2676 = vpack.c.b16 %v2616, %v2614
        %v2677 = vpack.c.b16 %v2617, %v2615
        %v2678 = vpack.c.b16 %v2620, %v2618
        %v2679 = vpack.c.b16 %v2621, %v2619
        %v2680 = vpack.c.b16 %v2624, %v2622
        %v2681 = vpack.c.b16 %v2625, %v2623
        %v2682 = vpack.c.b16 %v2628, %v2626
        %v2683 = vpack.c.b16 %v2629, %v2627
        %v2684 = vpack.c.b16 %v2632, %v2630
        %v2685 = vpack.c.b16 %v2633, %v2631
        %v2686 = vpack.c.b16 %v2636, %v2634
        %v2687 = vpack.c.b16 %v2637, %v2635
        %v2688 = vpack.c.b16 %v2640, %v2638
        %v2689 = vpack.c.b16 %v2641, %v2639
        %v2690 = vpack.c.b16 %v2644, %v2642
        %v2691 = vpack.c.b16 %v2645, %v2643
        %v2692 = vpack.c.b16 %v2648, %v2646
        %v2693 = vpack.c.b16 %v2649, %v2647
        %v2694 = vpack.c.b16 %v2652, %v2650
        %v2695 = vpack.c.b16 %v2653, %v2651
        %v2696 = vpack.c.b16 %v2656, %v2654
        %v2697 = vpack.c.b16 %v2657, %v2655
        %v2698 = vpack.c.b16 %v2660, %v2658
        %v2699 = vpack.c.b16 %v2661, %v2659
        %v2700 = vpack.c.b16 %v2664, %v2662
        %v2701 = vpack.c.b16 %v2665, %v2663
        %v2702 = vpack.c.b16 %v2668, %v2666
        %v2703 = vpack.c.b16 %v2669, %v2667
        %v2704 = vpack.c.b16 %v2672, %v2670
        %v2705 = vpack.c.b16 %v2673, %v2671
        %2738 = vmatprep.subr.bf16.mxu0 %v2675
        %2739 = vmatpush1.bf16.msra.mxu0 %v2674
        %2740 = vmatprep.subr.bf16.mxu0 %v2677
        %2741 = vmatpush1.bf16.msra.mxu0 %v2676
        %2742 = vmatprep.subr.bf16.mxu0 %v2679
        %2743 = vmatpush1.bf16.msra.mxu0 %v2678
        %2744 = vmatprep.subr.bf16.mxu0 %v2681
        %2745 = vmatpush1.bf16.msra.mxu0 %v2680
        %2746 = vmatprep.subr.bf16.mxu0 %v2683
        %2747 = vmatpush1.bf16.msra.mxu0 %v2682
        %2748 = vmatprep.subr.bf16.mxu0 %v2685
        %2749 = vmatpush1.bf16.msra.mxu0 %v2684
        %2750 = vmatprep.subr.bf16.mxu0 %v2687
        %2751 = vmatpush1.bf16.msra.mxu0 %v2686
        %2752 = vmatprep.subr.bf16.mxu0 %v2689
        %2753 = vmatpush1.bf16.msra.mxu0 %v2688
        %2754 = vmatprep.subr.bf16.mxu0 %v2691
        %2755 = vmatpush1.bf16.msra.mxu0 %v2690
        %2756 = vmatprep.subr.bf16.mxu0 %v2693
        %2757 = vmatpush1.bf16.msra.mxu0 %v2692
        %2758 = vmatprep.subr.bf16.mxu0 %v2695
        %2759 = vmatpush1.bf16.msra.mxu0 %v2694
        %2760 = vmatprep.subr.bf16.mxu0 %v2697
        %2761 = vmatpush1.bf16.msra.mxu0 %v2696
        %2762 = vmatprep.subr.bf16.mxu0 %v2699
        %2763 = vmatpush1.bf16.msra.mxu0 %v2698
        %2764 = vmatprep.subr.bf16.mxu0 %v2701
        %2765 = vmatpush1.bf16.msra.mxu0 %v2700
        %2766 = vmatprep.subr.bf16.mxu0 %v2703
        %2767 = vmatpush1.bf16.msra.mxu0 %v2702
        %2768 = vmatprep.subr.bf16.mxu0 %v2705
        %2769 = vmatpush1.bf16.msra.mxu0 %v2704
        %2770 = vmatprep.mubr.bf16.mxu0 %v2533
        %2771 = vmatmul.mubr.bf16.gmra.mrb[0].mxu0 %v2532
        %v2772 = vpop.f32.mrb[0].mxu0
        %v2773 = vadd.f32 %v2571, %v2772
        %v2774 = vpop.f32.mrb[0].mxu0
        %v2775 = vadd.f32 %v2575, %v2774
        %v2776 = vpop.f32.mrb[0].mxu0
        %v2777 = vadd.f32 %v2571, %v2776
        %v2778 = vpop.f32.mrb[0].mxu0
        %v2779 = vadd.f32 %v2575, %v2778
        %2780 = vdwg.mxu0
        %v2781 = vadd.f32 %v874, %v2773
        %v2782 = vadd.f32 %v875, %v2775
        %v2783 = vadd.f32 %v876, %v2777
        %v2784 = vadd.f32 %v877, %v2779
        %v2785 = vld [vmem:[%s10] sm:$0x3]
        %v2786 = vld [vmem:[%s11] sm:$0x3]
        %v2787 = vadd.f32 %v2781, %v2782
        %2788 = vadd.xlane.f32.xlu0 %v2787
        %v2789 = vpop.xlane.xlu0 %2788
        %v2790 = vadd.f32 %v2783, %v2784
        %2791 = vadd.xlane.f32.xlu0 %v2790
        %v2792 = vpop.xlane.xlu0 %2791
        %v2793 = vmul.f32 %v2789, %v821
        %v2794 = vmul.f32 %v2792, %v821
        %v2795 = vsub.f32 %v2781, %v2793
        %v2796 = vsub.f32 %v2782, %v2793
        %v2797 = vsub.f32 %v2783, %v2794
        %v2798 = vsub.f32 %v2784, %v2794
        %v2799 = vmul.f32 %v2795, %v2795
        %v2800 = vmul.f32 %v2796, %v2796
        %v2801 = vmul.f32 %v2797, %v2797
        %v2802 = vmul.f32 %v2798, %v2798
        %v2803 = vadd.f32 %v2799, %v2800
        %2804 = vadd.xlane.f32.xlu0 %v2803
        %v2805 = vpop.xlane.xlu0 %2804
        %v2806 = vadd.f32 %v2801, %v2802
        %2807 = vadd.xlane.f32.xlu0 %v2806
        %v2808 = vpop.xlane.xlu0 %2807
        %v2809 = vmul.f32 %v2805, %v821
        %v2810 = vmul.f32 %v2808, %v821
        %v2811 = vadd.f32 %v2809, 1e-12
        %v2812 = vadd.f32 %v2810, 1e-12
        %v2813 = vrsqrt.pop %v2811
        %v2814 = vrsqrt.pop %v2812
        %v2815 = vmul.f32 %v2795, %v2813
        %v2816 = vmul.f32 %v2796, %v2813
        %v2817 = vmul.f32 %v2797, %v2814
        %v2818 = vmul.f32 %v2798, %v2814
        %v2820 = vlaneseq
        %v2821 = vshrl.u32 %v2820, 7
        %v2822 = vsub.s32 0, %v2821
        %v2823 = vrot.slane %v2785, %v2822
        %v2824 = vlaneseq
        %v2825 = vshrl.u32 %v2824, 7
        %v2826 = vsub.s32 1, %v2825
        %v2827 = vrot.slane %v2785, %v2826
        %v2830 = vmul.f32 %v2815, %v2823
        %v2831 = vmul.f32 %v2816, %v2827
        %v2832 = vmul.f32 %v2817, %v2823
        %v2833 = vmul.f32 %v2818, %v2827
        %v2835 = vlaneseq
        %v2836 = vshrl.u32 %v2835, 7
        %v2837 = vsub.s32 0, %v2836
        %v2838 = vrot.slane %v2786, %v2837
        %v2839 = vlaneseq
        %v2840 = vshrl.u32 %v2839, 7
        %v2841 = vsub.s32 1, %v2840
        %v2842 = vrot.slane %v2786, %v2841
        %v2845 = vadd.f32 %v2830, %v2838
        %v2846 = vadd.f32 %v2831, %v2842
        %v2847 = vadd.f32 %v2832, %v2838
        %v2848 = vadd.f32 %v2833, %v2842
        %v2849 = vpack.c.bf16 %v2847, %v2845
        %v2850 = vpack.c.bf16 %v2848, %v2846
        %v2851 = vld [vmem:[#allocation7] sm:$0xff]
        %v2852 = vld [vmem:[#allocation7 + $0x8] sm:$0xff]
        %v2853 = vld [vmem:[#allocation7 + $0x10] sm:$0xff]
        %v2854 = vld [vmem:[#allocation7 + $0x18] sm:$0xff]
        %v2855 = vld [vmem:[#allocation7 + $0x20] sm:$0xff]
        %v2856 = vld [vmem:[#allocation7 + $0x28] sm:$0xff]
        %v2857 = vld [vmem:[#allocation7 + $0x30] sm:$0xff]
        %v2858 = vld [vmem:[#allocation7 + $0x38] sm:$0xff]
        %v2859 = vld [vmem:[#allocation7 + $0x40] sm:$0xff]
        %v2860 = vld [vmem:[#allocation7 + $0x48] sm:$0xff]
        %v2861 = vld [vmem:[#allocation7 + $0x50] sm:$0xff]
        %v2862 = vld [vmem:[#allocation7 + $0x58] sm:$0xff]
        %v2863 = vld [vmem:[#allocation7 + $0x60] sm:$0xff]
        %v2864 = vld [vmem:[#allocation7 + $0x68] sm:$0xff]
        %v2865 = vld [vmem:[#allocation7 + $0x70] sm:$0xff]
        %v2866 = vld [vmem:[#allocation7 + $0x78] sm:$0xff]
        %v2867 = vld [vmem:[#allocation7 + $0x80] sm:$0xff]
        %v2868 = vld [vmem:[#allocation7 + $0x88] sm:$0xff]
        %v2869 = vld [vmem:[#allocation7 + $0x90] sm:$0xff]
        %v2870 = vld [vmem:[#allocation7 + $0x98] sm:$0xff]
        %v2871 = vld [vmem:[#allocation7 + $0xa0] sm:$0xff]
        %v2872 = vld [vmem:[#allocation7 + $0xa8] sm:$0xff]
        %v2873 = vld [vmem:[#allocation7 + $0xb0] sm:$0xff]
        %v2874 = vld [vmem:[#allocation7 + $0xb8] sm:$0xff]
        %v2875 = vld [vmem:[#allocation7 + $0xc0] sm:$0xff]
        %v2876 = vld [vmem:[#allocation7 + $0xc8] sm:$0xff]
        %v2877 = vld [vmem:[#allocation7 + $0xd0] sm:$0xff]
        %v2878 = vld [vmem:[#allocation7 + $0xd8] sm:$0xff]
        %v2879 = vld [vmem:[#allocation7 + $0xe0] sm:$0xff]
        %v2880 = vld [vmem:[#allocation7 + $0xe8] sm:$0xff]
        %v2881 = vld [vmem:[#allocation7 + $0xf0] sm:$0xff]
        %v2882 = vld [vmem:[#allocation7 + $0xf8] sm:$0xff]
        %v2883 = vld [vmem:[#allocation7 + $0x100] sm:$0xff]
        %v2884 = vld [vmem:[#allocation7 + $0x108] sm:$0xff]
        %v2885 = vld [vmem:[#allocation7 + $0x110] sm:$0xff]
        %v2886 = vld [vmem:[#allocation7 + $0x118] sm:$0xff]
        %v2887 = vld [vmem:[#allocation7 + $0x120] sm:$0xff]
        %v2888 = vld [vmem:[#allocation7 + $0x128] sm:$0xff]
        %v2889 = vld [vmem:[#allocation7 + $0x130] sm:$0xff]
        %v2890 = vld [vmem:[#allocation7 + $0x138] sm:$0xff]
        %v2891 = vld [vmem:[#allocation7 + $0x140] sm:$0xff]
        %v2892 = vld [vmem:[#allocation7 + $0x148] sm:$0xff]
        %v2893 = vld [vmem:[#allocation7 + $0x150] sm:$0xff]
        %v2894 = vld [vmem:[#allocation7 + $0x158] sm:$0xff]
        %v2895 = vld [vmem:[#allocation7 + $0x160] sm:$0xff]
        %v2896 = vld [vmem:[#allocation7 + $0x168] sm:$0xff]
        %v2897 = vld [vmem:[#allocation7 + $0x170] sm:$0xff]
        %v2898 = vld [vmem:[#allocation7 + $0x178] sm:$0xff]
        %v2899 = vld [vmem:[#allocation7 + $0x180] sm:$0xff]
        %v2900 = vld [vmem:[#allocation7 + $0x188] sm:$0xff]
        %v2901 = vld [vmem:[#allocation7 + $0x190] sm:$0xff]
        %v2902 = vld [vmem:[#allocation7 + $0x198] sm:$0xff]
        %v2903 = vld [vmem:[#allocation7 + $0x1a0] sm:$0xff]
        %v2904 = vld [vmem:[#allocation7 + $0x1a8] sm:$0xff]
        %v2905 = vld [vmem:[#allocation7 + $0x1b0] sm:$0xff]
        %v2906 = vld [vmem:[#allocation7 + $0x1b8] sm:$0xff]
        %v2907 = vld [vmem:[#allocation7 + $0x1c0] sm:$0xff]
        %v2908 = vld [vmem:[#allocation7 + $0x1c8] sm:$0xff]
        %v2909 = vld [vmem:[#allocation7 + $0x1d0] sm:$0xff]
        %v2910 = vld [vmem:[#allocation7 + $0x1d8] sm:$0xff]
        %v2911 = vld [vmem:[#allocation7 + $0x1e0] sm:$0xff]
        %v2912 = vld [vmem:[#allocation7 + $0x1e8] sm:$0xff]
        %v2913 = vld [vmem:[#allocation7 + $0x1f0] sm:$0xff]
        %v2914 = vld [vmem:[#allocation7 + $0x1f8] sm:$0xff]
        %v2915 = vld [vmem:[%s13] sm:$0xf]
        %v2917 = vlaneseq
        %v2918 = vshrl.u32 %v2917, 7
        %v2919 = vsub.s32 0, %v2918
        %v2920 = vrot.slane %v2915, %v2919
        %v2921 = vlaneseq
        %v2922 = vshrl.u32 %v2921, 7
        %v2923 = vsub.s32 1, %v2922
        %v2924 = vrot.slane %v2915, %v2923
        %v2925 = vlaneseq
        %v2926 = vshrl.u32 %v2925, 7
        %v2927 = vsub.s32 2, %v2926
        %v2928 = vrot.slane %v2915, %v2927
        %v2929 = vlaneseq
        %v2930 = vshrl.u32 %v2929, 7
        %v2931 = vsub.s32 3, %v2930
        %v2932 = vrot.slane %v2915, %v2931
        %v3001 = vunpack.c.l.b16 %v2851
        %v3002 = vunpack.c.h.b16 %v2851
        %v3003 = vunpack.c.l.b16 %v2852
        %v3004 = vunpack.c.h.b16 %v2852
        %v3005 = vunpack.c.l.b16 %v2853
        %v3006 = vunpack.c.h.b16 %v2853
        %v3007 = vunpack.c.l.b16 %v2854
        %v3008 = vunpack.c.h.b16 %v2854
        %v3009 = vunpack.c.l.b16 %v2855
        %v3010 = vunpack.c.h.b16 %v2855
        %v3011 = vunpack.c.l.b16 %v2856
        %v3012 = vunpack.c.h.b16 %v2856
        %v3013 = vunpack.c.l.b16 %v2857
        %v3014 = vunpack.c.h.b16 %v2857
        %v3015 = vunpack.c.l.b16 %v2858
        %v3016 = vunpack.c.h.b16 %v2858
        %v3017 = vunpack.c.l.b16 %v2859
        %v3018 = vunpack.c.h.b16 %v2859
        %v3019 = vunpack.c.l.b16 %v2860
        %v3020 = vunpack.c.h.b16 %v2860
        %v3021 = vunpack.c.l.b16 %v2861
        %v3022 = vunpack.c.h.b16 %v2861
        %v3023 = vunpack.c.l.b16 %v2862
        %v3024 = vunpack.c.h.b16 %v2862
        %v3025 = vunpack.c.l.b16 %v2863
        %v3026 = vunpack.c.h.b16 %v2863
        %v3027 = vunpack.c.l.b16 %v2864
        %v3028 = vunpack.c.h.b16 %v2864
        %v3029 = vunpack.c.l.b16 %v2865
        %v3030 = vunpack.c.h.b16 %v2865
        %v3031 = vunpack.c.l.b16 %v2866
        %v3032 = vunpack.c.h.b16 %v2866
        %v3033 = vunpack.c.l.b16 %v2867
        %v3034 = vunpack.c.h.b16 %v2867
        %v3035 = vunpack.c.l.b16 %v2868
        %v3036 = vunpack.c.h.b16 %v2868
        %v3037 = vunpack.c.l.b16 %v2869
        %v3038 = vunpack.c.h.b16 %v2869
        %v3039 = vunpack.c.l.b16 %v2870
        %v3040 = vunpack.c.h.b16 %v2870
        %v3041 = vunpack.c.l.b16 %v2871
        %v3042 = vunpack.c.h.b16 %v2871
        %v3043 = vunpack.c.l.b16 %v2872
        %v3044 = vunpack.c.h.b16 %v2872
        %v3045 = vunpack.c.l.b16 %v2873
        %v3046 = vunpack.c.h.b16 %v2873
        %v3047 = vunpack.c.l.b16 %v2874
        %v3048 = vunpack.c.h.b16 %v2874
        %v3049 = vunpack.c.l.b16 %v2875
        %v3050 = vunpack.c.h.b16 %v2875
        %v3051 = vunpack.c.l.b16 %v2876
        %v3052 = vunpack.c.h.b16 %v2876
        %v3053 = vunpack.c.l.b16 %v2877
        %v3054 = vunpack.c.h.b16 %v2877
        %v3055 = vunpack.c.l.b16 %v2878
        %v3056 = vunpack.c.h.b16 %v2878
        %v3057 = vunpack.c.l.b16 %v2879
        %v3058 = vunpack.c.h.b16 %v2879
        %v3059 = vunpack.c.l.b16 %v2880
        %v3060 = vunpack.c.h.b16 %v2880
        %v3061 = vunpack.c.l.b16 %v2881
        %v3062 = vunpack.c.h.b16 %v2881
        %v3063 = vunpack.c.l.b16 %v2882
        %v3064 = vunpack.c.h.b16 %v2882
        %v3065 = vunpack.c.l.b16 %v2883
        %v3066 = vunpack.c.h.b16 %v2883
        %v3067 = vunpack.c.l.b16 %v2884
        %v3068 = vunpack.c.h.b16 %v2884
        %v3069 = vunpack.c.l.b16 %v2885
        %v3070 = vunpack.c.h.b16 %v2885
        %v3071 = vunpack.c.l.b16 %v2886
        %v3072 = vunpack.c.h.b16 %v2886
        %v3073 = vunpack.c.l.b16 %v2887
        %v3074 = vunpack.c.h.b16 %v2887
        %v3075 = vunpack.c.l.b16 %v2888
        %v3076 = vunpack.c.h.b16 %v2888
        %v3077 = vunpack.c.l.b16 %v2889
        %v3078 = vunpack.c.h.b16 %v2889
        %v3079 = vunpack.c.l.b16 %v2890
        %v3080 = vunpack.c.h.b16 %v2890
        %v3081 = vunpack.c.l.b16 %v2891
        %v3082 = vunpack.c.h.b16 %v2891
        %v3083 = vunpack.c.l.b16 %v2892
        %v3084 = vunpack.c.h.b16 %v2892
        %v3085 = vunpack.c.l.b16 %v2893
        %v3086 = vunpack.c.h.b16 %v2893
        %v3087 = vunpack.c.l.b16 %v2894
        %v3088 = vunpack.c.h.b16 %v2894
        %v3089 = vunpack.c.l.b16 %v2895
        %v3090 = vunpack.c.h.b16 %v2895
        %v3091 = vunpack.c.l.b16 %v2896
        %v3092 = vunpack.c.h.b16 %v2896
        %v3093 = vunpack.c.l.b16 %v2897
        %v3094 = vunpack.c.h.b16 %v2897
        %v3095 = vunpack.c.l.b16 %v2898
        %v3096 = vunpack.c.h.b16 %v2898
        %v3097 = vunpack.c.l.b16 %v2899
        %v3098 = vunpack.c.h.b16 %v2899
        %v3099 = vunpack.c.l.b16 %v2900
        %v3100 = vunpack.c.h.b16 %v2900
        %v3101 = vunpack.c.l.b16 %v2901
        %v3102 = vunpack.c.h.b16 %v2901
        %v3103 = vunpack.c.l.b16 %v2902
        %v3104 = vunpack.c.h.b16 %v2902
        %v3105 = vunpack.c.l.b16 %v2903
        %v3106 = vunpack.c.h.b16 %v2903
        %v3107 = vunpack.c.l.b16 %v2904
        %v3108 = vunpack.c.h.b16 %v2904
        %v3109 = vunpack.c.l.b16 %v2905
        %v3110 = vunpack.c.h.b16 %v2905
        %v3111 = vunpack.c.l.b16 %v2906
        %v3112 = vunpack.c.h.b16 %v2906
        %v3113 = vunpack.c.l.b16 %v2907
        %v3114 = vunpack.c.h.b16 %v2907
        %v3115 = vunpack.c.l.b16 %v2908
        %v3116 = vunpack.c.h.b16 %v2908
        %v3117 = vunpack.c.l.b16 %v2909
        %v3118 = vunpack.c.h.b16 %v2909
        %v3119 = vunpack.c.l.b16 %v2910
        %v3120 = vunpack.c.h.b16 %v2910
        %v3121 = vunpack.c.l.b16 %v2911
        %v3122 = vunpack.c.h.b16 %v2911
        %v3123 = vunpack.c.l.b16 %v2912
        %v3124 = vunpack.c.h.b16 %v2912
        %v3125 = vunpack.c.l.b16 %v2913
        %v3126 = vunpack.c.h.b16 %v2913
        %v3127 = vunpack.c.l.b16 %v2914
        %v3128 = vunpack.c.h.b16 %v2914
        %v3129 = vpack.c.b16 %v3005, %v3001
        %v3130 = vpack.c.b16 %v3006, %v3002
        %v3131 = vpack.c.b16 %v3007, %v3003
        %v3132 = vpack.c.b16 %v3008, %v3004
        %v3133 = vpack.c.b16 %v3013, %v3009
        %v3134 = vpack.c.b16 %v3014, %v3010
        %v3135 = vpack.c.b16 %v3015, %v3011
        %v3136 = vpack.c.b16 %v3016, %v3012
        %v3137 = vpack.c.b16 %v3021, %v3017
        %v3138 = vpack.c.b16 %v3022, %v3018
        %v3139 = vpack.c.b16 %v3023, %v3019
        %v3140 = vpack.c.b16 %v3024, %v3020
        %v3141 = vpack.c.b16 %v3029, %v3025
        %v3142 = vpack.c.b16 %v3030, %v3026
        %v3143 = vpack.c.b16 %v3031, %v3027
        %v3144 = vpack.c.b16 %v3032, %v3028
        %v3145 = vpack.c.b16 %v3037, %v3033
        %v3146 = vpack.c.b16 %v3038, %v3034
        %v3147 = vpack.c.b16 %v3039, %v3035
        %v3148 = vpack.c.b16 %v3040, %v3036
        %v3149 = vpack.c.b16 %v3045, %v3041
        %v3150 = vpack.c.b16 %v3046, %v3042
        %v3151 = vpack.c.b16 %v3047, %v3043
        %v3152 = vpack.c.b16 %v3048, %v3044
        %v3153 = vpack.c.b16 %v3053, %v3049
        %v3154 = vpack.c.b16 %v3054, %v3050
        %v3155 = vpack.c.b16 %v3055, %v3051
        %v3156 = vpack.c.b16 %v3056, %v3052
        %v3157 = vpack.c.b16 %v3061, %v3057
        %v3158 = vpack.c.b16 %v3062, %v3058
        %v3159 = vpack.c.b16 %v3063, %v3059
        %v3160 = vpack.c.b16 %v3064, %v3060
        %v3161 = vpack.c.b16 %v3069, %v3065
        %v3162 = vpack.c.b16 %v3070, %v3066
        %v3163 = vpack.c.b16 %v3071, %v3067
        %v3164 = vpack.c.b16 %v3072, %v3068
        %v3165 = vpack.c.b16 %v3077, %v3073
        %v3166 = vpack.c.b16 %v3078, %v3074
        %v3167 = vpack.c.b16 %v3079, %v3075
        %v3168 = vpack.c.b16 %v3080, %v3076
        %v3169 = vpack.c.b16 %v3085, %v3081
        %v3170 = vpack.c.b16 %v3086, %v3082
        %v3171 = vpack.c.b16 %v3087, %v3083
        %v3172 = vpack.c.b16 %v3088, %v3084
        %v3173 = vpack.c.b16 %v3093, %v3089
        %v3174 = vpack.c.b16 %v3094, %v3090
        %v3175 = vpack.c.b16 %v3095, %v3091
        %v3176 = vpack.c.b16 %v3096, %v3092
        %v3177 = vpack.c.b16 %v3101, %v3097
        %v3178 = vpack.c.b16 %v3102, %v3098
        %v3179 = vpack.c.b16 %v3103, %v3099
        %v3180 = vpack.c.b16 %v3104, %v3100
        %v3181 = vpack.c.b16 %v3109, %v3105
        %v3182 = vpack.c.b16 %v3110, %v3106
        %v3183 = vpack.c.b16 %v3111, %v3107
        %v3184 = vpack.c.b16 %v3112, %v3108
        %v3185 = vpack.c.b16 %v3117, %v3113
        %v3186 = vpack.c.b16 %v3118, %v3114
        %v3187 = vpack.c.b16 %v3119, %v3115
        %v3188 = vpack.c.b16 %v3120, %v3116
        %v3189 = vpack.c.b16 %v3125, %v3121
        %v3190 = vpack.c.b16 %v3126, %v3122
        %v3191 = vpack.c.b16 %v3127, %v3123
        %v3192 = vpack.c.b16 %v3128, %v3124
        %3257 = vmatprep.subr.bf16.mxu0 %v3130
        %3258 = vmatpush1.bf16.msra.mxu0 %v3129
        %3259 = vmatprep.subr.bf16.mxu0 %v3134
        %3260 = vmatpush1.bf16.msra.mxu0 %v3133
        %3261 = vmatprep.subr.bf16.mxu0 %v3138
        %3262 = vmatpush1.bf16.msra.mxu0 %v3137
        %3263 = vmatprep.subr.bf16.mxu0 %v3142
        %3264 = vmatpush1.bf16.msra.mxu0 %v3141
        %3265 = vmatprep.subr.bf16.mxu0 %v3146
        %3266 = vmatpush1.bf16.msra.mxu0 %v3145
        %3267 = vmatprep.subr.bf16.mxu0 %v3150
        %3268 = vmatpush1.bf16.msra.mxu0 %v3149
        %3269 = vmatprep.subr.bf16.mxu0 %v3154
        %3270 = vmatpush1.bf16.msra.mxu0 %v3153
        %3271 = vmatprep.subr.bf16.mxu0 %v3158
        %3272 = vmatpush1.bf16.msra.mxu0 %v3157
        %3273 = vmatprep.subr.bf16.mxu0 %v3162
        %3274 = vmatpush1.bf16.msra.mxu0 %v3161
        %3275 = vmatprep.subr.bf16.mxu0 %v3166
        %3276 = vmatpush1.bf16.msra.mxu0 %v3165
        %3277 = vmatprep.subr.bf16.mxu0 %v3170
        %3278 = vmatpush1.bf16.msra.mxu0 %v3169
        %3279 = vmatprep.subr.bf16.mxu0 %v3174
        %3280 = vmatpush1.bf16.msra.mxu0 %v3173
        %3281 = vmatprep.subr.bf16.mxu0 %v3178
        %3282 = vmatpush1.bf16.msra.mxu0 %v3177
        %3283 = vmatprep.subr.bf16.mxu0 %v3182
        %3284 = vmatpush1.bf16.msra.mxu0 %v3181
        %3285 = vmatprep.subr.bf16.mxu0 %v3186
        %3286 = vmatpush1.bf16.msra.mxu0 %v3185
        %3287 = vmatprep.subr.bf16.mxu0 %v3190
        %3288 = vmatpush1.bf16.msra.mxu0 %v3189
        %3289 = vmatprep.mubr.bf16.mxu0 %v2850
        %3290 = vmatmul.mubr.bf16.gmra.mrb[0].mxu0 %v2849
        %v3291 = vpop.f32.mrb[0].mxu0
        %v3292 = vadd.f32 %v2920, %v3291
        %v3293 = vpop.f32.mrb[0].mxu0
        %v3294 = vadd.f32 %v2924, %v3293
        %v3295 = vpop.f32.mrb[0].mxu0
        %v3296 = vadd.f32 %v2920, %v3295
        %v3297 = vpop.f32.mrb[0].mxu0
        %v3298 = vadd.f32 %v2924, %v3297
        %3299 = vdwg.mxu0
        %3300 = vmatprep.subr.bf16.mxu0 %v3132
        %3301 = vmatpush1.bf16.msra.mxu0 %v3131
        %3302 = vmatprep.subr.bf16.mxu0 %v3136
        %3303 = vmatpush1.bf16.msra.mxu0 %v3135
        %3304 = vmatprep.subr.bf16.mxu0 %v3140
        %3305 = vmatpush1.bf16.msra.mxu0 %v3139
        %3306 = vmatprep.subr.bf16.mxu0 %v3144
        %3307 = vmatpush1.bf16.msra.mxu0 %v3143
        %3308 = vmatprep.subr.bf16.mxu0 %v3148
        %3309 = vmatpush1.bf16.msra.mxu0 %v3147
        %3310 = vmatprep.subr.bf16.mxu0 %v3152
        %3311 = vmatpush1.bf16.msra.mxu0 %v3151
        %3312 = vmatprep.subr.bf16.mxu0 %v3156
        %3313 = vmatpush1.bf16.msra.mxu0 %v3155
        %3314 = vmatprep.subr.bf16.mxu0 %v3160
        %3315 = vmatpush1.bf16.msra.mxu0 %v3159
        %3316 = vmatprep.subr.bf16.mxu0 %v3164
        %3317 = vmatpush1.bf16.msra.mxu0 %v3163
        %3318 = vmatprep.subr.bf16.mxu0 %v3168
        %3319 = vmatpush1.bf16.msra.mxu0 %v3167
        %3320 = vmatprep.subr.bf16.mxu0 %v3172
        %3321 = vmatpush1.bf16.msra.mxu0 %v3171
        %3322 = vmatprep.subr.bf16.mxu0 %v3176
        %3323 = vmatpush1.bf16.msra.mxu0 %v3175
        %3324 = vmatprep.subr.bf16.mxu0 %v3180
        %3325 = vmatpush1.bf16.msra.mxu0 %v3179
        %3326 = vmatprep.subr.bf16.mxu0 %v3184
        %3327 = vmatpush1.bf16.msra.mxu0 %v3183
        %3328 = vmatprep.subr.bf16.mxu0 %v3188
        %3329 = vmatpush1.bf16.msra.mxu0 %v3187
        %3330 = vmatprep.subr.bf16.mxu0 %v3192
        %3331 = vmatpush1.bf16.msra.mxu0 %v3191
        %3332 = vmatprep.mubr.bf16.mxu0 %v2850
        %3333 = vmatmul.mubr.bf16.gmra.mrb[0].mxu0 %v2849
        %v3334 = vpop.f32.mrb[0].mxu0
        %v3335 = vadd.f32 %v2928, %v3334
        %v3336 = vpop.f32.mrb[0].mxu0
        %v3337 = vadd.f32 %v2932, %v3336
        %v3338 = vpop.f32.mrb[0].mxu0
        %v3339 = vadd.f32 %v2928, %v3338
        %v3340 = vpop.f32.mrb[0].mxu0
        %v3341 = vadd.f32 %v2932, %v3340
        %3342 = vdwg.mxu0
        %v3343 = vmul.f32 %v3292, %v3292
        %v3344 = vmul.f32 %v3294, %v3294
        %v3345 = vmul.f32 %v3335, %v3335
        %v3346 = vmul.f32 %v3337, %v3337
        %v3347 = vmul.f32 %v3296, %v3296
        %v3348 = vmul.f32 %v3298, %v3298
        %v3349 = vmul.f32 %v3339, %v3339
        %v3350 = vmul.f32 %v3341, %v3341
        %v3351 = vmul.f32 %v3292, %v3343
        %v3352 = vmul.f32 %v3294, %v3344
        %v3353 = vmul.f32 %v3335, %v3345
        %v3354 = vmul.f32 %v3337, %v3346
        %v3355 = vmul.f32 %v3296, %v3347
        %v3356 = vmul.f32 %v3298, %v3348
        %v3357 = vmul.f32 %v3339, %v3349
        %v3358 = vmul.f32 %v3341, %v3350
        %v3359 = vmul.f32 %v3351, 0.044715
        %v3360 = vmul.f32 %v3352, 0.044715
        %v3361 = vmul.f32 %v3353, 0.044715
        %v3362 = vmul.f32 %v3354, 0.044715
        %v3363 = vmul.f32 %v3355, 0.044715
        %v3364 = vmul.f32 %v3356, 0.044715
        %v3365 = vmul.f32 %v3357, 0.044715
        %v3366 = vmul.f32 %v3358, 0.044715
        %v3367 = vadd.f32 %v3292, %v3359
        %v3368 = vadd.f32 %v3294, %v3360
        %v3369 = vadd.f32 %v3335, %v3361
        %v3370 = vadd.f32 %v3337, %v3362
        %v3371 = vadd.f32 %v3296, %v3363
        %v3372 = vadd.f32 %v3298, %v3364
        %v3373 = vadd.f32 %v3339, %v3365
        %v3374 = vadd.f32 %v3341, %v3366
        %v3375 = vmul.f32 %v3367, 0.7978846
        %v3376 = vmul.f32 %v3368, 0.7978846
        %v3377 = vmul.f32 %v3369, 0.7978846
        %v3378 = vmul.f32 %v3370, 0.7978846
        %v3379 = vmul.f32 %v3371, 0.7978846
        %v3380 = vmul.f32 %v3372, 0.7978846
        %v3381 = vmul.f32 %v3373, 0.7978846
        %v3382 = vmul.f32 %v3374, 0.7978846
        %v3383 = vtanh.pop %v3375
        %v3384 = vtanh.pop %v3376
        %v3385 = vtanh.pop %v3377
        %v3386 = vtanh.pop %v3378
        %v3387 = vtanh.pop %v3379
        %v3388 = vtanh.pop %v3380
        %v3389 = vtanh.pop %v3381
        %v3390 = vtanh.pop %v3382
        %v3391 = vadd.f32 %v3383, 1.0
        %v3392 = vadd.f32 %v3384, 1.0
        %v3393 = vadd.f32 %v3385, 1.0
        %v3394 = vadd.f32 %v3386, 1.0
        %v3395 = vadd.f32 %v3387, 1.0
        %v3396 = vadd.f32 %v3388, 1.0
        %v3397 = vadd.f32 %v3389, 1.0
        %v3398 = vadd.f32 %v3390, 1.0
        %v3399 = vmul.f32 %v3391, 0.5
        %v3400 = vmul.f32 %v3392, 0.5
        %v3401 = vmul.f32 %v3393, 0.5
        %v3402 = vmul.f32 %v3394, 0.5
        %v3403 = vmul.f32 %v3395, 0.5
        %v3404 = vmul.f32 %v3396, 0.5
        %v3405 = vmul.f32 %v3397, 0.5
        %v3406 = vmul.f32 %v3398, 0.5
        %v3407 = vmul.f32 %v3292, %v3399
        %v3408 = vmul.f32 %v3294, %v3400
        %v3409 = vmul.f32 %v3335, %v3401
        %v3410 = vmul.f32 %v3337, %v3402
        %v3411 = vmul.f32 %v3296, %v3403
        %v3412 = vmul.f32 %v3298, %v3404
        %v3413 = vmul.f32 %v3339, %v3405
        %v3414 = vmul.f32 %v3341, %v3406
        %v3415 = vpack.c.bf16 %v3411, %v3407
        %v3416 = vpack.c.bf16 %v3412, %v3408
        %v3417 = vpack.c.bf16 %v3413, %v3409
        %v3418 = vpack.c.bf16 %v3414, %v3410
        %v3419 = vld [vmem:[#allocation8] sm:$0xff]
        %v3420 = vld [vmem:[#allocation8 + $0x8] sm:$0xff]
        %v3421 = vld [vmem:[#allocation8 + $0x10] sm:$0xff]
        %v3422 = vld [vmem:[#allocation8 + $0x18] sm:$0xff]
        %v3423 = vld [vmem:[#allocation8 + $0x20] sm:$0xff]
        %v3424 = vld [vmem:[#allocation8 + $0x28] sm:$0xff]
        %v3425 = vld [vmem:[#allocation8 + $0x30] sm:$0xff]
        %v3426 = vld [vmem:[#allocation8 + $0x38] sm:$0xff]
        %v3427 = vld [vmem:[#allocation8 + $0x40] sm:$0xff]
        %v3428 = vld [vmem:[#allocation8 + $0x48] sm:$0xff]
        %v3429 = vld [vmem:[#allocation8 + $0x50] sm:$0xff]
        %v3430 = vld [vmem:[#allocation8 + $0x58] sm:$0xff]
        %v3431 = vld [vmem:[#allocation8 + $0x60] sm:$0xff]
        %v3432 = vld [vmem:[#allocation8 + $0x68] sm:$0xff]
        %v3433 = vld [vmem:[#allocation8 + $0x70] sm:$0xff]
        %v3434 = vld [vmem:[#allocation8 + $0x78] sm:$0xff]
        %v3435 = vld [vmem:[#allocation8 + $0x80] sm:$0xff]
        %v3436 = vld [vmem:[#allocation8 + $0x88] sm:$0xff]
        %v3437 = vld [vmem:[#allocation8 + $0x90] sm:$0xff]
        %v3438 = vld [vmem:[#allocation8 + $0x98] sm:$0xff]
        %v3439 = vld [vmem:[#allocation8 + $0xa0] sm:$0xff]
        %v3440 = vld [vmem:[#allocation8 + $0xa8] sm:$0xff]
        %v3441 = vld [vmem:[#allocation8 + $0xb0] sm:$0xff]
        %v3442 = vld [vmem:[#allocation8 + $0xb8] sm:$0xff]
        %v3443 = vld [vmem:[#allocation8 + $0xc0] sm:$0xff]
        %v3444 = vld [vmem:[#allocation8 + $0xc8] sm:$0xff]
        %v3445 = vld [vmem:[#allocation8 + $0xd0] sm:$0xff]
        %v3446 = vld [vmem:[#allocation8 + $0xd8] sm:$0xff]
        %v3447 = vld [vmem:[#allocation8 + $0xe0] sm:$0xff]
        %v3448 = vld [vmem:[#allocation8 + $0xe8] sm:$0xff]
        %v3449 = vld [vmem:[#allocation8 + $0xf0] sm:$0xff]
        %v3450 = vld [vmem:[#allocation8 + $0xf8] sm:$0xff]
        %v3451 = vld [vmem:[#allocation8 + $0x100] sm:$0xff]
        %v3452 = vld [vmem:[#allocation8 + $0x108] sm:$0xff]
        %v3453 = vld [vmem:[#allocation8 + $0x110] sm:$0xff]
        %v3454 = vld [vmem:[#allocation8 + $0x118] sm:$0xff]
        %v3455 = vld [vmem:[#allocation8 + $0x120] sm:$0xff]
        %v3456 = vld [vmem:[#allocation8 + $0x128] sm:$0xff]
        %v3457 = vld [vmem:[#allocation8 + $0x130] sm:$0xff]
        %v3458 = vld [vmem:[#allocation8 + $0x138] sm:$0xff]
        %v3459 = vld [vmem:[#allocation8 + $0x140] sm:$0xff]
        %v3460 = vld [vmem:[#allocation8 + $0x148] sm:$0xff]
        %v3461 = vld [vmem:[#allocation8 + $0x150] sm:$0xff]
        %v3462 = vld [vmem:[#allocation8 + $0x158] sm:$0xff]
        %v3463 = vld [vmem:[#allocation8 + $0x160] sm:$0xff]
        %v3464 = vld [vmem:[#allocation8 + $0x168] sm:$0xff]
        %v3465 = vld [vmem:[#allocation8 + $0x170] sm:$0xff]
        %v3466 = vld [vmem:[#allocation8 + $0x178] sm:$0xff]
        %v3467 = vld [vmem:[#allocation8 + $0x180] sm:$0xff]
        %v3468 = vld [vmem:[#allocation8 + $0x188] sm:$0xff]
        %v3469 = vld [vmem:[#allocation8 + $0x190] sm:$0xff]
        %v3470 = vld [vmem:[#allocation8 + $0x198] sm:$0xff]
        %v3471 = vld [vmem:[#allocation8 + $0x1a0] sm:$0xff]
        %v3472 = vld [vmem:[#allocation8 + $0x1a8] sm:$0xff]
        %v3473 = vld [vmem:[#allocation8 + $0x1b0] sm:$0xff]
        %v3474 = vld [vmem:[#allocation8 + $0x1b8] sm:$0xff]
        %v3475 = vld [vmem:[#allocation8 + $0x1c0] sm:$0xff]
        %v3476 = vld [vmem:[#allocation8 + $0x1c8] sm:$0xff]
        %v3477 = vld [vmem:[#allocation8 + $0x1d0] sm:$0xff]
        %v3478 = vld [vmem:[#allocation8 + $0x1d8] sm:$0xff]
        %v3479 = vld [vmem:[#allocation8 + $0x1e0] sm:$0xff]
        %v3480 = vld [vmem:[#allocation8 + $0x1e8] sm:$0xff]
        %v3481 = vld [vmem:[#allocation8 + $0x1f0] sm:$0xff]
        %v3482 = vld [vmem:[#allocation8 + $0x1f8] sm:$0xff]
        %v3483 = vld [vmem:[%s15] sm:$0x3]
        %v3485 = vlaneseq
        %v3486 = vshrl.u32 %v3485, 7
        %v3487 = vsub.s32 0, %v3486
        %v3488 = vrot.slane %v3483, %v3487
        %v3489 = vlaneseq
        %v3490 = vshrl.u32 %v3489, 7
        %v3491 = vsub.s32 1, %v3490
        %v3492 = vrot.slane %v3483, %v3491
        %v3559 = vunpack.c.l.b16 %v3419
        %v3560 = vunpack.c.h.b16 %v3419
        %v3561 = vunpack.c.l.b16 %v3420
        %v3562 = vunpack.c.h.b16 %v3420
        %v3563 = vunpack.c.l.b16 %v3421
        %v3564 = vunpack.c.h.b16 %v3421
        %v3565 = vunpack.c.l.b16 %v3422
        %v3566 = vunpack.c.h.b16 %v3422
        %v3567 = vunpack.c.l.b16 %v3423
        %v3568 = vunpack.c.h.b16 %v3423
        %v3569 = vunpack.c.l.b16 %v3424
        %v3570 = vunpack.c.h.b16 %v3424
        %v3571 = vunpack.c.l.b16 %v3425
        %v3572 = vunpack.c.h.b16 %v3425
        %v3573 = vunpack.c.l.b16 %v3426
        %v3574 = vunpack.c.h.b16 %v3426
        %v3575 = vunpack.c.l.b16 %v3427
        %v3576 = vunpack.c.h.b16 %v3427
        %v3577 = vunpack.c.l.b16 %v3428
        %v3578 = vunpack.c.h.b16 %v3428
        %v3579 = vunpack.c.l.b16 %v3429
        %v3580 = vunpack.c.h.b16 %v3429
        %v3581 = vunpack.c.l.b16 %v3430
        %v3582 = vunpack.c.h.b16 %v3430
        %v3583 = vunpack.c.l.b16 %v3431
        %v3584 = vunpack.c.h.b16 %v3431
        %v3585 = vunpack.c.l.b16 %v3432
        %v3586 = vunpack.c.h.b16 %v3432
        %v3587 = vunpack.c.l.b16 %v3433
        %v3588 = vunpack.c.h.b16 %v3433
        %v3589 = vunpack.c.l.b16 %v3434
        %v3590 = vunpack.c.h.b16 %v3434
        %v3591 = vunpack.c.l.b16 %v3435
        %v3592 = vunpack.c.h.b16 %v3435
        %v3593 = vunpack.c.l.b16 %v3436
        %v3594 = vunpack.c.h.b16 %v3436
        %v3595 = vunpack.c.l.b16 %v3437
        %v3596 = vunpack.c.h.b16 %v3437
        %v3597 = vunpack.c.l.b16 %v3438
        %v3598 = vunpack.c.h.b16 %v3438
        %v3599 = vunpack.c.l.b16 %v3439
        %v3600 = vunpack.c.h.b16 %v3439
        %v3601 = vunpack.c.l.b16 %v3440
        %v3602 = vunpack.c.h.b16 %v3440
        %v3603 = vunpack.c.l.b16 %v3441
        %v3604 = vunpack.c.h.b16 %v3441
        %v3605 = vunpack.c.l.b16 %v3442
        %v3606 = vunpack.c.h.b16 %v3442
        %v3607 = vunpack.c.l.b16 %v3443
        %v3608 = vunpack.c.h.b16 %v3443
        %v3609 = vunpack.c.l.b16 %v3444
        %v3610 = vunpack.c.h.b16 %v3444
        %v3611 = vunpack.c.l.b16 %v3445
        %v3612 = vunpack.c.h.b16 %v3445
        %v3613 = vunpack.c.l.b16 %v3446
        %v3614 = vunpack.c.h.b16 %v3446
        %v3615 = vunpack.c.l.b16 %v3447
        %v3616 = vunpack.c.h.b16 %v3447
        %v3617 = vunpack.c.l.b16 %v3448
        %v3618 = vunpack.c.h.b16 %v3448
        %v3619 = vunpack.c.l.b16 %v3449
        %v3620 = vunpack.c.h.b16 %v3449
        %v3621 = vunpack.c.l.b16 %v3450
        %v3622 = vunpack.c.h.b16 %v3450
        %v3623 = vunpack.c.l.b16 %v3451
        %v3624 = vunpack.c.h.b16 %v3451
        %v3625 = vunpack.c.l.b16 %v3452
        %v3626 = vunpack.c.h.b16 %v3452
        %v3627 = vunpack.c.l.b16 %v3453
        %v3628 = vunpack.c.h.b16 %v3453
        %v3629 = vunpack.c.l.b16 %v3454
        %v3630 = vunpack.c.h.b16 %v3454
        %v3631 = vunpack.c.l.b16 %v3455
        %v3632 = vunpack.c.h.b16 %v3455
        %v3633 = vunpack.c.l.b16 %v3456
        %v3634 = vunpack.c.h.b16 %v3456
        %v3635 = vunpack.c.l.b16 %v3457
        %v3636 = vunpack.c.h.b16 %v3457
        %v3637 = vunpack.c.l.b16 %v3458
        %v3638 = vunpack.c.h.b16 %v3458
        %v3639 = vunpack.c.l.b16 %v3459
        %v3640 = vunpack.c.h.b16 %v3459
        %v3641 = vunpack.c.l.b16 %v3460
        %v3642 = vunpack.c.h.b16 %v3460
        %v3643 = vunpack.c.l.b16 %v3461
        %v3644 = vunpack.c.h.b16 %v3461
        %v3645 = vunpack.c.l.b16 %v3462
        %v3646 = vunpack.c.h.b16 %v3462
        %v3647 = vunpack.c.l.b16 %v3463
        %v3648 = vunpack.c.h.b16 %v3463
        %v3649 = vunpack.c.l.b16 %v3464
        %v3650 = vunpack.c.h.b16 %v3464
        %v3651 = vunpack.c.l.b16 %v3465
        %v3652 = vunpack.c.h.b16 %v3465
        %v3653 = vunpack.c.l.b16 %v3466
        %v3654 = vunpack.c.h.b16 %v3466
        %v3655 = vunpack.c.l.b16 %v3467
        %v3656 = vunpack.c.h.b16 %v3467
        %v3657 = vunpack.c.l.b16 %v3468
        %v3658 = vunpack.c.h.b16 %v3468
        %v3659 = vunpack.c.l.b16 %v3469
        %v3660 = vunpack.c.h.b16 %v3469
        %v3661 = vunpack.c.l.b16 %v3470
        %v3662 = vunpack.c.h.b16 %v3470
        %v3663 = vunpack.c.l.b16 %v3471
        %v3664 = vunpack.c.h.b16 %v3471
        %v3665 = vunpack.c.l.b16 %v3472
        %v3666 = vunpack.c.h.b16 %v3472
        %v3667 = vunpack.c.l.b16 %v3473
        %v3668 = vunpack.c.h.b16 %v3473
        %v3669 = vunpack.c.l.b16 %v3474
        %v3670 = vunpack.c.h.b16 %v3474
        %v3671 = vunpack.c.l.b16 %v3475
        %v3672 = vunpack.c.h.b16 %v3475
        %v3673 = vunpack.c.l.b16 %v3476
        %v3674 = vunpack.c.h.b16 %v3476
        %v3675 = vunpack.c.l.b16 %v3477
        %v3676 = vunpack.c.h.b16 %v3477
        %v3677 = vunpack.c.l.b16 %v3478
        %v3678 = vunpack.c.h.b16 %v3478
        %v3679 = vunpack.c.l.b16 %v3479
        %v3680 = vunpack.c.h.b16 %v3479
        %v3681 = vunpack.c.l.b16 %v3480
        %v3682 = vunpack.c.h.b16 %v3480
        %v3683 = vunpack.c.l.b16 %v3481
        %v3684 = vunpack.c.h.b16 %v3481
        %v3685 = vunpack.c.l.b16 %v3482
        %v3686 = vunpack.c.h.b16 %v3482
        %v3687 = vpack.c.b16 %v3561, %v3559
        %v3688 = vpack.c.b16 %v3562, %v3560
        %v3689 = vpack.c.b16 %v3565, %v3563
        %v3690 = vpack.c.b16 %v3566, %v3564
        %v3691 = vpack.c.b16 %v3569, %v3567
        %v3692 = vpack.c.b16 %v3570, %v3568
        %v3693 = vpack.c.b16 %v3573, %v3571
        %v3694 = vpack.c.b16 %v3574, %v3572
        %v3695 = vpack.c.b16 %v3577, %v3575
        %v3696 = vpack.c.b16 %v3578, %v3576
        %v3697 = vpack.c.b16 %v3581, %v3579
        %v3698 = vpack.c.b16 %v3582, %v3580
        %v3699 = vpack.c.b16 %v3585, %v3583
        %v3700 = vpack.c.b16 %v3586, %v3584
        %v3701 = vpack.c.b16 %v3589, %v3587
        %v3702 = vpack.c.b16 %v3590, %v3588
        %v3703 = vpack.c.b16 %v3593, %v3591
        %v3704 = vpack.c.b16 %v3594, %v3592
        %v3705 = vpack.c.b16 %v3597, %v3595
        %v3706 = vpack.c.b16 %v3598, %v3596
        %v3707 = vpack.c.b16 %v3601, %v3599
        %v3708 = vpack.c.b16 %v3602, %v3600
        %v3709 = vpack.c.b16 %v3605, %v3603
        %v3710 = vpack.c.b16 %v3606, %v3604
        %v3711 = vpack.c.b16 %v3609, %v3607
        %v3712 = vpack.c.b16 %v3610, %v3608
        %v3713 = vpack.c.b16 %v3613, %v3611
        %v3714 = vpack.c.b16 %v3614, %v3612
        %v3715 = vpack.c.b16 %v3617, %v3615
        %v3716 = vpack.c.b16 %v3618, %v3616
        %v3717 = vpack.c.b16 %v3621, %v3619
        %v3718 = vpack.c.b16 %v3622, %v3620
        %v3719 = vpack.c.b16 %v3625, %v3623
        %v3720 = vpack.c.b16 %v3626, %v3624
        %v3721 = vpack.c.b16 %v3629, %v3627
        %v3722 = vpack.c.b16 %v3630, %v3628
        %v3723 = vpack.c.b16 %v3633, %v3631
        %v3724 = vpack.c.b16 %v3634, %v3632
        %v3725 = vpack.c.b16 %v3637, %v3635
        %v3726 = vpack.c.b16 %v3638, %v3636
        %v3727 = vpack.c.b16 %v3641, %v3639
        %v3728 = vpack.c.b16 %v3642, %v3640
        %v3729 = vpack.c.b16 %v3645, %v3643
        %v3730 = vpack.c.b16 %v3646, %v3644
        %v3731 = vpack.c.b16 %v3649, %v3647
        %v3732 = vpack.c.b16 %v3650, %v3648
        %v3733 = vpack.c.b16 %v3653, %v3651
        %v3734 = vpack.c.b16 %v3654, %v3652
        %v3735 = vpack.c.b16 %v3657, %v3655
        %v3736 = vpack.c.b16 %v3658, %v3656
        %v3737 = vpack.c.b16 %v3661, %v3659
        %v3738 = vpack.c.b16 %v3662, %v3660
        %v3739 = vpack.c.b16 %v3665, %v3663
        %v3740 = vpack.c.b16 %v3666, %v3664
        %v3741 = vpack.c.b16 %v3669, %v3667
        %v3742 = vpack.c.b16 %v3670, %v3668
        %v3743 = vpack.c.b16 %v3673, %v3671
        %v3744 = vpack.c.b16 %v3674, %v3672
        %v3745 = vpack.c.b16 %v3677, %v3675
        %v3746 = vpack.c.b16 %v3678, %v3676
        %v3747 = vpack.c.b16 %v3681, %v3679
        %v3748 = vpack.c.b16 %v3682, %v3680
        %v3749 = vpack.c.b16 %v3685, %v3683
        %v3750 = vpack.c.b16 %v3686, %v3684
        %3815 = vmatprep.subr.bf16.mxu0 %v3688
        %3816 = vmatpush1.bf16.msra.mxu0 %v3687
        %3817 = vmatprep.subr.bf16.mxu0 %v3690
        %3818 = vmatpush1.bf16.msra.mxu0 %v3689
        %3819 = vmatprep.subr.bf16.mxu0 %v3692
        %3820 = vmatpush1.bf16.msra.mxu0 %v3691
        %3821 = vmatprep.subr.bf16.mxu0 %v3694
        %3822 = vmatpush1.bf16.msra.mxu0 %v3693
        %3823 = vmatprep.subr.bf16.mxu0 %v3696
        %3824 = vmatpush1.bf16.msra.mxu0 %v3695
        %3825 = vmatprep.subr.bf16.mxu0 %v3698
        %3826 = vmatpush1.bf16.msra.mxu0 %v3697
        %3827 = vmatprep.subr.bf16.mxu0 %v3700
        %3828 = vmatpush1.bf16.msra.mxu0 %v3699
        %3829 = vmatprep.subr.bf16.mxu0 %v3702
        %3830 = vmatpush1.bf16.msra.mxu0 %v3701
        %3831 = vmatprep.subr.bf16.mxu0 %v3704
        %3832 = vmatpush1.bf16.msra.mxu0 %v3703
        %3833 = vmatprep.subr.bf16.mxu0 %v3706
        %3834 = vmatpush1.bf16.msra.mxu0 %v3705
        %3835 = vmatprep.subr.bf16.mxu0 %v3708
        %3836 = vmatpush1.bf16.msra.mxu0 %v3707
        %3837 = vmatprep.subr.bf16.mxu0 %v3710
        %3838 = vmatpush1.bf16.msra.mxu0 %v3709
        %3839 = vmatprep.subr.bf16.mxu0 %v3712
        %3840 = vmatpush1.bf16.msra.mxu0 %v3711
        %3841 = vmatprep.subr.bf16.mxu0 %v3714
        %3842 = vmatpush1.bf16.msra.mxu0 %v3713
        %3843 = vmatprep.subr.bf16.mxu0 %v3716
        %3844 = vmatpush1.bf16.msra.mxu0 %v3715
        %3845 = vmatprep.subr.bf16.mxu0 %v3718
        %3846 = vmatpush1.bf16.msra.mxu0 %v3717
        %3847 = vmatprep.mubr.bf16.mxu0 %v3416
        %3848 = vmatmul.mubr.bf16.gmra.mrb[0].mxu0 %v3415
        %v3849 = vpop.f32.mrb[0].mxu0
        %v3850 = vadd.f32 %v3488, %v3849
        %v3851 = vpop.f32.mrb[0].mxu0
        %v3852 = vadd.f32 %v3492, %v3851
        %v3853 = vpop.f32.mrb[0].mxu0
        %v3854 = vadd.f32 %v3488, %v3853
        %v3855 = vpop.f32.mrb[0].mxu0
        %v3856 = vadd.f32 %v3492, %v3855
        %3857 = vdwg.mxu0
        %3858 = vmatprep.subr.bf16.mxu0 %v3720
        %3859 = vmatpush1.bf16.msra.mxu0 %v3719
        %3860 = vmatprep.subr.bf16.mxu0 %v3722
        %3861 = vmatpush1.bf16.msra.mxu0 %v3721
        %3862 = vmatprep.subr.bf16.mxu0 %v3724
        %3863 = vmatpush1.bf16.msra.mxu0 %v3723
        %3864 = vmatprep.subr.bf16.mxu0 %v3726
        %3865 = vmatpush1.bf16.msra.mxu0 %v3725
        %3866 = vmatprep.subr.bf16.mxu0 %v3728
        %3867 = vmatpush1.bf16.msra.mxu0 %v3727
        %3868 = vmatprep.subr.bf16.mxu0 %v3730
        %3869 = vmatpush1.bf16.msra.mxu0 %v3729
        %3870 = vmatprep.subr.bf16.mxu0 %v3732
        %3871 = vmatpush1.bf16.msra.mxu0 %v3731
        %3872 = vmatprep.subr.bf16.mxu0 %v3734
        %3873 = vmatpush1.bf16.msra.mxu0 %v3733
        %3874 = vmatprep.subr.bf16.mxu0 %v3736
        %3875 = vmatpush1.bf16.msra.mxu0 %v3735
        %3876 = vmatprep.subr.bf16.mxu0 %v3738
        %3877 = vmatpush1.bf16.msra.mxu0 %v3737
        %3878 = vmatprep.subr.bf16.mxu0 %v3740
        %3879 = vmatpush1.bf16.msra.mxu0 %v3739
        %3880 = vmatprep.subr.bf16.mxu0 %v3742
        %3881 = vmatpush1.bf16.msra.mxu0 %v3741
        %3882 = vmatprep.subr.bf16.mxu0 %v3744
        %3883 = vmatpush1.bf16.msra.mxu0 %v3743
        %3884 = vmatprep.subr.bf16.mxu0 %v3746
        %3885 = vmatpush1.bf16.msra.mxu0 %v3745
        %3886 = vmatprep.subr.bf16.mxu0 %v3748
        %3887 = vmatpush1.bf16.msra.mxu0 %v3747
        %3888 = vmatprep.subr.bf16.mxu0 %v3750
        %3889 = vmatpush1.bf16.msra.mxu0 %v3749
        %3890 = vmatprep.mubr.bf16.mxu0 %v3418
        %3891 = vmatmul.mubr.bf16.gmra.mrb[0].mxu0 %v3417
        %v3892 = vpop.f32.mrb[0].mxu0
        %v3893 = vadd.f32 %v3850, %v3892
        %v3894 = vpop.f32.mrb[0].mxu0
        %v3895 = vadd.f32 %v3852, %v3894
        %v3896 = vpop.f32.mrb[0].mxu0
        %v3897 = vadd.f32 %v3854, %v3896
        %v3898 = vpop.f32.mrb[0].mxu0
        %v3899 = vadd.f32 %v3856, %v3898
        %3900 = vdwg.mxu0
        %v3901 = vadd.f32 %v2845, %v3893
        %v3902 = vadd.f32 %v2846, %v3895
        %v3903 = vadd.f32 %v2847, %v3897
        %v3904 = vadd.f32 %v2848, %v3899
        %v3905 = vld [vmem:[%s16] sm:$0x3]
        %v3906 = vld [vmem:[%s17] sm:$0x3]
        %v3907 = vadd.f32 %v3901, %v3902
        %3908 = vadd.xlane.f32.xlu0 %v3907
        %v3909 = vpop.xlane.xlu0 %3908
        %v3910 = vadd.f32 %v3903, %v3904
        %3911 = vadd.xlane.f32.xlu0 %v3910
        %v3912 = vpop.xlane.xlu0 %3911
        %v3913 = vmul.f32 %v3909, %v821
        %v3914 = vmul.f32 %v3912, %v821
        %v3915 = vsub.f32 %v3901, %v3913
        %v3916 = vsub.f32 %v3902, %v3913
        %v3917 = vsub.f32 %v3903, %v3914
        %v3918 = vsub.f32 %v3904, %v3914
        %v3919 = vmul.f32 %v3915, %v3915
        %v3920 = vmul.f32 %v3916, %v3916
        %v3921 = vmul.f32 %v3917, %v3917
        %v3922 = vmul.f32 %v3918, %v3918
        %v3923 = vadd.f32 %v3919, %v3920
        %3924 = vadd.xlane.f32.xlu0 %v3923
        %v3925 = vpop.xlane.xlu0 %3924
        %v3926 = vadd.f32 %v3921, %v3922
        %3927 = vadd.xlane.f32.xlu0 %v3926
        %v3928 = vpop.xlane.xlu0 %3927
        %v3929 = vmul.f32 %v3925, %v821
        %v3930 = vmul.f32 %v3928, %v821
        %v3931 = vadd.f32 %v3929, 1e-12
        %v3932 = vadd.f32 %v3930, 1e-12
        %v3933 = vrsqrt.pop %v3931
        %v3934 = vrsqrt.pop %v3932
        %v3935 = vmul.f32 %v3915, %v3933
        %v3936 = vmul.f32 %v3916, %v3933
        %v3937 = vmul.f32 %v3917, %v3934
        %v3938 = vmul.f32 %v3918, %v3934
        %v3940 = vlaneseq
        %v3941 = vshrl.u32 %v3940, 7
        %v3942 = vsub.s32 0, %v3941
        %v3943 = vrot.slane %v3905, %v3942
        %v3944 = vlaneseq
        %v3945 = vshrl.u32 %v3944, 7
        %v3946 = vsub.s32 1, %v3945
        %v3947 = vrot.slane %v3905, %v3946
        %v3950 = vmul.f32 %v3935, %v3943
        %v3951 = vmul.f32 %v3936, %v3947
        %v3952 = vmul.f32 %v3937, %v3943
        %v3953 = vmul.f32 %v3938, %v3947
        %v3955 = vlaneseq
        %v3956 = vshrl.u32 %v3955, 7
        %v3957 = vsub.s32 0, %v3956
        %v3958 = vrot.slane %v3906, %v3957
        %v3959 = vlaneseq
        %v3960 = vshrl.u32 %v3959, 7
        %v3961 = vsub.s32 1, %v3960
        %v3962 = vrot.slane %v3906, %v3961
        %v3965 = vadd.f32 %v3950, %v3958
        %v3966 = vadd.f32 %v3951, %v3962
        %v3967 = vadd.f32 %v3952, %v3958
        %v3968 = vadd.f32 %v3953, %v3962
        %v3969 = vpack.c.bf16 %v3967, %v3965
        %v3970 = vpack.c.bf16 %v3968, %v3966
        %s3971 = scalar_lea.vmem [#allocation2], 768
        %v3972 = vld [vmem:[%s3971] sm:$0xff]
        %v3973 = vld [vmem:[%s3971 + $0x8] sm:$0xff]
        %v3974 = vld [vmem:[%s3971 + $0x10] sm:$0xff]
        %v3975 = vld [vmem:[%s3971 + $0x18] sm:$0xff]
        %v3976 = vld [vmem:[%s3971 + $0x20] sm:$0xff]
        %v3977 = vld [vmem:[%s3971 + $0x28] sm:$0xff]
        %v3978 = vld [vmem:[%s3971 + $0x30] sm:$0xff]
        %v3979 = vld [vmem:[%s3971 + $0x38] sm:$0xff]
        %v3980 = vld [vmem:[%s3971 + $0x40] sm:$0xff]
        %v3981 = vld [vmem:[%s3971 + $0x48] sm:$0xff]
        %v3982 = vld [vmem:[%s3971 + $0x50] sm:$0xff]
        %v3983 = vld [vmem:[%s3971 + $0x58] sm:$0xff]
        %v3984 = vld [vmem:[%s3971 + $0x60] sm:$0xff]
        %v3985 = vld [vmem:[%s3971 + $0x68] sm:$0xff]
        %v3986 = vld [vmem:[%s3971 + $0x70] sm:$0xff]
        %v3987 = vld [vmem:[%s3971 + $0x78] sm:$0xff]
        %v3988 = vld [vmem:[%s3971 + $0x80] sm:$0xff]
        %v3989 = vld [vmem:[%s3971 + $0x88] sm:$0xff]
        %v3990 = vld [vmem:[%s3971 + $0x90] sm:$0xff]
        %v3991 = vld [vmem:[%s3971 + $0x98] sm:$0xff]
        %v3992 = vld [vmem:[%s3971 + $0xa0] sm:$0xff]
        %v3993 = vld [vmem:[%s3971 + $0xa8] sm:$0xff]
        %v3994 = vld [vmem:[%s3971 + $0xb0] sm:$0xff]
        %v3995 = vld [vmem:[%s3971 + $0xb8] sm:$0xff]
        %v3996 = vld [vmem:[%s3971 + $0xc0] sm:$0xff]
        %v3997 = vld [vmem:[%s3971 + $0xc8] sm:$0xff]
        %v3998 = vld [vmem:[%s3971 + $0xd0] sm:$0xff]
        %v3999 = vld [vmem:[%s3971 + $0xd8] sm:$0xff]
        %v4000 = vld [vmem:[%s3971 + $0xe0] sm:$0xff]
        %v4001 = vld [vmem:[%s3971 + $0xe8] sm:$0xff]
        %v4002 = vld [vmem:[%s3971 + $0xf0] sm:$0xff]
        %v4003 = vld [vmem:[%s3971 + $0xf8] sm:$0xff]
        %v4004 = vld [vmem:[%s3971 + $0x100] sm:$0xff]
        %v4005 = vld [vmem:[%s3971 + $0x108] sm:$0xff]
        %v4006 = vld [vmem:[%s3971 + $0x110] sm:$0xff]
        %v4007 = vld [vmem:[%s3971 + $0x118] sm:$0xff]
        %v4008 = vld [vmem:[%s3971 + $0x120] sm:$0xff]
        %v4009 = vld [vmem:[%s3971 + $0x128] sm:$0xff]
        %v4010 = vld [vmem:[%s3971 + $0x130] sm:$0xff]
        %v4011 = vld [vmem:[%s3971 + $0x138] sm:$0xff]
        %v4012 = vld [vmem:[%s3971 + $0x140] sm:$0xff]
        %v4013 = vld [vmem:[%s3971 + $0x148] sm:$0xff]
        %v4014 = vld [vmem:[%s3971 + $0x150] sm:$0xff]
        %v4015 = vld [vmem:[%s3971 + $0x158] sm:$0xff]
        %v4016 = vld [vmem:[%s3971 + $0x160] sm:$0xff]
        %v4017 = vld [vmem:[%s3971 + $0x168] sm:$0xff]
        %v4018 = vld [vmem:[%s3971 + $0x170] sm:$0xff]
        %v4019 = vld [vmem:[%s3971 + $0x178] sm:$0xff]
        %v4020 = vld [vmem:[%s3971 + $0x180] sm:$0xff]
        %v4021 = vld [vmem:[%s3971 + $0x188] sm:$0xff]
        %v4022 = vld [vmem:[%s3971 + $0x190] sm:$0xff]
        %v4023 = vld [vmem:[%s3971 + $0x198] sm:$0xff]
        %v4024 = vld [vmem:[%s3971 + $0x1a0] sm:$0xff]
        %v4025 = vld [vmem:[%s3971 + $0x1a8] sm:$0xff]
        %v4026 = vld [vmem:[%s3971 + $0x1b0] sm:$0xff]
        %v4027 = vld [vmem:[%s3971 + $0x1b8] sm:$0xff]
        %v4028 = vld [vmem:[%s3971 + $0x1c0] sm:$0xff]
        %v4029 = vld [vmem:[%s3971 + $0x1c8] sm:$0xff]
        %v4030 = vld [vmem:[%s3971 + $0x1d0] sm:$0xff]
        %v4031 = vld [vmem:[%s3971 + $0x1d8] sm:$0xff]
        %v4032 = vld [vmem:[%s3971 + $0x1e0] sm:$0xff]
        %v4033 = vld [vmem:[%s3971 + $0x1e8] sm:$0xff]
        %v4034 = vld [vmem:[%s3971 + $0x1f0] sm:$0xff]
        %v4035 = vld [vmem:[%s3971 + $0x1f8] sm:$0xff]
        %v4036 = vld [vmem:[%s3971 + $0x200] sm:$0xff]
        %v4037 = vld [vmem:[%s3971 + $0x208] sm:$0xff]
        %v4038 = vld [vmem:[%s3971 + $0x210] sm:$0xff]
        %v4039 = vld [vmem:[%s3971 + $0x218] sm:$0xff]
        %v4040 = vld [vmem:[%s3971 + $0x220] sm:$0xff]
        %v4041 = vld [vmem:[%s3971 + $0x228] sm:$0xff]
        %v4042 = vld [vmem:[%s3971 + $0x230] sm:$0xff]
        %v4043 = vld [vmem:[%s3971 + $0x238] sm:$0xff]
        %v4044 = vld [vmem:[%s3971 + $0x240] sm:$0xff]
        %v4045 = vld [vmem:[%s3971 + $0x248] sm:$0xff]
        %v4046 = vld [vmem:[%s3971 + $0x250] sm:$0xff]
        %v4047 = vld [vmem:[%s3971 + $0x258] sm:$0xff]
        %v4048 = vld [vmem:[%s3971 + $0x260] sm:$0xff]
        %v4049 = vld [vmem:[%s3971 + $0x268] sm:$0xff]
        %v4050 = vld [vmem:[%s3971 + $0x270] sm:$0xff]
        %v4051 = vld [vmem:[%s3971 + $0x278] sm:$0xff]
        %v4052 = vld [vmem:[%s3971 + $0x280] sm:$0xff]
        %v4053 = vld [vmem:[%s3971 + $0x288] sm:$0xff]
        %v4054 = vld [vmem:[%s3971 + $0x290] sm:$0xff]
        %v4055 = vld [vmem:[%s3971 + $0x298] sm:$0xff]
        %v4056 = vld [vmem:[%s3971 + $0x2a0] sm:$0xff]
        %v4057 = vld [vmem:[%s3971 + $0x2a8] sm:$0xff]
        %v4058 = vld [vmem:[%s3971 + $0x2b0] sm:$0xff]
        %v4059 = vld [vmem:[%s3971 + $0x2b8] sm:$0xff]
        %v4060 = vld [vmem:[%s3971 + $0x2c0] sm:$0xff]
        %v4061 = vld [vmem:[%s3971 + $0x2c8] sm:$0xff]
        %v4062 = vld [vmem:[%s3971 + $0x2d0] sm:$0xff]
        %v4063 = vld [vmem:[%s3971 + $0x2d8] sm:$0xff]
        %v4064 = vld [vmem:[%s3971 + $0x2e0] sm:$0xff]
        %v4065 = vld [vmem:[%s3971 + $0x2e8] sm:$0xff]
        %v4066 = vld [vmem:[%s3971 + $0x2f0] sm:$0xff]
        %v4067 = vld [vmem:[%s3971 + $0x2f8] sm:$0xff]
        %s4068 = scalar_lea.vmem %s7, 6
        %v4069 = vld [vmem:[%s4068] sm:$0x3f]
        %v4071 = vlaneseq
        %v4072 = vshrl.u32 %v4071, 7
        %v4073 = vsub.s32 0, %v4072
        %v4074 = vrot.slane %v4069, %v4073
        %v4075 = vlaneseq
        %v4076 = vshrl.u32 %v4075, 7
        %v4077 = vsub.s32 1, %v4076
        %v4078 = vrot.slane %v4069, %v4077
        %v4079 = vlaneseq
        %v4080 = vshrl.u32 %v4079, 7
        %v4081 = vsub.s32 2, %v4080
        %v4082 = vrot.slane %v4069, %v4081
        %v4083 = vlaneseq
        %v4084 = vshrl.u32 %v4083, 7
        %v4085 = vsub.s32 3, %v4084
        %v4086 = vrot.slane %v4069, %v4085
        %v4087 = vlaneseq
        %v4088 = vshrl.u32 %v4087, 7
        %v4089 = vsub.s32 4, %v4088
        %v4090 = vrot.slane %v4069, %v4089
        %v4091 = vlaneseq
        %v4092 = vshrl.u32 %v4091, 7
        %v4093 = vsub.s32 5, %v4092
        %v4094 = vrot.slane %v4069, %v4093
        %v4197 = vunpack.c.l.b16 %v3972
        %v4198 = vunpack.c.h.b16 %v3972
        %v4199 = vunpack.c.l.b16 %v3973
        %v4200 = vunpack.c.h.b16 %v3973
        %v4201 = vunpack.c.l.b16 %v3974
        %v4202 = vunpack.c.h.b16 %v3974
        %v4203 = vunpack.c.l.b16 %v3975
        %v4204 = vunpack.c.h.b16 %v3975
        %v4205 = vunpack.c.l.b16 %v3976
        %v4206 = vunpack.c.h.b16 %v3976
        %v4207 = vunpack.c.l.b16 %v3977
        %v4208 = vunpack.c.h.b16 %v3977
        %v4209 = vunpack.c.l.b16 %v3978
        %v4210 = vunpack.c.h.b16 %v3978
        %v4211 = vunpack.c.l.b16 %v3979
        %v4212 = vunpack.c.h.b16 %v3979
        %v4213 = vunpack.c.l.b16 %v3980
        %v4214 = vunpack.c.h.b16 %v3980
        %v4215 = vunpack.c.l.b16 %v3981
        %v4216 = vunpack.c.h.b16 %v3981
        %v4217 = vunpack.c.l.b16 %v3982
        %v4218 = vunpack.c.h.b16 %v3982
        %v4219 = vunpack.c.l.b16 %v3983
        %v4220 = vunpack.c.h.b16 %v3983
        %v4221 = vunpack.c.l.b16 %v3984
        %v4222 = vunpack.c.h.b16 %v3984
        %v4223 = vunpack.c.l.b16 %v3985
        %v4224 = vunpack.c.h.b16 %v3985
        %v4225 = vunpack.c.l.b16 %v3986
        %v4226 = vunpack.c.h.b16 %v3986
        %v4227 = vunpack.c.l.b16 %v3987
        %v4228 = vunpack.c.h.b16 %v3987
        %v4229 = vunpack.c.l.b16 %v3988
        %v4230 = vunpack.c.h.b16 %v3988
        %v4231 = vunpack.c.l.b16 %v3989
        %v4232 = vunpack.c.h.b16 %v3989
        %v4233 = vunpack.c.l.b16 %v3990
        %v4234 = vunpack.c.h.b16 %v3990
        %v4235 = vunpack.c.l.b16 %v3991
        %v4236 = vunpack.c.h.b16 %v3991
        %v4237 = vunpack.c.l.b16 %v3992
        %v4238 = vunpack.c.h.b16 %v3992
        %v4239 = vunpack.c.l.b16 %v3993
        %v4240 = vunpack.c.h.b16 %v3993
        %v4241 = vunpack.c.l.b16 %v3994
        %v4242 = vunpack.c.h.b16 %v3994
        %v4243 = vunpack.c.l.b16 %v3995
        %v4244 = vunpack.c.h.b16 %v3995
        %v4245 = vunpack.c.l.b16 %v3996
        %v4246 = vunpack.c.h.b16 %v3996
        %v4247 = vunpack.c.l.b16 %v3997
        %v4248 = vunpack.c.h.b16 %v3997
        %v4249 = vunpack.c.l.b16 %v3998
        %v4250 = vunpack.c.h.b16 %v3998
        %v4251 = vunpack.c.l.b16 %v3999
        %v4252 = vunpack.c.h.b16 %v3999
        %v4253 = vunpack.c.l.b16 %v4000
        %v4254 = vunpack.c.h.b16 %v4000
        %v4255 = vunpack.c.l.b16 %v4001
        %v4256 = vunpack.c.h.b16 %v4001
        %v4257 = vunpack.c.l.b16 %v4002
        %v4258 = vunpack.c.h.b16 %v4002
        %v4259 = vunpack.c.l.b16 %v4003
        %v4260 = vunpack.c.h.b16 %v4003
        %v4261 = vunpack.c.l.b16 %v4004
        %v4262 = vunpack.c.h.b16 %v4004
        %v4263 = vunpack.c.l.b16 %v4005
        %v4264 = vunpack.c.h.b16 %v4005
        %v4265 = vunpack.c.l.b16 %v4006
        %v4266 = vunpack.c.h.b16 %v4006
        %v4267 = vunpack.c.l.b16 %v4007
        %v4268 = vunpack.c.h.b16 %v4007
        %v4269 = vunpack.c.l.b16 %v4008
        %v4270 = vunpack.c.h.b16 %v4008
        %v4271 = vunpack.c.l.b16 %v4009
        %v4272 = vunpack.c.h.b16 %v4009
        %v4273 = vunpack.c.l.b16 %v4010
        %v4274 = vunpack.c.h.b16 %v4010
        %v4275 = vunpack.c.l.b16 %v4011
        %v4276 = vunpack.c.h.b16 %v4011
        %v4277 = vunpack.c.l.b16 %v4012
        %v4278 = vunpack.c.h.b16 %v4012
        %v4279 = vunpack.c.l.b16 %v4013
        %v4280 = vunpack.c.h.b16 %v4013
        %v4281 = vunpack.c.l.b16 %v4014
        %v4282 = vunpack.c.h.b16 %v4014
        %v4283 = vunpack.c.l.b16 %v4015
        %v4284 = vunpack.c.h.b16 %v4015
        %v4285 = vunpack.c.l.b16 %v4016
        %v4286 = vunpack.c.h.b16 %v4016
        %v4287 = vunpack.c.l.b16 %v4017
        %v4288 = vunpack.c.h.b16 %v4017
        %v4289 = vunpack.c.l.b16 %v4018
        %v4290 = vunpack.c.h.b16 %v4018
        %v4291 = vunpack.c.l.b16 %v4019
        %v4292 = vunpack.c.h.b16 %v4019
        %v4293 = vunpack.c.l.b16 %v4020
        %v4294 = vunpack.c.h.b16 %v4020
        %v4295 = vunpack.c.l.b16 %v4021
        %v4296 = vunpack.c.h.b16 %v4021
        %v4297 = vunpack.c.l.b16 %v4022
        %v4298 = vunpack.c.h.b16 %v4022
        %v4299 = vunpack.c.l.b16 %v4023
        %v4300 = vunpack.c.h.b16 %v4023
        %v4301 = vunpack.c.l.b16 %v4024
        %v4302 = vunpack.c.h.b16 %v4024
        %v4303 = vunpack.c.l.b16 %v4025
        %v4304 = vunpack.c.h.b16 %v4025
        %v4305 = vunpack.c.l.b16 %v4026
        %v4306 = vunpack.c.h.b16 %v4026
        %v4307 = vunpack.c.l.b16 %v4027
        %v4308 = vunpack.c.h.b16 %v4027
        %v4309 = vunpack.c.l.b16 %v4028
        %v4310 = vunpack.c.h.b16 %v4028
        %v4311 = vunpack.c.l.b16 %v4029
        %v4312 = vunpack.c.h.b16 %v4029
        %v4313 = vunpack.c.l.b16 %v4030
        %v4314 = vunpack.c.h.b16 %v4030
        %v4315 = vunpack.c.l.b16 %v4031
        %v4316 = vunpack.c.h.b16 %v4031
        %v4317 = vunpack.c.l.b16 %v4032
        %v4318 = vunpack.c.h.b16 %v4032
        %v4319 = vunpack.c.l.b16 %v4033
        %v4320 = vunpack.c.h.b16 %v4033
        %v4321 = vunpack.c.l.b16 %v4034
        %v4322 = vunpack.c.h.b16 %v4034
        %v4323 = vunpack.c.l.b16 %v4035
        %v4324 = vunpack.c.h.b16 %v4035
        %v4325 = vunpack.c.l.b16 %v4036
        %v4326 = vunpack.c.h.b16 %v4036
        %v4327 = vunpack.c.l.b16 %v4037
        %v4328 = vunpack.c.h.b16 %v4037
        %v4329 = vunpack.c.l.b16 %v4038
        %v4330 = vunpack.c.h.b16 %v4038
        %v4331 = vunpack.c.l.b16 %v4039
        %v4332 = vunpack.c.h.b16 %v4039
        %v4333 = vunpack.c.l.b16 %v4040
        %v4334 = vunpack.c.h.b16 %v4040
        %v4335 = vunpack.c.l.b16 %v4041
        %v4336 = vunpack.c.h.b16 %v4041
        %v4337 = vunpack.c.l.b16 %v4042
        %v4338 = vunpack.c.h.b16 %v4042
        %v4339 = vunpack.c.l.b16 %v4043
        %v4340 = vunpack.c.h.b16 %v4043
        %v4341 = vunpack.c.l.b16 %v4044
        %v4342 = vunpack.c.h.b16 %v4044
        %v4343 = vunpack.c.l.b16 %v4045
        %v4344 = vunpack.c.h.b16 %v4045
        %v4345 = vunpack.c.l.b16 %v4046
        %v4346 = vunpack.c.h.b16 %v4046
        %v4347 = vunpack.c.l.b16 %v4047
        %v4348 = vunpack.c.h.b16 %v4047
        %v4349 = vunpack.c.l.b16 %v4048
        %v4350 = vunpack.c.h.b16 %v4048
        %v4351 = vunpack.c.l.b16 %v4049
        %v4352 = vunpack.c.h.b16 %v4049
        %v4353 = vunpack.c.l.b16 %v4050
        %v4354 = vunpack.c.h.b16 %v4050
        %v4355 = vunpack.c.l.b16 %v4051
        %v4356 = vunpack.c.h.b16 %v4051
        %v4357 = vunpack.c.l.b16 %v4052
        %v4358 = vunpack.c.h.b16 %v4052
        %v4359 = vunpack.c.l.b16 %v4053
        %v4360 = vunpack.c.h.b16 %v4053
        %v4361 = vunpack.c.l.b16 %v4054
        %v4362 = vunpack.c.h.b16 %v4054
        %v4363 = vunpack.c.l.b16 %v4055
        %v4364 = vunpack.c.h.b16 %v4055
        %v4365 = vunpack.c.l.b16 %v4056
        %v4366 = vunpack.c.h.b16 %v4056
        %v4367 = vunpack.c.l.b16 %v4057
        %v4368 = vunpack.c.h.b16 %v4057
        %v4369 = vunpack.c.l.b16 %v4058
        %v4370 = vunpack.c.h.b16 %v4058
        %v4371 = vunpack.c.l.b16 %v4059
        %v4372 = vunpack.c.h.b16 %v4059
        %v4373 = vunpack.c.l.b16 %v4060
        %v4374 = vunpack.c.h.b16 %v4060
        %v4375 = vunpack.c.l.b16 %v4061
        %v4376 = vunpack.c.h.b16 %v4061
        %v4377 = vunpack.c.l.b16 %v4062
        %v4378 = vunpack.c.h.b16 %v4062
        %v4379 = vunpack.c.l.b16 %v4063
        %v4380 = vunpack.c.h.b16 %v4063
        %v4381 = vunpack.c.l.b16 %v4064
        %v4382 = vunpack.c.h.b16 %v4064
        %v4383 = vunpack.c.l.b16 %v4065
        %v4384 = vunpack.c.h.b16 %v4065
        %v4385 = vunpack.c.l.b16 %v4066
        %v4386 = vunpack.c.h.b16 %v4066
        %v4387 = vunpack.c.l.b16 %v4067
        %v4388 = vunpack.c.h.b16 %v4067
        %v4389 = vpack.c.b16 %v4203, %v4197
        %v4390 = vpack.c.b16 %v4204, %v4198
        %v4391 = vpack.c.b16 %v4205, %v4199
        %v4392 = vpack.c.b16 %v4206, %v4200
        %v4393 = vpack.c.b16 %v4207, %v4201
        %v4394 = vpack.c.b16 %v4208, %v4202
        %v4395 = vpack.c.b16 %v4215, %v4209
        %v4396 = vpack.c.b16 %v4216, %v4210
        %v4397 = vpack.c.b16 %v4217, %v4211
        %v4398 = vpack.c.b16 %v4218, %v4212
        %v4399 = vpack.c.b16 %v4219, %v4213
        %v4400 = vpack.c.b16 %v4220, %v4214
        %v4401 = vpack.c.b16 %v4227, %v4221
        %v4402 = vpack.c.b16 %v4228, %v4222
        %v4403 = vpack.c.b16 %v4229, %v4223
        %v4404 = vpack.c.b16 %v4230, %v4224
        %v4405 = vpack.c.b16 %v4231, %v4225
        %v4406 = vpack.c.b16 %v4232, %v4226
        %v4407 = vpack.c.b16 %v4239, %v4233
        %v4408 = vpack.c.b16 %v4240, %v4234
        %v4409 = vpack.c.b16 %v4241, %v4235
        %v4410 = vpack.c.b16 %v4242, %v4236
        %v4411 = vpack.c.b16 %v4243, %v4237
        %v4412 = vpack.c.b16 %v4244, %v4238
        %v4413 = vpack.c.b16 %v4251, %v4245
        %v4414 = vpack.c.b16 %v4252, %v4246
        %v4415 = vpack.c.b16 %v4253, %v4247
        %v4416 = vpack.c.b16 %v4254, %v4248
        %v4417 = vpack.c.b16 %v4255, %v4249
        %v4418 = vpack.c.b16 %v4256, %v4250
        %v4419 = vpack.c.b16 %v4263, %v4257
        %v4420 = vpack.c.b16 %v4264, %v4258
        %v4421 = vpack.c.b16 %v4265, %v4259
        %v4422 = vpack.c.b16 %v4266, %v4260
        %v4423 = vpack.c.b16 %v4267, %v4261
        %v4424 = vpack.c.b16 %v4268, %v4262
        %v4425 = vpack.c.b16 %v4275, %v4269
        %v4426 = vpack.c.b16 %v4276, %v4270
        %v4427 = vpack.c.b16 %v4277, %v4271
        %v4428 = vpack.c.b16 %v4278, %v4272
        %v4429 = vpack.c.b16 %v4279, %v4273
        %v4430 = vpack.c.b16 %v4280, %v4274
        %v4431 = vpack.c.b16 %v4287, %v4281
        %v4432 = vpack.c.b16 %v4288, %v4282
        %v4433 = vpack.c.b16 %v4289, %v4283
        %v4434 = vpack.c.b16 %v4290, %v4284
        %v4435 = vpack.c.b16 %v4291, %v4285
        %v4436 = vpack.c.b16 %v4292, %v4286
        %v4437 = vpack.c.b16 %v4299, %v4293
        %v4438 = vpack.c.b16 %v4300, %v4294
        %v4439 = vpack.c.b16 %v4301, %v4295
        %v4440 = vpack.c.b16 %v4302, %v4296
        %v4441 = vpack.c.b16 %v4303, %v4297
        %v4442 = vpack.c.b16 %v4304, %v4298
        %v4443 = vpack.c.b16 %v4311, %v4305
        %v4444 = vpack.c.b16 %v4312, %v4306
        %v4445 = vpack.c.b16 %v4313, %v4307
        %v4446 = vpack.c.b16 %v4314, %v4308
        %v4447 = vpack.c.b16 %v4315, %v4309
        %v4448 = vpack.c.b16 %v4316, %v4310
        %v4449 = vpack.c.b16 %v4323, %v4317
        %v4450 = vpack.c.b16 %v4324, %v4318
        %v4451 = vpack.c.b16 %v4325, %v4319
        %v4452 = vpack.c.b16 %v4326, %v4320
        %v4453 = vpack.c.b16 %v4327, %v4321
        %v4454 = vpack.c.b16 %v4328, %v4322
        %v4455 = vpack.c.b16 %v4335, %v4329
        %v4456 = vpack.c.b16 %v4336, %v4330
        %v4457 = vpack.c.b16 %v4337, %v4331
        %v4458 = vpack.c.b16 %v4338, %v4332
        %v4459 = vpack.c.b16 %v4339, %v4333
        %v4460 = vpack.c.b16 %v4340, %v4334
        %v4461 = vpack.c.b16 %v4347, %v4341
        %v4462 = vpack.c.b16 %v4348, %v4342
        %v4463 = vpack.c.b16 %v4349, %v4343
        %v4464 = vpack.c.b16 %v4350, %v4344
        %v4465 = vpack.c.b16 %v4351, %v4345
        %v4466 = vpack.c.b16 %v4352, %v4346
        %v4467 = vpack.c.b16 %v4359, %v4353
        %v4468 = vpack.c.b16 %v4360, %v4354
        %v4469 = vpack.c.b16 %v4361, %v4355
        %v4470 = vpack.c.b16 %v4362, %v4356
        %v4471 = vpack.c.b16 %v4363, %v4357
        %v4472 = vpack.c.b16 %v4364, %v4358
        %v4473 = vpack.c.b16 %v4371, %v4365
        %v4474 = vpack.c.b16 %v4372, %v4366
        %v4475 = vpack.c.b16 %v4373, %v4367
        %v4476 = vpack.c.b16 %v4374, %v4368
        %v4477 = vpack.c.b16 %v4375, %v4369
        %v4478 = vpack.c.b16 %v4376, %v4370
        %v4479 = vpack.c.b16 %v4383, %v4377
        %v4480 = vpack.c.b16 %v4384, %v4378
        %v4481 = vpack.c.b16 %v4385, %v4379
        %v4482 = vpack.c.b16 %v4386, %v4380
        %v4483 = vpack.c.b16 %v4387, %v4381
        %v4484 = vpack.c.b16 %v4388, %v4382
        %4581 = vmatprep.subr.bf16.mxu0 %v4390
        %4582 = vmatpush1.bf16.msra.mxu0 %v4389
        %4583 = vmatprep.subr.bf16.mxu0 %v4396
        %4584 = vmatpush1.bf16.msra.mxu0 %v4395
        %4585 = vmatprep.subr.bf16.mxu0 %v4402
        %4586 = vmatpush1.bf16.msra.mxu0 %v4401
        %4587 = vmatprep.subr.bf16.mxu0 %v4408
        %4588 = vmatpush1.bf16.msra.mxu0 %v4407
        %4589 = vmatprep.subr.bf16.mxu0 %v4414
        %4590 = vmatpush1.bf16.msra.mxu0 %v4413
        %4591 = vmatprep.subr.bf16.mxu0 %v4420
        %4592 = vmatpush1.bf16.msra.mxu0 %v4419
        %4593 = vmatprep.subr.bf16.mxu0 %v4426
        %4594 = vmatpush1.bf16.msra.mxu0 %v4425
        %4595 = vmatprep.subr.bf16.mxu0 %v4432
        %4596 = vmatpush1.bf16.msra.mxu0 %v4431
        %4597 = vmatprep.subr.bf16.mxu0 %v4438
        %4598 = vmatpush1.bf16.msra.mxu0 %v4437
        %4599 = vmatprep.subr.bf16.mxu0 %v4444
        %4600 = vmatpush1.bf16.msra.mxu0 %v4443
        %4601 = vmatprep.subr.bf16.mxu0 %v4450
        %4602 = vmatpush1.bf16.msra.mxu0 %v4449
        %4603 = vmatprep.subr.bf16.mxu0 %v4456
        %4604 = vmatpush1.bf16.msra.mxu0 %v4455
        %4605 = vmatprep.subr.bf16.mxu0 %v4462
        %4606 = vmatpush1.bf16.msra.mxu0 %v4461
        %4607 = vmatprep.subr.bf16.mxu0 %v4468
        %4608 = vmatpush1.bf16.msra.mxu0 %v4467
        %4609 = vmatprep.subr.bf16.mxu0 %v4474
        %4610 = vmatpush1.bf16.msra.mxu0 %v4473
        %4611 = vmatprep.subr.bf16.mxu0 %v4480
        %4612 = vmatpush1.bf16.msra.mxu0 %v4479
        %4613 = vmatprep.mubr.bf16.mxu0 %v3970
        %4614 = vmatmul.mubr.bf16.gmra.mrb[0].mxu0 %v3969
        %v4615 = vpop.f32.mrb[0].mxu0
        %v4616 = vadd.f32 %v4074, %v4615
        %v4617 = vpop.f32.mrb[0].mxu0
        %v4618 = vadd.f32 %v4078, %v4617
        %v4619 = vpop.f32.mrb[0].mxu0
        %v4620 = vadd.f32 %v4074, %v4619
        %v4621 = vpop.f32.mrb[0].mxu0
        %v4622 = vadd.f32 %v4078, %v4621
        %4623 = vdwg.mxu0
        %4624 = vmatprep.subr.bf16.mxu0 %v4392
        %4625 = vmatpush1.bf16.msra.mxu0 %v4391
        %4626 = vmatprep.subr.bf16.mxu0 %v4398
        %4627 = vmatpush1.bf16.msra.mxu0 %v4397
        %4628 = vmatprep.subr.bf16.mxu0 %v4404
        %4629 = vmatpush1.bf16.msra.mxu0 %v4403
        %4630 = vmatprep.subr.bf16.mxu0 %v4410
        %4631 = vmatpush1.bf16.msra.mxu0 %v4409
        %4632 = vmatprep.subr.bf16.mxu0 %v4416
        %4633 = vmatpush1.bf16.msra.mxu0 %v4415
        %4634 = vmatprep.subr.bf16.mxu0 %v4422
        %4635 = vmatpush1.bf16.msra.mxu0 %v4421
        %4636 = vmatprep.subr.bf16.mxu0 %v4428
        %4637 = vmatpush1.bf16.msra.mxu0 %v4427
        %4638 = vmatprep.subr.bf16.mxu0 %v4434
        %4639 = vmatpush1.bf16.msra.mxu0 %v4433
        %4640 = vmatprep.subr.bf16.mxu0 %v4440
        %4641 = vmatpush1.bf16.msra.mxu0 %v4439
        %4642 = vmatprep.subr.bf16.mxu0 %v4446
        %4643 = vmatpush1.bf16.msra.mxu0 %v4445
        %4644 = vmatprep.subr.bf16.mxu0 %v4452
        %4645 = vmatpush1.bf16.msra.mxu0 %v4451
        %4646 = vmatprep.subr.bf16.mxu0 %v4458
        %4647 = vmatpush1.bf16.msra.mxu0 %v4457
        %4648 = vmatprep.subr.bf16.mxu0 %v4464
        %4649 = vmatpush1.bf16.msra.mxu0 %v4463
        %4650 = vmatprep.subr.bf16.mxu0 %v4470
        %4651 = vmatpush1.bf16.msra.mxu0 %v4469
        %4652 = vmatprep.subr.bf16.mxu0 %v4476
        %4653 = vmatpush1.bf16.msra.mxu0 %v4475
        %4654 = vmatprep.subr.bf16.mxu0 %v4482
        %4655 = vmatpush1.bf16.msra.mxu0 %v4481
        %4656 = vmatprep.mubr.bf16.mxu0 %v3970
        %4657 = vmatmul.mubr.bf16.gmra.mrb[0].mxu0 %v3969
        %v4658 = vpop.f32.mrb[0].mxu0
        %v4659 = vadd.f32 %v4082, %v4658
        %v4660 = vpop.f32.mrb[0].mxu0
        %v4661 = vadd.f32 %v4086, %v4660
        %v4662 = vpop.f32.mrb[0].mxu0
        %v4663 = vadd.f32 %v4082, %v4662
        %v4664 = vpop.f32.mrb[0].mxu0
        %v4665 = vadd.f32 %v4086, %v4664
        %4666 = vdwg.mxu0
        %4667 = vmatprep.subr.bf16.mxu0 %v4394
        %4668 = vmatpush1.bf16.msra.mxu0 %v4393
        %4669 = vmatprep.subr.bf16.mxu0 %v4400
        %4670 = vmatpush1.bf16.msra.mxu0 %v4399
        %4671 = vmatprep.subr.bf16.mxu0 %v4406
        %4672 = vmatpush1.bf16.msra.mxu0 %v4405
        %4673 = vmatprep.subr.bf16.mxu0 %v4412
        %4674 = vmatpush1.bf16.msra.mxu0 %v4411
        %4675 = vmatprep.subr.bf16.mxu0 %v4418
        %4676 = vmatpush1.bf16.msra.mxu0 %v4417
        %4677 = vmatprep.subr.bf16.mxu0 %v4424
        %4678 = vmatpush1.bf16.msra.mxu0 %v4423
        %4679 = vmatprep.subr.bf16.mxu0 %v4430
        %4680 = vmatpush1.bf16.msra.mxu0 %v4429
        %4681 = vmatprep.subr.bf16.mxu0 %v4436
        %4682 = vmatpush1.bf16.msra.mxu0 %v4435
        %4683 = vmatprep.subr.bf16.mxu0 %v4442
        %4684 = vmatpush1.bf16.msra.mxu0 %v4441
        %4685 = vmatprep.subr.bf16.mxu0 %v4448
        %4686 = vmatpush1.bf16.msra.mxu0 %v4447
        %4687 = vmatprep.subr.bf16.mxu0 %v4454
        %4688 = vmatpush1.bf16.msra.mxu0 %v4453
        %4689 = vmatprep.subr.bf16.mxu0 %v4460
        %4690 = vmatpush1.bf16.msra.mxu0 %v4459
        %4691 = vmatprep.subr.bf16.mxu0 %v4466
        %4692 = vmatpush1.bf16.msra.mxu0 %v4465
        %4693 = vmatprep.subr.bf16.mxu0 %v4472
        %4694 = vmatpush1.bf16.msra.mxu0 %v4471
        %4695 = vmatprep.subr.bf16.mxu0 %v4478
        %4696 = vmatpush1.bf16.msra.mxu0 %v4477
        %4697 = vmatprep.subr.bf16.mxu0 %v4484
        %4698 = vmatpush1.bf16.msra.mxu0 %v4483
        %4699 = vmatprep.mubr.bf16.mxu0 %v3970
        %4700 = vmatmul.mubr.bf16.gmra.mrb[0].mxu0 %v3969
        %v4701 = vpop.f32.mrb[0].mxu0
        %v4702 = vadd.f32 %v4090, %v4701
        %v4703 = vpop.f32.mrb[0].mxu0
        %v4704 = vadd.f32 %v4094, %v4703
        %v4705 = vpop.f32.mrb[0].mxu0
        %v4706 = vadd.f32 %v4090, %v4705
        %v4707 = vpop.f32.mrb[0].mxu0
        %v4708 = vadd.f32 %v4094, %v4707
        %4709 = vdwg.mxu0
        %v4710 = vpack.c.bf16 %v4620, %v4616
        %v4711 = vpack.c.bf16 %v4622, %v4618
        %v4712 = vpack.c.bf16 %v4663, %v4659
        %v4713 = vpack.c.bf16 %v4665, %v4661
        %v4714 = vpack.c.bf16 %v4706, %v4702
        %v4715 = vpack.c.bf16 %v4708, %v4704
        %4717 = vrot.lane.b32.xlu0 %v4710, 64
        %v4718 = vpop.permute.xlu0 %4717
        %4720 = vrot.lane.b32.xlu0 %v4711, 64
        %v4721 = vpop.permute.xlu0 %4720
        %4723 = vrot.lane.b32.xlu0 %v4712, 64
        %v4724 = vpop.permute.xlu0 %4723
        %4726 = vrot.lane.b32.xlu0 %v4713, 64
        %v4727 = vpop.permute.xlu0 %4726
        %4729 = vrot.lane.b32.xlu0 %v4714, 64
        %v4730 = vpop.permute.xlu0 %4729
        %4732 = vrot.lane.b32.xlu0 %v4715, 64
        %v4733 = vpop.permute.xlu0 %4732
        %v4735 = vsel %vm766, %v4710, 0
        %v4738 = vsel %vm766, %v4712, 0
        %4740 = vmatprep.subr.bf16.mxu0 0
        %4741 = vmatpush1.bf16.xpose.msra.mxu0 %v4738
        %4742 = vmatprep.subr.bf16.mxu0 0
        %4743 = vmatpush1.bf16.xpose.msra.mxu0 0
        %4744 = vmatprep.subr.bf16.mxu0 0
        %4745 = vmatpush1.bf16.xpose.msra.mxu0 0
        %4746 = vmatprep.subr.bf16.mxu0 0
        %4747 = vmatpush1.bf16.xpose.msra.mxu0 0
        %4748 = vmatprep.subr.bf16.mxu0 0
        %4749 = vmatpush1.bf16.xpose.msra.mxu0 0
        %4750 = vmatprep.subr.bf16.mxu0 0
        %4751 = vmatpush1.bf16.xpose.msra.mxu0 0
        %4752 = vmatprep.subr.bf16.mxu0 0
        %4753 = vmatpush1.bf16.xpose.msra.mxu0 0
        %4754 = vmatprep.subr.bf16.mxu0 0
        %4755 = vmatpush1.bf16.xpose.msra.mxu0 0
        %4756 = vmatprep.subr.bf16.mxu0 0
        %4757 = vmatpush1.bf16.xpose.msra.mxu0 0
        %4758 = vmatprep.subr.bf16.mxu0 0
        %4759 = vmatpush1.bf16.xpose.msra.mxu0 0
        %4760 = vmatprep.subr.bf16.mxu0 0
        %4761 = vmatpush1.bf16.xpose.msra.mxu0 0
        %4762 = vmatprep.subr.bf16.mxu0 0
        %4763 = vmatpush1.bf16.xpose.msra.mxu0 0
        %4764 = vmatprep.subr.bf16.mxu0 0
        %4765 = vmatpush1.bf16.xpose.msra.mxu0 0
        %4766 = vmatprep.subr.bf16.mxu0 0
        %4767 = vmatpush1.bf16.xpose.msra.mxu0 0
        %4768 = vmatprep.subr.bf16.mxu0 0
        %4769 = vmatpush1.bf16.xpose.msra.mxu0 0
        %4770 = vmatprep.subr.bf16.mxu0 0
        %4771 = vmatpush1.bf16.xpose.msra.mxu0 0
        %4772 = vmatprep.mubr.bf16.mxu0 0
        %4773 = vmatmul.mubr.bf16.gmra.mrb[0].mxu0 %v4735
        %v4774 = vpop.f32.mrb[0].mxu0
        %v4775 = vadd.f32 0.0, %v4774
        %v4776 = vpop.f32.mrb[0].mxu0
        %v4777 = vpop.f32.mrb[0].mxu0
        %v4778 = vpop.f32.mrb[0].mxu0
        %4779 = vdwg.mxu0
        %v4781 = vsel %vm766, %v4718, 0
        %v4784 = vsel %vm766, %v4724, 0
        %4786 = vmatprep.subr.bf16.mxu0 0
        %4787 = vmatpush1.bf16.xpose.msra.mxu0 %v4784
        %4788 = vmatprep.subr.bf16.mxu0 0
        %4789 = vmatpush1.bf16.xpose.msra.mxu0 0
        %4790 = vmatprep.subr.bf16.mxu0 0
        %4791 = vmatpush1.bf16.xpose.msra.mxu0 0
        %4792 = vmatprep.subr.bf16.mxu0 0
        %4793 = vmatpush1.bf16.xpose.msra.mxu0 0
        %4794 = vmatprep.subr.bf16.mxu0 0
        %4795 = vmatpush1.bf16.xpose.msra.mxu0 0
        %4796 = vmatprep.subr.bf16.mxu0 0
        %4797 = vmatpush1.bf16.xpose.msra.mxu0 0
        %4798 = vmatprep.subr.bf16.mxu0 0
        %4799 = vmatpush1.bf16.xpose.msra.mxu0 0
        %4800 = vmatprep.subr.bf16.mxu0 0
        %4801 = vmatpush1.bf16.xpose.msra.mxu0 0
        %4802 = vmatprep.subr.bf16.mxu0 0
        %4803 = vmatpush1.bf16.xpose.msra.mxu0 0
        %4804 = vmatprep.subr.bf16.mxu0 0
        %4805 = vmatpush1.bf16.xpose.msra.mxu0 0
        %4806 = vmatprep.subr.bf16.mxu0 0
        %4807 = vmatpush1.bf16.xpose.msra.mxu0 0
        %4808 = vmatprep.subr.bf16.mxu0 0
        %4809 = vmatpush1.bf16.xpose.msra.mxu0 0
        %4810 = vmatprep.subr.bf16.mxu0 0
        %4811 = vmatpush1.bf16.xpose.msra.mxu0 0
        %4812 = vmatprep.subr.bf16.mxu0 0
        %4813 = vmatpush1.bf16.xpose.msra.mxu0 0
        %4814 = vmatprep.subr.bf16.mxu0 0
        %4815 = vmatpush1.bf16.xpose.msra.mxu0 0
        %4816 = vmatprep.subr.bf16.mxu0 0
        %4817 = vmatpush1.bf16.xpose.msra.mxu0 0
        %4818 = vmatprep.mubr.bf16.mxu0 0
        %4819 = vmatmul.mubr.bf16.gmra.mrb[0].mxu0 %v4781
        %v4820 = vpop.f32.mrb[0].mxu0
        %v4821 = vadd.f32 0.0, %v4820
        %v4822 = vpop.f32.mrb[0].mxu0
        %v4823 = vpop.f32.mrb[0].mxu0
        %v4824 = vpop.f32.mrb[0].mxu0
        %4825 = vdwg.mxu0
        %v4827 = vsel %vm766, %v4711, 0
        %v4830 = vsel %vm766, %v4713, 0
        %4832 = vmatprep.subr.bf16.mxu0 0
        %4833 = vmatpush1.bf16.xpose.msra.mxu0 %v4830
        %4834 = vmatprep.subr.bf16.mxu0 0
        %4835 = vmatpush1.bf16.xpose.msra.mxu0 0
        %4836 = vmatprep.subr.bf16.mxu0 0
        %4837 = vmatpush1.bf16.xpose.msra.mxu0 0
        %4838 = vmatprep.subr.bf16.mxu0 0
        %4839 = vmatpush1.bf16.xpose.msra.mxu0 0
        %4840 = vmatprep.subr.bf16.mxu0 0
        %4841 = vmatpush1.bf16.xpose.msra.mxu0 0
        %4842 = vmatprep.subr.bf16.mxu0 0
        %4843 = vmatpush1.bf16.xpose.msra.mxu0 0
        %4844 = vmatprep.subr.bf16.mxu0 0
        %4845 = vmatpush1.bf16.xpose.msra.mxu0 0
        %4846 = vmatprep.subr.bf16.mxu0 0
        %4847 = vmatpush1.bf16.xpose.msra.mxu0 0
        %4848 = vmatprep.subr.bf16.mxu0 0
        %4849 = vmatpush1.bf16.xpose.msra.mxu0 0
        %4850 = vmatprep.subr.bf16.mxu0 0
        %4851 = vmatpush1.bf16.xpose.msra.mxu0 0
        %4852 = vmatprep.subr.bf16.mxu0 0
        %4853 = vmatpush1.bf16.xpose.msra.mxu0 0
        %4854 = vmatprep.subr.bf16.mxu0 0
        %4855 = vmatpush1.bf16.xpose.msra.mxu0 0
        %4856 = vmatprep.subr.bf16.mxu0 0
        %4857 = vmatpush1.bf16.xpose.msra.mxu0 0
        %4858 = vmatprep.subr.bf16.mxu0 0
        %4859 = vmatpush1.bf16.xpose.msra.mxu0 0
        %4860 = vmatprep.subr.bf16.mxu0 0
        %4861 = vmatpush1.bf16.xpose.msra.mxu0 0
        %4862 = vmatprep.subr.bf16.mxu0 0
        %4863 = vmatpush1.bf16.xpose.msra.mxu0 0
        %4864 = vmatprep.mubr.bf16.mxu0 0
        %4865 = vmatmul.mubr.bf16.gmra.mrb[0].mxu0 %v4827
        %v4866 = vpop.f32.mrb[0].mxu0
        %v4867 = vadd.f32 0.0, %v4866
        %v4868 = vpop.f32.mrb[0].mxu0
        %v4869 = vpop.f32.mrb[0].mxu0
        %v4870 = vpop.f32.mrb[0].mxu0
        %4871 = vdwg.mxu0
        %v4873 = vsel %vm766, %v4721, 0
        %v4876 = vsel %vm766, %v4727, 0
        %4878 = vmatprep.subr.bf16.mxu0 0
        %4879 = vmatpush1.bf16.xpose.msra.mxu0 %v4876
        %4880 = vmatprep.subr.bf16.mxu0 0
        %4881 = vmatpush1.bf16.xpose.msra.mxu0 0
        %4882 = vmatprep.subr.bf16.mxu0 0
        %4883 = vmatpush1.bf16.xpose.msra.mxu0 0
        %4884 = vmatprep.subr.bf16.mxu0 0
        %4885 = vmatpush1.bf16.xpose.msra.mxu0 0
        %4886 = vmatprep.subr.bf16.mxu0 0
        %4887 = vmatpush1.bf16.xpose.msra.mxu0 0
        %4888 = vmatprep.subr.bf16.mxu0 0
        %4889 = vmatpush1.bf16.xpose.msra.mxu0 0
        %4890 = vmatprep.subr.bf16.mxu0 0
        %4891 = vmatpush1.bf16.xpose.msra.mxu0 0
        %4892 = vmatprep.subr.bf16.mxu0 0
        %4893 = vmatpush1.bf16.xpose.msra.mxu0 0
        %4894 = vmatprep.subr.bf16.mxu0 0
        %4895 = vmatpush1.bf16.xpose.msra.mxu0 0
        %4896 = vmatprep.subr.bf16.mxu0 0
        %4897 = vmatpush1.bf16.xpose.msra.mxu0 0
        %4898 = vmatprep.subr.bf16.mxu0 0
        %4899 = vmatpush1.bf16.xpose.msra.mxu0 0
        %4900 = vmatprep.subr.bf16.mxu0 0
        %4901 = vmatpush1.bf16.xpose.msra.mxu0 0
        %4902 = vmatprep.subr.bf16.mxu0 0
        %4903 = vmatpush1.bf16.xpose.msra.mxu0 0
        %4904 = vmatprep.subr.bf16.mxu0 0
        %4905 = vmatpush1.bf16.xpose.msra.mxu0 0
        %4906 = vmatprep.subr.bf16.mxu0 0
        %4907 = vmatpush1.bf16.xpose.msra.mxu0 0
        %4908 = vmatprep.subr.bf16.mxu0 0
        %4909 = vmatpush1.bf16.xpose.msra.mxu0 0
        %4910 = vmatprep.mubr.bf16.mxu0 0
        %4911 = vmatmul.mubr.bf16.gmra.mrb[0].mxu0 %v4873
        %v4912 = vpop.f32.mrb[0].mxu0
        %v4913 = vadd.f32 0.0, %v4912
        %v4914 = vpop.f32.mrb[0].mxu0
        %v4915 = vpop.f32.mrb[0].mxu0
        %v4916 = vpop.f32.mrb[0].mxu0
        %4917 = vdwg.mxu0
        %v4918 = vmul.f32 %v4775, 0.125
        %v4919 = vmul.f32 %v4821, 0.125
        %v4920 = vmul.f32 %v4867, 0.125
        %v4921 = vmul.f32 %v4913, 0.125
        %v4922 = vadd.f32 %v4918, %v1833
        %v4923 = vadd.f32 %v4919, %v1833
        %v4924 = vadd.f32 %v4920, %v1833
        %v4925 = vadd.f32 %v4921, %v1833
        %v4926 = vsel %vm1838, %v4922, -inf
        %4927 = vmax.xlane.f32.xlu0 %v4926
        %v4928 = vpop.xlane.xlu0 %4927
        %v4929 = vsel %vm1838, %v4923, -inf
        %4930 = vmax.xlane.f32.xlu0 %v4929
        %v4931 = vpop.xlane.xlu0 %4930
        %v4932 = vsel %vm1838, %v4924, -inf
        %4933 = vmax.xlane.f32.xlu0 %v4932
        %v4934 = vpop.xlane.xlu0 %4933
        %v4935 = vsel %vm1838, %v4925, -inf
        %4936 = vmax.xlane.f32.xlu0 %v4935
        %v4937 = vpop.xlane.xlu0 %4936
        %v4938 = vsub.f32 %v4922, %v4928
        %v4939 = vsub.f32 %v4923, %v4931
        %v4940 = vsub.f32 %v4924, %v4934
        %v4941 = vsub.f32 %v4925, %v4937
        %v4942 = vmul.f32 %v4938, 1.442695
        %v4943 = vpow.pop %v4942
        %v4944 = vmul.f32 %v4939, 1.442695
        %v4945 = vpow.pop %v4944
        %v4946 = vmul.f32 %v4940, 1.442695
        %v4947 = vpow.pop %v4946
        %v4948 = vmul.f32 %v4941, 1.442695
        %v4949 = vpow.pop %v4948
        %v4950 = vsel %vm1838, %v4943, 0.0
        %4951 = vadd.xlane.f32.xlu0 %v4950
        %v4952 = vpop.xlane.xlu0 %4951
        %v4953 = vsel %vm1838, %v4945, 0.0
        %4954 = vadd.xlane.f32.xlu0 %v4953
        %v4955 = vpop.xlane.xlu0 %4954
        %v4956 = vsel %vm1838, %v4947, 0.0
        %4957 = vadd.xlane.f32.xlu0 %v4956
        %v4958 = vpop.xlane.xlu0 %4957
        %v4959 = vsel %vm1838, %v4949, 0.0
        %4960 = vadd.xlane.f32.xlu0 %v4959
        %v4961 = vpop.xlane.xlu0 %4960
        %v4962 = vrcp.pop %v4952
        %v4963 = vrcp.pop %v4955
        %v4964 = vrcp.pop %v4958
        %v4965 = vrcp.pop %v4961
        %v4966 = vmul.f32 %v4943, %v4962
        %v4967 = vmul.f32 %v4945, %v4963
        %v4968 = vmul.f32 %v4947, %v4964
        %v4969 = vmul.f32 %v4949, %v4965
        %v4970 = vpack.c.bf16 %v4966, %v4966
        %v4971 = vpack.c.bf16 %v4967, %v4967
        %v4972 = vpack.c.bf16 %v4968, %v4968
        %v4973 = vpack.c.bf16 %v4969, %v4969
        %v4975 = vsel %vm1838, %v4970, 0
        %v4978 = vsel %vm1890, %v4714, 0
        %4980 = vmatprep.subr.bf16.mxu0 0
        %4981 = vmatpush1.bf16.msra.mxu0 %v4978
        %4982 = vmatprep.subr.bf16.mxu0 0
        %4983 = vmatpush1.bf16.msra.mxu0 0
        %4984 = vmatprep.subr.bf16.mxu0 0
        %4985 = vmatpush1.bf16.msra.mxu0 0
        %4986 = vmatprep.subr.bf16.mxu0 0
        %4987 = vmatpush1.bf16.msra.mxu0 0
        %4988 = vmatprep.subr.bf16.mxu0 0
        %4989 = vmatpush1.bf16.msra.mxu0 0
        %4990 = vmatprep.subr.bf16.mxu0 0
        %4991 = vmatpush1.bf16.msra.mxu0 0
        %4992 = vmatprep.subr.bf16.mxu0 0
        %4993 = vmatpush1.bf16.msra.mxu0 0
        %4994 = vmatprep.subr.bf16.mxu0 0
        %4995 = vmatpush1.bf16.msra.mxu0 0
        %4996 = vmatprep.subr.bf16.mxu0 0
        %4997 = vmatpush1.bf16.msra.mxu0 0
        %4998 = vmatprep.subr.bf16.mxu0 0
        %4999 = vmatpush1.bf16.msra.mxu0 0
        %5000 = vmatprep.subr.bf16.mxu0 0
        %5001 = vmatpush1.bf16.msra.mxu0 0
        %5002 = vmatprep.subr.bf16.mxu0 0
        %5003 = vmatpush1.bf16.msra.mxu0 0
        %5004 = vmatprep.subr.bf16.mxu0 0
        %5005 = vmatpush1.bf16.msra.mxu0 0
        %5006 = vmatprep.subr.bf16.mxu0 0
        %5007 = vmatpush1.bf16.msra.mxu0 0
        %5008 = vmatprep.subr.bf16.mxu0 0
        %5009 = vmatpush1.bf16.msra.mxu0 0
        %5010 = vmatprep.subr.bf16.mxu0 0
        %5011 = vmatpush1.bf16.msra.mxu0 0
        %5012 = vmatprep.mubr.bf16.mxu0 0
        %5013 = vmatmul.mubr.bf16.gmra.mrb[0].mxu0 %v4975
        %v5014 = vpop.f32.mrb[0].mxu0
        %v5015 = vadd.f32 0.0, %v5014
        %v5016 = vpop.f32.mrb[0].mxu0
        %v5017 = vpop.f32.mrb[0].mxu0
        %v5018 = vpop.f32.mrb[0].mxu0
        %5019 = vdwg.mxu0
        %v5021 = vsel %vm1838, %v4971, 0
        %v5024 = vsel %vm1890, %v4730, 0
        %5026 = vmatprep.subr.bf16.mxu0 0
        %5027 = vmatpush1.bf16.msra.mxu0 %v5024
        %5028 = vmatprep.subr.bf16.mxu0 0
        %5029 = vmatpush1.bf16.msra.mxu0 0
        %5030 = vmatprep.subr.bf16.mxu0 0
        %5031 = vmatpush1.bf16.msra.mxu0 0
        %5032 = vmatprep.subr.bf16.mxu0 0
        %5033 = vmatpush1.bf16.msra.mxu0 0
        %5034 = vmatprep.subr.bf16.mxu0 0
        %5035 = vmatpush1.bf16.msra.mxu0 0
        %5036 = vmatprep.subr.bf16.mxu0 0
        %5037 = vmatpush1.bf16.msra.mxu0 0
        %5038 = vmatprep.subr.bf16.mxu0 0
        %5039 = vmatpush1.bf16.msra.mxu0 0
        %5040 = vmatprep.subr.bf16.mxu0 0
        %5041 = vmatpush1.bf16.msra.mxu0 0
        %5042 = vmatprep.subr.bf16.mxu0 0
        %5043 = vmatpush1.bf16.msra.mxu0 0
        %5044 = vmatprep.subr.bf16.mxu0 0
        %5045 = vmatpush1.bf16.msra.mxu0 0
        %5046 = vmatprep.subr.bf16.mxu0 0
        %5047 = vmatpush1.bf16.msra.mxu0 0
        %5048 = vmatprep.subr.bf16.mxu0 0
        %5049 = vmatpush1.bf16.msra.mxu0 0
        %5050 = vmatprep.subr.bf16.mxu0 0
        %5051 = vmatpush1.bf16.msra.mxu0 0
        %5052 = vmatprep.subr.bf16.mxu0 0
        %5053 = vmatpush1.bf16.msra.mxu0 0
        %5054 = vmatprep.subr.bf16.mxu0 0
        %5055 = vmatpush1.bf16.msra.mxu0 0
        %5056 = vmatprep.subr.bf16.mxu0 0
        %5057 = vmatpush1.bf16.msra.mxu0 0
        %5058 = vmatprep.mubr.bf16.mxu0 0
        %5059 = vmatmul.mubr.bf16.gmra.mrb[0].mxu0 %v5021
        %v5060 = vpop.f32.mrb[0].mxu0
        %v5061 = vadd.f32 0.0, %v5060
        %v5062 = vpop.f32.mrb[0].mxu0
        %v5063 = vpop.f32.mrb[0].mxu0
        %v5064 = vpop.f32.mrb[0].mxu0
        %5065 = vdwg.mxu0
        %v5067 = vsel %vm1838, %v4972, 0
        %v5070 = vsel %vm1890, %v4715, 0
        %5072 = vmatprep.subr.bf16.mxu0 0
        %5073 = vmatpush1.bf16.msra.mxu0 %v5070
        %5074 = vmatprep.subr.bf16.mxu0 0
        %5075 = vmatpush1.bf16.msra.mxu0 0
        %5076 = vmatprep.subr.bf16.mxu0 0
        %5077 = vmatpush1.bf16.msra.mxu0 0
        %5078 = vmatprep.subr.bf16.mxu0 0
        %5079 = vmatpush1.bf16.msra.mxu0 0
        %5080 = vmatprep.subr.bf16.mxu0 0
        %5081 = vmatpush1.bf16.msra.mxu0 0
        %5082 = vmatprep.subr.bf16.mxu0 0
        %5083 = vmatpush1.bf16.msra.mxu0 0
        %5084 = vmatprep.subr.bf16.mxu0 0
        %5085 = vmatpush1.bf16.msra.mxu0 0
        %5086 = vmatprep.subr.bf16.mxu0 0
        %5087 = vmatpush1.bf16.msra.mxu0 0
        %5088 = vmatprep.subr.bf16.mxu0 0
        %5089 = vmatpush1.bf16.msra.mxu0 0
        %5090 = vmatprep.subr.bf16.mxu0 0
        %5091 = vmatpush1.bf16.msra.mxu0 0
        %5092 = vmatprep.subr.bf16.mxu0 0
        %5093 = vmatpush1.bf16.msra.mxu0 0
        %5094 = vmatprep.subr.bf16.mxu0 0
        %5095 = vmatpush1.bf16.msra.mxu0 0
        %5096 = vmatprep.subr.bf16.mxu0 0
        %5097 = vmatpush1.bf16.msra.mxu0 0
        %5098 = vmatprep.subr.bf16.mxu0 0
        %5099 = vmatpush1.bf16.msra.mxu0 0
        %5100 = vmatprep.subr.bf16.mxu0 0
        %5101 = vmatpush1.bf16.msra.mxu0 0
        %5102 = vmatprep.subr.bf16.mxu0 0
        %5103 = vmatpush1.bf16.msra.mxu0 0
        %5104 = vmatprep.mubr.bf16.mxu0 0
        %5105 = vmatmul.mubr.bf16.gmra.mrb[0].mxu0 %v5067
        %v5106 = vpop.f32.mrb[0].mxu0
        %v5107 = vadd.f32 0.0, %v5106
        %v5108 = vpop.f32.mrb[0].mxu0
        %v5109 = vpop.f32.mrb[0].mxu0
        %v5110 = vpop.f32.mrb[0].mxu0
        %5111 = vdwg.mxu0
        %v5113 = vsel %vm1838, %v4973, 0
        %v5116 = vsel %vm1890, %v4733, 0
        %5118 = vmatprep.subr.bf16.mxu0 0
        %5119 = vmatpush1.bf16.msra.mxu0 %v5116
        %5120 = vmatprep.subr.bf16.mxu0 0
        %5121 = vmatpush1.bf16.msra.mxu0 0
        %5122 = vmatprep.subr.bf16.mxu0 0
        %5123 = vmatpush1.bf16.msra.mxu0 0
        %5124 = vmatprep.subr.bf16.mxu0 0
        %5125 = vmatpush1.bf16.msra.mxu0 0
        %5126 = vmatprep.subr.bf16.mxu0 0
        %5127 = vmatpush1.bf16.msra.mxu0 0
        %5128 = vmatprep.subr.bf16.mxu0 0
        %5129 = vmatpush1.bf16.msra.mxu0 0
        %5130 = vmatprep.subr.bf16.mxu0 0
        %5131 = vmatpush1.bf16.msra.mxu0 0
        %5132 = vmatprep.subr.bf16.mxu0 0
        %5133 = vmatpush1.bf16.msra.mxu0 0
        %5134 = vmatprep.subr.bf16.mxu0 0
        %5135 = vmatpush1.bf16.msra.mxu0 0
        %5136 = vmatprep.subr.bf16.mxu0 0
        %5137 = vmatpush1.bf16.msra.mxu0 0
        %5138 = vmatprep.subr.bf16.mxu0 0
        %5139 = vmatpush1.bf16.msra.mxu0 0
        %5140 = vmatprep.subr.bf16.mxu0 0
        %5141 = vmatpush1.bf16.msra.mxu0 0
        %5142 = vmatprep.subr.bf16.mxu0 0
        %5143 = vmatpush1.bf16.msra.mxu0 0
        %5144 = vmatprep.subr.bf16.mxu0 0
        %5145 = vmatpush1.bf16.msra.mxu0 0
        %5146 = vmatprep.subr.bf16.mxu0 0
        %5147 = vmatpush1.bf16.msra.mxu0 0
        %5148 = vmatprep.subr.bf16.mxu0 0
        %5149 = vmatpush1.bf16.msra.mxu0 0
        %5150 = vmatprep.mubr.bf16.mxu0 0
        %5151 = vmatmul.mubr.bf16.gmra.mrb[0].mxu0 %v5113
        %v5152 = vpop.f32.mrb[0].mxu0
        %v5153 = vadd.f32 0.0, %v5152
        %v5154 = vpop.f32.mrb[0].mxu0
        %v5155 = vpop.f32.mrb[0].mxu0
        %v5156 = vpop.f32.mrb[0].mxu0
        %5157 = vdwg.mxu0
        %5159 = vrot.lane.b32.xlu0 %v5061, 64
        %v5160 = vpop.permute.xlu0 %5159
        %5163 = vrot.lane.b32.xlu0 %v5153, 64
        %v5164 = vpop.permute.xlu0 %5163
        %v5166 = vsel %vm766, %v5015, %v5160
        %v5167 = vsel %vm766, %v5107, %v5164
        %v5168 = vrot.slane %v4710, 4
        %v5169 = vrot.slane %v4712, 4
        %v5171 = vsel %vm766, %v5168, 0
        %v5174 = vsel %vm766, %v5169, 0
        %5176 = vmatprep.subr.bf16.mxu0 0
        %5177 = vmatpush1.bf16.xpose.msra.mxu0 %v5174
        %5178 = vmatprep.subr.bf16.mxu0 0
        %5179 = vmatpush1.bf16.xpose.msra.mxu0 0
        %5180 = vmatprep.subr.bf16.mxu0 0
        %5181 = vmatpush1.bf16.xpose.msra.mxu0 0
        %5182 = vmatprep.subr.bf16.mxu0 0
        %5183 = vmatpush1.bf16.xpose.msra.mxu0 0
        %5184 = vmatprep.subr.bf16.mxu0 0
        %5185 = vmatpush1.bf16.xpose.msra.mxu0 0
        %5186 = vmatprep.subr.bf16.mxu0 0
        %5187 = vmatpush1.bf16.xpose.msra.mxu0 0
        %5188 = vmatprep.subr.bf16.mxu0 0
        %5189 = vmatpush1.bf16.xpose.msra.mxu0 0
        %5190 = vmatprep.subr.bf16.mxu0 0
        %5191 = vmatpush1.bf16.xpose.msra.mxu0 0
        %5192 = vmatprep.subr.bf16.mxu0 0
        %5193 = vmatpush1.bf16.xpose.msra.mxu0 0
        %5194 = vmatprep.subr.bf16.mxu0 0
        %5195 = vmatpush1.bf16.xpose.msra.mxu0 0
        %5196 = vmatprep.subr.bf16.mxu0 0
        %5197 = vmatpush1.bf16.xpose.msra.mxu0 0
        %5198 = vmatprep.subr.bf16.mxu0 0
        %5199 = vmatpush1.bf16.xpose.msra.mxu0 0
        %5200 = vmatprep.subr.bf16.mxu0 0
        %5201 = vmatpush1.bf16.xpose.msra.mxu0 0
        %5202 = vmatprep.subr.bf16.mxu0 0
        %5203 = vmatpush1.bf16.xpose.msra.mxu0 0
        %5204 = vmatprep.subr.bf16.mxu0 0
        %5205 = vmatpush1.bf16.xpose.msra.mxu0 0
        %5206 = vmatprep.subr.bf16.mxu0 0
        %5207 = vmatpush1.bf16.xpose.msra.mxu0 0
        %5208 = vmatprep.mubr.bf16.mxu0 0
        %5209 = vmatmul.mubr.bf16.gmra.mrb[0].mxu0 %v5171
        %v5210 = vpop.f32.mrb[0].mxu0
        %v5211 = vadd.f32 0.0, %v5210
        %v5212 = vpop.f32.mrb[0].mxu0
        %v5213 = vpop.f32.mrb[0].mxu0
        %v5214 = vpop.f32.mrb[0].mxu0
        %5215 = vdwg.mxu0
        %v5216 = vrot.slane %v4718, 4
        %v5217 = vrot.slane %v4724, 4
        %v5219 = vsel %vm766, %v5216, 0
        %v5222 = vsel %vm766, %v5217, 0
        %5224 = vmatprep.subr.bf16.mxu0 0
        %5225 = vmatpush1.bf16.xpose.msra.mxu0 %v5222
        %5226 = vmatprep.subr.bf16.mxu0 0
        %5227 = vmatpush1.bf16.xpose.msra.mxu0 0
        %5228 = vmatprep.subr.bf16.mxu0 0
        %5229 = vmatpush1.bf16.xpose.msra.mxu0 0
        %5230 = vmatprep.subr.bf16.mxu0 0
        %5231 = vmatpush1.bf16.xpose.msra.mxu0 0
        %5232 = vmatprep.subr.bf16.mxu0 0
        %5233 = vmatpush1.bf16.xpose.msra.mxu0 0
        %5234 = vmatprep.subr.bf16.mxu0 0
        %5235 = vmatpush1.bf16.xpose.msra.mxu0 0
        %5236 = vmatprep.subr.bf16.mxu0 0
        %5237 = vmatpush1.bf16.xpose.msra.mxu0 0
        %5238 = vmatprep.subr.bf16.mxu0 0
        %5239 = vmatpush1.bf16.xpose.msra.mxu0 0
        %5240 = vmatprep.subr.bf16.mxu0 0
        %5241 = vmatpush1.bf16.xpose.msra.mxu0 0
        %5242 = vmatprep.subr.bf16.mxu0 0
        %5243 = vmatpush1.bf16.xpose.msra.mxu0 0
        %5244 = vmatprep.subr.bf16.mxu0 0
        %5245 = vmatpush1.bf16.xpose.msra.mxu0 0
        %5246 = vmatprep.subr.bf16.mxu0 0
        %5247 = vmatpush1.bf16.xpose.msra.mxu0 0
        %5248 = vmatprep.subr.bf16.mxu0 0
        %5249 = vmatpush1.bf16.xpose.msra.mxu0 0
        %5250 = vmatprep.subr.bf16.mxu0 0
        %5251 = vmatpush1.bf16.xpose.msra.mxu0 0
        %5252 = vmatprep.subr.bf16.mxu0 0
        %5253 = vmatpush1.bf16.xpose.msra.mxu0 0
        %5254 = vmatprep.subr.bf16.mxu0 0
        %5255 = vmatpush1.bf16.xpose.msra.mxu0 0
        %5256 = vmatprep.mubr.bf16.mxu0 0
        %5257 = vmatmul.mubr.bf16.gmra.mrb[0].mxu0 %v5219
        %v5258 = vpop.f32.mrb[0].mxu0
        %v5259 = vadd.f32 0.0, %v5258
        %v5260 = vpop.f32.mrb[0].mxu0
        %v5261 = vpop.f32.mrb[0].mxu0
        %v5262 = vpop.f32.mrb[0].mxu0
        %5263 = vdwg.mxu0
        %v5264 = vrot.slane %v4711, 4
        %v5265 = vrot.slane %v4713, 4
        %v5267 = vsel %vm766, %v5264, 0
        %v5270 = vsel %vm766, %v5265, 0
        %5272 = vmatprep.subr.bf16.mxu0 0
        %5273 = vmatpush1.bf16.xpose.msra.mxu0 %v5270
        %5274 = vmatprep.subr.bf16.mxu0 0
        %5275 = vmatpush1.bf16.xpose.msra.mxu0 0
        %5276 = vmatprep.subr.bf16.mxu0 0
        %5277 = vmatpush1.bf16.xpose.msra.mxu0 0
        %5278 = vmatprep.subr.bf16.mxu0 0
        %5279 = vmatpush1.bf16.xpose.msra.mxu0 0
        %5280 = vmatprep.subr.bf16.mxu0 0
        %5281 = vmatpush1.bf16.xpose.msra.mxu0 0
        %5282 = vmatprep.subr.bf16.mxu0 0
        %5283 = vmatpush1.bf16.xpose.msra.mxu0 0
        %5284 = vmatprep.subr.bf16.mxu0 0
        %5285 = vmatpush1.bf16.xpose.msra.mxu0 0
        %5286 = vmatprep.subr.bf16.mxu0 0
        %5287 = vmatpush1.bf16.xpose.msra.mxu0 0
        %5288 = vmatprep.subr.bf16.mxu0 0
        %5289 = vmatpush1.bf16.xpose.msra.mxu0 0
        %5290 = vmatprep.subr.bf16.mxu0 0
        %5291 = vmatpush1.bf16.xpose.msra.mxu0 0
        %5292 = vmatprep.subr.bf16.mxu0 0
        %5293 = vmatpush1.bf16.xpose.msra.mxu0 0
        %5294 = vmatprep.subr.bf16.mxu0 0
        %5295 = vmatpush1.bf16.xpose.msra.mxu0 0
        %5296 = vmatprep.subr.bf16.mxu0 0
        %5297 = vmatpush1.bf16.xpose.msra.mxu0 0
        %5298 = vmatprep.subr.bf16.mxu0 0
        %5299 = vmatpush1.bf16.xpose.msra.mxu0 0
        %5300 = vmatprep.subr.bf16.mxu0 0
        %5301 = vmatpush1.bf16.xpose.msra.mxu0 0
        %5302 = vmatprep.subr.bf16.mxu0 0
        %5303 = vmatpush1.bf16.xpose.msra.mxu0 0
        %5304 = vmatprep.mubr.bf16.mxu0 0
        %5305 = vmatmul.mubr.bf16.gmra.mrb[0].mxu0 %v5267
        %v5306 = vpop.f32.mrb[0].mxu0
        %v5307 = vadd.f32 0.0, %v5306
        %v5308 = vpop.f32.mrb[0].mxu0
        %v5309 = vpop.f32.mrb[0].mxu0
        %v5310 = vpop.f32.mrb[0].mxu0
        %5311 = vdwg.mxu0
        %v5312 = vrot.slane %v4721, 4
        %v5313 = vrot.slane %v4727, 4
        %v5315 = vsel %vm766, %v5312, 0
        %v5318 = vsel %vm766, %v5313, 0
        %5320 = vmatprep.subr.bf16.mxu0 0
        %5321 = vmatpush1.bf16.xpose.msra.mxu0 %v5318
        %5322 = vmatprep.subr.bf16.mxu0 0
        %5323 = vmatpush1.bf16.xpose.msra.mxu0 0
        %5324 = vmatprep.subr.bf16.mxu0 0
        %5325 = vmatpush1.bf16.xpose.msra.mxu0 0
        %5326 = vmatprep.subr.bf16.mxu0 0
        %5327 = vmatpush1.bf16.xpose.msra.mxu0 0
        %5328 = vmatprep.subr.bf16.mxu0 0
        %5329 = vmatpush1.bf16.xpose.msra.mxu0 0
        %5330 = vmatprep.subr.bf16.mxu0 0
        %5331 = vmatpush1.bf16.xpose.msra.mxu0 0
        %5332 = vmatprep.subr.bf16.mxu0 0
        %5333 = vmatpush1.bf16.xpose.msra.mxu0 0
        %5334 = vmatprep.subr.bf16.mxu0 0
        %5335 = vmatpush1.bf16.xpose.msra.mxu0 0
        %5336 = vmatprep.subr.bf16.mxu0 0
        %5337 = vmatpush1.bf16.xpose.msra.mxu0 0
        %5338 = vmatprep.subr.bf16.mxu0 0
        %5339 = vmatpush1.bf16.xpose.msra.mxu0 0
        %5340 = vmatprep.subr.bf16.mxu0 0
        %5341 = vmatpush1.bf16.xpose.msra.mxu0 0
        %5342 = vmatprep.subr.bf16.mxu0 0
        %5343 = vmatpush1.bf16.xpose.msra.mxu0 0
        %5344 = vmatprep.subr.bf16.mxu0 0
        %5345 = vmatpush1.bf16.xpose.msra.mxu0 0
        %5346 = vmatprep.subr.bf16.mxu0 0
        %5347 = vmatpush1.bf16.xpose.msra.mxu0 0
        %5348 = vmatprep.subr.bf16.mxu0 0
        %5349 = vmatpush1.bf16.xpose.msra.mxu0 0
        %5350 = vmatprep.subr.bf16.mxu0 0
        %5351 = vmatpush1.bf16.xpose.msra.mxu0 0
        %5352 = vmatprep.mubr.bf16.mxu0 0
        %5353 = vmatmul.mubr.bf16.gmra.mrb[0].mxu0 %v5315
        %v5354 = vpop.f32.mrb[0].mxu0
        %v5355 = vadd.f32 0.0, %v5354
        %v5356 = vpop.f32.mrb[0].mxu0
        %v5357 = vpop.f32.mrb[0].mxu0
        %v5358 = vpop.f32.mrb[0].mxu0
        %5359 = vdwg.mxu0
        %v5360 = vmul.f32 %v5211, 0.125
        %v5361 = vmul.f32 %v5259, 0.125
        %v5362 = vmul.f32 %v5307, 0.125
        %v5363 = vmul.f32 %v5355, 0.125
        %v5364 = vadd.f32 %v5360, %v2281
        %v5365 = vadd.f32 %v5361, %v2281
        %v5366 = vadd.f32 %v5362, %v2281
        %v5367 = vadd.f32 %v5363, %v2281
        %v5368 = vsel %vm1838, %v5364, -inf
        %5369 = vmax.xlane.f32.xlu0 %v5368
        %v5370 = vpop.xlane.xlu0 %5369
        %v5371 = vsel %vm1838, %v5365, -inf
        %5372 = vmax.xlane.f32.xlu0 %v5371
        %v5373 = vpop.xlane.xlu0 %5372
        %v5374 = vsel %vm1838, %v5366, -inf
        %5375 = vmax.xlane.f32.xlu0 %v5374
        %v5376 = vpop.xlane.xlu0 %5375
        %v5377 = vsel %vm1838, %v5367, -inf
        %5378 = vmax.xlane.f32.xlu0 %v5377
        %v5379 = vpop.xlane.xlu0 %5378
        %v5380 = vsub.f32 %v5364, %v5370
        %v5381 = vsub.f32 %v5365, %v5373
        %v5382 = vsub.f32 %v5366, %v5376
        %v5383 = vsub.f32 %v5367, %v5379
        %v5384 = vmul.f32 %v5380, 1.442695
        %v5385 = vpow.pop %v5384
        %v5386 = vmul.f32 %v5381, 1.442695
        %v5387 = vpow.pop %v5386
        %v5388 = vmul.f32 %v5382, 1.442695
        %v5389 = vpow.pop %v5388
        %v5390 = vmul.f32 %v5383, 1.442695
        %v5391 = vpow.pop %v5390
        %v5392 = vsel %vm1838, %v5385, 0.0
        %5393 = vadd.xlane.f32.xlu0 %v5392
        %v5394 = vpop.xlane.xlu0 %5393
        %v5395 = vsel %vm1838, %v5387, 0.0
        %5396 = vadd.xlane.f32.xlu0 %v5395
        %v5397 = vpop.xlane.xlu0 %5396
        %v5398 = vsel %vm1838, %v5389, 0.0
        %5399 = vadd.xlane.f32.xlu0 %v5398
        %v5400 = vpop.xlane.xlu0 %5399
        %v5401 = vsel %vm1838, %v5391, 0.0
        %5402 = vadd.xlane.f32.xlu0 %v5401
        %v5403 = vpop.xlane.xlu0 %5402
        %v5404 = vrcp.pop %v5394
        %v5405 = vrcp.pop %v5397
        %v5406 = vrcp.pop %v5400
        %v5407 = vrcp.pop %v5403
        %v5408 = vmul.f32 %v5385, %v5404
        %v5409 = vmul.f32 %v5387, %v5405
        %v5410 = vmul.f32 %v5389, %v5406
        %v5411 = vmul.f32 %v5391, %v5407
        %v5412 = vpack.c.bf16 %v5408, %v5408
        %v5413 = vpack.c.bf16 %v5409, %v5409
        %v5414 = vpack.c.bf16 %v5410, %v5410
        %v5415 = vpack.c.bf16 %v5411, %v5411
        %v5416 = vrot.slane %v4714, 4
        %v5418 = vsel %vm1838, %v5412, 0
        %v5421 = vsel %vm1890, %v5416, 0
        %5423 = vmatprep.subr.bf16.mxu0 0
        %5424 = vmatpush1.bf16.msra.mxu0 %v5421
        %5425 = vmatprep.subr.bf16.mxu0 0
        %5426 = vmatpush1.bf16.msra.mxu0 0
        %5427 = vmatprep.subr.bf16.mxu0 0
        %5428 = vmatpush1.bf16.msra.mxu0 0
        %5429 = vmatprep.subr.bf16.mxu0 0
        %5430 = vmatpush1.bf16.msra.mxu0 0
        %5431 = vmatprep.subr.bf16.mxu0 0
        %5432 = vmatpush1.bf16.msra.mxu0 0
        %5433 = vmatprep.subr.bf16.mxu0 0
        %5434 = vmatpush1.bf16.msra.mxu0 0
        %5435 = vmatprep.subr.bf16.mxu0 0
        %5436 = vmatpush1.bf16.msra.mxu0 0
        %5437 = vmatprep.subr.bf16.mxu0 0
        %5438 = vmatpush1.bf16.msra.mxu0 0
        %5439 = vmatprep.subr.bf16.mxu0 0
        %5440 = vmatpush1.bf16.msra.mxu0 0
        %5441 = vmatprep.subr.bf16.mxu0 0
        %5442 = vmatpush1.bf16.msra.mxu0 0
        %5443 = vmatprep.subr.bf16.mxu0 0
        %5444 = vmatpush1.bf16.msra.mxu0 0
        %5445 = vmatprep.subr.bf16.mxu0 0
        %5446 = vmatpush1.bf16.msra.mxu0 0
        %5447 = vmatprep.subr.bf16.mxu0 0
        %5448 = vmatpush1.bf16.msra.mxu0 0
        %5449 = vmatprep.subr.bf16.mxu0 0
        %5450 = vmatpush1.bf16.msra.mxu0 0
        %5451 = vmatprep.subr.bf16.mxu0 0
        %5452 = vmatpush1.bf16.msra.mxu0 0
        %5453 = vmatprep.subr.bf16.mxu0 0
        %5454 = vmatpush1.bf16.msra.mxu0 0
        %5455 = vmatprep.mubr.bf16.mxu0 0
        %5456 = vmatmul.mubr.bf16.gmra.mrb[0].mxu0 %v5418
        %v5457 = vpop.f32.mrb[0].mxu0
        %v5458 = vadd.f32 0.0, %v5457
        %v5459 = vpop.f32.mrb[0].mxu0
        %v5460 = vpop.f32.mrb[0].mxu0
        %v5461 = vpop.f32.mrb[0].mxu0
        %5462 = vdwg.mxu0
        %v5463 = vrot.slane %v4730, 4
        %v5465 = vsel %vm1838, %v5413, 0
        %v5468 = vsel %vm1890, %v5463, 0
        %5470 = vmatprep.subr.bf16.mxu0 0
        %5471 = vmatpush1.bf16.msra.mxu0 %v5468
        %5472 = vmatprep.subr.bf16.mxu0 0
        %5473 = vmatpush1.bf16.msra.mxu0 0
        %5474 = vmatprep.subr.bf16.mxu0 0
        %5475 = vmatpush1.bf16.msra.mxu0 0
        %5476 = vmatprep.subr.bf16.mxu0 0
        %5477 = vmatpush1.bf16.msra.mxu0 0
        %5478 = vmatprep.subr.bf16.mxu0 0
        %5479 = vmatpush1.bf16.msra.mxu0 0
        %5480 = vmatprep.subr.bf16.mxu0 0
        %5481 = vmatpush1.bf16.msra.mxu0 0
        %5482 = vmatprep.subr.bf16.mxu0 0
        %5483 = vmatpush1.bf16.msra.mxu0 0
        %5484 = vmatprep.subr.bf16.mxu0 0
        %5485 = vmatpush1.bf16.msra.mxu0 0
        %5486 = vmatprep.subr.bf16.mxu0 0
        %5487 = vmatpush1.bf16.msra.mxu0 0
        %5488 = vmatprep.subr.bf16.mxu0 0
        %5489 = vmatpush1.bf16.msra.mxu0 0
        %5490 = vmatprep.subr.bf16.mxu0 0
        %5491 = vmatpush1.bf16.msra.mxu0 0
        %5492 = vmatprep.subr.bf16.mxu0 0
        %5493 = vmatpush1.bf16.msra.mxu0 0
        %5494 = vmatprep.subr.bf16.mxu0 0
        %5495 = vmatpush1.bf16.msra.mxu0 0
        %5496 = vmatprep.subr.bf16.mxu0 0
        %5497 = vmatpush1.bf16.msra.mxu0 0
        %5498 = vmatprep.subr.bf16.mxu0 0
        %5499 = vmatpush1.bf16.msra.mxu0 0
        %5500 = vmatprep.subr.bf16.mxu0 0
        %5501 = vmatpush1.bf16.msra.mxu0 0
        %5502 = vmatprep.mubr.bf16.mxu0 0
        %5503 = vmatmul.mubr.bf16.gmra.mrb[0].mxu0 %v5465
        %v5504 = vpop.f32.mrb[0].mxu0
        %v5505 = vadd.f32 0.0, %v5504
        %v5506 = vpop.f32.mrb[0].mxu0
        %v5507 = vpop.f32.mrb[0].mxu0
        %v5508 = vpop.f32.mrb[0].mxu0
        %5509 = vdwg.mxu0
        %v5510 = vrot.slane %v4715, 4
        %v5512 = vsel %vm1838, %v5414, 0
        %v5515 = vsel %vm1890, %v5510, 0
        %5517 = vmatprep.subr.bf16.mxu0 0
        %5518 = vmatpush1.bf16.msra.mxu0 %v5515
        %5519 = vmatprep.subr.bf16.mxu0 0
        %5520 = vmatpush1.bf16.msra.mxu0 0
        %5521 = vmatprep.subr.bf16.mxu0 0
        %5522 = vmatpush1.bf16.msra.mxu0 0
        %5523 = vmatprep.subr.bf16.mxu0 0
        %5524 = vmatpush1.bf16.msra.mxu0 0
        %5525 = vmatprep.subr.bf16.mxu0 0
        %5526 = vmatpush1.bf16.msra.mxu0 0
        %5527 = vmatprep.subr.bf16.mxu0 0
        %5528 = vmatpush1.bf16.msra.mxu0 0
        %5529 = vmatprep.subr.bf16.mxu0 0
        %5530 = vmatpush1.bf16.msra.mxu0 0
        %5531 = vmatprep.subr.bf16.mxu0 0
        %5532 = vmatpush1.bf16.msra.mxu0 0
        %5533 = vmatprep.subr.bf16.mxu0 0
        %5534 = vmatpush1.bf16.msra.mxu0 0
        %5535 = vmatprep.subr.bf16.mxu0 0
        %5536 = vmatpush1.bf16.msra.mxu0 0
        %5537 = vmatprep.subr.bf16.mxu0 0
        %5538 = vmatpush1.bf16.msra.mxu0 0
        %5539 = vmatprep.subr.bf16.mxu0 0
        %5540 = vmatpush1.bf16.msra.mxu0 0
        %5541 = vmatprep.subr.bf16.mxu0 0
        %5542 = vmatpush1.bf16.msra.mxu0 0
        %5543 = vmatprep.subr.bf16.mxu0 0
        %5544 = vmatpush1.bf16.msra.mxu0 0
        %5545 = vmatprep.subr.bf16.mxu0 0
        %5546 = vmatpush1.bf16.msra.mxu0 0
        %5547 = vmatprep.subr.bf16.mxu0 0
        %5548 = vmatpush1.bf16.msra.mxu0 0
        %5549 = vmatprep.mubr.bf16.mxu0 0
        %5550 = vmatmul.mubr.bf16.gmra.mrb[0].mxu0 %v5512
        %v5551 = vpop.f32.mrb[0].mxu0
        %v5552 = vadd.f32 0.0, %v5551
        %v5553 = vpop.f32.mrb[0].mxu0
        %v5554 = vpop.f32.mrb[0].mxu0
        %v5555 = vpop.f32.mrb[0].mxu0
        %5556 = vdwg.mxu0
        %v5557 = vrot.slane %v4733, 4
        %v5559 = vsel %vm1838, %v5415, 0
        %v5562 = vsel %vm1890, %v5557, 0
        %5564 = vmatprep.subr.bf16.mxu0 0
        %5565 = vmatpush1.bf16.msra.mxu0 %v5562
        %5566 = vmatprep.subr.bf16.mxu0 0
        %5567 = vmatpush1.bf16.msra.mxu0 0
        %5568 = vmatprep.subr.bf16.mxu0 0
        %5569 = vmatpush1.bf16.msra.mxu0 0
        %5570 = vmatprep.subr.bf16.mxu0 0
        %5571 = vmatpush1.bf16.msra.mxu0 0
        %5572 = vmatprep.subr.bf16.mxu0 0
        %5573 = vmatpush1.bf16.msra.mxu0 0
        %5574 = vmatprep.subr.bf16.mxu0 0
        %5575 = vmatpush1.bf16.msra.mxu0 0
        %5576 = vmatprep.subr.bf16.mxu0 0
        %5577 = vmatpush1.bf16.msra.mxu0 0
        %5578 = vmatprep.subr.bf16.mxu0 0
        %5579 = vmatpush1.bf16.msra.mxu0 0
        %5580 = vmatprep.subr.bf16.mxu0 0
        %5581 = vmatpush1.bf16.msra.mxu0 0
        %5582 = vmatprep.subr.bf16.mxu0 0
        %5583 = vmatpush1.bf16.msra.mxu0 0
        %5584 = vmatprep.subr.bf16.mxu0 0
        %5585 = vmatpush1.bf16.msra.mxu0 0
        %5586 = vmatprep.subr.bf16.mxu0 0
        %5587 = vmatpush1.bf16.msra.mxu0 0
        %5588 = vmatprep.subr.bf16.mxu0 0
        %5589 = vmatpush1.bf16.msra.mxu0 0
        %5590 = vmatprep.subr.bf16.mxu0 0
        %5591 = vmatpush1.bf16.msra.mxu0 0
        %5592 = vmatprep.subr.bf16.mxu0 0
        %5593 = vmatpush1.bf16.msra.mxu0 0
        %5594 = vmatprep.subr.bf16.mxu0 0
        %5595 = vmatpush1.bf16.msra.mxu0 0
        %5596 = vmatprep.mubr.bf16.mxu0 0
        %5597 = vmatmul.mubr.bf16.gmra.mrb[0].mxu0 %v5559
        %v5598 = vpop.f32.mrb[0].mxu0
        %v5599 = vadd.f32 0.0, %v5598
        %v5600 = vpop.f32.mrb[0].mxu0
        %v5601 = vpop.f32.mrb[0].mxu0
        %v5602 = vpop.f32.mrb[0].mxu0
        %5603 = vdwg.mxu0
        %5605 = vrot.lane.b32.xlu0 %v5505, 64
        %v5606 = vpop.permute.xlu0 %5605
        %5609 = vrot.lane.b32.xlu0 %v5599, 64
        %v5610 = vpop.permute.xlu0 %5609
        %v5612 = vsel %vm766, %v5458, %v5606
        %v5613 = vsel %vm766, %v5552, %v5610
        %v5614 = vpack.c.bf16 %v5612, %v5166
        %v5615 = vpack.c.bf16 %v5613, %v5167
        %s5616 = scalar_lea.vmem [#allocation5], 256
        %v5617 = vld [vmem:[%s5616] sm:$0xff]
        %v5618 = vld [vmem:[%s5616 + $0x8] sm:$0xff]
        %v5619 = vld [vmem:[%s5616 + $0x10] sm:$0xff]
        %v5620 = vld [vmem:[%s5616 + $0x18] sm:$0xff]
        %v5621 = vld [vmem:[%s5616 + $0x20] sm:$0xff]
        %v5622 = vld [vmem:[%s5616 + $0x28] sm:$0xff]
        %v5623 = vld [vmem:[%s5616 + $0x30] sm:$0xff]
        %v5624 = vld [vmem:[%s5616 + $0x38] sm:$0xff]
        %v5625 = vld [vmem:[%s5616 + $0x40] sm:$0xff]
        %v5626 = vld [vmem:[%s5616 + $0x48] sm:$0xff]
        %v5627 = vld [vmem:[%s5616 + $0x50] sm:$0xff]
        %v5628 = vld [vmem:[%s5616 + $0x58] sm:$0xff]
        %v5629 = vld [vmem:[%s5616 + $0x60] sm:$0xff]
        %v5630 = vld [vmem:[%s5616 + $0x68] sm:$0xff]
        %v5631 = vld [vmem:[%s5616 + $0x70] sm:$0xff]
        %v5632 = vld [vmem:[%s5616 + $0x78] sm:$0xff]
        %v5633 = vld [vmem:[%s5616 + $0x80] sm:$0xff]
        %v5634 = vld [vmem:[%s5616 + $0x88] sm:$0xff]
        %v5635 = vld [vmem:[%s5616 + $0x90] sm:$0xff]
        %v5636 = vld [vmem:[%s5616 + $0x98] sm:$0xff]
        %v5637 = vld [vmem:[%s5616 + $0xa0] sm:$0xff]
        %v5638 = vld [vmem:[%s5616 + $0xa8] sm:$0xff]
        %v5639 = vld [vmem:[%s5616 + $0xb0] sm:$0xff]
        %v5640 = vld [vmem:[%s5616 + $0xb8] sm:$0xff]
        %v5641 = vld [vmem:[%s5616 + $0xc0] sm:$0xff]
        %v5642 = vld [vmem:[%s5616 + $0xc8] sm:$0xff]
        %v5643 = vld [vmem:[%s5616 + $0xd0] sm:$0xff]
        %v5644 = vld [vmem:[%s5616 + $0xd8] sm:$0xff]
        %v5645 = vld [vmem:[%s5616 + $0xe0] sm:$0xff]
        %v5646 = vld [vmem:[%s5616 + $0xe8] sm:$0xff]
        %v5647 = vld [vmem:[%s5616 + $0xf0] sm:$0xff]
        %v5648 = vld [vmem:[%s5616 + $0xf8] sm:$0xff]
        %s5649 = scalar_lea.vmem %s9, 2
        %v5650 = vld [vmem:[%s5649] sm:$0x3]
        %v5652 = vlaneseq
        %v5653 = vshrl.u32 %v5652, 7
        %v5654 = vsub.s32 0, %v5653
        %v5655 = vrot.slane %v5650, %v5654
        %v5656 = vlaneseq
        %v5657 = vshrl.u32 %v5656, 7
        %v5658 = vsub.s32 1, %v5657
        %v5659 = vrot.slane %v5650, %v5658
        %v5694 = vunpack.c.l.b16 %v5617
        %v5695 = vunpack.c.h.b16 %v5617
        %v5696 = vunpack.c.l.b16 %v5618
        %v5697 = vunpack.c.h.b16 %v5618
        %v5698 = vunpack.c.l.b16 %v5619
        %v5699 = vunpack.c.h.b16 %v5619
        %v5700 = vunpack.c.l.b16 %v5620
        %v5701 = vunpack.c.h.b16 %v5620
        %v5702 = vunpack.c.l.b16 %v5621
        %v5703 = vunpack.c.h.b16 %v5621
        %v5704 = vunpack.c.l.b16 %v5622
        %v5705 = vunpack.c.h.b16 %v5622
        %v5706 = vunpack.c.l.b16 %v5623
        %v5707 = vunpack.c.h.b16 %v5623
        %v5708 = vunpack.c.l.b16 %v5624
        %v5709 = vunpack.c.h.b16 %v5624
        %v5710 = vunpack.c.l.b16 %v5625
        %v5711 = vunpack.c.h.b16 %v5625
        %v5712 = vunpack.c.l.b16 %v5626
        %v5713 = vunpack.c.h.b16 %v5626
        %v5714 = vunpack.c.l.b16 %v5627
        %v5715 = vunpack.c.h.b16 %v5627
        %v5716 = vunpack.c.l.b16 %v5628
        %v5717 = vunpack.c.h.b16 %v5628
        %v5718 = vunpack.c.l.b16 %v5629
        %v5719 = vunpack.c.h.b16 %v5629
        %v5720 = vunpack.c.l.b16 %v5630
        %v5721 = vunpack.c.h.b16 %v5630
        %v5722 = vunpack.c.l.b16 %v5631
        %v5723 = vunpack.c.h.b16 %v5631
        %v5724 = vunpack.c.l.b16 %v5632
        %v5725 = vunpack.c.h.b16 %v5632
        %v5726 = vunpack.c.l.b16 %v5633
        %v5727 = vunpack.c.h.b16 %v5633
        %v5728 = vunpack.c.l.b16 %v5634
        %v5729 = vunpack.c.h.b16 %v5634
        %v5730 = vunpack.c.l.b16 %v5635
        %v5731 = vunpack.c.h.b16 %v5635
        %v5732 = vunpack.c.l.b16 %v5636
        %v5733 = vunpack.c.h.b16 %v5636
        %v5734 = vunpack.c.l.b16 %v5637
        %v5735 = vunpack.c.h.b16 %v5637
        %v5736 = vunpack.c.l.b16 %v5638
        %v5737 = vunpack.c.h.b16 %v5638
        %v5738 = vunpack.c.l.b16 %v5639
        %v5739 = vunpack.c.h.b16 %v5639
        %v5740 = vunpack.c.l.b16 %v5640
        %v5741 = vunpack.c.h.b16 %v5640
        %v5742 = vunpack.c.l.b16 %v5641
        %v5743 = vunpack.c.h.b16 %v5641
        %v5744 = vunpack.c.l.b16 %v5642
        %v5745 = vunpack.c.h.b16 %v5642
        %v5746 = vunpack.c.l.b16 %v5643
        %v5747 = vunpack.c.h.b16 %v5643
        %v5748 = vunpack.c.l.b16 %v5644
        %v5749 = vunpack.c.h.b16 %v5644
        %v5750 = vunpack.c.l.b16 %v5645
        %v5751 = vunpack.c.h.b16 %v5645
        %v5752 = vunpack.c.l.b16 %v5646
        %v5753 = vunpack.c.h.b16 %v5646
        %v5754 = vunpack.c.l.b16 %v5647
        %v5755 = vunpack.c.h.b16 %v5647
        %v5756 = vunpack.c.l.b16 %v5648
        %v5757 = vunpack.c.h.b16 %v5648
        %v5758 = vpack.c.b16 %v5696, %v5694
        %v5759 = vpack.c.b16 %v5697, %v5695
        %v5760 = vpack.c.b16 %v5700, %v5698
        %v5761 = vpack.c.b16 %v5701, %v5699
        %v5762 = vpack.c.b16 %v5704, %v5702
        %v5763 = vpack.c.b16 %v5705, %v5703
        %v5764 = vpack.c.b16 %v5708, %v5706
        %v5765 = vpack.c.b16 %v5709, %v5707
        %v5766 = vpack.c.b16 %v5712, %v5710
        %v5767 = vpack.c.b16 %v5713, %v5711
        %v5768 = vpack.c.b16 %v5716, %v5714
        %v5769 = vpack.c.b16 %v5717, %v5715
        %v5770 = vpack.c.b16 %v5720, %v5718
        %v5771 = vpack.c.b16 %v5721, %v5719
        %v5772 = vpack.c.b16 %v5724, %v5722
        %v5773 = vpack.c.b16 %v5725, %v5723
        %v5774 = vpack.c.b16 %v5728, %v5726
        %v5775 = vpack.c.b16 %v5729, %v5727
        %v5776 = vpack.c.b16 %v5732, %v5730
        %v5777 = vpack.c.b16 %v5733, %v5731
        %v5778 = vpack.c.b16 %v5736, %v5734
        %v5779 = vpack.c.b16 %v5737, %v5735
        %v5780 = vpack.c.b16 %v5740, %v5738
        %v5781 = vpack.c.b16 %v5741, %v5739
        %v5782 = vpack.c.b16 %v5744, %v5742
        %v5783 = vpack.c.b16 %v5745, %v5743
        %v5784 = vpack.c.b16 %v5748, %v5746
        %v5785 = vpack.c.b16 %v5749, %v5747
        %v5786 = vpack.c.b16 %v5752, %v5750
        %v5787 = vpack.c.b16 %v5753, %v5751
        %v5788 = vpack.c.b16 %v5756, %v5754
        %v5789 = vpack.c.b16 %v5757, %v5755
        %5822 = vmatprep.subr.bf16.mxu0 %v5759
        %5823 = vmatpush1.bf16.msra.mxu0 %v5758
        %5824 = vmatprep.subr.bf16.mxu0 %v5761
        %5825 = vmatpush1.bf16.msra.mxu0 %v5760
        %5826 = vmatprep.subr.bf16.mxu0 %v5763
        %5827 = vmatpush1.bf16.msra.mxu0 %v5762
        %5828 = vmatprep.subr.bf16.mxu0 %v5765
        %5829 = vmatpush1.bf16.msra.mxu0 %v5764
        %5830 = vmatprep.subr.bf16.mxu0 %v5767
        %5831 = vmatpush1.bf16.msra.mxu0 %v5766
        %5832 = vmatprep.subr.bf16.mxu0 %v5769
        %5833 = vmatpush1.bf16.msra.mxu0 %v5768
        %5834 = vmatprep.subr.bf16.mxu0 %v5771
        %5835 = vmatpush1.bf16.msra.mxu0 %v5770
        %5836 = vmatprep.subr.bf16.mxu0 %v5773
        %5837 = vmatpush1.bf16.msra.mxu0 %v5772
        %5838 = vmatprep.subr.bf16.mxu0 %v5775
        %5839 = vmatpush1.bf16.msra.mxu0 %v5774
        %5840 = vmatprep.subr.bf16.mxu0 %v5777
        %5841 = vmatpush1.bf16.msra.mxu0 %v5776
        %5842 = vmatprep.subr.bf16.mxu0 %v5779
        %5843 = vmatpush1.bf16.msra.mxu0 %v5778
        %5844 = vmatprep.subr.bf16.mxu0 %v5781
        %5845 = vmatpush1.bf16.msra.mxu0 %v5780
        %5846 = vmatprep.subr.bf16.mxu0 %v5783
        %5847 = vmatpush1.bf16.msra.mxu0 %v5782
        %5848 = vmatprep.subr.bf16.mxu0 %v5785
        %5849 = vmatpush1.bf16.msra.mxu0 %v5784
        %5850 = vmatprep.subr.bf16.mxu0 %v5787
        %5851 = vmatpush1.bf16.msra.mxu0 %v5786
        %5852 = vmatprep.subr.bf16.mxu0 %v5789
        %5853 = vmatpush1.bf16.msra.mxu0 %v5788
        %5854 = vmatprep.mubr.bf16.mxu0 %v5615
        %5855 = vmatmul.mubr.bf16.gmra.mrb[0].mxu0 %v5614
        %v5856 = vpop.f32.mrb[0].mxu0
        %v5857 = vadd.f32 %v5655, %v5856
        %v5858 = vpop.f32.mrb[0].mxu0
        %v5859 = vadd.f32 %v5659, %v5858
        %v5860 = vpop.f32.mrb[0].mxu0
        %v5861 = vadd.f32 %v5655, %v5860
        %v5862 = vpop.f32.mrb[0].mxu0
        %v5863 = vadd.f32 %v5659, %v5862
        %5864 = vdwg.mxu0
        %v5865 = vadd.f32 %v3965, %v5857
        %v5866 = vadd.f32 %v3966, %v5859
        %v5867 = vadd.f32 %v3967, %v5861
        %v5868 = vadd.f32 %v3968, %v5863
        %s5869 = scalar_lea.vmem %s10, 2
        %v5870 = vld [vmem:[%s5869] sm:$0x3]
        %s5871 = scalar_lea.vmem %s11, 2
        %v5872 = vld [vmem:[%s5871] sm:$0x3]
        %v5873 = vadd.f32 %v5865, %v5866
        %5874 = vadd.xlane.f32.xlu0 %v5873
        %v5875 = vpop.xlane.xlu0 %5874
        %v5876 = vadd.f32 %v5867, %v5868
        %5877 = vadd.xlane.f32.xlu0 %v5876
        %v5878 = vpop.xlane.xlu0 %5877
        %v5879 = vmul.f32 %v5875, %v821
        %v5880 = vmul.f32 %v5878, %v821
        %v5881 = vsub.f32 %v5865, %v5879
        %v5882 = vsub.f32 %v5866, %v5879
        %v5883 = vsub.f32 %v5867, %v5880
        %v5884 = vsub.f32 %v5868, %v5880
        %v5885 = vmul.f32 %v5881, %v5881
        %v5886 = vmul.f32 %v5882, %v5882
        %v5887 = vmul.f32 %v5883, %v5883
        %v5888 = vmul.f32 %v5884, %v5884
        %v5889 = vadd.f32 %v5885, %v5886
        %5890 = vadd.xlane.f32.xlu0 %v5889
        %v5891 = vpop.xlane.xlu0 %5890
        %v5892 = vadd.f32 %v5887, %v5888
        %5893 = vadd.xlane.f32.xlu0 %v5892
        %v5894 = vpop.xlane.xlu0 %5893
        %v5895 = vmul.f32 %v5891, %v821
        %v5896 = vmul.f32 %v5894, %v821
        %v5897 = vadd.f32 %v5895, 1e-12
        %v5898 = vadd.f32 %v5896, 1e-12
        %v5899 = vrsqrt.pop %v5897
        %v5900 = vrsqrt.pop %v5898
        %v5901 = vmul.f32 %v5881, %v5899
        %v5902 = vmul.f32 %v5882, %v5899
        %v5903 = vmul.f32 %v5883, %v5900
        %v5904 = vmul.f32 %v5884, %v5900
        %v5906 = vlaneseq
        %v5907 = vshrl.u32 %v5906, 7
        %v5908 = vsub.s32 0, %v5907
        %v5909 = vrot.slane %v5870, %v5908
        %v5910 = vlaneseq
        %v5911 = vshrl.u32 %v5910, 7
        %v5912 = vsub.s32 1, %v5911
        %v5913 = vrot.slane %v5870, %v5912
        %v5916 = vmul.f32 %v5901, %v5909
        %v5917 = vmul.f32 %v5902, %v5913
        %v5918 = vmul.f32 %v5903, %v5909
        %v5919 = vmul.f32 %v5904, %v5913
        %v5921 = vlaneseq
        %v5922 = vshrl.u32 %v5921, 7
        %v5923 = vsub.s32 0, %v5922
        %v5924 = vrot.slane %v5872, %v5923
        %v5925 = vlaneseq
        %v5926 = vshrl.u32 %v5925, 7
        %v5927 = vsub.s32 1, %v5926
        %v5928 = vrot.slane %v5872, %v5927
        %v5931 = vadd.f32 %v5916, %v5924
        %v5932 = vadd.f32 %v5917, %v5928
        %v5933 = vadd.f32 %v5918, %v5924
        %v5934 = vadd.f32 %v5919, %v5928
        %v5935 = vpack.c.bf16 %v5933, %v5931
        %v5936 = vpack.c.bf16 %v5934, %v5932
        %s5937 = scalar_lea.vmem [#allocation7], 512
        %v5938 = vld [vmem:[%s5937] sm:$0xff]
        %v5939 = vld [vmem:[%s5937 + $0x8] sm:$0xff]
        %v5940 = vld [vmem:[%s5937 + $0x10] sm:$0xff]
        %v5941 = vld [vmem:[%s5937 + $0x18] sm:$0xff]
        %v5942 = vld [vmem:[%s5937 + $0x20] sm:$0xff]
        %v5943 = vld [vmem:[%s5937 + $0x28] sm:$0xff]
        %v5944 = vld [vmem:[%s5937 + $0x30] sm:$0xff]
        %v5945 = vld [vmem:[%s5937 + $0x38] sm:$0xff]
        %v5946 = vld [vmem:[%s5937 + $0x40] sm:$0xff]
        %v5947 = vld [vmem:[%s5937 + $0x48] sm:$0xff]
        %v5948 = vld [vmem:[%s5937 + $0x50] sm:$0xff]
        %v5949 = vld [vmem:[%s5937 + $0x58] sm:$0xff]
        %v5950 = vld [vmem:[%s5937 + $0x60] sm:$0xff]
        %v5951 = vld [vmem:[%s5937 + $0x68] sm:$0xff]
        %v5952 = vld [vmem:[%s5937 + $0x70] sm:$0xff]
        %v5953 = vld [vmem:[%s5937 + $0x78] sm:$0xff]
        %v5954 = vld [vmem:[%s5937 + $0x80] sm:$0xff]
        %v5955 = vld [vmem:[%s5937 + $0x88] sm:$0xff]
        %v5956 = vld [vmem:[%s5937 + $0x90] sm:$0xff]
        %v5957 = vld [vmem:[%s5937 + $0x98] sm:$0xff]
        %v5958 = vld [vmem:[%s5937 + $0xa0] sm:$0xff]
        %v5959 = vld [vmem:[%s5937 + $0xa8] sm:$0xff]
        %v5960 = vld [vmem:[%s5937 + $0xb0] sm:$0xff]
        %v5961 = vld [vmem:[%s5937 + $0xb8] sm:$0xff]
        %v5962 = vld [vmem:[%s5937 + $0xc0] sm:$0xff]
        %v5963 = vld [vmem:[%s5937 + $0xc8] sm:$0xff]
        %v5964 = vld [vmem:[%s5937 + $0xd0] sm:$0xff]
        %v5965 = vld [vmem:[%s5937 + $0xd8] sm:$0xff]
        %v5966 = vld [vmem:[%s5937 + $0xe0] sm:$0xff]
        %v5967 = vld [vmem:[%s5937 + $0xe8] sm:$0xff]
        %v5968 = vld [vmem:[%s5937 + $0xf0] sm:$0xff]
        %v5969 = vld [vmem:[%s5937 + $0xf8] sm:$0xff]
        %v5970 = vld [vmem:[%s5937 + $0x100] sm:$0xff]
        %v5971 = vld [vmem:[%s5937 + $0x108] sm:$0xff]
        %v5972 = vld [vmem:[%s5937 + $0x110] sm:$0xff]
        %v5973 = vld [vmem:[%s5937 + $0x118] sm:$0xff]
        %v5974 = vld [vmem:[%s5937 + $0x120] sm:$0xff]
        %v5975 = vld [vmem:[%s5937 + $0x128] sm:$0xff]
        %v5976 = vld [vmem:[%s5937 + $0x130] sm:$0xff]
        %v5977 = vld [vmem:[%s5937 + $0x138] sm:$0xff]
        %v5978 = vld [vmem:[%s5937 + $0x140] sm:$0xff]
        %v5979 = vld [vmem:[%s5937 + $0x148] sm:$0xff]
        %v5980 = vld [vmem:[%s5937 + $0x150] sm:$0xff]
        %v5981 = vld [vmem:[%s5937 + $0x158] sm:$0xff]
        %v5982 = vld [vmem:[%s5937 + $0x160] sm:$0xff]
        %v5983 = vld [vmem:[%s5937 + $0x168] sm:$0xff]
        %v5984 = vld [vmem:[%s5937 + $0x170] sm:$0xff]
        %v5985 = vld [vmem:[%s5937 + $0x178] sm:$0xff]
        %v5986 = vld [vmem:[%s5937 + $0x180] sm:$0xff]
        %v5987 = vld [vmem:[%s5937 + $0x188] sm:$0xff]
        %v5988 = vld [vmem:[%s5937 + $0x190] sm:$0xff]
        %v5989 = vld [vmem:[%s5937 + $0x198] sm:$0xff]
        %v5990 = vld [vmem:[%s5937 + $0x1a0] sm:$0xff]
        %v5991 = vld [vmem:[%s5937 + $0x1a8] sm:$0xff]
        %v5992 = vld [vmem:[%s5937 + $0x1b0] sm:$0xff]
        %v5993 = vld [vmem:[%s5937 + $0x1b8] sm:$0xff]
        %v5994 = vld [vmem:[%s5937 + $0x1c0] sm:$0xff]
        %v5995 = vld [vmem:[%s5937 + $0x1c8] sm:$0xff]
        %v5996 = vld [vmem:[%s5937 + $0x1d0] sm:$0xff]
        %v5997 = vld [vmem:[%s5937 + $0x1d8] sm:$0xff]
        %v5998 = vld [vmem:[%s5937 + $0x1e0] sm:$0xff]
        %v5999 = vld [vmem:[%s5937 + $0x1e8] sm:$0xff]
        %v6000 = vld [vmem:[%s5937 + $0x1f0] sm:$0xff]
        %v6001 = vld [vmem:[%s5937 + $0x1f8] sm:$0xff]
        %s6002 = scalar_lea.vmem %s13, 4
        %v6003 = vld [vmem:[%s6002] sm:$0xf]
        %v6005 = vlaneseq
        %v6006 = vshrl.u32 %v6005, 7
        %v6007 = vsub.s32 0, %v6006
        %v6008 = vrot.slane %v6003, %v6007
        %v6009 = vlaneseq
        %v6010 = vshrl.u32 %v6009, 7
        %v6011 = vsub.s32 1, %v6010
        %v6012 = vrot.slane %v6003, %v6011
        %v6013 = vlaneseq
        %v6014 = vshrl.u32 %v6013, 7
        %v6015 = vsub.s32 2, %v6014
        %v6016 = vrot.slane %v6003, %v6015
        %v6017 = vlaneseq
        %v6018 = vshrl.u32 %v6017, 7
        %v6019 = vsub.s32 3, %v6018
        %v6020 = vrot.slane %v6003, %v6019
        %v6089 = vunpack.c.l.b16 %v5938
        %v6090 = vunpack.c.h.b16 %v5938
        %v6091 = vunpack.c.l.b16 %v5939
        %v6092 = vunpack.c.h.b16 %v5939
        %v6093 = vunpack.c.l.b16 %v5940
        %v6094 = vunpack.c.h.b16 %v5940
        %v6095 = vunpack.c.l.b16 %v5941
        %v6096 = vunpack.c.h.b16 %v5941
        %v6097 = vunpack.c.l.b16 %v5942
        %v6098 = vunpack.c.h.b16 %v5942
        %v6099 = vunpack.c.l.b16 %v5943
        %v6100 = vunpack.c.h.b16 %v5943
        %v6101 = vunpack.c.l.b16 %v5944
        %v6102 = vunpack.c.h.b16 %v5944
        %v6103 = vunpack.c.l.b16 %v5945
        %v6104 = vunpack.c.h.b16 %v5945
        %v6105 = vunpack.c.l.b16 %v5946
        %v6106 = vunpack.c.h.b16 %v5946
        %v6107 = vunpack.c.l.b16 %v5947
        %v6108 = vunpack.c.h.b16 %v5947
        %v6109 = vunpack.c.l.b16 %v5948
        %v6110 = vunpack.c.h.b16 %v5948
        %v6111 = vunpack.c.l.b16 %v5949
        %v6112 = vunpack.c.h.b16 %v5949
        %v6113 = vunpack.c.l.b16 %v5950
        %v6114 = vunpack.c.h.b16 %v5950
        %v6115 = vunpack.c.l.b16 %v5951
        %v6116 = vunpack.c.h.b16 %v5951
        %v6117 = vunpack.c.l.b16 %v5952
        %v6118 = vunpack.c.h.b16 %v5952
        %v6119 = vunpack.c.l.b16 %v5953
        %v6120 = vunpack.c.h.b16 %v5953
        %v6121 = vunpack.c.l.b16 %v5954
        %v6122 = vunpack.c.h.b16 %v5954
        %v6123 = vunpack.c.l.b16 %v5955
        %v6124 = vunpack.c.h.b16 %v5955
        %v6125 = vunpack.c.l.b16 %v5956
        %v6126 = vunpack.c.h.b16 %v5956
        %v6127 = vunpack.c.l.b16 %v5957
        %v6128 = vunpack.c.h.b16 %v5957
        %v6129 = vunpack.c.l.b16 %v5958
        %v6130 = vunpack.c.h.b16 %v5958
        %v6131 = vunpack.c.l.b16 %v5959
        %v6132 = vunpack.c.h.b16 %v5959
        %v6133 = vunpack.c.l.b16 %v5960
        %v6134 = vunpack.c.h.b16 %v5960
        %v6135 = vunpack.c.l.b16 %v5961
        %v6136 = vunpack.c.h.b16 %v5961
        %v6137 = vunpack.c.l.b16 %v5962
        %v6138 = vunpack.c.h.b16 %v5962
        %v6139 = vunpack.c.l.b16 %v5963
        %v6140 = vunpack.c.h.b16 %v5963
        %v6141 = vunpack.c.l.b16 %v5964
        %v6142 = vunpack.c.h.b16 %v5964
        %v6143 = vunpack.c.l.b16 %v5965
        %v6144 = vunpack.c.h.b16 %v5965
        %v6145 = vunpack.c.l.b16 %v5966
        %v6146 = vunpack.c.h.b16 %v5966
        %v6147 = vunpack.c.l.b16 %v5967
        %v6148 = vunpack.c.h.b16 %v5967
        %v6149 = vunpack.c.l.b16 %v5968
        %v6150 = vunpack.c.h.b16 %v5968
        %v6151 = vunpack.c.l.b16 %v5969
        %v6152 = vunpack.c.h.b16 %v5969
        %v6153 = vunpack.c.l.b16 %v5970
        %v6154 = vunpack.c.h.b16 %v5970
        %v6155 = vunpack.c.l.b16 %v5971
        %v6156 = vunpack.c.h.b16 %v5971
        %v6157 = vunpack.c.l.b16 %v5972
        %v6158 = vunpack.c.h.b16 %v5972
        %v6159 = vunpack.c.l.b16 %v5973
        %v6160 = vunpack.c.h.b16 %v5973
        %v6161 = vunpack.c.l.b16 %v5974
        %v6162 = vunpack.c.h.b16 %v5974
        %v6163 = vunpack.c.l.b16 %v5975
        %v6164 = vunpack.c.h.b16 %v5975
        %v6165 = vunpack.c.l.b16 %v5976
        %v6166 = vunpack.c.h.b16 %v5976
        %v6167 = vunpack.c.l.b16 %v5977
        %v6168 = vunpack.c.h.b16 %v5977
        %v6169 = vunpack.c.l.b16 %v5978
        %v6170 = vunpack.c.h.b16 %v5978
        %v6171 = vunpack.c.l.b16 %v5979
        %v6172 = vunpack.c.h.b16 %v5979
        %v6173 = vunpack.c.l.b16 %v5980
        %v6174 = vunpack.c.h.b16 %v5980
        %v6175 = vunpack.c.l.b16 %v5981
        %v6176 = vunpack.c.h.b16 %v5981
        %v6177 = vunpack.c.l.b16 %v5982
        %v6178 = vunpack.c.h.b16 %v5982
        %v6179 = vunpack.c.l.b16 %v5983
        %v6180 = vunpack.c.h.b16 %v5983
        %v6181 = vunpack.c.l.b16 %v5984
        %v6182 = vunpack.c.h.b16 %v5984
        %v6183 = vunpack.c.l.b16 %v5985
        %v6184 = vunpack.c.h.b16 %v5985
        %v6185 = vunpack.c.l.b16 %v5986
        %v6186 = vunpack.c.h.b16 %v5986
        %v6187 = vunpack.c.l.b16 %v5987
        %v6188 = vunpack.c.h.b16 %v5987
        %v6189 = vunpack.c.l.b16 %v5988
        %v6190 = vunpack.c.h.b16 %v5988
        %v6191 = vunpack.c.l.b16 %v5989
        %v6192 = vunpack.c.h.b16 %v5989
        %v6193 = vunpack.c.l.b16 %v5990
        %v6194 = vunpack.c.h.b16 %v5990
        %v6195 = vunpack.c.l.b16 %v5991
        %v6196 = vunpack.c.h.b16 %v5991
        %v6197 = vunpack.c.l.b16 %v5992
        %v6198 = vunpack.c.h.b16 %v5992
        %v6199 = vunpack.c.l.b16 %v5993
        %v6200 = vunpack.c.h.b16 %v5993
        %v6201 = vunpack.c.l.b16 %v5994
        %v6202 = vunpack.c.h.b16 %v5994
        %v6203 = vunpack.c.l.b16 %v5995
        %v6204 = vunpack.c.h.b16 %v5995
        %v6205 = vunpack.c.l.b16 %v5996
        %v6206 = vunpack.c.h.b16 %v5996
        %v6207 = vunpack.c.l.b16 %v5997
        %v6208 = vunpack.c.h.b16 %v5997
        %v6209 = vunpack.c.l.b16 %v5998
        %v6210 = vunpack.c.h.b16 %v5998
        %v6211 = vunpack.c.l.b16 %v5999
        %v6212 = vunpack.c.h.b16 %v5999
        %v6213 = vunpack.c.l.b16 %v6000
        %v6214 = vunpack.c.h.b16 %v6000
        %v6215 = vunpack.c.l.b16 %v6001
        %v6216 = vunpack.c.h.b16 %v6001
        %v6217 = vpack.c.b16 %v6093, %v6089
        %v6218 = vpack.c.b16 %v6094, %v6090
        %v6219 = vpack.c.b16 %v6095, %v6091
        %v6220 = vpack.c.b16 %v6096, %v6092
        %v6221 = vpack.c.b16 %v6101, %v6097
        %v6222 = vpack.c.b16 %v6102, %v6098
        %v6223 = vpack.c.b16 %v6103, %v6099
        %v6224 = vpack.c.b16 %v6104, %v6100
        %v6225 = vpack.c.b16 %v6109, %v6105
        %v6226 = vpack.c.b16 %v6110, %v6106
        %v6227 = vpack.c.b16 %v6111, %v6107
        %v6228 = vpack.c.b16 %v6112, %v6108
        %v6229 = vpack.c.b16 %v6117, %v6113
        %v6230 = vpack.c.b16 %v6118, %v6114
        %v6231 = vpack.c.b16 %v6119, %v6115
        %v6232 = vpack.c.b16 %v6120, %v6116
        %v6233 = vpack.c.b16 %v6125, %v6121
        %v6234 = vpack.c.b16 %v6126, %v6122
        %v6235 = vpack.c.b16 %v6127, %v6123
        %v6236 = vpack.c.b16 %v6128, %v6124
        %v6237 = vpack.c.b16 %v6133, %v6129
        %v6238 = vpack.c.b16 %v6134, %v6130
        %v6239 = vpack.c.b16 %v6135, %v6131
        %v6240 = vpack.c.b16 %v6136, %v6132
        %v6241 = vpack.c.b16 %v6141, %v6137
        %v6242 = vpack.c.b16 %v6142, %v6138
        %v6243 = vpack.c.b16 %v6143, %v6139
        %v6244 = vpack.c.b16 %v6144, %v6140
        %v6245 = vpack.c.b16 %v6149, %v6145
        %v6246 = vpack.c.b16 %v6150, %v6146
        %v6247 = vpack.c.b16 %v6151, %v6147
        %v6248 = vpack.c.b16 %v6152, %v6148
        %v6249 = vpack.c.b16 %v6157, %v6153
        %v6250 = vpack.c.b16 %v6158, %v6154
        %v6251 = vpack.c.b16 %v6159, %v6155
        %v6252 = vpack.c.b16 %v6160, %v6156
        %v6253 = vpack.c.b16 %v6165, %v6161
        %v6254 = vpack.c.b16 %v6166, %v6162
        %v6255 = vpack.c.b16 %v6167, %v6163
        %v6256 = vpack.c.b16 %v6168, %v6164
        %v6257 = vpack.c.b16 %v6173, %v6169
        %v6258 = vpack.c.b16 %v6174, %v6170
        %v6259 = vpack.c.b16 %v6175, %v6171
        %v6260 = vpack.c.b16 %v6176, %v6172
        %v6261 = vpack.c.b16 %v6181, %v6177
        %v6262 = vpack.c.b16 %v6182, %v6178
        %v6263 = vpack.c.b16 %v6183, %v6179
        %v6264 = vpack.c.b16 %v6184, %v6180
        %v6265 = vpack.c.b16 %v6189, %v6185
        %v6266 = vpack.c.b16 %v6190, %v6186
        %v6267 = vpack.c.b16 %v6191, %v6187
        %v6268 = vpack.c.b16 %v6192, %v6188
        %v6269 = vpack.c.b16 %v6197, %v6193
        %v6270 = vpack.c.b16 %v6198, %v6194
        %v6271 = vpack.c.b16 %v6199, %v6195
        %v6272 = vpack.c.b16 %v6200, %v6196
        %v6273 = vpack.c.b16 %v6205, %v6201
        %v6274 = vpack.c.b16 %v6206, %v6202
        %v6275 = vpack.c.b16 %v6207, %v6203
        %v6276 = vpack.c.b16 %v6208, %v6204
        %v6277 = vpack.c.b16 %v6213, %v6209
        %v6278 = vpack.c.b16 %v6214, %v6210
        %v6279 = vpack.c.b16 %v6215, %v6211
        %v6280 = vpack.c.b16 %v6216, %v6212
        %6345 = vmatprep.subr.bf16.mxu0 %v6218
        %6346 = vmatpush1.bf16.msra.mxu0 %v6217
        %6347 = vmatprep.subr.bf16.mxu0 %v6222
        %6348 = vmatpush1.bf16.msra.mxu0 %v6221
        %6349 = vmatprep.subr.bf16.mxu0 %v6226
        %6350 = vmatpush1.bf16.msra.mxu0 %v6225
        %6351 = vmatprep.subr.bf16.mxu0 %v6230
        %6352 = vmatpush1.bf16.msra.mxu0 %v6229
        %6353 = vmatprep.subr.bf16.mxu0 %v6234
        %6354 = vmatpush1.bf16.msra.mxu0 %v6233
        %6355 = vmatprep.subr.bf16.mxu0 %v6238
        %6356 = vmatpush1.bf16.msra.mxu0 %v6237
        %6357 = vmatprep.subr.bf16.mxu0 %v6242
        %6358 = vmatpush1.bf16.msra.mxu0 %v6241
        %6359 = vmatprep.subr.bf16.mxu0 %v6246
        %6360 = vmatpush1.bf16.msra.mxu0 %v6245
        %6361 = vmatprep.subr.bf16.mxu0 %v6250
        %6362 = vmatpush1.bf16.msra.mxu0 %v6249
        %6363 = vmatprep.subr.bf16.mxu0 %v6254
        %6364 = vmatpush1.bf16.msra.mxu0 %v6253
        %6365 = vmatprep.subr.bf16.mxu0 %v6258
        %6366 = vmatpush1.bf16.msra.mxu0 %v6257
        %6367 = vmatprep.subr.bf16.mxu0 %v6262
        %6368 = vmatpush1.bf16.msra.mxu0 %v6261
        %6369 = vmatprep.subr.bf16.mxu0 %v6266
        %6370 = vmatpush1.bf16.msra.mxu0 %v6265
        %6371 = vmatprep.subr.bf16.mxu0 %v6270
        %6372 = vmatpush1.bf16.msra.mxu0 %v6269
        %6373 = vmatprep.subr.bf16.mxu0 %v6274
        %6374 = vmatpush1.bf16.msra.mxu0 %v6273
        %6375 = vmatprep.subr.bf16.mxu0 %v6278
        %6376 = vmatpush1.bf16.msra.mxu0 %v6277
        %6377 = vmatprep.mubr.bf16.mxu0 %v5936
        %6378 = vmatmul.mubr.bf16.gmra.mrb[0].mxu0 %v5935
        %v6379 = vpop.f32.mrb[0].mxu0
        %v6380 = vadd.f32 %v6008, %v6379
        %v6381 = vpop.f32.mrb[0].mxu0
        %v6382 = vadd.f32 %v6012, %v6381
        %v6383 = vpop.f32.mrb[0].mxu0
        %v6384 = vadd.f32 %v6008, %v6383
        %v6385 = vpop.f32.mrb[0].mxu0
        %v6386 = vadd.f32 %v6012, %v6385
        %6387 = vdwg.mxu0
        %6388 = vmatprep.subr.bf16.mxu0 %v6220
        %6389 = vmatpush1.bf16.msra.mxu0 %v6219
        %6390 = vmatprep.subr.bf16.mxu0 %v6224
        %6391 = vmatpush1.bf16.msra.mxu0 %v6223
        %6392 = vmatprep.subr.bf16.mxu0 %v6228
        %6393 = vmatpush1.bf16.msra.mxu0 %v6227
        %6394 = vmatprep.subr.bf16.mxu0 %v6232
        %6395 = vmatpush1.bf16.msra.mxu0 %v6231
        %6396 = vmatprep.subr.bf16.mxu0 %v6236
        %6397 = vmatpush1.bf16.msra.mxu0 %v6235
        %6398 = vmatprep.subr.bf16.mxu0 %v6240
        %6399 = vmatpush1.bf16.msra.mxu0 %v6239
        %6400 = vmatprep.subr.bf16.mxu0 %v6244
        %6401 = vmatpush1.bf16.msra.mxu0 %v6243
        %6402 = vmatprep.subr.bf16.mxu0 %v6248
        %6403 = vmatpush1.bf16.msra.mxu0 %v6247
        %6404 = vmatprep.subr.bf16.mxu0 %v6252
        %6405 = vmatpush1.bf16.msra.mxu0 %v6251
        %6406 = vmatprep.subr.bf16.mxu0 %v6256
        %6407 = vmatpush1.bf16.msra.mxu0 %v6255
        %6408 = vmatprep.subr.bf16.mxu0 %v6260
        %6409 = vmatpush1.bf16.msra.mxu0 %v6259
        %6410 = vmatprep.subr.bf16.mxu0 %v6264
        %6411 = vmatpush1.bf16.msra.mxu0 %v6263
        %6412 = vmatprep.subr.bf16.mxu0 %v6268
        %6413 = vmatpush1.bf16.msra.mxu0 %v6267
        %6414 = vmatprep.subr.bf16.mxu0 %v6272
        %6415 = vmatpush1.bf16.msra.mxu0 %v6271
        %6416 = vmatprep.subr.bf16.mxu0 %v6276
        %6417 = vmatpush1.bf16.msra.mxu0 %v6275
        %6418 = vmatprep.subr.bf16.mxu0 %v6280
        %6419 = vmatpush1.bf16.msra.mxu0 %v6279
        %6420 = vmatprep.mubr.bf16.mxu0 %v5936
        %6421 = vmatmul.mubr.bf16.gmra.mrb[0].mxu0 %v5935
        %v6422 = vpop.f32.mrb[0].mxu0
        %v6423 = vadd.f32 %v6016, %v6422
        %v6424 = vpop.f32.mrb[0].mxu0
        %v6425 = vadd.f32 %v6020, %v6424
        %v6426 = vpop.f32.mrb[0].mxu0
        %v6427 = vadd.f32 %v6016, %v6426
        %v6428 = vpop.f32.mrb[0].mxu0
        %v6429 = vadd.f32 %v6020, %v6428
        %6430 = vdwg.mxu0
        %v6431 = vmul.f32 %v6380, %v6380
        %v6432 = vmul.f32 %v6382, %v6382
        %v6433 = vmul.f32 %v6423, %v6423
        %v6434 = vmul.f32 %v6425, %v6425
        %v6435 = vmul.f32 %v6384, %v6384
        %v6436 = vmul.f32 %v6386, %v6386
        %v6437 = vmul.f32 %v6427, %v6427
        %v6438 = vmul.f32 %v6429, %v6429
        %v6439 = vmul.f32 %v6380, %v6431
        %v6440 = vmul.f32 %v6382, %v6432
        %v6441 = vmul.f32 %v6423, %v6433
        %v6442 = vmul.f32 %v6425, %v6434
        %v6443 = vmul.f32 %v6384, %v6435
        %v6444 = vmul.f32 %v6386, %v6436
        %v6445 = vmul.f32 %v6427, %v6437
        %v6446 = vmul.f32 %v6429, %v6438
        %v6447 = vmul.f32 %v6439, 0.044715
        %v6448 = vmul.f32 %v6440, 0.044715
        %v6449 = vmul.f32 %v6441, 0.044715
        %v6450 = vmul.f32 %v6442, 0.044715
        %v6451 = vmul.f32 %v6443, 0.044715
        %v6452 = vmul.f32 %v6444, 0.044715
        %v6453 = vmul.f32 %v6445, 0.044715
        %v6454 = vmul.f32 %v6446, 0.044715
        %v6455 = vadd.f32 %v6380, %v6447
        %v6456 = vadd.f32 %v6382, %v6448
        %v6457 = vadd.f32 %v6423, %v6449
        %v6458 = vadd.f32 %v6425, %v6450
        %v6459 = vadd.f32 %v6384, %v6451
        %v6460 = vadd.f32 %v6386, %v6452
        %v6461 = vadd.f32 %v6427, %v6453
        %v6462 = vadd.f32 %v6429, %v6454
        %v6463 = vmul.f32 %v6455, 0.7978846
        %v6464 = vmul.f32 %v6456, 0.7978846
        %v6465 = vmul.f32 %v6457, 0.7978846
        %v6466 = vmul.f32 %v6458, 0.7978846
        %v6467 = vmul.f32 %v6459, 0.7978846
        %v6468 = vmul.f32 %v6460, 0.7978846
        %v6469 = vmul.f32 %v6461, 0.7978846
        %v6470 = vmul.f32 %v6462, 0.7978846
        %v6471 = vtanh.pop %v6463
        %v6472 = vtanh.pop %v6464
        %v6473 = vtanh.pop %v6465
        %v6474 = vtanh.pop %v6466
        %v6475 = vtanh.pop %v6467
        %v6476 = vtanh.pop %v6468
        %v6477 = vtanh.pop %v6469
        %v6478 = vtanh.pop %v6470
        %v6479 = vadd.f32 %v6471, 1.0
        %v6480 = vadd.f32 %v6472, 1.0
        %v6481 = vadd.f32 %v6473, 1.0
        %v6482 = vadd.f32 %v6474, 1.0
        %v6483 = vadd.f32 %v6475, 1.0
        %v6484 = vadd.f32 %v6476, 1.0
        %v6485 = vadd.f32 %v6477, 1.0
        %v6486 = vadd.f32 %v6478, 1.0
        %v6487 = vmul.f32 %v6479, 0.5
        %v6488 = vmul.f32 %v6480, 0.5
        %v6489 = vmul.f32 %v6481, 0.5
        %v6490 = vmul.f32 %v6482, 0.5
        %v6491 = vmul.f32 %v6483, 0.5
        %v6492 = vmul.f32 %v6484, 0.5
        %v6493 = vmul.f32 %v6485, 0.5
        %v6494 = vmul.f32 %v6486, 0.5
        %v6495 = vmul.f32 %v6380, %v6487
        %v6496 = vmul.f32 %v6382, %v6488
        %v6497 = vmul.f32 %v6423, %v6489
        %v6498 = vmul.f32 %v6425, %v6490
        %v6499 = vmul.f32 %v6384, %v6491
        %v6500 = vmul.f32 %v6386, %v6492
        %v6501 = vmul.f32 %v6427, %v6493
        %v6502 = vmul.f32 %v6429, %v6494
        %v6503 = vpack.c.bf16 %v6499, %v6495
        %v6504 = vpack.c.bf16 %v6500, %v6496
        %v6505 = vpack.c.bf16 %v6501, %v6497
        %v6506 = vpack.c.bf16 %v6502, %v6498
        %s6507 = scalar_lea.vmem [#allocation8], 512
        %v6508 = vld [vmem:[%s6507] sm:$0xff]
        %v6509 = vld [vmem:[%s6507 + $0x8] sm:$0xff]
        %v6510 = vld [vmem:[%s6507 + $0x10] sm:$0xff]
        %v6511 = vld [vmem:[%s6507 + $0x18] sm:$0xff]
        %v6512 = vld [vmem:[%s6507 + $0x20] sm:$0xff]
        %v6513 = vld [vmem:[%s6507 + $0x28] sm:$0xff]
        %v6514 = vld [vmem:[%s6507 + $0x30] sm:$0xff]
        %v6515 = vld [vmem:[%s6507 + $0x38] sm:$0xff]
        %v6516 = vld [vmem:[%s6507 + $0x40] sm:$0xff]
        %v6517 = vld [vmem:[%s6507 + $0x48] sm:$0xff]
        %v6518 = vld [vmem:[%s6507 + $0x50] sm:$0xff]
        %v6519 = vld [vmem:[%s6507 + $0x58] sm:$0xff]
        %v6520 = vld [vmem:[%s6507 + $0x60] sm:$0xff]
        %v6521 = vld [vmem:[%s6507 + $0x68] sm:$0xff]
        %v6522 = vld [vmem:[%s6507 + $0x70] sm:$0xff]
        %v6523 = vld [vmem:[%s6507 + $0x78] sm:$0xff]
        %v6524 = vld [vmem:[%s6507 + $0x80] sm:$0xff]
        %v6525 = vld [vmem:[%s6507 + $0x88] sm:$0xff]
        %v6526 = vld [vmem:[%s6507 + $0x90] sm:$0xff]
        %v6527 = vld [vmem:[%s6507 + $0x98] sm:$0xff]
        %v6528 = vld [vmem:[%s6507 + $0xa0] sm:$0xff]
        %v6529 = vld [vmem:[%s6507 + $0xa8] sm:$0xff]
        %v6530 = vld [vmem:[%s6507 + $0xb0] sm:$0xff]
        %v6531 = vld [vmem:[%s6507 + $0xb8] sm:$0xff]
        %v6532 = vld [vmem:[%s6507 + $0xc0] sm:$0xff]
        %v6533 = vld [vmem:[%s6507 + $0xc8] sm:$0xff]
        %v6534 = vld [vmem:[%s6507 + $0xd0] sm:$0xff]
        %v6535 = vld [vmem:[%s6507 + $0xd8] sm:$0xff]
        %v6536 = vld [vmem:[%s6507 + $0xe0] sm:$0xff]
        %v6537 = vld [vmem:[%s6507 + $0xe8] sm:$0xff]
        %v6538 = vld [vmem:[%s6507 + $0xf0] sm:$0xff]
        %v6539 = vld [vmem:[%s6507 + $0xf8] sm:$0xff]
        %v6540 = vld [vmem:[%s6507 + $0x100] sm:$0xff]
        %v6541 = vld [vmem:[%s6507 + $0x108] sm:$0xff]
        %v6542 = vld [vmem:[%s6507 + $0x110] sm:$0xff]
        %v6543 = vld [vmem:[%s6507 + $0x118] sm:$0xff]
        %v6544 = vld [vmem:[%s6507 + $0x120] sm:$0xff]
        %v6545 = vld [vmem:[%s6507 + $0x128] sm:$0xff]
        %v6546 = vld [vmem:[%s6507 + $0x130] sm:$0xff]
        %v6547 = vld [vmem:[%s6507 + $0x138] sm:$0xff]
        %v6548 = vld [vmem:[%s6507 + $0x140] sm:$0xff]
        %v6549 = vld [vmem:[%s6507 + $0x148] sm:$0xff]
        %v6550 = vld [vmem:[%s6507 + $0x150] sm:$0xff]
        %v6551 = vld [vmem:[%s6507 + $0x158] sm:$0xff]
        %v6552 = vld [vmem:[%s6507 + $0x160] sm:$0xff]
        %v6553 = vld [vmem:[%s6507 + $0x168] sm:$0xff]
        %v6554 = vld [vmem:[%s6507 + $0x170] sm:$0xff]
        %v6555 = vld [vmem:[%s6507 + $0x178] sm:$0xff]
        %v6556 = vld [vmem:[%s6507 + $0x180] sm:$0xff]
        %v6557 = vld [vmem:[%s6507 + $0x188] sm:$0xff]
        %v6558 = vld [vmem:[%s6507 + $0x190] sm:$0xff]
        %v6559 = vld [vmem:[%s6507 + $0x198] sm:$0xff]
        %v6560 = vld [vmem:[%s6507 + $0x1a0] sm:$0xff]
        %v6561 = vld [vmem:[%s6507 + $0x1a8] sm:$0xff]
        %v6562 = vld [vmem:[%s6507 + $0x1b0] sm:$0xff]
        %v6563 = vld [vmem:[%s6507 + $0x1b8] sm:$0xff]
        %v6564 = vld [vmem:[%s6507 + $0x1c0] sm:$0xff]
        %v6565 = vld [vmem:[%s6507 + $0x1c8] sm:$0xff]
        %v6566 = vld [vmem:[%s6507 + $0x1d0] sm:$0xff]
        %v6567 = vld [vmem:[%s6507 + $0x1d8] sm:$0xff]
        %v6568 = vld [vmem:[%s6507 + $0x1e0] sm:$0xff]
        %v6569 = vld [vmem:[%s6507 + $0x1e8] sm:$0xff]
        %v6570 = vld [vmem:[%s6507 + $0x1f0] sm:$0xff]
        %v6571 = vld [vmem:[%s6507 + $0x1f8] sm:$0xff]
        %s6572 = scalar_lea.vmem %s15, 2
        %v6573 = vld [vmem:[%s6572] sm:$0x3]
        %v6575 = vlaneseq
        %v6576 = vshrl.u32 %v6575, 7
        %v6577 = vsub.s32 0, %v6576
        %v6578 = vrot.slane %v6573, %v6577
        %v6579 = vlaneseq
        %v6580 = vshrl.u32 %v6579, 7
        %v6581 = vsub.s32 1, %v6580
        %v6582 = vrot.slane %v6573, %v6581
        %v6649 = vunpack.c.l.b16 %v6508
        %v6650 = vunpack.c.h.b16 %v6508
        %v6651 = vunpack.c.l.b16 %v6509
        %v6652 = vunpack.c.h.b16 %v6509
        %v6653 = vunpack.c.l.b16 %v6510
        %v6654 = vunpack.c.h.b16 %v6510
        %v6655 = vunpack.c.l.b16 %v6511
        %v6656 = vunpack.c.h.b16 %v6511
        %v6657 = vunpack.c.l.b16 %v6512
        %v6658 = vunpack.c.h.b16 %v6512
        %v6659 = vunpack.c.l.b16 %v6513
        %v6660 = vunpack.c.h.b16 %v6513
        %v6661 = vunpack.c.l.b16 %v6514
        %v6662 = vunpack.c.h.b16 %v6514
        %v6663 = vunpack.c.l.b16 %v6515
        %v6664 = vunpack.c.h.b16 %v6515
        %v6665 = vunpack.c.l.b16 %v6516
        %v6666 = vunpack.c.h.b16 %v6516
        %v6667 = vunpack.c.l.b16 %v6517
        %v6668 = vunpack.c.h.b16 %v6517
        %v6669 = vunpack.c.l.b16 %v6518
        %v6670 = vunpack.c.h.b16 %v6518
        %v6671 = vunpack.c.l.b16 %v6519
        %v6672 = vunpack.c.h.b16 %v6519
        %v6673 = vunpack.c.l.b16 %v6520
        %v6674 = vunpack.c.h.b16 %v6520
        %v6675 = vunpack.c.l.b16 %v6521
        %v6676 = vunpack.c.h.b16 %v6521
        %v6677 = vunpack.c.l.b16 %v6522
        %v6678 = vunpack.c.h.b16 %v6522
        %v6679 = vunpack.c.l.b16 %v6523
        %v6680 = vunpack.c.h.b16 %v6523
        %v6681 = vunpack.c.l.b16 %v6524
        %v6682 = vunpack.c.h.b16 %v6524
        %v6683 = vunpack.c.l.b16 %v6525
        %v6684 = vunpack.c.h.b16 %v6525
        %v6685 = vunpack.c.l.b16 %v6526
        %v6686 = vunpack.c.h.b16 %v6526
        %v6687 = vunpack.c.l.b16 %v6527
        %v6688 = vunpack.c.h.b16 %v6527
        %v6689 = vunpack.c.l.b16 %v6528
        %v6690 = vunpack.c.h.b16 %v6528
        %v6691 = vunpack.c.l.b16 %v6529
        %v6692 = vunpack.c.h.b16 %v6529
        %v6693 = vunpack.c.l.b16 %v6530
        %v6694 = vunpack.c.h.b16 %v6530
        %v6695 = vunpack.c.l.b16 %v6531
        %v6696 = vunpack.c.h.b16 %v6531
        %v6697 = vunpack.c.l.b16 %v6532
        %v6698 = vunpack.c.h.b16 %v6532
        %v6699 = vunpack.c.l.b16 %v6533
        %v6700 = vunpack.c.h.b16 %v6533
        %v6701 = vunpack.c.l.b16 %v6534
        %v6702 = vunpack.c.h.b16 %v6534
        %v6703 = vunpack.c.l.b16 %v6535
        %v6704 = vunpack.c.h.b16 %v6535
        %v6705 = vunpack.c.l.b16 %v6536
        %v6706 = vunpack.c.h.b16 %v6536
        %v6707 = vunpack.c.l.b16 %v6537
        %v6708 = vunpack.c.h.b16 %v6537
        %v6709 = vunpack.c.l.b16 %v6538
        %v6710 = vunpack.c.h.b16 %v6538
        %v6711 = vunpack.c.l.b16 %v6539
        %v6712 = vunpack.c.h.b16 %v6539
        %v6713 = vunpack.c.l.b16 %v6540
        %v6714 = vunpack.c.h.b16 %v6540
        %v6715 = vunpack.c.l.b16 %v6541
        %v6716 = vunpack.c.h.b16 %v6541
        %v6717 = vunpack.c.l.b16 %v6542
        %v6718 = vunpack.c.h.b16 %v6542
        %v6719 = vunpack.c.l.b16 %v6543
        %v6720 = vunpack.c.h.b16 %v6543
        %v6721 = vunpack.c.l.b16 %v6544
        %v6722 = vunpack.c.h.b16 %v6544
        %v6723 = vunpack.c.l.b16 %v6545
        %v6724 = vunpack.c.h.b16 %v6545
        %v6725 = vunpack.c.l.b16 %v6546
        %v6726 = vunpack.c.h.b16 %v6546
        %v6727 = vunpack.c.l.b16 %v6547
        %v6728 = vunpack.c.h.b16 %v6547
        %v6729 = vunpack.c.l.b16 %v6548
        %v6730 = vunpack.c.h.b16 %v6548
        %v6731 = vunpack.c.l.b16 %v6549
        %v6732 = vunpack.c.h.b16 %v6549
        %v6733 = vunpack.c.l.b16 %v6550
        %v6734 = vunpack.c.h.b16 %v6550
        %v6735 = vunpack.c.l.b16 %v6551
        %v6736 = vunpack.c.h.b16 %v6551
        %v6737 = vunpack.c.l.b16 %v6552
        %v6738 = vunpack.c.h.b16 %v6552
        %v6739 = vunpack.c.l.b16 %v6553
        %v6740 = vunpack.c.h.b16 %v6553
        %v6741 = vunpack.c.l.b16 %v6554
        %v6742 = vunpack.c.h.b16 %v6554
        %v6743 = vunpack.c.l.b16 %v6555
        %v6744 = vunpack.c.h.b16 %v6555
        %v6745 = vunpack.c.l.b16 %v6556
        %v6746 = vunpack.c.h.b16 %v6556
        %v6747 = vunpack.c.l.b16 %v6557
        %v6748 = vunpack.c.h.b16 %v6557
        %v6749 = vunpack.c.l.b16 %v6558
        %v6750 = vunpack.c.h.b16 %v6558
        %v6751 = vunpack.c.l.b16 %v6559
        %v6752 = vunpack.c.h.b16 %v6559
        %v6753 = vunpack.c.l.b16 %v6560
        %v6754 = vunpack.c.h.b16 %v6560
        %v6755 = vunpack.c.l.b16 %v6561
        %v6756 = vunpack.c.h.b16 %v6561
        %v6757 = vunpack.c.l.b16 %v6562
        %v6758 = vunpack.c.h.b16 %v6562
        %v6759 = vunpack.c.l.b16 %v6563
        %v6760 = vunpack.c.h.b16 %v6563
        %v6761 = vunpack.c.l.b16 %v6564
        %v6762 = vunpack.c.h.b16 %v6564
        %v6763 = vunpack.c.l.b16 %v6565
        %v6764 = vunpack.c.h.b16 %v6565
        %v6765 = vunpack.c.l.b16 %v6566
        %v6766 = vunpack.c.h.b16 %v6566
        %v6767 = vunpack.c.l.b16 %v6567
        %v6768 = vunpack.c.h.b16 %v6567
        %v6769 = vunpack.c.l.b16 %v6568
        %v6770 = vunpack.c.h.b16 %v6568
        %v6771 = vunpack.c.l.b16 %v6569
        %v6772 = vunpack.c.h.b16 %v6569
        %v6773 = vunpack.c.l.b16 %v6570
        %v6774 = vunpack.c.h.b16 %v6570
        %v6775 = vunpack.c.l.b16 %v6571
        %v6776 = vunpack.c.h.b16 %v6571
        %v6777 = vpack.c.b16 %v6651, %v6649
        %v6778 = vpack.c.b16 %v6652, %v6650
        %v6779 = vpack.c.b16 %v6655, %v6653
        %v6780 = vpack.c.b16 %v6656, %v6654
        %v6781 = vpack.c.b16 %v6659, %v6657
        %v6782 = vpack.c.b16 %v6660, %v6658
        %v6783 = vpack.c.b16 %v6663, %v6661
        %v6784 = vpack.c.b16 %v6664, %v6662
        %v6785 = vpack.c.b16 %v6667, %v6665
        %v6786 = vpack.c.b16 %v6668, %v6666
        %v6787 = vpack.c.b16 %v6671, %v6669
        %v6788 = vpack.c.b16 %v6672, %v6670
        %v6789 = vpack.c.b16 %v6675, %v6673
        %v6790 = vpack.c.b16 %v6676, %v6674
        %v6791 = vpack.c.b16 %v6679, %v6677
        %v6792 = vpack.c.b16 %v6680, %v6678
        %v6793 = vpack.c.b16 %v6683, %v6681
        %v6794 = vpack.c.b16 %v6684, %v6682
        %v6795 = vpack.c.b16 %v6687, %v6685
        %v6796 = vpack.c.b16 %v6688, %v6686
        %v6797 = vpack.c.b16 %v6691, %v6689
        %v6798 = vpack.c.b16 %v6692, %v6690
        %v6799 = vpack.c.b16 %v6695, %v6693
        %v6800 = vpack.c.b16 %v6696, %v6694
        %v6801 = vpack.c.b16 %v6699, %v6697
        %v6802 = vpack.c.b16 %v6700, %v6698
        %v6803 = vpack.c.b16 %v6703, %v6701
        %v6804 = vpack.c.b16 %v6704, %v6702
        %v6805 = vpack.c.b16 %v6707, %v6705
        %v6806 = vpack.c.b16 %v6708, %v6706
        %v6807 = vpack.c.b16 %v6711, %v6709
        %v6808 = vpack.c.b16 %v6712, %v6710
        %v6809 = vpack.c.b16 %v6715, %v6713
        %v6810 = vpack.c.b16 %v6716, %v6714
        %v6811 = vpack.c.b16 %v6719, %v6717
        %v6812 = vpack.c.b16 %v6720, %v6718
        %v6813 = vpack.c.b16 %v6723, %v6721
        %v6814 = vpack.c.b16 %v6724, %v6722
        %v6815 = vpack.c.b16 %v6727, %v6725
        %v6816 = vpack.c.b16 %v6728, %v6726
        %v6817 = vpack.c.b16 %v6731, %v6729
        %v6818 = vpack.c.b16 %v6732, %v6730
        %v6819 = vpack.c.b16 %v6735, %v6733
        %v6820 = vpack.c.b16 %v6736, %v6734
        %v6821 = vpack.c.b16 %v6739, %v6737
        %v6822 = vpack.c.b16 %v6740, %v6738
        %v6823 = vpack.c.b16 %v6743, %v6741
        %v6824 = vpack.c.b16 %v6744, %v6742
        %v6825 = vpack.c.b16 %v6747, %v6745
        %v6826 = vpack.c.b16 %v6748, %v6746
        %v6827 = vpack.c.b16 %v6751, %v6749
        %v6828 = vpack.c.b16 %v6752, %v6750
        %v6829 = vpack.c.b16 %v6755, %v6753
        %v6830 = vpack.c.b16 %v6756, %v6754
        %v6831 = vpack.c.b16 %v6759, %v6757
        %v6832 = vpack.c.b16 %v6760, %v6758
        %v6833 = vpack.c.b16 %v6763, %v6761
        %v6834 = vpack.c.b16 %v6764, %v6762
        %v6835 = vpack.c.b16 %v6767, %v6765
        %v6836 = vpack.c.b16 %v6768, %v6766
        %v6837 = vpack.c.b16 %v6771, %v6769
        %v6838 = vpack.c.b16 %v6772, %v6770
        %v6839 = vpack.c.b16 %v6775, %v6773
        %v6840 = vpack.c.b16 %v6776, %v6774
        %6905 = vmatprep.subr.bf16.mxu0 %v6778
        %6906 = vmatpush1.bf16.msra.mxu0 %v6777
        %6907 = vmatprep.subr.bf16.mxu0 %v6780
        %6908 = vmatpush1.bf16.msra.mxu0 %v6779
        %6909 = vmatprep.subr.bf16.mxu0 %v6782
        %6910 = vmatpush1.bf16.msra.mxu0 %v6781
        %6911 = vmatprep.subr.bf16.mxu0 %v6784
        %6912 = vmatpush1.bf16.msra.mxu0 %v6783
        %6913 = vmatprep.subr.bf16.mxu0 %v6786
        %6914 = vmatpush1.bf16.msra.mxu0 %v6785
        %6915 = vmatprep.subr.bf16.mxu0 %v6788
        %6916 = vmatpush1.bf16.msra.mxu0 %v6787
        %6917 = vmatprep.subr.bf16.mxu0 %v6790
        %6918 = vmatpush1.bf16.msra.mxu0 %v6789
        %6919 = vmatprep.subr.bf16.mxu0 %v6792
        %6920 = vmatpush1.bf16.msra.mxu0 %v6791
        %6921 = vmatprep.subr.bf16.mxu0 %v6794
        %6922 = vmatpush1.bf16.msra.mxu0 %v6793
        %6923 = vmatprep.subr.bf16.mxu0 %v6796
        %6924 = vmatpush1.bf16.msra.mxu0 %v6795
        %6925 = vmatprep.subr.bf16.mxu0 %v6798
        %6926 = vmatpush1.bf16.msra.mxu0 %v6797
        %6927 = vmatprep.subr.bf16.mxu0 %v6800
        %6928 = vmatpush1.bf16.msra.mxu0 %v6799
        %6929 = vmatprep.subr.bf16.mxu0 %v6802
        %6930 = vmatpush1.bf16.msra.mxu0 %v6801
        %6931 = vmatprep.subr.bf16.mxu0 %v6804
        %6932 = vmatpush1.bf16.msra.mxu0 %v6803
        %6933 = vmatprep.subr.bf16.mxu0 %v6806
        %6934 = vmatpush1.bf16.msra.mxu0 %v6805
        %6935 = vmatprep.subr.bf16.mxu0 %v6808
        %6936 = vmatpush1.bf16.msra.mxu0 %v6807
        %6937 = vmatprep.mubr.bf16.mxu0 %v6504
        %6938 = vmatmul.mubr.bf16.gmra.mrb[0].mxu0 %v6503
        %v6939 = vpop.f32.mrb[0].mxu0
        %v6940 = vadd.f32 %v6578, %v6939
        %v6941 = vpop.f32.mrb[0].mxu0
        %v6942 = vadd.f32 %v6582, %v6941
        %v6943 = vpop.f32.mrb[0].mxu0
        %v6944 = vadd.f32 %v6578, %v6943
        %v6945 = vpop.f32.mrb[0].mxu0
        %v6946 = vadd.f32 %v6582, %v6945
        %6947 = vdwg.mxu0
        %6948 = vmatprep.subr.bf16.mxu0 %v6810
        %6949 = vmatpush1.bf16.msra.mxu0 %v6809
        %6950 = vmatprep.subr.bf16.mxu0 %v6812
        %6951 = vmatpush1.bf16.msra.mxu0 %v6811
        %6952 = vmatprep.subr.bf16.mxu0 %v6814
        %6953 = vmatpush1.bf16.msra.mxu0 %v6813
        %6954 = vmatprep.subr.bf16.mxu0 %v6816
        %6955 = vmatpush1.bf16.msra.mxu0 %v6815
        %6956 = vmatprep.subr.bf16.mxu0 %v6818
        %6957 = vmatpush1.bf16.msra.mxu0 %v6817
        %6958 = vmatprep.subr.bf16.mxu0 %v6820
        %6959 = vmatpush1.bf16.msra.mxu0 %v6819
        %6960 = vmatprep.subr.bf16.mxu0 %v6822
        %6961 = vmatpush1.bf16.msra.mxu0 %v6821
        %6962 = vmatprep.subr.bf16.mxu0 %v6824
        %6963 = vmatpush1.bf16.msra.mxu0 %v6823
        %6964 = vmatprep.subr.bf16.mxu0 %v6826
        %6965 = vmatpush1.bf16.msra.mxu0 %v6825
        %6966 = vmatprep.subr.bf16.mxu0 %v6828
        %6967 = vmatpush1.bf16.msra.mxu0 %v6827
        %6968 = vmatprep.subr.bf16.mxu0 %v6830
        %6969 = vmatpush1.bf16.msra.mxu0 %v6829
        %6970 = vmatprep.subr.bf16.mxu0 %v6832
        %6971 = vmatpush1.bf16.msra.mxu0 %v6831
        %6972 = vmatprep.subr.bf16.mxu0 %v6834
        %6973 = vmatpush1.bf16.msra.mxu0 %v6833
        %6974 = vmatprep.subr.bf16.mxu0 %v6836
        %6975 = vmatpush1.bf16.msra.mxu0 %v6835
        %6976 = vmatprep.subr.bf16.mxu0 %v6838
        %6977 = vmatpush1.bf16.msra.mxu0 %v6837
        %6978 = vmatprep.subr.bf16.mxu0 %v6840
        %6979 = vmatpush1.bf16.msra.mxu0 %v6839
        %6980 = vmatprep.mubr.bf16.mxu0 %v6506
        %6981 = vmatmul.mubr.bf16.gmra.mrb[0].mxu0 %v6505
        %v6982 = vpop.f32.mrb[0].mxu0
        %v6983 = vadd.f32 %v6940, %v6982
        %v6984 = vpop.f32.mrb[0].mxu0
        %v6985 = vadd.f32 %v6942, %v6984
        %v6986 = vpop.f32.mrb[0].mxu0
        %v6987 = vadd.f32 %v6944, %v6986
        %v6988 = vpop.f32.mrb[0].mxu0
        %v6989 = vadd.f32 %v6946, %v6988
        %6990 = vdwg.mxu0
        %v6991 = vadd.f32 %v5931, %v6983
        %v6992 = vadd.f32 %v5932, %v6985
        %v6993 = vadd.f32 %v5933, %v6987
        %v6994 = vadd.f32 %v5934, %v6989
        %s6995 = scalar_lea.vmem %s16, 2
        %v6996 = vld [vmem:[%s6995] sm:$0x3]
        %s6997 = scalar_lea.vmem %s17, 2
        %v6998 = vld [vmem:[%s6997] sm:$0x3]
        %v6999 = vadd.f32 %v6991, %v6992
        %7000 = vadd.xlane.f32.xlu0 %v6999
        %v7001 = vpop.xlane.xlu0 %7000
        %v7002 = vadd.f32 %v6993, %v6994
        %7003 = vadd.xlane.f32.xlu0 %v7002
        %v7004 = vpop.xlane.xlu0 %7003
        %v7005 = vmul.f32 %v7001, %v821
        %v7006 = vmul.f32 %v7004, %v821
        %v7007 = vsub.f32 %v6991, %v7005
        %v7008 = vsub.f32 %v6992, %v7005
        %v7009 = vsub.f32 %v6993, %v7006
        %v7010 = vsub.f32 %v6994, %v7006
        %v7011 = vmul.f32 %v7007, %v7007
        %v7012 = vmul.f32 %v7008, %v7008
        %v7013 = vmul.f32 %v7009, %v7009
        %v7014 = vmul.f32 %v7010, %v7010
        %v7015 = vadd.f32 %v7011, %v7012
        %7016 = vadd.xlane.f32.xlu0 %v7015
        %v7017 = vpop.xlane.xlu0 %7016
        %v7018 = vadd.f32 %v7013, %v7014
        %7019 = vadd.xlane.f32.xlu0 %v7018
        %v7020 = vpop.xlane.xlu0 %7019
        %v7021 = vmul.f32 %v7017, %v821
        %v7022 = vmul.f32 %v7020, %v821
        %v7023 = vadd.f32 %v7021, 1e-12
        %v7024 = vadd.f32 %v7022, 1e-12
        %v7025 = vrsqrt.pop %v7023
        %v7026 = vrsqrt.pop %v7024
        %v7027 = vmul.f32 %v7007, %v7025
        %v7028 = vmul.f32 %v7008, %v7025
        %v7029 = vmul.f32 %v7009, %v7026
        %v7030 = vmul.f32 %v7010, %v7026
        %v7032 = vlaneseq
        %v7033 = vshrl.u32 %v7032, 7
        %v7034 = vsub.s32 0, %v7033
        %v7035 = vrot.slane %v6996, %v7034
        %v7036 = vlaneseq
        %v7037 = vshrl.u32 %v7036, 7
        %v7038 = vsub.s32 1, %v7037
        %v7039 = vrot.slane %v6996, %v7038
        %v7042 = vmul.f32 %v7027, %v7035
        %v7043 = vmul.f32 %v7028, %v7039
        %v7044 = vmul.f32 %v7029, %v7035
        %v7045 = vmul.f32 %v7030, %v7039
        %v7047 = vlaneseq
        %v7048 = vshrl.u32 %v7047, 7
        %v7049 = vsub.s32 0, %v7048
        %v7050 = vrot.slane %v6998, %v7049
        %v7051 = vlaneseq
        %v7052 = vshrl.u32 %v7051, 7
        %v7053 = vsub.s32 1, %v7052
        %v7054 = vrot.slane %v6998, %v7053
        %v7057 = vadd.f32 %v7042, %v7050
        %v7058 = vadd.f32 %v7043, %v7054
        %v7059 = vadd.f32 %v7044, %v7050
        %v7060 = vadd.f32 %v7045, %v7054
        %v7063 = vrot.slane %v7059, 7
        %v7064 = vrot.slane %v7060, 7
        %vm7067 = vcmask 1040384
        %v7068 = vsel %vm7067, %v7057, %v7063
        %v7069 = vsel %vm7067, %v7058, %v7064
        %v7070 = vpack.c.bf16 %v7068, %v7068
        %v7071 = vpack.c.bf16 %v7069, %v7069
        %v7072 = vld [vmem:[%s18] sm:$0xf]
        %v7073 = vld [vmem:[%s18 + $0x4] sm:$0xf]
        %v7074 = vld [vmem:[%s18 + $0x8] sm:$0xf]
        %v7075 = vld [vmem:[%s18 + $0xc] sm:$0xf]
        %v7076 = vld [vmem:[%s18 + $0x10] sm:$0xf]
        %v7077 = vld [vmem:[%s18 + $0x14] sm:$0xf]
        %v7078 = vld [vmem:[%s18 + $0x18] sm:$0xf]
        %v7079 = vld [vmem:[%s18 + $0x1c] sm:$0xf]
        %v7080 = vld [vmem:[%s18 + $0x20] sm:$0xf]
        %v7081 = vld [vmem:[%s18 + $0x24] sm:$0xf]
        %v7082 = vld [vmem:[%s18 + $0x28] sm:$0xf]
        %v7083 = vld [vmem:[%s18 + $0x2c] sm:$0xf]
        %v7084 = vld [vmem:[%s18 + $0x30] sm:$0xf]
        %v7085 = vld [vmem:[%s18 + $0x34] sm:$0xf]
        %v7086 = vld [vmem:[%s18 + $0x38] sm:$0xf]
        %v7087 = vld [vmem:[%s18 + $0x3c] sm:$0xf]
        %v7088 = vld [vmem:[%s18 + $0x40] sm:$0xf]
        %v7089 = vld [vmem:[%s18 + $0x44] sm:$0xf]
        %v7090 = vld [vmem:[%s18 + $0x48] sm:$0xf]
        %v7091 = vld [vmem:[%s18 + $0x4c] sm:$0xf]
        %v7092 = vld [vmem:[%s18 + $0x50] sm:$0xf]
        %v7093 = vld [vmem:[%s18 + $0x54] sm:$0xf]
        %v7094 = vld [vmem:[%s18 + $0x58] sm:$0xf]
        %v7095 = vld [vmem:[%s18 + $0x5c] sm:$0xf]
        %v7096 = vld [vmem:[%s18 + $0x60] sm:$0xf]
        %v7097 = vld [vmem:[%s18 + $0x64] sm:$0xf]
        %v7098 = vld [vmem:[%s18 + $0x68] sm:$0xf]
        %v7099 = vld [vmem:[%s18 + $0x6c] sm:$0xf]
        %v7100 = vld [vmem:[%s18 + $0x70] sm:$0xf]
        %v7101 = vld [vmem:[%s18 + $0x74] sm:$0xf]
        %v7102 = vld [vmem:[%s18 + $0x78] sm:$0xf]
        %v7103 = vld [vmem:[%s18 + $0x7c] sm:$0xf]
        %v7104 = vld [vmem:[%s19] sm:$0x1]
        %v7106 = vlaneseq
        %v7107 = vshrl.u32 %v7106, 7
        %v7108 = vsub.s32 0, %v7107
        %v7109 = vrot.slane %v7104, %v7108
        %v7143 = vunpack.c.l.b16 %v7072
        %v7144 = vunpack.c.l.b16 %v7073
        %v7145 = vunpack.c.l.b16 %v7074
        %v7146 = vunpack.c.l.b16 %v7075
        %v7147 = vunpack.c.l.b16 %v7076
        %v7148 = vunpack.c.l.b16 %v7077
        %v7149 = vunpack.c.l.b16 %v7078
        %v7150 = vunpack.c.l.b16 %v7079
        %v7151 = vunpack.c.l.b16 %v7080
        %v7152 = vunpack.c.l.b16 %v7081
        %v7153 = vunpack.c.l.b16 %v7082
        %v7154 = vunpack.c.l.b16 %v7083
        %v7155 = vunpack.c.l.b16 %v7084
        %v7156 = vunpack.c.l.b16 %v7085
        %v7157 = vunpack.c.l.b16 %v7086
        %v7158 = vunpack.c.l.b16 %v7087
        %v7159 = vunpack.c.l.b16 %v7088
        %v7160 = vunpack.c.l.b16 %v7089
        %v7161 = vunpack.c.l.b16 %v7090
        %v7162 = vunpack.c.l.b16 %v7091
        %v7163 = vunpack.c.l.b16 %v7092
        %v7164 = vunpack.c.l.b16 %v7093
        %v7165 = vunpack.c.l.b16 %v7094
        %v7166 = vunpack.c.l.b16 %v7095
        %v7167 = vunpack.c.l.b16 %v7096
        %v7168 = vunpack.c.l.b16 %v7097
        %v7169 = vunpack.c.l.b16 %v7098
        %v7170 = vunpack.c.l.b16 %v7099
        %v7171 = vunpack.c.l.b16 %v7100
        %v7172 = vunpack.c.l.b16 %v7101
        %v7173 = vunpack.c.l.b16 %v7102
        %v7174 = vunpack.c.l.b16 %v7103
        %v7175 = vpack.c.b16 %v7144, %v7143
        %v7176 = vpack.c.b16 %v7146, %v7145
        %v7177 = vpack.c.b16 %v7148, %v7147
        %v7178 = vpack.c.b16 %v7150, %v7149
        %v7179 = vpack.c.b16 %v7152, %v7151
        %v7180 = vpack.c.b16 %v7154, %v7153
        %v7181 = vpack.c.b16 %v7156, %v7155
        %v7182 = vpack.c.b16 %v7158, %v7157
        %v7183 = vpack.c.b16 %v7160, %v7159
        %v7184 = vpack.c.b16 %v7162, %v7161
        %v7185 = vpack.c.b16 %v7164, %v7163
        %v7186 = vpack.c.b16 %v7166, %v7165
        %v7187 = vpack.c.b16 %v7168, %v7167
        %v7188 = vpack.c.b16 %v7170, %v7169
        %v7189 = vpack.c.b16 %v7172, %v7171
        %v7190 = vpack.c.b16 %v7174, %v7173
        %7207 = vmatprep.subr.bf16.mxu0 0
        %7208 = vmatpush1.bf16.msra.mxu0 %v7175
        %7209 = vmatprep.subr.bf16.mxu0 0
        %7210 = vmatpush1.bf16.msra.mxu0 %v7176
        %7211 = vmatprep.subr.bf16.mxu0 0
        %7212 = vmatpush1.bf16.msra.mxu0 %v7177
        %7213 = vmatprep.subr.bf16.mxu0 0
        %7214 = vmatpush1.bf16.msra.mxu0 %v7178
        %7215 = vmatprep.subr.bf16.mxu0 0
        %7216 = vmatpush1.bf16.msra.mxu0 %v7179
        %7217 = vmatprep.subr.bf16.mxu0 0
        %7218 = vmatpush1.bf16.msra.mxu0 %v7180
        %7219 = vmatprep.subr.bf16.mxu0 0
        %7220 = vmatpush1.bf16.msra.mxu0 %v7181
        %7221 = vmatprep.subr.bf16.mxu0 0
        %7222 = vmatpush1.bf16.msra.mxu0 %v7182
        %7223 = vmatprep.subr.bf16.mxu0 0
        %7224 = vmatpush1.bf16.msra.mxu0 %v7183
        %7225 = vmatprep.subr.bf16.mxu0 0
        %7226 = vmatpush1.bf16.msra.mxu0 %v7184
        %7227 = vmatprep.subr.bf16.mxu0 0
        %7228 = vmatpush1.bf16.msra.mxu0 %v7185
        %7229 = vmatprep.subr.bf16.mxu0 0
        %7230 = vmatpush1.bf16.msra.mxu0 %v7186
        %7231 = vmatprep.subr.bf16.mxu0 0
        %7232 = vmatpush1.bf16.msra.mxu0 %v7187
        %7233 = vmatprep.subr.bf16.mxu0 0
        %7234 = vmatpush1.bf16.msra.mxu0 %v7188
        %7235 = vmatprep.subr.bf16.mxu0 0
        %7236 = vmatpush1.bf16.msra.mxu0 %v7189
        %7237 = vmatprep.subr.bf16.mxu0 0
        %7238 = vmatpush1.bf16.msra.mxu0 %v7190
        %7239 = vmatprep.mubr.bf16.mxu0 %v7071
        %7240 = vmatmul.mubr.bf16.gmra.mrb[0].mxu0 %v7070
        %v7241 = vpop.f32.mrb[0].mxu0
        %v7242 = vadd.f32 %v7109, %v7241
        %v7243 = vpop.f32.mrb[0].mxu0
        %v7244 = vpop.f32.mrb[0].mxu0
        %v7245 = vpop.f32.mrb[0].mxu0
        %7246 = vdwg.mxu0
        %vm7247 = vcmask 25600
        %7248 = vst.msk [vmem:[%s695] sm:$0x3] %vm7247, %v7242
        %s7249 = sand.u32 %s475, 1
        %s7250 = scalar_lea.sflag [#allocation4], %s7249
        %s7251 = sand.u32 %s475, 1
        %s7252 = smul.addr %s7251, 2
        %s7253 = scalar_lea.vmem [#allocation10], %s7252
        // Predicated region
        $region117: #{custom_bert_forward.1} parent=99 // pred_check
          %p7254 = pneg %p485
        $region118: #{custom_bert_forward.1} parent=99 // pred_check_branch
          %7256 = sbr.rel (%p7254) target = $region120
        $region119: #{custom_bert_forward.1} parent=99 // pred_region
          %s7258 = ssub.s32 32, 32
          %7259 = vsyncadd %s7250, %s7258
          %s7260 = smul.addr %s37, 32
          %s7261 = scalar_lea.hbm %s20, %s7260
          %s7263 = sshll.u32 %s7253, 4
          %s7264 = int_to_ptr.vmem [resolvable:$true] %s7263
          %7266 = dma.vmem_to_hbm [thread:$0]  %s7264, 32, %s7261, %s7250
        $region120: #{custom_bert_forward.1} parent=99 // pred_fallthru
          _
      $region100: #{custom_bert_forward.1} parent=5 // pred_fallthru
        _
      %p7267 = scmp.le.s32.totalorder 2, %s32
      // Predicated region
      $region121: #{custom_bert_forward.1} parent=5 // pred_check
        %p7268 = pneg %p7267
      $region122: #{custom_bert_forward.1} parent=5 // pred_check_branch
        %7270 = sbr.rel (%p7268) target = $region124
      $region123: #{custom_bert_forward.1} parent=5 // pred_region
        %s7271 = ssub.s32 %s32, 2
        // Predicated region
        $region125: #{custom_bert_forward.1} parent=123 // pred_check
          %p7272 = pneg %p491
        $region126: #{custom_bert_forward.1} parent=123 // pred_check_branch
          %7274 = sbr.rel (%p7272) target = $region128
        $region127: #{custom_bert_forward.1} parent=123 // pred_region
          %s7275 = sand.u32 %s476, 1
          %s7276 = scalar_lea.sflag [#allocation4], %s7275
          %s7277 = sand.u32 %s476, 1
          %s7278 = smul.addr %s7277, 2
          %s7279 = scalar_lea.vmem [#allocation10], %s7278
          %7280 = dma.done %s7276, 32
        $region128: #{custom_bert_forward.1} parent=123 // pred_fallthru
          _
      $region124: #{custom_bert_forward.1} parent=5 // pred_fallthru
        _
    $region6: #{custom_bert_forward.1} parent=1 // loop_footer
      %s36 = sadd.s32 1, %s32
    $region7: #{custom_bert_forward.1} parent=1 // loop_footer_branch
      %31 = sbr.rel target = $region3
    $region8: #{custom_bert_forward.1} parent=1 // loop_exit
      _
    %7281 = vsyncpa [#allocation3], 1
    %s7282 = scalar_lea.sflag [#allocation3], 1
    %7283 = vsyncpa %s7282, 1
    %7284 = vsyncpa [#allocation6], 1
    %7285 = vsyncpa [#allocation9], 1
    %7286 = vsyncpa [#allocation4], 1
    %s7287 = scalar_lea.sflag [#allocation4], 1
    %7288 = vsyncpa %s7287, 1

</llo_original>
